<compile_context>
chip_gen: v7x
topology: tpu7x:2x2x1
jax: 0.10.0
libtpu: 0.0.40
codegen_flags: <defaults>
</compile_context>

<pallas_src>
import functools

import jax
import jax.numpy as jnp
import numpy as np
from jax.experimental import pallas as pl
from jax.experimental.pallas import tpu as pltpu


def _elu(h):
    # ELU(alpha=1): x if x > 0 else exp(x) - 1   (clamp exp arg for safety)
    return jnp.where(h > 0.0, h, jnp.exp(jnp.minimum(h, 0.0)) - 1.0)


# ----------------------------------------------------------------------------
# Layer 1: K-tiled, N-split linear + ELU.  x, w in bf16; accumulate f32.
# ----------------------------------------------------------------------------
def _linear1_kernel(x_ref, w_ref, b_ref, o_ref, acc_ref):
    k = pl.program_id(1)

    @pl.when(k == 0)
    def _():
        acc_ref[...] = jnp.zeros_like(acc_ref)

    acc_ref[...] += jnp.dot(
        x_ref[...], w_ref[...], preferred_element_type=jnp.float32
    )

    @pl.when(k == pl.num_programs(1) - 1)
    def _():
        h = acc_ref[...] + b_ref[...]          # f32 epilogue (v5e-friendly)
        o_ref[...] = _elu(h).astype(o_ref.dtype)


def linear1_pallas(x_bf16, w_bf16, b_f32, *, tk, tn):
    """x: (M, K) bf16, w: (K, N) bf16, b: (1, N) f32.  K%tk==0, N%tn==0, tn%128==0."""
    M, K = x_bf16.shape
    Kw, N = w_bf16.shape
    assert K == Kw and K % tk == 0 and N % tn == 0 and tn % 128 == 0

    return pl.pallas_call(
        _linear1_kernel,
        out_shape=jax.ShapeDtypeStruct((M, N), jnp.float32),
        grid_spec=pltpu.PrefetchScalarGridSpec(
            num_scalar_prefetch=0,
            grid=(N // tn, K // tk),                       # reduction axis last
            in_specs=[
                pl.BlockSpec((M, tk), lambda n, k: (0, k)),
                pl.BlockSpec((tk, tn), lambda n, k: (k, n)),
                pl.BlockSpec((1, tn), lambda n, k: (0, n)),
            ],
            out_specs=pl.BlockSpec((M, tn), lambda n, k: (0, n)),
            scratch_shapes=[pltpu.VMEM((M, tn), jnp.float32)],
        ),
        compiler_params=pltpu.CompilerParams(
            dimension_semantics=("parallel", "arbitrary"),  # N split across v7x TCs
            vmem_limit_bytes=32 << 20,                      # ~9 MiB actually needed
        ),
    )(x_bf16, w_bf16, b_f32)


# ----------------------------------------------------------------------------
# Layers 2 + 3 fused: ELU(h1 @ w2 + b2) @ w3 + b3, single launch, all in VMEM.
# ----------------------------------------------------------------------------
def _tail_kernel(h1_ref, w2_ref, b2_ref, w3_ref, b3_ref, o_ref):
    h2 = jnp.dot(h1_ref[...], w2_ref[...], preferred_element_type=jnp.float32)
    h2 = _elu(h2 + b2_ref[...])
    h3 = jnp.dot(h2, w3_ref[...], preferred_element_type=jnp.float32) + b3_ref[...]
    o_ref[...] = h3.astype(o_ref.dtype)


def tail_pallas(h1, w2, b2, w3, b3):
    M, N1 = h1.shape
    _, N2 = w2.shape
    _, N3 = w3.shape
    return pl.pallas_call(
        _tail_kernel,
        out_shape=jax.ShapeDtypeStruct((M, N3), jnp.float32),
        grid_spec=pltpu.PrefetchScalarGridSpec(
            num_scalar_prefetch=0,
            grid=(1,),
            in_specs=[
                pl.BlockSpec((M, N1), lambda i: (0, 0)),
                pl.BlockSpec((N1, N2), lambda i: (0, 0)),
                pl.BlockSpec((1, N2), lambda i: (0, 0)),
                pl.BlockSpec((N2, N3), lambda i: (0, 0)),
                pl.BlockSpec((1, N3), lambda i: (0, 0)),
            ],
            out_specs=pl.BlockSpec((M, N3), lambda i: (0, 0)),
        ),
        compiler_params=pltpu.CompilerParams(
            dimension_semantics=("arbitrary",),
        ),
    )(h1, w2, b2, w3, b3)


# ----------------------------------------------------------------------------
# Parameter init / one-time preparation (padding + bf16 cast hoisted here).
# ----------------------------------------------------------------------------
def init_params(key, channel, z_dim):
    """torch.nn.Linear-style U(-1/sqrt(fan_in), 1/sqrt(fan_in)); weights stored (K_in, N_out)."""
    dims = [(channel * 96 * 96, 900), (900, 300), (300, 2 * z_dim)]
    params = []
    for fan_in, fan_out in dims:
        key, kw, kb = jax.random.split(key, 3)
        bound = 1.0 / np.sqrt(fan_in)
        w = jax.random.uniform(kw, (fan_in, fan_out), jnp.float32, -bound, bound)
        b = jax.random.uniform(kb, (fan_out,), jnp.float32, -bound, bound)
        params.append((w, b))
    return params


def _pad2d(w, rows, cols, dtype):
    K, N = w.shape
    return jnp.zeros((rows, cols), dtype).at[:K, :N].set(w.astype(dtype))


def _pad_bias(b, cols):
    return jnp.zeros((1, cols), jnp.float32).at[0, : b.shape[0]].set(b)


def prepare_params(params, z_dim):
    """Done ONCE at load time (not per forward): pad feature dims to lane multiples
    and cast the large layer-1 weight to bf16 for half-bandwidth streaming."""
    (w1, b1), (w2, b2), (w3, b3) = params
    K1 = w1.shape[0]
    n1, n2 = 1024, 384
    n3 = max(128, ((2 * z_dim + 127) // 128) * 128)
    w1p = _pad2d(w1, K1, n1, jnp.bfloat16)        # 900  -> 1024, bf16
    b1p = _pad_bias(b1, n1)
    w2p = _pad2d(w2, n1, n2, jnp.float32)         # (900,300) -> (1024,384), f32 (tiny)
    b2p = _pad_bias(b2, n2)
    w3p = _pad2d(w3, n2, n3, jnp.float32)         # (300,2z) -> (384,>=128), f32 (tiny)
    b3p = _pad_bias(b3, n3)
    return (w1p, b1p, w2p, b2p, w3p, b3p)


# ----------------------------------------------------------------------------
# Forward: reproduces Encoder_share.forward -> (m, v), each (B, z_dim).
# ----------------------------------------------------------------------------
@functools.partial(jax.jit, static_argnums=(2,))
def encoder_share_forward(x_nchw, prepared, z_dim):
    w1p, b1p, w2p, b2p, w3p, b3p = prepared
    B = x_nchw.shape[0]
    x = x_nchw.reshape(B, -1).astype(jnp.bfloat16)        # (B, C*96*96) bf16
    K = x.shape[1]
    tk = K // 8                                           # = C*1152, lane-aligned

    # NOTE: with B=2 the MXU/store path is idle; the whole layer is weight-stream
    # bound, which is exactly what the bf16 weight + dual-TC N-split optimize.
    h1 = linear1_pallas(x, w1p, b1p, tk=tk, tn=512)       # (B, 1024) f32
    h3 = tail_pallas(h1, w2p, b2p, w3p, b3p)              # (B, n3_pad) f32

    h = h3[:, : 2 * z_dim]
    # gaussian_parameters(h, dim=1): split in half, v = softplus(second) + 1e-8
    m = h[:, :z_dim]
    v = jax.nn.softplus(h[:, z_dim:]) + 1e-8
    return m, v


# ----------------------------------------------------------------------------
# Pure-JAX reference (same bf16 quantization of the layer-1 path).
# ----------------------------------------------------------------------------
def _reference_forward(x_nchw, params, z_dim):
    (w1, b1), (w2, b2), (w3, b3) = params
    x = x_nchw.reshape(x_nchw.shape[0], -1).astype(jnp.float32)
    x = x.astype(jnp.bfloat16).astype(jnp.float32)
    w1 = w1.astype(jnp.bfloat16).astype(jnp.float32)
    h = _elu(x @ w1 + b1)
    h = _elu(h @ w2 + b2)
    h = h @ w3 + b3
    return h[:, :z_dim], jax.nn.softplus(h[:, z_dim:]) + 1e-8


if __name__ == "__main__":
    B, C, z_dim = 2, 4, 16
    key = jax.random.PRNGKey(0)
    kx, kp = jax.random.split(key)

    # The module hard-codes 96x96 spatial (Linear in_features = C*96*96).
    x = jax.random.normal(kx, (B, C, 96, 96), jnp.float32)
    params = init_params(kp, C, z_dim)
    prepared = prepare_params(params, z_dim)              # hoisted: one-time cost

    m, v = encoder_share_forward(x, prepared, z_dim)
    m, v = jax.block_until_ready(m), jax.block_until_ready(v)

    m_ref, v_ref = _reference_forward(x, params, z_dim)
    np.testing.assert_allclose(np.asarray(m), np.asarray(m_ref), rtol=5e-3, atol=5e-3)
    np.testing.assert_allclose(np.asarray(v), np.asarray(v_ref), rtol=5e-3, atol=5e-3)

    print("KERNEL_OK")
</pallas_src>

<mosaic_0001>
module attributes {stable_mosaic.version = 11 : i64} {
  func.func @_tail_kernel(%arg0: i32, %arg1: memref<2x1024xf32, #tpu.memory_space<vmem>>, %arg2: memref<1024x384xf32, #tpu.memory_space<vmem>>, %arg3: memref<1x384xf32, #tpu.memory_space<vmem>>, %arg4: memref<384x128xf32, #tpu.memory_space<vmem>>, %arg5: memref<1x128xf32, #tpu.memory_space<vmem>>, %arg6: memref<2x128xf32, #tpu.memory_space<vmem>>) attributes {dimension_semantics = [#tpu.dimension_semantics<arbitrary>], iteration_bounds = array<i64: 1>, scalar_prefetch = 0 : i64, scratch_operands = 0 : i64, tpu.core_type = #tpu.core_type<tc>, window_params = [{pipeline_mode = #tpu.pipeline_mode<synchronous>, transform_indices = @transform_0, window_bounds = array<i64: 2, 1024>}, {pipeline_mode = #tpu.pipeline_mode<synchronous>, transform_indices = @transform_1, window_bounds = array<i64: 1024, 384>}, {pipeline_mode = #tpu.pipeline_mode<synchronous>, transform_indices = @transform_2, window_bounds = array<i64: 1, 384>}, {pipeline_mode = #tpu.pipeline_mode<synchronous>, transform_indices = @transform_3, window_bounds = array<i64: 384, 128>}, {pipeline_mode = #tpu.pipeline_mode<synchronous>, transform_indices = @transform_4, window_bounds = array<i64: 1, 128>}, {pipeline_mode = #tpu.pipeline_mode<synchronous>, transform_indices = @transform_5, window_bounds = array<i64: 2, 128>}]} {
    %c0 = arith.constant 0 : index
    %c0_0 = arith.constant 0 : index
    %0 = vector.load %arg1[%c0, %c0_0] : memref<2x1024xf32, #tpu.memory_space<vmem>>, vector<2x1024xf32>
    %c0_1 = arith.constant 0 : index
    %c0_2 = arith.constant 0 : index
    %1 = vector.load %arg2[%c0_1, %c0_2] : memref<1024x384xf32, #tpu.memory_space<vmem>>, vector<1024x384xf32>
    %cst = arith.constant dense<0.000000e+00> : vector<2x384xf32>
    %2 = tpu.matmul %0, %1, %cst {dimension_numbers = #tpu.dot_dimension_numbers<[1], [0], [0], [1], [0, 0, 1, 1], [], []>} : vector<2x1024xf32>, vector<1024x384xf32>, vector<2x384xf32> -> vector<2x384xf32>
    %c0_3 = arith.constant 0 : index
    %c0_4 = arith.constant 0 : index
    %3 = vector.load %arg3[%c0_3, %c0_4] : memref<1x384xf32, #tpu.memory_space<vmem>>, vector<1x384xf32>
    %4 = vector.broadcast %3 : vector<1x384xf32> to vector<2x384xf32>
    %5 = arith.addf %2, %4 : vector<2x384xf32>
    %cst_5 = arith.constant 0.000000e+00 : f32
    %6 = vector.broadcast %cst_5 : f32 to vector<2x384xf32>
    %7 = arith.cmpf ogt, %5, %6 : vector<2x384xf32>
    %cst_6 = arith.constant 0.000000e+00 : f32
    %8 = vector.broadcast %cst_6 : f32 to vector<2x384xf32>
    %9 = arith.minimumf %5, %8 : vector<2x384xf32>
    %10 = math.exp %9 : vector<2x384xf32>
    %cst_7 = arith.constant 1.000000e+00 : f32
    %11 = vector.broadcast %cst_7 : f32 to vector<2x384xf32>
    %12 = arith.subf %10, %11 : vector<2x384xf32>
    %13 = arith.select %7, %5, %12 : vector<2x384xi1>, vector<2x384xf32>
    %c0_8 = arith.constant 0 : index
    %c0_9 = arith.constant 0 : index
    %14 = vector.load %arg4[%c0_8, %c0_9] : memref<384x128xf32, #tpu.memory_space<vmem>>, vector<384x128xf32>
    %cst_10 = arith.constant dense<0.000000e+00> : vector<2x128xf32>
    %15 = tpu.matmul %13, %14, %cst_10 {dimension_numbers = #tpu.dot_dimension_numbers<[1], [0], [0], [1], [0, 0, 1, 1], [], []>} : vector<2x384xf32>, vector<384x128xf32>, vector<2x128xf32> -> vector<2x128xf32>
    %c0_11 = arith.constant 0 : index
    %c0_12 = arith.constant 0 : index
    %16 = vector.load %arg5[%c0_11, %c0_12] : memref<1x128xf32, #tpu.memory_space<vmem>>, vector<1x128xf32>
    %17 = vector.broadcast %16 : vector<1x128xf32> to vector<2x128xf32>
    %18 = arith.addf %15, %17 : vector<2x128xf32>
    %c0_13 = arith.constant 0 : index
    %c0_14 = arith.constant 0 : index
    %19 = vector.load %arg6[%c0_13, %c0_14] : memref<2x128xf32, #tpu.memory_space<vmem>>, vector<2x128xf32>
    tpu.vector_store %arg6[%c0_13, %c0_14], %18 {strides = array<i32>} : memref<2x128xf32, #tpu.memory_space<vmem>>, vector<2x128xf32>,
    return
  }
  func.func @transform_0(%arg0: i32) -> (i32, i32) {
    %c0_i32 = arith.constant 0 : i32
    %c0_i32_0 = arith.constant 0 : i32
    %c0_i32_1 = arith.constant 0 : i32
    return %c0_i32, %c0_i32_0 : i32, i32
  }
  func.func @transform_1(%arg0: i32) -> (i32, i32) {
    %c0_i32 = arith.constant 0 : i32
    %c0_i32_0 = arith.constant 0 : i32
    %c0_i32_1 = arith.constant 0 : i32
    return %c0_i32, %c0_i32_0 : i32, i32
  }
  func.func @transform_2(%arg0: i32) -> (i32, i32) {
    %c0_i32 = arith.constant 0 : i32
    %c0_i32_0 = arith.constant 0 : i32
    %c0_i32_1 = arith.constant 0 : i32
    return %c0_i32, %c0_i32_0 : i32, i32
  }
  func.func @transform_3(%arg0: i32) -> (i32, i32) {
    %c0_i32 = arith.constant 0 : i32
    %c0_i32_0 = arith.constant 0 : i32
    %c0_i32_1 = arith.constant 0 : i32
    return %c0_i32, %c0_i32_0 : i32, i32
  }
  func.func @transform_4(%arg0: i32) -> (i32, i32) {
    %c0_i32 = arith.constant 0 : i32
    %c0_i32_0 = arith.constant 0 : i32
    %c0_i32_1 = arith.constant 0 : i32
    return %c0_i32, %c0_i32_0 : i32, i32
  }
  func.func @transform_5(%arg0: i32) -> (i32, i32) {
    %c0_i32 = arith.constant 0 : i32
    %c0_i32_0 = arith.constant 0 : i32
    %c0_i32_1 = arith.constant 0 : i32
    return %c0_i32, %c0_i32_0 : i32, i32
  }
}

module attributes {stable_mosaic.version = 11 : i64} {
  func.func @_linear1_kernel(%arg0: i32, %arg1: i32, %arg2: memref<2x4608xbf16, #tpu.memory_space<vmem>>, %arg3: memref<4608x512xbf16, #tpu.memory_space<vmem>>, %arg4: memref<1x512xf32, #tpu.memory_space<vmem>>, %arg5: memref<2x512xf32, #tpu.memory_space<vmem>>, %arg6: memref<2x512xf32, #tpu.memory_space<vmem>>) attributes {dimension_semantics = [#tpu.dimension_semantics<parallel>, #tpu.dimension_semantics<arbitrary>], iteration_bounds = array<i64: 2, 8>, scalar_prefetch = 0 : i64, scratch_operands = 1 : i64, tpu.core_type = #tpu.core_type<tc>, window_params = [{transform_indices = @transform_0, window_bounds = array<i64: 2, 4608>}, {transform_indices = @transform_1, window_bounds = array<i64: 4608, 512>}, {transform_indices = @transform_2, window_bounds = array<i64: 1, 512>}, {transform_indices = @transform_3, window_bounds = array<i64: 2, 512>}]} {
    %c0_i32 = arith.constant 0 : i32
    %0 = arith.cmpi eq, %arg1, %c0_i32 : i32
    %1 = arith.extui %0 : i1 to i32
    %c0_i32_0 = arith.constant 0 : i32
    %2 = arith.cmpi ne, %1, %c0_i32_0 : i32
    scf.if %2 {
      %cst_9 = arith.constant 0.000000e+00 : f32
      %12 = vector.broadcast %cst_9 : f32 to vector<2x512xf32>
      %c0_10 = arith.constant 0 : index
      %c0_11 = arith.constant 0 : index
      %13 = vector.load %arg6[%c0_10, %c0_11] : memref<2x512xf32, #tpu.memory_space<vmem>>, vector<2x512xf32>
      tpu.vector_store %arg6[%c0_10, %c0_11], %12 {strides = array<i32>} : memref<2x512xf32, #tpu.memory_space<vmem>>, vector<2x512xf32>,
    } else {
    }
    %c0 = arith.constant 0 : index
    %c0_1 = arith.constant 0 : index
    %3 = vector.load %arg6[%c0, %c0_1] : memref<2x512xf32, #tpu.memory_space<vmem>>, vector<2x512xf32>
    %c0_2 = arith.constant 0 : index
    %c0_3 = arith.constant 0 : index
    %4 = vector.load %arg2[%c0_2, %c0_3] : memref<2x4608xbf16, #tpu.memory_space<vmem>>, vector<2x4608xbf16>
    %c0_4 = arith.constant 0 : index
    %c0_5 = arith.constant 0 : index
    %5 = vector.load %arg3[%c0_4, %c0_5] : memref<4608x512xbf16, #tpu.memory_space<vmem>>, vector<4608x512xbf16>
    %cst = arith.constant dense<0.000000e+00> : vector<2x512xf32>
    %6 = tpu.matmul %4, %5, %cst {dimension_numbers = #tpu.dot_dimension_numbers<[1], [0], [0], [1], [0, 0, 1, 1], [], []>} : vector<2x4608xbf16>, vector<4608x512xbf16>, vector<2x512xf32> -> vector<2x512xf32>
    %7 = arith.addf %3, %6 : vector<2x512xf32>
    %c0_6 = arith.constant 0 : index
    %c0_7 = arith.constant 0 : index
    %8 = vector.load %arg6[%c0_6, %c0_7] : memref<2x512xf32, #tpu.memory_space<vmem>>, vector<2x512xf32>
    tpu.vector_store %arg6[%c0_6, %c0_7], %7 {strides = array<i32>} : memref<2x512xf32, #tpu.memory_space<vmem>>, vector<2x512xf32>,
    %c7_i32 = arith.constant 7 : i32
    %9 = arith.cmpi eq, %arg1, %c7_i32 : i32
    %10 = arith.extui %9 : i1 to i32
    %c0_i32_8 = arith.constant 0 : i32
    %11 = arith.cmpi ne, %10, %c0_i32_8 : i32
    scf.if %11 {
      %c0_9 = arith.constant 0 : index
      %c0_10 = arith.constant 0 : index
      %12 = vector.load %arg6[%c0_9, %c0_10] : memref<2x512xf32, #tpu.memory_space<vmem>>, vector<2x512xf32>
      %c0_11 = arith.constant 0 : index
      %c0_12 = arith.constant 0 : index
      %13 = vector.load %arg4[%c0_11, %c0_12] : memref<1x512xf32, #tpu.memory_space<vmem>>, vector<1x512xf32>
      %14 = vector.broadcast %13 : vector<1x512xf32> to vector<2x512xf32>
      %15 = arith.addf %12, %14 : vector<2x512xf32>
      %cst_13 = arith.constant 0.000000e+00 : f32
      %16 = vector.broadcast %cst_13 : f32 to vector<2x512xf32>
      %17 = arith.cmpf ogt, %15, %16 : vector<2x512xf32>
      %cst_14 = arith.constant 0.000000e+00 : f32
      %18 = vector.broadcast %cst_14 : f32 to vector<2x512xf32>
      %19 = arith.minimumf %15, %18 : vector<2x512xf32>
      %20 = math.exp %19 : vector<2x512xf32>
      %cst_15 = arith.constant 1.000000e+00 : f32
      %21 = vector.broadcast %cst_15 : f32 to vector<2x512xf32>
      %22 = arith.subf %20, %21 : vector<2x512xf32>
      %23 = arith.select %17, %15, %22 : vector<2x512xi1>, vector<2x512xf32>
      %c0_16 = arith.constant 0 : index
      %c0_17 = arith.constant 0 : index
      %24 = vector.load %arg5[%c0_16, %c0_17] : memref<2x512xf32, #tpu.memory_space<vmem>>, vector<2x512xf32>
      tpu.vector_store %arg5[%c0_16, %c0_17], %23 {strides = array<i32>} : memref<2x512xf32, #tpu.memory_space<vmem>>, vector<2x512xf32>,
    } else {
    }
    return
  }
  func.func @transform_0(%arg0: i32, %arg1: i32) -> (i32, i32) {
    %c0_i32 = arith.constant 0 : i32
    %c0_i32_0 = arith.constant 0 : i32
    return %c0_i32, %arg1 : i32, i32
  }
  func.func @transform_1(%arg0: i32, %arg1: i32) -> (i32, i32) {
    %c0_i32 = arith.constant 0 : i32
    return %arg1, %arg0 : i32, i32
  }
  func.func @transform_2(%arg0: i32, %arg1: i32) -> (i32, i32) {
    %c0_i32 = arith.constant 0 : i32
    %c0_i32_0 = arith.constant 0 : i32
    return %c0_i32, %arg0 : i32, i32
  }
  func.func @transform_3(%arg0: i32, %arg1: i32) -> (i32, i32) {
    %c0_i32 = arith.constant 0 : i32
    %c0_i32_0 = arith.constant 0 : i32
    return %c0_i32, %arg0 : i32, i32
  }
}

</mosaic_0001>

<llo_original>
// kernel: encoder_share_forward.3
$region0: #{encoder_share_forward.3}
  #allocation0 [shape = 'u32[]', space=smem, size = 0x4, offset = 0x4, fixed_abs, tag = 'smem constant byte address 0x4 - core index']
  #allocation1 [shape = 'u32[144,128]{1,0:T(1,128)}', space=vmem, size = 0x12000, scoped, tag = 'internal scratch']
  %s0 = inlined_call_operand.vmem [shape: f32[2,1024], index: 0, kind: input, shape index: {}]
  %s1 = inlined_call_operand.vmem [shape: f32[1024,384], index: 1, kind: input, shape index: {}]
  %s2 = inlined_call_operand.vmem [shape: f32[1,384], index: 2, kind: input, shape index: {}]
  %s3 = inlined_call_operand.vmem [shape: f32[384,128], index: 3, kind: input, shape index: {}]
  %s4 = inlined_call_operand.vmem [shape: f32[1,128], index: 4, kind: input, shape index: {}]
  %s5 = inlined_call_operand.vmem [shape: f32[2,128], index: 5, kind: output, shape index: {}]
  %s6 = sld [smem:[#allocation0]]
  $region30: #{encoder_share_forward.3} parent=0
    _
  %s8 = ssub.s32 1, %s6
  %s9 = scalar_select 0, %s8, %s6
  // Predicated region
  $region2: #{encoder_share_forward.3} parent=0 // pred_check
    _
  $region3: #{encoder_share_forward.3} parent=0 // pred_check_branch
    %11 = sbr.rel (0) target = $region5
  $region4: #{encoder_share_forward.3} parent=0 // pred_region
    _
  $region5: #{encoder_share_forward.3} parent=0 // pred_fallthru
    _
  // Predicated region
  $region6: #{encoder_share_forward.3} parent=0 // pred_check
    _
  $region7: #{encoder_share_forward.3} parent=0 // pred_check_branch
    %13 = sbr.rel (0) target = $region9
  $region8: #{encoder_share_forward.3} parent=0 // pred_region
    _
  $region9: #{encoder_share_forward.3} parent=0 // pred_fallthru
    _
  // Predicated region
  $region10: #{encoder_share_forward.3} parent=0 // pred_check
    _
  $region11: #{encoder_share_forward.3} parent=0 // pred_check_branch
    %15 = sbr.rel (0) target = $region13
  $region12: #{encoder_share_forward.3} parent=0 // pred_region
    _
  $region13: #{encoder_share_forward.3} parent=0 // pred_fallthru
    _
  // Predicated region
  $region14: #{encoder_share_forward.3} parent=0 // pred_check
    _
  $region15: #{encoder_share_forward.3} parent=0 // pred_check_branch
    %17 = sbr.rel (0) target = $region17
  $region16: #{encoder_share_forward.3} parent=0 // pred_region
    _
  $region17: #{encoder_share_forward.3} parent=0 // pred_fallthru
    _
  // Predicated region
  $region18: #{encoder_share_forward.3} parent=0 // pred_check
    _
  $region19: #{encoder_share_forward.3} parent=0 // pred_check_branch
    %19 = sbr.rel (0) target = $region21
  $region20: #{encoder_share_forward.3} parent=0 // pred_region
    _
  $region21: #{encoder_share_forward.3} parent=0 // pred_fallthru
    _
  %v20 = vld [vmem:[%s0] sm:$0xff]
  %v21 = vld [vmem:[%s0 + $0x8] sm:$0xff]
  %v22 = vld [vmem:[%s1] sm:$0xff]
  %v23 = vld [vmem:[%s1 + $0x8] sm:$0xff]
  %v24 = vld [vmem:[%s1 + $0x10] sm:$0xff]
  %v25 = vld [vmem:[%s1 + $0x18] sm:$0xff]
  %v26 = vld [vmem:[%s1 + $0x20] sm:$0xff]
  %v27 = vld [vmem:[%s1 + $0x28] sm:$0xff]
  %v28 = vld [vmem:[%s1 + $0x30] sm:$0xff]
  %v29 = vld [vmem:[%s1 + $0x38] sm:$0xff]
  %v30 = vld [vmem:[%s1 + $0x40] sm:$0xff]
  %v31 = vld [vmem:[%s1 + $0x48] sm:$0xff]
  %v32 = vld [vmem:[%s1 + $0x50] sm:$0xff]
  %v33 = vld [vmem:[%s1 + $0x58] sm:$0xff]
  %v34 = vld [vmem:[%s1 + $0x60] sm:$0xff]
  %v35 = vld [vmem:[%s1 + $0x68] sm:$0xff]
  %v36 = vld [vmem:[%s1 + $0x70] sm:$0xff]
  %v37 = vld [vmem:[%s1 + $0x78] sm:$0xff]
  %v38 = vld [vmem:[%s1 + $0x80] sm:$0xff]
  %v39 = vld [vmem:[%s1 + $0x88] sm:$0xff]
  %v40 = vld [vmem:[%s1 + $0x90] sm:$0xff]
  %v41 = vld [vmem:[%s1 + $0x98] sm:$0xff]
  %v42 = vld [vmem:[%s1 + $0xa0] sm:$0xff]
  %v43 = vld [vmem:[%s1 + $0xa8] sm:$0xff]
  %v44 = vld [vmem:[%s1 + $0xb0] sm:$0xff]
  %v45 = vld [vmem:[%s1 + $0xb8] sm:$0xff]
  %v46 = vld [vmem:[%s1 + $0xc0] sm:$0xff]
  %v47 = vld [vmem:[%s1 + $0xc8] sm:$0xff]
  %v48 = vld [vmem:[%s1 + $0xd0] sm:$0xff]
  %v49 = vld [vmem:[%s1 + $0xd8] sm:$0xff]
  %v50 = vld [vmem:[%s1 + $0xe0] sm:$0xff]
  %v51 = vld [vmem:[%s1 + $0xe8] sm:$0xff]
  %v52 = vld [vmem:[%s1 + $0xf0] sm:$0xff]
  %v53 = vld [vmem:[%s1 + $0xf8] sm:$0xff]
  %v54 = vld [vmem:[%s1 + $0x100] sm:$0xff]
  %v55 = vld [vmem:[%s1 + $0x108] sm:$0xff]
  %v56 = vld [vmem:[%s1 + $0x110] sm:$0xff]
  %v57 = vld [vmem:[%s1 + $0x118] sm:$0xff]
  %v58 = vld [vmem:[%s1 + $0x120] sm:$0xff]
  %v59 = vld [vmem:[%s1 + $0x128] sm:$0xff]
  %v60 = vld [vmem:[%s1 + $0x130] sm:$0xff]
  %v61 = vld [vmem:[%s1 + $0x138] sm:$0xff]
  %v62 = vld [vmem:[%s1 + $0x140] sm:$0xff]
  %v63 = vld [vmem:[%s1 + $0x148] sm:$0xff]
  %v64 = vld [vmem:[%s1 + $0x150] sm:$0xff]
  %v65 = vld [vmem:[%s1 + $0x158] sm:$0xff]
  %v66 = vld [vmem:[%s1 + $0x160] sm:$0xff]
  %v67 = vld [vmem:[%s1 + $0x168] sm:$0xff]
  %v68 = vld [vmem:[%s1 + $0x170] sm:$0xff]
  %v69 = vld [vmem:[%s1 + $0x178] sm:$0xff]
  %v70 = vld [vmem:[%s1 + $0x180] sm:$0xff]
  %v71 = vld [vmem:[%s1 + $0x188] sm:$0xff]
  %v72 = vld [vmem:[%s1 + $0x190] sm:$0xff]
  %v73 = vld [vmem:[%s1 + $0x198] sm:$0xff]
  %v74 = vld [vmem:[%s1 + $0x1a0] sm:$0xff]
  %v75 = vld [vmem:[%s1 + $0x1a8] sm:$0xff]
  %v76 = vld [vmem:[%s1 + $0x1b0] sm:$0xff]
  %v77 = vld [vmem:[%s1 + $0x1b8] sm:$0xff]
  %v78 = vld [vmem:[%s1 + $0x1c0] sm:$0xff]
  %v79 = vld [vmem:[%s1 + $0x1c8] sm:$0xff]
  %v80 = vld [vmem:[%s1 + $0x1d0] sm:$0xff]
  %v81 = vld [vmem:[%s1 + $0x1d8] sm:$0xff]
  %v82 = vld [vmem:[%s1 + $0x1e0] sm:$0xff]
  %v83 = vld [vmem:[%s1 + $0x1e8] sm:$0xff]
  %v84 = vld [vmem:[%s1 + $0x1f0] sm:$0xff]
  %v85 = vld [vmem:[%s1 + $0x1f8] sm:$0xff]
  %v86 = vld [vmem:[%s1 + $0x200] sm:$0xff]
  %v87 = vld [vmem:[%s1 + $0x208] sm:$0xff]
  %v88 = vld [vmem:[%s1 + $0x210] sm:$0xff]
  %v89 = vld [vmem:[%s1 + $0x218] sm:$0xff]
  %v90 = vld [vmem:[%s1 + $0x220] sm:$0xff]
  %v91 = vld [vmem:[%s1 + $0x228] sm:$0xff]
  %v92 = vld [vmem:[%s1 + $0x230] sm:$0xff]
  %v93 = vld [vmem:[%s1 + $0x238] sm:$0xff]
  %v94 = vld [vmem:[%s1 + $0x240] sm:$0xff]
  %v95 = vld [vmem:[%s1 + $0x248] sm:$0xff]
  %v96 = vld [vmem:[%s1 + $0x250] sm:$0xff]
  %v97 = vld [vmem:[%s1 + $0x258] sm:$0xff]
  %v98 = vld [vmem:[%s1 + $0x260] sm:$0xff]
  %v99 = vld [vmem:[%s1 + $0x268] sm:$0xff]
  %v100 = vld [vmem:[%s1 + $0x270] sm:$0xff]
  %v101 = vld [vmem:[%s1 + $0x278] sm:$0xff]
  %v102 = vld [vmem:[%s1 + $0x280] sm:$0xff]
  %v103 = vld [vmem:[%s1 + $0x288] sm:$0xff]
  %v104 = vld [vmem:[%s1 + $0x290] sm:$0xff]
  %v105 = vld [vmem:[%s1 + $0x298] sm:$0xff]
  %v106 = vld [vmem:[%s1 + $0x2a0] sm:$0xff]
  %v107 = vld [vmem:[%s1 + $0x2a8] sm:$0xff]
  %v108 = vld [vmem:[%s1 + $0x2b0] sm:$0xff]
  %v109 = vld [vmem:[%s1 + $0x2b8] sm:$0xff]
  %v110 = vld [vmem:[%s1 + $0x2c0] sm:$0xff]
  %v111 = vld [vmem:[%s1 + $0x2c8] sm:$0xff]
  %v112 = vld [vmem:[%s1 + $0x2d0] sm:$0xff]
  %v113 = vld [vmem:[%s1 + $0x2d8] sm:$0xff]
  %v114 = vld [vmem:[%s1 + $0x2e0] sm:$0xff]
  %v115 = vld [vmem:[%s1 + $0x2e8] sm:$0xff]
  %v116 = vld [vmem:[%s1 + $0x2f0] sm:$0xff]
  %v117 = vld [vmem:[%s1 + $0x2f8] sm:$0xff]
  %v118 = vld [vmem:[%s1 + $0x300] sm:$0xff]
  %v119 = vld [vmem:[%s1 + $0x308] sm:$0xff]
  %v120 = vld [vmem:[%s1 + $0x310] sm:$0xff]
  %v121 = vld [vmem:[%s1 + $0x318] sm:$0xff]
  %v122 = vld [vmem:[%s1 + $0x320] sm:$0xff]
  %v123 = vld [vmem:[%s1 + $0x328] sm:$0xff]
  %v124 = vld [vmem:[%s1 + $0x330] sm:$0xff]
  %v125 = vld [vmem:[%s1 + $0x338] sm:$0xff]
  %v126 = vld [vmem:[%s1 + $0x340] sm:$0xff]
  %v127 = vld [vmem:[%s1 + $0x348] sm:$0xff]
  %v128 = vld [vmem:[%s1 + $0x350] sm:$0xff]
  %v129 = vld [vmem:[%s1 + $0x358] sm:$0xff]
  %v130 = vld [vmem:[%s1 + $0x360] sm:$0xff]
  %v131 = vld [vmem:[%s1 + $0x368] sm:$0xff]
  %v132 = vld [vmem:[%s1 + $0x370] sm:$0xff]
  %v133 = vld [vmem:[%s1 + $0x378] sm:$0xff]
  %v134 = vld [vmem:[%s1 + $0x380] sm:$0xff]
  %v135 = vld [vmem:[%s1 + $0x388] sm:$0xff]
  %v136 = vld [vmem:[%s1 + $0x390] sm:$0xff]
  %v137 = vld [vmem:[%s1 + $0x398] sm:$0xff]
  %v138 = vld [vmem:[%s1 + $0x3a0] sm:$0xff]
  %v139 = vld [vmem:[%s1 + $0x3a8] sm:$0xff]
  %v140 = vld [vmem:[%s1 + $0x3b0] sm:$0xff]
  %v141 = vld [vmem:[%s1 + $0x3b8] sm:$0xff]
  %v142 = vld [vmem:[%s1 + $0x3c0] sm:$0xff]
  %v143 = vld [vmem:[%s1 + $0x3c8] sm:$0xff]
  %v144 = vld [vmem:[%s1 + $0x3d0] sm:$0xff]
  %v145 = vld [vmem:[%s1 + $0x3d8] sm:$0xff]
  %v146 = vld [vmem:[%s1 + $0x3e0] sm:$0xff]
  %v147 = vld [vmem:[%s1 + $0x3e8] sm:$0xff]
  %v148 = vld [vmem:[%s1 + $0x3f0] sm:$0xff]
  %v149 = vld [vmem:[%s1 + $0x3f8] sm:$0xff]
  %v150 = vld [vmem:[%s1 + $0x400] sm:$0xff]
  %v151 = vld [vmem:[%s1 + $0x408] sm:$0xff]
  %v152 = vld [vmem:[%s1 + $0x410] sm:$0xff]
  %v153 = vld [vmem:[%s1 + $0x418] sm:$0xff]
  %v154 = vld [vmem:[%s1 + $0x420] sm:$0xff]
  %v155 = vld [vmem:[%s1 + $0x428] sm:$0xff]
  %v156 = vld [vmem:[%s1 + $0x430] sm:$0xff]
  %v157 = vld [vmem:[%s1 + $0x438] sm:$0xff]
  %v158 = vld [vmem:[%s1 + $0x440] sm:$0xff]
  %v159 = vld [vmem:[%s1 + $0x448] sm:$0xff]
  %v160 = vld [vmem:[%s1 + $0x450] sm:$0xff]
  %v161 = vld [vmem:[%s1 + $0x458] sm:$0xff]
  %v162 = vld [vmem:[%s1 + $0x460] sm:$0xff]
  %v163 = vld [vmem:[%s1 + $0x468] sm:$0xff]
  %v164 = vld [vmem:[%s1 + $0x470] sm:$0xff]
  %v165 = vld [vmem:[%s1 + $0x478] sm:$0xff]
  %v166 = vld [vmem:[%s1 + $0x480] sm:$0xff]
  %v167 = vld [vmem:[%s1 + $0x488] sm:$0xff]
  %v168 = vld [vmem:[%s1 + $0x490] sm:$0xff]
  %v169 = vld [vmem:[%s1 + $0x498] sm:$0xff]
  %v170 = vld [vmem:[%s1 + $0x4a0] sm:$0xff]
  %v171 = vld [vmem:[%s1 + $0x4a8] sm:$0xff]
  %v172 = vld [vmem:[%s1 + $0x4b0] sm:$0xff]
  %v173 = vld [vmem:[%s1 + $0x4b8] sm:$0xff]
  %v174 = vld [vmem:[%s1 + $0x4c0] sm:$0xff]
  %v175 = vld [vmem:[%s1 + $0x4c8] sm:$0xff]
  %v176 = vld [vmem:[%s1 + $0x4d0] sm:$0xff]
  %v177 = vld [vmem:[%s1 + $0x4d8] sm:$0xff]
  %v178 = vld [vmem:[%s1 + $0x4e0] sm:$0xff]
  %v179 = vld [vmem:[%s1 + $0x4e8] sm:$0xff]
  %v180 = vld [vmem:[%s1 + $0x4f0] sm:$0xff]
  %v181 = vld [vmem:[%s1 + $0x4f8] sm:$0xff]
  %v182 = vld [vmem:[%s1 + $0x500] sm:$0xff]
  %v183 = vld [vmem:[%s1 + $0x508] sm:$0xff]
  %v184 = vld [vmem:[%s1 + $0x510] sm:$0xff]
  %v185 = vld [vmem:[%s1 + $0x518] sm:$0xff]
  %v186 = vld [vmem:[%s1 + $0x520] sm:$0xff]
  %v187 = vld [vmem:[%s1 + $0x528] sm:$0xff]
  %v188 = vld [vmem:[%s1 + $0x530] sm:$0xff]
  %v189 = vld [vmem:[%s1 + $0x538] sm:$0xff]
  %v190 = vld [vmem:[%s1 + $0x540] sm:$0xff]
  %v191 = vld [vmem:[%s1 + $0x548] sm:$0xff]
  %v192 = vld [vmem:[%s1 + $0x550] sm:$0xff]
  %v193 = vld [vmem:[%s1 + $0x558] sm:$0xff]
  %v194 = vld [vmem:[%s1 + $0x560] sm:$0xff]
  %v195 = vld [vmem:[%s1 + $0x568] sm:$0xff]
  %v196 = vld [vmem:[%s1 + $0x570] sm:$0xff]
  %v197 = vld [vmem:[%s1 + $0x578] sm:$0xff]
  %v198 = vld [vmem:[%s1 + $0x580] sm:$0xff]
  %v199 = vld [vmem:[%s1 + $0x588] sm:$0xff]
  %v200 = vld [vmem:[%s1 + $0x590] sm:$0xff]
  %v201 = vld [vmem:[%s1 + $0x598] sm:$0xff]
  %v202 = vld [vmem:[%s1 + $0x5a0] sm:$0xff]
  %v203 = vld [vmem:[%s1 + $0x5a8] sm:$0xff]
  %v204 = vld [vmem:[%s1 + $0x5b0] sm:$0xff]
  %v205 = vld [vmem:[%s1 + $0x5b8] sm:$0xff]
  %v206 = vld [vmem:[%s1 + $0x5c0] sm:$0xff]
  %v207 = vld [vmem:[%s1 + $0x5c8] sm:$0xff]
  %v208 = vld [vmem:[%s1 + $0x5d0] sm:$0xff]
  %v209 = vld [vmem:[%s1 + $0x5d8] sm:$0xff]
  %v210 = vld [vmem:[%s1 + $0x5e0] sm:$0xff]
  %v211 = vld [vmem:[%s1 + $0x5e8] sm:$0xff]
  %v212 = vld [vmem:[%s1 + $0x5f0] sm:$0xff]
  %v213 = vld [vmem:[%s1 + $0x5f8] sm:$0xff]
  %v214 = vld [vmem:[%s1 + $0x600] sm:$0xff]
  %v215 = vld [vmem:[%s1 + $0x608] sm:$0xff]
  %v216 = vld [vmem:[%s1 + $0x610] sm:$0xff]
  %v217 = vld [vmem:[%s1 + $0x618] sm:$0xff]
  %v218 = vld [vmem:[%s1 + $0x620] sm:$0xff]
  %v219 = vld [vmem:[%s1 + $0x628] sm:$0xff]
  %v220 = vld [vmem:[%s1 + $0x630] sm:$0xff]
  %v221 = vld [vmem:[%s1 + $0x638] sm:$0xff]
  %v222 = vld [vmem:[%s1 + $0x640] sm:$0xff]
  %v223 = vld [vmem:[%s1 + $0x648] sm:$0xff]
  %v224 = vld [vmem:[%s1 + $0x650] sm:$0xff]
  %v225 = vld [vmem:[%s1 + $0x658] sm:$0xff]
  %v226 = vld [vmem:[%s1 + $0x660] sm:$0xff]
  %v227 = vld [vmem:[%s1 + $0x668] sm:$0xff]
  %v228 = vld [vmem:[%s1 + $0x670] sm:$0xff]
  %v229 = vld [vmem:[%s1 + $0x678] sm:$0xff]
  %v230 = vld [vmem:[%s1 + $0x680] sm:$0xff]
  %v231 = vld [vmem:[%s1 + $0x688] sm:$0xff]
  %v232 = vld [vmem:[%s1 + $0x690] sm:$0xff]
  %v233 = vld [vmem:[%s1 + $0x698] sm:$0xff]
  %v234 = vld [vmem:[%s1 + $0x6a0] sm:$0xff]
  %v235 = vld [vmem:[%s1 + $0x6a8] sm:$0xff]
  %v236 = vld [vmem:[%s1 + $0x6b0] sm:$0xff]
  %v237 = vld [vmem:[%s1 + $0x6b8] sm:$0xff]
  %v238 = vld [vmem:[%s1 + $0x6c0] sm:$0xff]
  %v239 = vld [vmem:[%s1 + $0x6c8] sm:$0xff]
  %v240 = vld [vmem:[%s1 + $0x6d0] sm:$0xff]
  %v241 = vld [vmem:[%s1 + $0x6d8] sm:$0xff]
  %v242 = vld [vmem:[%s1 + $0x6e0] sm:$0xff]
  %v243 = vld [vmem:[%s1 + $0x6e8] sm:$0xff]
  %v244 = vld [vmem:[%s1 + $0x6f0] sm:$0xff]
  %v245 = vld [vmem:[%s1 + $0x6f8] sm:$0xff]
  %v246 = vld [vmem:[%s1 + $0x700] sm:$0xff]
  %v247 = vld [vmem:[%s1 + $0x708] sm:$0xff]
  %v248 = vld [vmem:[%s1 + $0x710] sm:$0xff]
  %v249 = vld [vmem:[%s1 + $0x718] sm:$0xff]
  %v250 = vld [vmem:[%s1 + $0x720] sm:$0xff]
  %v251 = vld [vmem:[%s1 + $0x728] sm:$0xff]
  %v252 = vld [vmem:[%s1 + $0x730] sm:$0xff]
  %v253 = vld [vmem:[%s1 + $0x738] sm:$0xff]
  %v254 = vld [vmem:[%s1 + $0x740] sm:$0xff]
  %v255 = vld [vmem:[%s1 + $0x748] sm:$0xff]
  %v256 = vld [vmem:[%s1 + $0x750] sm:$0xff]
  %v257 = vld [vmem:[%s1 + $0x758] sm:$0xff]
  %v258 = vld [vmem:[%s1 + $0x760] sm:$0xff]
  %v259 = vld [vmem:[%s1 + $0x768] sm:$0xff]
  %v260 = vld [vmem:[%s1 + $0x770] sm:$0xff]
  %v261 = vld [vmem:[%s1 + $0x778] sm:$0xff]
  %v262 = vld [vmem:[%s1 + $0x780] sm:$0xff]
  %v263 = vld [vmem:[%s1 + $0x788] sm:$0xff]
  %v264 = vld [vmem:[%s1 + $0x790] sm:$0xff]
  %v265 = vld [vmem:[%s1 + $0x798] sm:$0xff]
  %v266 = vld [vmem:[%s1 + $0x7a0] sm:$0xff]
  %v267 = vld [vmem:[%s1 + $0x7a8] sm:$0xff]
  %v268 = vld [vmem:[%s1 + $0x7b0] sm:$0xff]
  %v269 = vld [vmem:[%s1 + $0x7b8] sm:$0xff]
  %v270 = vld [vmem:[%s1 + $0x7c0] sm:$0xff]
  %v271 = vld [vmem:[%s1 + $0x7c8] sm:$0xff]
  %v272 = vld [vmem:[%s1 + $0x7d0] sm:$0xff]
  %v273 = vld [vmem:[%s1 + $0x7d8] sm:$0xff]
  %v274 = vld [vmem:[%s1 + $0x7e0] sm:$0xff]
  %v275 = vld [vmem:[%s1 + $0x7e8] sm:$0xff]
  %v276 = vld [vmem:[%s1 + $0x7f0] sm:$0xff]
  %v277 = vld [vmem:[%s1 + $0x7f8] sm:$0xff]
  %v278 = vld [vmem:[%s1 + $0x800] sm:$0xff]
  %v279 = vld [vmem:[%s1 + $0x808] sm:$0xff]
  %v280 = vld [vmem:[%s1 + $0x810] sm:$0xff]
  %v281 = vld [vmem:[%s1 + $0x818] sm:$0xff]
  %v282 = vld [vmem:[%s1 + $0x820] sm:$0xff]
  %v283 = vld [vmem:[%s1 + $0x828] sm:$0xff]
  %v284 = vld [vmem:[%s1 + $0x830] sm:$0xff]
  %v285 = vld [vmem:[%s1 + $0x838] sm:$0xff]
  %v286 = vld [vmem:[%s1 + $0x840] sm:$0xff]
  %v287 = vld [vmem:[%s1 + $0x848] sm:$0xff]
  %v288 = vld [vmem:[%s1 + $0x850] sm:$0xff]
  %v289 = vld [vmem:[%s1 + $0x858] sm:$0xff]
  %v290 = vld [vmem:[%s1 + $0x860] sm:$0xff]
  %v291 = vld [vmem:[%s1 + $0x868] sm:$0xff]
  %v292 = vld [vmem:[%s1 + $0x870] sm:$0xff]
  %v293 = vld [vmem:[%s1 + $0x878] sm:$0xff]
  %v294 = vld [vmem:[%s1 + $0x880] sm:$0xff]
  %v295 = vld [vmem:[%s1 + $0x888] sm:$0xff]
  %v296 = vld [vmem:[%s1 + $0x890] sm:$0xff]
  %v297 = vld [vmem:[%s1 + $0x898] sm:$0xff]
  %v298 = vld [vmem:[%s1 + $0x8a0] sm:$0xff]
  %v299 = vld [vmem:[%s1 + $0x8a8] sm:$0xff]
  %v300 = vld [vmem:[%s1 + $0x8b0] sm:$0xff]
  %v301 = vld [vmem:[%s1 + $0x8b8] sm:$0xff]
  %v302 = vld [vmem:[%s1 + $0x8c0] sm:$0xff]
  %v303 = vld [vmem:[%s1 + $0x8c8] sm:$0xff]
  %v304 = vld [vmem:[%s1 + $0x8d0] sm:$0xff]
  %v305 = vld [vmem:[%s1 + $0x8d8] sm:$0xff]
  %v306 = vld [vmem:[%s1 + $0x8e0] sm:$0xff]
  %v307 = vld [vmem:[%s1 + $0x8e8] sm:$0xff]
  %v308 = vld [vmem:[%s1 + $0x8f0] sm:$0xff]
  %v309 = vld [vmem:[%s1 + $0x8f8] sm:$0xff]
  %v310 = vld [vmem:[%s1 + $0x900] sm:$0xff]
  %v311 = vld [vmem:[%s1 + $0x908] sm:$0xff]
  %v312 = vld [vmem:[%s1 + $0x910] sm:$0xff]
  %v313 = vld [vmem:[%s1 + $0x918] sm:$0xff]
  %v314 = vld [vmem:[%s1 + $0x920] sm:$0xff]
  %v315 = vld [vmem:[%s1 + $0x928] sm:$0xff]
  %v316 = vld [vmem:[%s1 + $0x930] sm:$0xff]
  %v317 = vld [vmem:[%s1 + $0x938] sm:$0xff]
  %v318 = vld [vmem:[%s1 + $0x940] sm:$0xff]
  %v319 = vld [vmem:[%s1 + $0x948] sm:$0xff]
  %v320 = vld [vmem:[%s1 + $0x950] sm:$0xff]
  %v321 = vld [vmem:[%s1 + $0x958] sm:$0xff]
  %v322 = vld [vmem:[%s1 + $0x960] sm:$0xff]
  %v323 = vld [vmem:[%s1 + $0x968] sm:$0xff]
  %v324 = vld [vmem:[%s1 + $0x970] sm:$0xff]
  %v325 = vld [vmem:[%s1 + $0x978] sm:$0xff]
  %v326 = vld [vmem:[%s1 + $0x980] sm:$0xff]
  %v327 = vld [vmem:[%s1 + $0x988] sm:$0xff]
  %v328 = vld [vmem:[%s1 + $0x990] sm:$0xff]
  %v329 = vld [vmem:[%s1 + $0x998] sm:$0xff]
  %v330 = vld [vmem:[%s1 + $0x9a0] sm:$0xff]
  %v331 = vld [vmem:[%s1 + $0x9a8] sm:$0xff]
  %v332 = vld [vmem:[%s1 + $0x9b0] sm:$0xff]
  %v333 = vld [vmem:[%s1 + $0x9b8] sm:$0xff]
  %v334 = vld [vmem:[%s1 + $0x9c0] sm:$0xff]
  %v335 = vld [vmem:[%s1 + $0x9c8] sm:$0xff]
  %v336 = vld [vmem:[%s1 + $0x9d0] sm:$0xff]
  %v337 = vld [vmem:[%s1 + $0x9d8] sm:$0xff]
  %v338 = vld [vmem:[%s1 + $0x9e0] sm:$0xff]
  %v339 = vld [vmem:[%s1 + $0x9e8] sm:$0xff]
  %v340 = vld [vmem:[%s1 + $0x9f0] sm:$0xff]
  %v341 = vld [vmem:[%s1 + $0x9f8] sm:$0xff]
  %v342 = vld [vmem:[%s1 + $0xa00] sm:$0xff]
  %v343 = vld [vmem:[%s1 + $0xa08] sm:$0xff]
  %v344 = vld [vmem:[%s1 + $0xa10] sm:$0xff]
  %v345 = vld [vmem:[%s1 + $0xa18] sm:$0xff]
  %v346 = vld [vmem:[%s1 + $0xa20] sm:$0xff]
  %v347 = vld [vmem:[%s1 + $0xa28] sm:$0xff]
  %v348 = vld [vmem:[%s1 + $0xa30] sm:$0xff]
  %v349 = vld [vmem:[%s1 + $0xa38] sm:$0xff]
  %v350 = vld [vmem:[%s1 + $0xa40] sm:$0xff]
  %v351 = vld [vmem:[%s1 + $0xa48] sm:$0xff]
  %v352 = vld [vmem:[%s1 + $0xa50] sm:$0xff]
  %v353 = vld [vmem:[%s1 + $0xa58] sm:$0xff]
  %v354 = vld [vmem:[%s1 + $0xa60] sm:$0xff]
  %v355 = vld [vmem:[%s1 + $0xa68] sm:$0xff]
  %v356 = vld [vmem:[%s1 + $0xa70] sm:$0xff]
  %v357 = vld [vmem:[%s1 + $0xa78] sm:$0xff]
  %v358 = vld [vmem:[%s1 + $0xa80] sm:$0xff]
  %v359 = vld [vmem:[%s1 + $0xa88] sm:$0xff]
  %v360 = vld [vmem:[%s1 + $0xa90] sm:$0xff]
  %v361 = vld [vmem:[%s1 + $0xa98] sm:$0xff]
  %v362 = vld [vmem:[%s1 + $0xaa0] sm:$0xff]
  %v363 = vld [vmem:[%s1 + $0xaa8] sm:$0xff]
  %v364 = vld [vmem:[%s1 + $0xab0] sm:$0xff]
  %v365 = vld [vmem:[%s1 + $0xab8] sm:$0xff]
  %v366 = vld [vmem:[%s1 + $0xac0] sm:$0xff]
  %v367 = vld [vmem:[%s1 + $0xac8] sm:$0xff]
  %v368 = vld [vmem:[%s1 + $0xad0] sm:$0xff]
  %v369 = vld [vmem:[%s1 + $0xad8] sm:$0xff]
  %v370 = vld [vmem:[%s1 + $0xae0] sm:$0xff]
  %v371 = vld [vmem:[%s1 + $0xae8] sm:$0xff]
  %v372 = vld [vmem:[%s1 + $0xaf0] sm:$0xff]
  %v373 = vld [vmem:[%s1 + $0xaf8] sm:$0xff]
  %v374 = vld [vmem:[%s1 + $0xb00] sm:$0xff]
  %v375 = vld [vmem:[%s1 + $0xb08] sm:$0xff]
  %v376 = vld [vmem:[%s1 + $0xb10] sm:$0xff]
  %v377 = vld [vmem:[%s1 + $0xb18] sm:$0xff]
  %v378 = vld [vmem:[%s1 + $0xb20] sm:$0xff]
  %v379 = vld [vmem:[%s1 + $0xb28] sm:$0xff]
  %v380 = vld [vmem:[%s1 + $0xb30] sm:$0xff]
  %v381 = vld [vmem:[%s1 + $0xb38] sm:$0xff]
  %v382 = vld [vmem:[%s1 + $0xb40] sm:$0xff]
  %v383 = vld [vmem:[%s1 + $0xb48] sm:$0xff]
  %v384 = vld [vmem:[%s1 + $0xb50] sm:$0xff]
  %v385 = vld [vmem:[%s1 + $0xb58] sm:$0xff]
  %v386 = vld [vmem:[%s1 + $0xb60] sm:$0xff]
  %v387 = vld [vmem:[%s1 + $0xb68] sm:$0xff]
  %v388 = vld [vmem:[%s1 + $0xb70] sm:$0xff]
  %v389 = vld [vmem:[%s1 + $0xb78] sm:$0xff]
  %v390 = vld [vmem:[%s1 + $0xb80] sm:$0xff]
  %v391 = vld [vmem:[%s1 + $0xb88] sm:$0xff]
  %v392 = vld [vmem:[%s1 + $0xb90] sm:$0xff]
  %v393 = vld [vmem:[%s1 + $0xb98] sm:$0xff]
  %v394 = vld [vmem:[%s1 + $0xba0] sm:$0xff]
  %v395 = vld [vmem:[%s1 + $0xba8] sm:$0xff]
  %v396 = vld [vmem:[%s1 + $0xbb0] sm:$0xff]
  %v397 = vld [vmem:[%s1 + $0xbb8] sm:$0xff]
  %v398 = vld [vmem:[%s1 + $0xbc0] sm:$0xff]
  %v399 = vld [vmem:[%s1 + $0xbc8] sm:$0xff]
  %v400 = vld [vmem:[%s1 + $0xbd0] sm:$0xff]
  %v401 = vld [vmem:[%s1 + $0xbd8] sm:$0xff]
  %v402 = vld [vmem:[%s1 + $0xbe0] sm:$0xff]
  %v403 = vld [vmem:[%s1 + $0xbe8] sm:$0xff]
  %v404 = vld [vmem:[%s1 + $0xbf0] sm:$0xff]
  %v405 = vld [vmem:[%s1 + $0xbf8] sm:$0xff]
  %v406 = vld [vmem:[%s2] sm:$0x7]
  %v408 = vlaneseq
  %v409 = vshrl.u32 %v408, 7
  %v410 = vsub.s32 0, %v409
  %v411 = vrot.slane %v406, %v410
  %v412 = vlaneseq
  %v413 = vshrl.u32 %v412, 7
  %v414 = vsub.s32 1, %v413
  %v415 = vrot.slane %v406, %v414
  %v416 = vlaneseq
  %v417 = vshrl.u32 %v416, 7
  %v418 = vsub.s32 2, %v417
  %v419 = vrot.slane %v406, %v418
  %v425 = vcombine.high %v20, %v20
  %v427 = vunpack.c.l.s4 1983009808
  %v428 = vunpack.c.0.s8 %v427
  %v429 = vlaneseq
  %v430 = vshrl.u32 %v429, 7
  %v431 = vsub.s32 %v428, %v430
  %v432 = vrot.slane %v20, %v431
  %v434 = vunpack.c.l.s4 1983009808
  %v435 = vunpack.c.0.s8 %v434
  %v436 = vlaneseq
  %v437 = vshrl.u32 %v436, 7
  %v438 = vsub.s32 %v435, %v437
  %v439 = vrot.slane %v425, %v438
  %v440 = vcombine.high %v432, %v432
  %v441 = vcombine.high %v439, %v439
  %v442 = vcombine.high %v21, %v21
  %v444 = vunpack.c.l.s4 1983009808
  %v445 = vunpack.c.0.s8 %v444
  %v446 = vlaneseq
  %v447 = vshrl.u32 %v446, 7
  %v448 = vsub.s32 %v445, %v447
  %v449 = vrot.slane %v21, %v448
  %v451 = vunpack.c.l.s4 1983009808
  %v452 = vunpack.c.0.s8 %v451
  %v453 = vlaneseq
  %v454 = vshrl.u32 %v453, 7
  %v455 = vsub.s32 %v452, %v454
  %v456 = vrot.slane %v442, %v455
  %v457 = vcombine.high %v449, %v449
  %v458 = vcombine.high %v456, %v456
  %467 = vmatprep.subr.mxu0 %v23
  %468 = vmatpush1.msra.mxu0 %v22
  %469 = vmatprep.subr.mxu0 %v26
  %470 = vmatpush1.msra.mxu0 %v25
  %471 = vmatprep.subr.mxu0 %v29
  %472 = vmatpush1.msra.mxu0 %v28
  %473 = vmatprep.subr.mxu0 %v32
  %474 = vmatpush1.msra.mxu0 %v31
  %475 = vmatprep.subr.mxu0 %v35
  %476 = vmatpush1.msra.mxu0 %v34
  %477 = vmatprep.subr.mxu0 %v38
  %478 = vmatpush1.msra.mxu0 %v37
  %479 = vmatprep.subr.mxu0 %v41
  %480 = vmatpush1.msra.mxu0 %v40
  %481 = vmatprep.subr.mxu0 %v44
  %482 = vmatpush1.msra.mxu0 %v43
  %483 = vmatprep.subr.mxu0 %v47
  %484 = vmatpush1.msra.mxu0 %v46
  %485 = vmatprep.subr.mxu0 %v50
  %486 = vmatpush1.msra.mxu0 %v49
  %487 = vmatprep.subr.mxu0 %v53
  %488 = vmatpush1.msra.mxu0 %v52
  %489 = vmatprep.subr.mxu0 %v56
  %490 = vmatpush1.msra.mxu0 %v55
  %491 = vmatprep.subr.mxu0 %v59
  %492 = vmatpush1.msra.mxu0 %v58
  %493 = vmatprep.subr.mxu0 %v62
  %494 = vmatpush1.msra.mxu0 %v61
  %495 = vmatprep.subr.mxu0 %v65
  %496 = vmatpush1.msra.mxu0 %v64
  %497 = vmatprep.subr.mxu0 %v68
  %498 = vmatpush1.msra.mxu0 %v67
  %499 = vmatprep.subr.mxu0 %v71
  %500 = vmatpush1.msra.mxu0 %v70
  %501 = vmatprep.subr.mxu0 %v74
  %502 = vmatpush1.msra.mxu0 %v73
  %503 = vmatprep.subr.mxu0 %v77
  %504 = vmatpush1.msra.mxu0 %v76
  %505 = vmatprep.subr.mxu0 %v80
  %506 = vmatpush1.msra.mxu0 %v79
  %507 = vmatprep.subr.mxu0 %v83
  %508 = vmatpush1.msra.mxu0 %v82
  %509 = vmatprep.subr.mxu0 %v86
  %510 = vmatpush1.msra.mxu0 %v85
  %511 = vmatprep.subr.mxu0 %v89
  %512 = vmatpush1.msra.mxu0 %v88
  %513 = vmatprep.subr.mxu0 %v92
  %514 = vmatpush1.msra.mxu0 %v91
  %515 = vmatprep.subr.mxu0 %v95
  %516 = vmatpush1.msra.mxu0 %v94
  %517 = vmatprep.subr.mxu0 %v98
  %518 = vmatpush1.msra.mxu0 %v97
  %519 = vmatprep.subr.mxu0 %v101
  %520 = vmatpush1.msra.mxu0 %v100
  %521 = vmatprep.subr.mxu0 %v104
  %522 = vmatpush1.msra.mxu0 %v103
  %523 = vmatprep.subr.mxu0 %v107
  %524 = vmatpush1.msra.mxu0 %v106
  %525 = vmatprep.subr.mxu0 %v110
  %526 = vmatpush1.msra.mxu0 %v109
  %527 = vmatprep.subr.mxu0 %v113
  %528 = vmatpush1.msra.mxu0 %v112
  %529 = vmatprep.subr.mxu0 %v116
  %530 = vmatpush1.msra.mxu0 %v115
  %531 = vmatprep.mubr.f32.mxu0 %v440
  %532 = vmatmul.mubr.f32.gmra.mrb[0].mxu0 %v432
  %v533 = vpop.f32.mrb[0].mxu0
  %v534 = vadd.f32 %v411, %v533
  %v535 = vpop.f32.mrb[0].mxu0
  %v536 = vadd.f32 %v415, %v535
  %537 = vdwg.mxu0
  %538 = vmatprep.subr.mxu0 %v119
  %539 = vmatpush1.msra.mxu0 %v118
  %540 = vmatprep.subr.mxu0 %v122
  %541 = vmatpush1.msra.mxu0 %v121
  %542 = vmatprep.subr.mxu0 %v125
  %543 = vmatpush1.msra.mxu0 %v124
  %544 = vmatprep.subr.mxu0 %v128
  %545 = vmatpush1.msra.mxu0 %v127
  %546 = vmatprep.subr.mxu0 %v131
  %547 = vmatpush1.msra.mxu0 %v130
  %548 = vmatprep.subr.mxu0 %v134
  %549 = vmatpush1.msra.mxu0 %v133
  %550 = vmatprep.subr.mxu0 %v137
  %551 = vmatpush1.msra.mxu0 %v136
  %552 = vmatprep.subr.mxu0 %v140
  %553 = vmatpush1.msra.mxu0 %v139
  %554 = vmatprep.subr.mxu0 %v143
  %555 = vmatpush1.msra.mxu0 %v142
  %556 = vmatprep.subr.mxu0 %v146
  %557 = vmatpush1.msra.mxu0 %v145
  %558 = vmatprep.subr.mxu0 %v149
  %559 = vmatpush1.msra.mxu0 %v148
  %560 = vmatprep.subr.mxu0 %v152
  %561 = vmatpush1.msra.mxu0 %v151
  %562 = vmatprep.subr.mxu0 %v155
  %563 = vmatpush1.msra.mxu0 %v154
  %564 = vmatprep.subr.mxu0 %v158
  %565 = vmatpush1.msra.mxu0 %v157
  %566 = vmatprep.subr.mxu0 %v161
  %567 = vmatpush1.msra.mxu0 %v160
  %568 = vmatprep.subr.mxu0 %v164
  %569 = vmatpush1.msra.mxu0 %v163
  %570 = vmatprep.subr.mxu0 %v167
  %571 = vmatpush1.msra.mxu0 %v166
  %572 = vmatprep.subr.mxu0 %v170
  %573 = vmatpush1.msra.mxu0 %v169
  %574 = vmatprep.subr.mxu0 %v173
  %575 = vmatpush1.msra.mxu0 %v172
  %576 = vmatprep.subr.mxu0 %v176
  %577 = vmatpush1.msra.mxu0 %v175
  %578 = vmatprep.subr.mxu0 %v179
  %579 = vmatpush1.msra.mxu0 %v178
  %580 = vmatprep.subr.mxu0 %v182
  %581 = vmatpush1.msra.mxu0 %v181
  %582 = vmatprep.subr.mxu0 %v185
  %583 = vmatpush1.msra.mxu0 %v184
  %584 = vmatprep.subr.mxu0 %v188
  %585 = vmatpush1.msra.mxu0 %v187
  %586 = vmatprep.subr.mxu0 %v191
  %587 = vmatpush1.msra.mxu0 %v190
  %588 = vmatprep.subr.mxu0 %v194
  %589 = vmatpush1.msra.mxu0 %v193
  %590 = vmatprep.subr.mxu0 %v197
  %591 = vmatpush1.msra.mxu0 %v196
  %592 = vmatprep.subr.mxu0 %v200
  %593 = vmatpush1.msra.mxu0 %v199
  %594 = vmatprep.subr.mxu0 %v203
  %595 = vmatpush1.msra.mxu0 %v202
  %596 = vmatprep.subr.mxu0 %v206
  %597 = vmatpush1.msra.mxu0 %v205
  %598 = vmatprep.subr.mxu0 %v209
  %599 = vmatpush1.msra.mxu0 %v208
  %600 = vmatprep.subr.mxu0 %v212
  %601 = vmatpush1.msra.mxu0 %v211
  %602 = vmatprep.mubr.f32.mxu0 %v441
  %603 = vmatmul.mubr.f32.gmra.mrb[0].mxu0 %v439
  %v604 = vpop.f32.mrb[0].mxu0
  %v605 = vadd.f32 %v534, %v604
  %v606 = vpop.f32.mrb[0].mxu0
  %v607 = vadd.f32 %v536, %v606
  %608 = vdwg.mxu0
  %609 = vmatprep.subr.mxu0 %v215
  %610 = vmatpush1.msra.mxu0 %v214
  %611 = vmatprep.subr.mxu0 %v218
  %612 = vmatpush1.msra.mxu0 %v217
  %613 = vmatprep.subr.mxu0 %v221
  %614 = vmatpush1.msra.mxu0 %v220
  %615 = vmatprep.subr.mxu0 %v224
  %616 = vmatpush1.msra.mxu0 %v223
  %617 = vmatprep.subr.mxu0 %v227
  %618 = vmatpush1.msra.mxu0 %v226
  %619 = vmatprep.subr.mxu0 %v230
  %620 = vmatpush1.msra.mxu0 %v229
  %621 = vmatprep.subr.mxu0 %v233
  %622 = vmatpush1.msra.mxu0 %v232
  %623 = vmatprep.subr.mxu0 %v236
  %624 = vmatpush1.msra.mxu0 %v235
  %625 = vmatprep.subr.mxu0 %v239
  %626 = vmatpush1.msra.mxu0 %v238
  %627 = vmatprep.subr.mxu0 %v242
  %628 = vmatpush1.msra.mxu0 %v241
  %629 = vmatprep.subr.mxu0 %v245
  %630 = vmatpush1.msra.mxu0 %v244
  %631 = vmatprep.subr.mxu0 %v248
  %632 = vmatpush1.msra.mxu0 %v247
  %633 = vmatprep.subr.mxu0 %v251
  %634 = vmatpush1.msra.mxu0 %v250
  %635 = vmatprep.subr.mxu0 %v254
  %636 = vmatpush1.msra.mxu0 %v253
  %637 = vmatprep.subr.mxu0 %v257
  %638 = vmatpush1.msra.mxu0 %v256
  %639 = vmatprep.subr.mxu0 %v260
  %640 = vmatpush1.msra.mxu0 %v259
  %641 = vmatprep.subr.mxu0 %v263
  %642 = vmatpush1.msra.mxu0 %v262
  %643 = vmatprep.subr.mxu0 %v266
  %644 = vmatpush1.msra.mxu0 %v265
  %645 = vmatprep.subr.mxu0 %v269
  %646 = vmatpush1.msra.mxu0 %v268
  %647 = vmatprep.subr.mxu0 %v272
  %648 = vmatpush1.msra.mxu0 %v271
  %649 = vmatprep.subr.mxu0 %v275
  %650 = vmatpush1.msra.mxu0 %v274
  %651 = vmatprep.subr.mxu0 %v278
  %652 = vmatpush1.msra.mxu0 %v277
  %653 = vmatprep.subr.mxu0 %v281
  %654 = vmatpush1.msra.mxu0 %v280
  %655 = vmatprep.subr.mxu0 %v284
  %656 = vmatpush1.msra.mxu0 %v283
  %657 = vmatprep.subr.mxu0 %v287
  %658 = vmatpush1.msra.mxu0 %v286
  %659 = vmatprep.subr.mxu0 %v290
  %660 = vmatpush1.msra.mxu0 %v289
  %661 = vmatprep.subr.mxu0 %v293
  %662 = vmatpush1.msra.mxu0 %v292
  %663 = vmatprep.subr.mxu0 %v296
  %664 = vmatpush1.msra.mxu0 %v295
  %665 = vmatprep.subr.mxu0 %v299
  %666 = vmatpush1.msra.mxu0 %v298
  %667 = vmatprep.subr.mxu0 %v302
  %668 = vmatpush1.msra.mxu0 %v301
  %669 = vmatprep.subr.mxu0 %v305
  %670 = vmatpush1.msra.mxu0 %v304
  %671 = vmatprep.subr.mxu0 %v308
  %672 = vmatpush1.msra.mxu0 %v307
  %673 = vmatprep.mubr.f32.mxu0 %v457
  %674 = vmatmul.mubr.f32.gmra.mrb[0].mxu0 %v449
  %v675 = vpop.f32.mrb[0].mxu0
  %v676 = vadd.f32 %v605, %v675
  %v677 = vpop.f32.mrb[0].mxu0
  %v678 = vadd.f32 %v607, %v677
  %679 = vdwg.mxu0
  %680 = vmatprep.subr.mxu0 %v311
  %681 = vmatpush1.msra.mxu0 %v310
  %682 = vmatprep.subr.mxu0 %v314
  %683 = vmatpush1.msra.mxu0 %v313
  %684 = vmatprep.subr.mxu0 %v317
  %685 = vmatpush1.msra.mxu0 %v316
  %686 = vmatprep.subr.mxu0 %v320
  %687 = vmatpush1.msra.mxu0 %v319
  %688 = vmatprep.subr.mxu0 %v323
  %689 = vmatpush1.msra.mxu0 %v322
  %690 = vmatprep.subr.mxu0 %v326
  %691 = vmatpush1.msra.mxu0 %v325
  %692 = vmatprep.subr.mxu0 %v329
  %693 = vmatpush1.msra.mxu0 %v328
  %694 = vmatprep.subr.mxu0 %v332
  %695 = vmatpush1.msra.mxu0 %v331
  %696 = vmatprep.subr.mxu0 %v335
  %697 = vmatpush1.msra.mxu0 %v334
  %698 = vmatprep.subr.mxu0 %v338
  %699 = vmatpush1.msra.mxu0 %v337
  %700 = vmatprep.subr.mxu0 %v341
  %701 = vmatpush1.msra.mxu0 %v340
  %702 = vmatprep.subr.mxu0 %v344
  %703 = vmatpush1.msra.mxu0 %v343
  %704 = vmatprep.subr.mxu0 %v347
  %705 = vmatpush1.msra.mxu0 %v346
  %706 = vmatprep.subr.mxu0 %v350
  %707 = vmatpush1.msra.mxu0 %v349
  %708 = vmatprep.subr.mxu0 %v353
  %709 = vmatpush1.msra.mxu0 %v352
  %710 = vmatprep.subr.mxu0 %v356
  %711 = vmatpush1.msra.mxu0 %v355
  %712 = vmatprep.subr.mxu0 %v359
  %713 = vmatpush1.msra.mxu0 %v358
  %714 = vmatprep.subr.mxu0 %v362
  %715 = vmatpush1.msra.mxu0 %v361
  %716 = vmatprep.subr.mxu0 %v365
  %717 = vmatpush1.msra.mxu0 %v364
  %718 = vmatprep.subr.mxu0 %v368
  %719 = vmatpush1.msra.mxu0 %v367
  %720 = vmatprep.subr.mxu0 %v371
  %721 = vmatpush1.msra.mxu0 %v370
  %722 = vmatprep.subr.mxu0 %v374
  %723 = vmatpush1.msra.mxu0 %v373
  %724 = vmatprep.subr.mxu0 %v377
  %725 = vmatpush1.msra.mxu0 %v376
  %726 = vmatprep.subr.mxu0 %v380
  %727 = vmatpush1.msra.mxu0 %v379
  %728 = vmatprep.subr.mxu0 %v383
  %729 = vmatpush1.msra.mxu0 %v382
  %730 = vmatprep.subr.mxu0 %v386
  %731 = vmatpush1.msra.mxu0 %v385
  %732 = vmatprep.subr.mxu0 %v389
  %733 = vmatpush1.msra.mxu0 %v388
  %734 = vmatprep.subr.mxu0 %v392
  %735 = vmatpush1.msra.mxu0 %v391
  %736 = vmatprep.subr.mxu0 %v395
  %737 = vmatpush1.msra.mxu0 %v394
  %738 = vmatprep.subr.mxu0 %v398
  %739 = vmatpush1.msra.mxu0 %v397
  %740 = vmatprep.subr.mxu0 %v401
  %741 = vmatpush1.msra.mxu0 %v400
  %742 = vmatprep.subr.mxu0 %v404
  %743 = vmatpush1.msra.mxu0 %v403
  %744 = vmatprep.mubr.f32.mxu0 %v458
  %745 = vmatmul.mubr.f32.gmra.mrb[0].mxu0 %v456
  %v746 = vpop.f32.mrb[0].mxu0
  %v747 = vadd.f32 %v676, %v746
  %v748 = vpop.f32.mrb[0].mxu0
  %v749 = vadd.f32 %v678, %v748
  %750 = vdwg.mxu0
  %751 = vmatprep.subr.mxu0 0.0
  %752 = vmatpush1.msra.mxu0 %v24
  %753 = vmatprep.subr.mxu0 0.0
  %754 = vmatpush1.msra.mxu0 %v27
  %755 = vmatprep.subr.mxu0 0.0
  %756 = vmatpush1.msra.mxu0 %v30
  %757 = vmatprep.subr.mxu0 0.0
  %758 = vmatpush1.msra.mxu0 %v33
  %759 = vmatprep.subr.mxu0 0.0
  %760 = vmatpush1.msra.mxu0 %v36
  %761 = vmatprep.subr.mxu0 0.0
  %762 = vmatpush1.msra.mxu0 %v39
  %763 = vmatprep.subr.mxu0 0.0
  %764 = vmatpush1.msra.mxu0 %v42
  %765 = vmatprep.subr.mxu0 0.0
  %766 = vmatpush1.msra.mxu0 %v45
  %767 = vmatprep.subr.mxu0 0.0
  %768 = vmatpush1.msra.mxu0 %v48
  %769 = vmatprep.subr.mxu0 0.0
  %770 = vmatpush1.msra.mxu0 %v51
  %771 = vmatprep.subr.mxu0 0.0
  %772 = vmatpush1.msra.mxu0 %v54
  %773 = vmatprep.subr.mxu0 0.0
  %774 = vmatpush1.msra.mxu0 %v57
  %775 = vmatprep.subr.mxu0 0.0
  %776 = vmatpush1.msra.mxu0 %v60
  %777 = vmatprep.subr.mxu0 0.0
  %778 = vmatpush1.msra.mxu0 %v63
  %779 = vmatprep.subr.mxu0 0.0
  %780 = vmatpush1.msra.mxu0 %v66
  %781 = vmatprep.subr.mxu0 0.0
  %782 = vmatpush1.msra.mxu0 %v69
  %783 = vmatprep.subr.mxu0 0.0
  %784 = vmatpush1.msra.mxu0 %v72
  %785 = vmatprep.subr.mxu0 0.0
  %786 = vmatpush1.msra.mxu0 %v75
  %787 = vmatprep.subr.mxu0 0.0
  %788 = vmatpush1.msra.mxu0 %v78
  %789 = vmatprep.subr.mxu0 0.0
  %790 = vmatpush1.msra.mxu0 %v81
  %791 = vmatprep.subr.mxu0 0.0
  %792 = vmatpush1.msra.mxu0 %v84
  %793 = vmatprep.subr.mxu0 0.0
  %794 = vmatpush1.msra.mxu0 %v87
  %795 = vmatprep.subr.mxu0 0.0
  %796 = vmatpush1.msra.mxu0 %v90
  %797 = vmatprep.subr.mxu0 0.0
  %798 = vmatpush1.msra.mxu0 %v93
  %799 = vmatprep.subr.mxu0 0.0
  %800 = vmatpush1.msra.mxu0 %v96
  %801 = vmatprep.subr.mxu0 0.0
  %802 = vmatpush1.msra.mxu0 %v99
  %803 = vmatprep.subr.mxu0 0.0
  %804 = vmatpush1.msra.mxu0 %v102
  %805 = vmatprep.subr.mxu0 0.0
  %806 = vmatpush1.msra.mxu0 %v105
  %807 = vmatprep.subr.mxu0 0.0
  %808 = vmatpush1.msra.mxu0 %v108
  %809 = vmatprep.subr.mxu0 0.0
  %810 = vmatpush1.msra.mxu0 %v111
  %811 = vmatprep.subr.mxu0 0.0
  %812 = vmatpush1.msra.mxu0 %v114
  %813 = vmatprep.subr.mxu0 0.0
  %814 = vmatpush1.msra.mxu0 %v117
  %815 = vmatprep.mubr.f32.mxu0 %v440
  %816 = vmatmul.mubr.f32.gmra.mrb[0].mxu0 %v432
  %v817 = vpop.f32.mrb[0].mxu0
  %v818 = vadd.f32 %v419, %v817
  %v819 = vpop.f32.mrb[0].mxu0
  %820 = vdwg.mxu0
  %821 = vmatprep.subr.mxu0 0.0
  %822 = vmatpush1.msra.mxu0 %v120
  %823 = vmatprep.subr.mxu0 0.0
  %824 = vmatpush1.msra.mxu0 %v123
  %825 = vmatprep.subr.mxu0 0.0
  %826 = vmatpush1.msra.mxu0 %v126
  %827 = vmatprep.subr.mxu0 0.0
  %828 = vmatpush1.msra.mxu0 %v129
  %829 = vmatprep.subr.mxu0 0.0
  %830 = vmatpush1.msra.mxu0 %v132
  %831 = vmatprep.subr.mxu0 0.0
  %832 = vmatpush1.msra.mxu0 %v135
  %833 = vmatprep.subr.mxu0 0.0
  %834 = vmatpush1.msra.mxu0 %v138
  %835 = vmatprep.subr.mxu0 0.0
  %836 = vmatpush1.msra.mxu0 %v141
  %837 = vmatprep.subr.mxu0 0.0
  %838 = vmatpush1.msra.mxu0 %v144
  %839 = vmatprep.subr.mxu0 0.0
  %840 = vmatpush1.msra.mxu0 %v147
  %841 = vmatprep.subr.mxu0 0.0
  %842 = vmatpush1.msra.mxu0 %v150
  %843 = vmatprep.subr.mxu0 0.0
  %844 = vmatpush1.msra.mxu0 %v153
  %845 = vmatprep.subr.mxu0 0.0
  %846 = vmatpush1.msra.mxu0 %v156
  %847 = vmatprep.subr.mxu0 0.0
  %848 = vmatpush1.msra.mxu0 %v159
  %849 = vmatprep.subr.mxu0 0.0
  %850 = vmatpush1.msra.mxu0 %v162
  %851 = vmatprep.subr.mxu0 0.0
  %852 = vmatpush1.msra.mxu0 %v165
  %853 = vmatprep.subr.mxu0 0.0
  %854 = vmatpush1.msra.mxu0 %v168
  %855 = vmatprep.subr.mxu0 0.0
  %856 = vmatpush1.msra.mxu0 %v171
  %857 = vmatprep.subr.mxu0 0.0
  %858 = vmatpush1.msra.mxu0 %v174
  %859 = vmatprep.subr.mxu0 0.0
  %860 = vmatpush1.msra.mxu0 %v177
  %861 = vmatprep.subr.mxu0 0.0
  %862 = vmatpush1.msra.mxu0 %v180
  %863 = vmatprep.subr.mxu0 0.0
  %864 = vmatpush1.msra.mxu0 %v183
  %865 = vmatprep.subr.mxu0 0.0
  %866 = vmatpush1.msra.mxu0 %v186
  %867 = vmatprep.subr.mxu0 0.0
  %868 = vmatpush1.msra.mxu0 %v189
  %869 = vmatprep.subr.mxu0 0.0
  %870 = vmatpush1.msra.mxu0 %v192
  %871 = vmatprep.subr.mxu0 0.0
  %872 = vmatpush1.msra.mxu0 %v195
  %873 = vmatprep.subr.mxu0 0.0
  %874 = vmatpush1.msra.mxu0 %v198
  %875 = vmatprep.subr.mxu0 0.0
  %876 = vmatpush1.msra.mxu0 %v201
  %877 = vmatprep.subr.mxu0 0.0
  %878 = vmatpush1.msra.mxu0 %v204
  %879 = vmatprep.subr.mxu0 0.0
  %880 = vmatpush1.msra.mxu0 %v207
  %881 = vmatprep.subr.mxu0 0.0
  %882 = vmatpush1.msra.mxu0 %v210
  %883 = vmatprep.subr.mxu0 0.0
  %884 = vmatpush1.msra.mxu0 %v213
  %885 = vmatprep.mubr.f32.mxu0 %v441
  %886 = vmatmul.mubr.f32.gmra.mrb[0].mxu0 %v439
  %v887 = vpop.f32.mrb[0].mxu0
  %v888 = vadd.f32 %v818, %v887
  %v889 = vpop.f32.mrb[0].mxu0
  %890 = vdwg.mxu0
  %891 = vmatprep.subr.mxu0 0.0
  %892 = vmatpush1.msra.mxu0 %v216
  %893 = vmatprep.subr.mxu0 0.0
  %894 = vmatpush1.msra.mxu0 %v219
  %895 = vmatprep.subr.mxu0 0.0
  %896 = vmatpush1.msra.mxu0 %v222
  %897 = vmatprep.subr.mxu0 0.0
  %898 = vmatpush1.msra.mxu0 %v225
  %899 = vmatprep.subr.mxu0 0.0
  %900 = vmatpush1.msra.mxu0 %v228
  %901 = vmatprep.subr.mxu0 0.0
  %902 = vmatpush1.msra.mxu0 %v231
  %903 = vmatprep.subr.mxu0 0.0
  %904 = vmatpush1.msra.mxu0 %v234
  %905 = vmatprep.subr.mxu0 0.0
  %906 = vmatpush1.msra.mxu0 %v237
  %907 = vmatprep.subr.mxu0 0.0
  %908 = vmatpush1.msra.mxu0 %v240
  %909 = vmatprep.subr.mxu0 0.0
  %910 = vmatpush1.msra.mxu0 %v243
  %911 = vmatprep.subr.mxu0 0.0
  %912 = vmatpush1.msra.mxu0 %v246
  %913 = vmatprep.subr.mxu0 0.0
  %914 = vmatpush1.msra.mxu0 %v249
  %915 = vmatprep.subr.mxu0 0.0
  %916 = vmatpush1.msra.mxu0 %v252
  %917 = vmatprep.subr.mxu0 0.0
  %918 = vmatpush1.msra.mxu0 %v255
  %919 = vmatprep.subr.mxu0 0.0
  %920 = vmatpush1.msra.mxu0 %v258
  %921 = vmatprep.subr.mxu0 0.0
  %922 = vmatpush1.msra.mxu0 %v261
  %923 = vmatprep.subr.mxu0 0.0
  %924 = vmatpush1.msra.mxu0 %v264
  %925 = vmatprep.subr.mxu0 0.0
  %926 = vmatpush1.msra.mxu0 %v267
  %927 = vmatprep.subr.mxu0 0.0
  %928 = vmatpush1.msra.mxu0 %v270
  %929 = vmatprep.subr.mxu0 0.0
  %930 = vmatpush1.msra.mxu0 %v273
  %931 = vmatprep.subr.mxu0 0.0
  %932 = vmatpush1.msra.mxu0 %v276
  %933 = vmatprep.subr.mxu0 0.0
  %934 = vmatpush1.msra.mxu0 %v279
  %935 = vmatprep.subr.mxu0 0.0
  %936 = vmatpush1.msra.mxu0 %v282
  %937 = vmatprep.subr.mxu0 0.0
  %938 = vmatpush1.msra.mxu0 %v285
  %939 = vmatprep.subr.mxu0 0.0
  %940 = vmatpush1.msra.mxu0 %v288
  %941 = vmatprep.subr.mxu0 0.0
  %942 = vmatpush1.msra.mxu0 %v291
  %943 = vmatprep.subr.mxu0 0.0
  %944 = vmatpush1.msra.mxu0 %v294
  %945 = vmatprep.subr.mxu0 0.0
  %946 = vmatpush1.msra.mxu0 %v297
  %947 = vmatprep.subr.mxu0 0.0
  %948 = vmatpush1.msra.mxu0 %v300
  %949 = vmatprep.subr.mxu0 0.0
  %950 = vmatpush1.msra.mxu0 %v303
  %951 = vmatprep.subr.mxu0 0.0
  %952 = vmatpush1.msra.mxu0 %v306
  %953 = vmatprep.subr.mxu0 0.0
  %954 = vmatpush1.msra.mxu0 %v309
  %955 = vmatprep.mubr.f32.mxu0 %v457
  %956 = vmatmul.mubr.f32.gmra.mrb[0].mxu0 %v449
  %v957 = vpop.f32.mrb[0].mxu0
  %v958 = vadd.f32 %v888, %v957
  %v959 = vpop.f32.mrb[0].mxu0
  %960 = vdwg.mxu0
  %961 = vmatprep.subr.mxu0 0.0
  %962 = vmatpush1.msra.mxu0 %v312
  %963 = vmatprep.subr.mxu0 0.0
  %964 = vmatpush1.msra.mxu0 %v315
  %965 = vmatprep.subr.mxu0 0.0
  %966 = vmatpush1.msra.mxu0 %v318
  %967 = vmatprep.subr.mxu0 0.0
  %968 = vmatpush1.msra.mxu0 %v321
  %969 = vmatprep.subr.mxu0 0.0
  %970 = vmatpush1.msra.mxu0 %v324
  %971 = vmatprep.subr.mxu0 0.0
  %972 = vmatpush1.msra.mxu0 %v327
  %973 = vmatprep.subr.mxu0 0.0
  %974 = vmatpush1.msra.mxu0 %v330
  %975 = vmatprep.subr.mxu0 0.0
  %976 = vmatpush1.msra.mxu0 %v333
  %977 = vmatprep.subr.mxu0 0.0
  %978 = vmatpush1.msra.mxu0 %v336
  %979 = vmatprep.subr.mxu0 0.0
  %980 = vmatpush1.msra.mxu0 %v339
  %981 = vmatprep.subr.mxu0 0.0
  %982 = vmatpush1.msra.mxu0 %v342
  %983 = vmatprep.subr.mxu0 0.0
  %984 = vmatpush1.msra.mxu0 %v345
  %985 = vmatprep.subr.mxu0 0.0
  %986 = vmatpush1.msra.mxu0 %v348
  %987 = vmatprep.subr.mxu0 0.0
  %988 = vmatpush1.msra.mxu0 %v351
  %989 = vmatprep.subr.mxu0 0.0
  %990 = vmatpush1.msra.mxu0 %v354
  %991 = vmatprep.subr.mxu0 0.0
  %992 = vmatpush1.msra.mxu0 %v357
  %993 = vmatprep.subr.mxu0 0.0
  %994 = vmatpush1.msra.mxu0 %v360
  %995 = vmatprep.subr.mxu0 0.0
  %996 = vmatpush1.msra.mxu0 %v363
  %997 = vmatprep.subr.mxu0 0.0
  %998 = vmatpush1.msra.mxu0 %v366
  %999 = vmatprep.subr.mxu0 0.0
  %1000 = vmatpush1.msra.mxu0 %v369
  %1001 = vmatprep.subr.mxu0 0.0
  %1002 = vmatpush1.msra.mxu0 %v372
  %1003 = vmatprep.subr.mxu0 0.0
  %1004 = vmatpush1.msra.mxu0 %v375
  %1005 = vmatprep.subr.mxu0 0.0
  %1006 = vmatpush1.msra.mxu0 %v378
  %1007 = vmatprep.subr.mxu0 0.0
  %1008 = vmatpush1.msra.mxu0 %v381
  %1009 = vmatprep.subr.mxu0 0.0
  %1010 = vmatpush1.msra.mxu0 %v384
  %1011 = vmatprep.subr.mxu0 0.0
  %1012 = vmatpush1.msra.mxu0 %v387
  %1013 = vmatprep.subr.mxu0 0.0
  %1014 = vmatpush1.msra.mxu0 %v390
  %1015 = vmatprep.subr.mxu0 0.0
  %1016 = vmatpush1.msra.mxu0 %v393
  %1017 = vmatprep.subr.mxu0 0.0
  %1018 = vmatpush1.msra.mxu0 %v396
  %1019 = vmatprep.subr.mxu0 0.0
  %1020 = vmatpush1.msra.mxu0 %v399
  %1021 = vmatprep.subr.mxu0 0.0
  %1022 = vmatpush1.msra.mxu0 %v402
  %1023 = vmatprep.subr.mxu0 0.0
  %1024 = vmatpush1.msra.mxu0 %v405
  %1025 = vmatprep.mubr.f32.mxu0 %v458
  %1026 = vmatmul.mubr.f32.gmra.mrb[0].mxu0 %v456
  %v1027 = vpop.f32.mrb[0].mxu0
  %v1028 = vadd.f32 %v958, %v1027
  %v1029 = vpop.f32.mrb[0].mxu0
  %1030 = vdwg.mxu0
  %vm1031 = vcmp.gt.f32.partialorder %v747, 0.0
  %vm1032 = vcmp.gt.f32.partialorder %v749, 0.0
  %vm1033 = vcmp.gt.f32.partialorder %v1028, 0.0
  %v1034 = vmin.f32 %v747, 0.0
  %v1035 = vmin.f32 %v749, 0.0
  %v1036 = vmin.f32 %v1028, 0.0
  %v1037 = vmul.f32 %v1034, 1.442695
  %v1038 = vpow.pop %v1037
  %v1039 = vmul.f32 %v1035, 1.442695
  %v1040 = vpow.pop %v1039
  %v1041 = vmul.f32 %v1036, 1.442695
  %v1042 = vpow.pop %v1041
  %v1043 = vsub.f32 %v1038, 1.0
  %v1044 = vsub.f32 %v1040, 1.0
  %v1045 = vsub.f32 %v1042, 1.0
  %v1046 = vsel %vm1031, %v747, %v1043
  %v1047 = vsel %vm1032, %v749, %v1044
  %v1048 = vsel %vm1033, %v1028, %v1045
  %v1049 = vld [vmem:[%s3] sm:$0xff]
  %v1050 = vld [vmem:[%s3 + $0x8] sm:$0xff]
  %v1051 = vld [vmem:[%s3 + $0x10] sm:$0xff]
  %v1052 = vld [vmem:[%s3 + $0x18] sm:$0xff]
  %v1053 = vld [vmem:[%s3 + $0x20] sm:$0xff]
  %v1054 = vld [vmem:[%s3 + $0x28] sm:$0xff]
  %v1055 = vld [vmem:[%s3 + $0x30] sm:$0xff]
  %v1056 = vld [vmem:[%s3 + $0x38] sm:$0xff]
  %v1057 = vld [vmem:[%s3 + $0x40] sm:$0xff]
  %v1058 = vld [vmem:[%s3 + $0x48] sm:$0xff]
  %v1059 = vld [vmem:[%s3 + $0x50] sm:$0xff]
  %v1060 = vld [vmem:[%s3 + $0x58] sm:$0xff]
  %v1061 = vld [vmem:[%s3 + $0x60] sm:$0xff]
  %v1062 = vld [vmem:[%s3 + $0x68] sm:$0xff]
  %v1063 = vld [vmem:[%s3 + $0x70] sm:$0xff]
  %v1064 = vld [vmem:[%s3 + $0x78] sm:$0xff]
  %v1065 = vld [vmem:[%s3 + $0x80] sm:$0xff]
  %v1066 = vld [vmem:[%s3 + $0x88] sm:$0xff]
  %v1067 = vld [vmem:[%s3 + $0x90] sm:$0xff]
  %v1068 = vld [vmem:[%s3 + $0x98] sm:$0xff]
  %v1069 = vld [vmem:[%s3 + $0xa0] sm:$0xff]
  %v1070 = vld [vmem:[%s3 + $0xa8] sm:$0xff]
  %v1071 = vld [vmem:[%s3 + $0xb0] sm:$0xff]
  %v1072 = vld [vmem:[%s3 + $0xb8] sm:$0xff]
  %v1073 = vld [vmem:[%s3 + $0xc0] sm:$0xff]
  %v1074 = vld [vmem:[%s3 + $0xc8] sm:$0xff]
  %v1075 = vld [vmem:[%s3 + $0xd0] sm:$0xff]
  %v1076 = vld [vmem:[%s3 + $0xd8] sm:$0xff]
  %v1077 = vld [vmem:[%s3 + $0xe0] sm:$0xff]
  %v1078 = vld [vmem:[%s3 + $0xe8] sm:$0xff]
  %v1079 = vld [vmem:[%s3 + $0xf0] sm:$0xff]
  %v1080 = vld [vmem:[%s3 + $0xf8] sm:$0xff]
  %v1081 = vld [vmem:[%s3 + $0x100] sm:$0xff]
  %v1082 = vld [vmem:[%s3 + $0x108] sm:$0xff]
  %v1083 = vld [vmem:[%s3 + $0x110] sm:$0xff]
  %v1084 = vld [vmem:[%s3 + $0x118] sm:$0xff]
  %v1085 = vld [vmem:[%s3 + $0x120] sm:$0xff]
  %v1086 = vld [vmem:[%s3 + $0x128] sm:$0xff]
  %v1087 = vld [vmem:[%s3 + $0x130] sm:$0xff]
  %v1088 = vld [vmem:[%s3 + $0x138] sm:$0xff]
  %v1089 = vld [vmem:[%s3 + $0x140] sm:$0xff]
  %v1090 = vld [vmem:[%s3 + $0x148] sm:$0xff]
  %v1091 = vld [vmem:[%s3 + $0x150] sm:$0xff]
  %v1092 = vld [vmem:[%s3 + $0x158] sm:$0xff]
  %v1093 = vld [vmem:[%s3 + $0x160] sm:$0xff]
  %v1094 = vld [vmem:[%s3 + $0x168] sm:$0xff]
  %v1095 = vld [vmem:[%s3 + $0x170] sm:$0xff]
  %v1096 = vld [vmem:[%s3 + $0x178] sm:$0xff]
  %v1097 = vld [vmem:[%s4] sm:$0x1]
  %v1099 = vlaneseq
  %v1100 = vshrl.u32 %v1099, 7
  %v1101 = vsub.s32 0, %v1100
  %v1102 = vrot.slane %v1097, %v1101
  %1104 = vmatprep.subr.mxu0 0.0
  %1105 = vmatpush1.msra.mxu0 %v1049
  %1106 = vmatprep.subr.mxu0 0.0
  %1107 = vmatpush1.msra.mxu0 %v1050
  %1108 = vmatprep.subr.mxu0 0.0
  %1109 = vmatpush1.msra.mxu0 %v1051
  %1110 = vmatprep.subr.mxu0 0.0
  %1111 = vmatpush1.msra.mxu0 %v1052
  %1112 = vmatprep.subr.mxu0 0.0
  %1113 = vmatpush1.msra.mxu0 %v1053
  %1114 = vmatprep.subr.mxu0 0.0
  %1115 = vmatpush1.msra.mxu0 %v1054
  %1116 = vmatprep.subr.mxu0 0.0
  %1117 = vmatpush1.msra.mxu0 %v1055
  %1118 = vmatprep.subr.mxu0 0.0
  %1119 = vmatpush1.msra.mxu0 %v1056
  %1120 = vmatprep.subr.mxu0 0.0
  %1121 = vmatpush1.msra.mxu0 %v1057
  %1122 = vmatprep.subr.mxu0 0.0
  %1123 = vmatpush1.msra.mxu0 %v1058
  %1124 = vmatprep.subr.mxu0 0.0
  %1125 = vmatpush1.msra.mxu0 %v1059
  %1126 = vmatprep.subr.mxu0 0.0
  %1127 = vmatpush1.msra.mxu0 %v1060
  %1128 = vmatprep.subr.mxu0 0.0
  %1129 = vmatpush1.msra.mxu0 %v1061
  %1130 = vmatprep.subr.mxu0 0.0
  %1131 = vmatpush1.msra.mxu0 %v1062
  %1132 = vmatprep.subr.mxu0 0.0
  %1133 = vmatpush1.msra.mxu0 %v1063
  %1134 = vmatprep.subr.mxu0 0.0
  %1135 = vmatpush1.msra.mxu0 %v1064
  %1136 = vmatprep.subr.mxu0 0.0
  %1137 = vmatpush1.msra.mxu0 %v1065
  %1138 = vmatprep.subr.mxu0 0.0
  %1139 = vmatpush1.msra.mxu0 %v1066
  %1140 = vmatprep.subr.mxu0 0.0
  %1141 = vmatpush1.msra.mxu0 %v1067
  %1142 = vmatprep.subr.mxu0 0.0
  %1143 = vmatpush1.msra.mxu0 %v1068
  %1144 = vmatprep.subr.mxu0 0.0
  %1145 = vmatpush1.msra.mxu0 %v1069
  %1146 = vmatprep.subr.mxu0 0.0
  %1147 = vmatpush1.msra.mxu0 %v1070
  %1148 = vmatprep.subr.mxu0 0.0
  %1149 = vmatpush1.msra.mxu0 %v1071
  %1150 = vmatprep.subr.mxu0 0.0
  %1151 = vmatpush1.msra.mxu0 %v1072
  %1152 = vmatprep.subr.mxu0 0.0
  %1153 = vmatpush1.msra.mxu0 %v1073
  %1154 = vmatprep.subr.mxu0 0.0
  %1155 = vmatpush1.msra.mxu0 %v1074
  %1156 = vmatprep.subr.mxu0 0.0
  %1157 = vmatpush1.msra.mxu0 %v1075
  %1158 = vmatprep.subr.mxu0 0.0
  %1159 = vmatpush1.msra.mxu0 %v1076
  %1160 = vmatprep.subr.mxu0 0.0
  %1161 = vmatpush1.msra.mxu0 %v1077
  %1162 = vmatprep.subr.mxu0 0.0
  %1163 = vmatpush1.msra.mxu0 %v1078
  %1164 = vmatprep.subr.mxu0 0.0
  %1165 = vmatpush1.msra.mxu0 %v1079
  %1166 = vmatprep.subr.mxu0 0.0
  %1167 = vmatpush1.msra.mxu0 %v1080
  %1168 = vmatprep.mubr.f32.mxu0 %v1047
  %1169 = vmatmul.mubr.f32.gmra.mrb[0].mxu0 %v1046
  %v1170 = vpop.f32.mrb[0].mxu0
  %v1171 = vadd.f32 %v1102, %v1170
  %v1172 = vpop.f32.mrb[0].mxu0
  %1173 = vdwg.mxu0
  %1174 = vmatprep.subr.mxu0 0.0
  %1175 = vmatpush1.msra.mxu0 %v1081
  %1176 = vmatprep.subr.mxu0 0.0
  %1177 = vmatpush1.msra.mxu0 %v1082
  %1178 = vmatprep.subr.mxu0 0.0
  %1179 = vmatpush1.msra.mxu0 %v1083
  %1180 = vmatprep.subr.mxu0 0.0
  %1181 = vmatpush1.msra.mxu0 %v1084
  %1182 = vmatprep.subr.mxu0 0.0
  %1183 = vmatpush1.msra.mxu0 %v1085
  %1184 = vmatprep.subr.mxu0 0.0
  %1185 = vmatpush1.msra.mxu0 %v1086
  %1186 = vmatprep.subr.mxu0 0.0
  %1187 = vmatpush1.msra.mxu0 %v1087
  %1188 = vmatprep.subr.mxu0 0.0
  %1189 = vmatpush1.msra.mxu0 %v1088
  %1190 = vmatprep.subr.mxu0 0.0
  %1191 = vmatpush1.msra.mxu0 %v1089
  %1192 = vmatprep.subr.mxu0 0.0
  %1193 = vmatpush1.msra.mxu0 %v1090
  %1194 = vmatprep.subr.mxu0 0.0
  %1195 = vmatpush1.msra.mxu0 %v1091
  %1196 = vmatprep.subr.mxu0 0.0
  %1197 = vmatpush1.msra.mxu0 %v1092
  %1198 = vmatprep.subr.mxu0 0.0
  %1199 = vmatpush1.msra.mxu0 %v1093
  %1200 = vmatprep.subr.mxu0 0.0
  %1201 = vmatpush1.msra.mxu0 %v1094
  %1202 = vmatprep.subr.mxu0 0.0
  %1203 = vmatpush1.msra.mxu0 %v1095
  %1204 = vmatprep.subr.mxu0 0.0
  %1205 = vmatpush1.msra.mxu0 %v1096
  %1206 = vmatprep.subr.mxu0 0.0
  %1207 = vmatpush1.msra.mxu0 0.0
  %1208 = vmatprep.subr.mxu0 0.0
  %1209 = vmatpush1.msra.mxu0 0.0
  %1210 = vmatprep.subr.mxu0 0.0
  %1211 = vmatpush1.msra.mxu0 0.0
  %1212 = vmatprep.subr.mxu0 0.0
  %1213 = vmatpush1.msra.mxu0 0.0
  %1214 = vmatprep.subr.mxu0 0.0
  %1215 = vmatpush1.msra.mxu0 0.0
  %1216 = vmatprep.subr.mxu0 0.0
  %1217 = vmatpush1.msra.mxu0 0.0
  %1218 = vmatprep.subr.mxu0 0.0
  %1219 = vmatpush1.msra.mxu0 0.0
  %1220 = vmatprep.subr.mxu0 0.0
  %1221 = vmatpush1.msra.mxu0 0.0
  %1222 = vmatprep.subr.mxu0 0.0
  %1223 = vmatpush1.msra.mxu0 0.0
  %1224 = vmatprep.subr.mxu0 0.0
  %1225 = vmatpush1.msra.mxu0 0.0
  %1226 = vmatprep.subr.mxu0 0.0
  %1227 = vmatpush1.msra.mxu0 0.0
  %1228 = vmatprep.subr.mxu0 0.0
  %1229 = vmatpush1.msra.mxu0 0.0
  %1230 = vmatprep.subr.mxu0 0.0
  %1231 = vmatpush1.msra.mxu0 0.0
  %1232 = vmatprep.subr.mxu0 0.0
  %1233 = vmatpush1.msra.mxu0 0.0
  %1234 = vmatprep.subr.mxu0 0.0
  %1235 = vmatpush1.msra.mxu0 0.0
  %1236 = vmatprep.subr.mxu0 0.0
  %1237 = vmatpush1.msra.mxu0 0.0
  %1238 = vmatprep.mubr.f32.mxu0 0.0
  %1239 = vmatmul.mubr.f32.gmra.mrb[0].mxu0 %v1048
  %v1240 = vpop.f32.mrb[0].mxu0
  %v1241 = vadd.f32 %v1171, %v1240
  %v1242 = vpop.f32.mrb[0].mxu0
  %1243 = vdwg.mxu0
  %1244 = vst [vmem:[%s5] sm:$0x3] %v1241
  // Predicated region
  $region22: #{encoder_share_forward.3} parent=0 // pred_check
    _
  $region23: #{encoder_share_forward.3} parent=0 // pred_check_branch
    %1246 = sbr.rel (0) target = $region25
  $region24: #{encoder_share_forward.3} parent=0 // pred_region
    _
  $region25: #{encoder_share_forward.3} parent=0 // pred_fallthru
    _
  // Predicated region
  $region26: #{encoder_share_forward.3} parent=0 // pred_check
    _
  $region27: #{encoder_share_forward.3} parent=0 // pred_check_branch
    %1248 = sbr.rel (0) target = $region29
  $region28: #{encoder_share_forward.3} parent=0 // pred_region
    _
  $region29: #{encoder_share_forward.3} parent=0 // pred_fallthru
    _

// kernel: encoder_share_forward.2
$region0: #{encoder_share_forward.2}
  #allocation0 [shape = 'u32[]', space=smem, size = 0x4, offset = 0x4, fixed_abs, tag = 'smem constant byte address 0x4 - core index']
  #allocation1 [shape = 'u32[144,128]{1,0:T(1,128)}', space=vmem, size = 0x12000, scoped, tag = 'internal scratch']
  #allocation2 [shape = 'f32[2,512]{1,0:T(2,128)}', space=vmem, size = 0x1000, scoped, tag = 'scratch operand']
  %s0 = inlined_call_operand.vmem [shape: bf16[2,36864], index: 0, kind: input, shape index: {}]
  %s1 = inlined_call_operand.hbm [shape: bf16[36864,1024], index: 1, kind: input, shape index: {}]
  %s2 = inlined_call_operand.hbm [shape: f32[1,1024], index: 2, kind: input, shape index: {}]
  %s3 = inlined_call_operand.vmem [shape: f32[2,1024], index: 3, kind: output, shape index: {}]
  %s4 = sld [smem:[#allocation0]]
  $region61: #{encoder_share_forward.2} parent=0
    _
  %s6 = ssub.s32 1, %s4
  %s7 = scalar_select 0, %s6, %s4
  $region1: #{encoder_share_forward.2} parent=0
    #allocation3 [shape = 'u8[9437184]{0}', space=vmem, size = 0x900000, scoped, tag = 'input window, operand 1']
    #allocation4 [shape = 's32[2]{0}', space=sflag, size = 0x8, scoped, tag = 'scoped memory for encoder_share_forward.2']
    #allocation5 [shape = 'u8[4096]{0}', space=vmem, size = 0x1000, scoped, tag = 'input window, operand 2']
    #allocation6 [shape = 's32[2]{0}', space=sflag, size = 0x8, scoped, tag = 'scoped memory for encoder_share_forward.2']
    %8 = vsyncpa [#allocation4], 0
    %s9 = scalar_lea.sflag [#allocation4], 1
    %10 = vsyncpa %s9, 0
    %11 = vsyncpa [#allocation6], 0
    %s12 = scalar_lea.sflag [#allocation6], 1
    %13 = vsyncpa %s12, 0
    loop: start=0, step=1, limit=18
    $region2: #{encoder_share_forward.2} parent=1 // loop_pre_header
      _
    $region3: #{encoder_share_forward.2} parent=1 // loop_header
      %s15 = sphi 0, %s19
      %p16 = scmp.ge.s32.totalorder %s15, 18
      %s22 = sphi 0, %s34
      %s23 = sphi 0, %s30
      %s24 = sphi 0, %s22
      %s25 = sphi 0, %s23
      %s26 = sphi 0, %s24
      %s27 = sphi 0, %s25
      %s37 = sphi 0, %s39
      %s40 = sphi 0, %s37
      %s41 = sphi 0, %s40
      %s57 = sphi 0, %s41
      %s65 = sphi 0, %s67
      %s68 = sphi 0, %s65
      %s69 = sphi 0, %s68
      %s85 = sphi 0, %s69
      %s91 = sphi 0, %s93
      %s94 = sphi 0, %s91
      %s95 = sphi 0, %s94
      %s111 = sphi 0, %s95
      %s117 = sphi 0, %s119
      %s120 = sphi 0, %s117
      %s121 = sphi 0, %s120
      %s137 = sphi 0, %s121
    $region4: #{encoder_share_forward.2} parent=1 // loop_header_branch
      %18 = sbr.rel (%p16) target = $region8
    $region5: #{encoder_share_forward.2} parent=1 // loop_body
      %s20 = ssub.s32 %s15, 1
      %s21 = ssub.s32 %s15, 2
      %s28 = sadd.s32 1, %s23
      %p29 = scmp.ge.s32.totalorder %s28, 8
      %s30 = scalar_select %p29, 0, %s28
      %s31 = sadd.s32 1, %s22
      %s32 = scalar_select %p29, %s31, %s22
      %p33 = scmp.ge.s32.totalorder %s32, 2
      %s34 = scalar_select %p33, 0, %s32
      %s35 = ssub.s32 %s23, %s30
      %p36 = scmp.eq.s32.totalorder %s35, 0
      %s38 = sadd.s32 %s37, 1
      %s39 = scalar_select %p36, %s37, %s38
      %p42 = pneg %p36
      %p43 = scmp.eq.s32.totalorder %s15, 15
      %p44 = por %p42, %p43
      %p45 = scmp.ne.s32.totalorder %s37, %s40
      %p46 = scmp.eq.s32.totalorder %s15, 0
      %p47 = por %p45, %p46
      %p48 = scmp.ne.s32.totalorder %s37, %s40
      %p49 = scmp.eq.s32.totalorder %s20, 15
      %p50 = por %p48, %p49
      %p51 = scmp.ne.s32.totalorder %s40, %s41
      %p52 = scmp.eq.s32.totalorder %s20, 0
      %p53 = por %p51, %p52
      %p54 = scmp.ne.s32.totalorder %s40, %s41
      %p55 = scmp.eq.s32.totalorder %s21, 15
      %p56 = por %p54, %p55
      %p58 = scmp.ne.s32.totalorder %s41, %s57
      %p59 = scmp.eq.s32.totalorder %s21, 0
      %p60 = por %p58, %p59
      %s61 = ssub.s32 %s23, %s30
      %s62 = ssub.s32 %s22, %s34
      %s63 = sor.u32 %s61, %s62
      %p64 = scmp.eq.s32.totalorder %s63, 0
      %s66 = sadd.s32 %s65, 1
      %s67 = scalar_select %p64, %s65, %s66
      %p70 = pneg %p64
      %p71 = scmp.eq.s32.totalorder %s15, 15
      %p72 = por %p70, %p71
      %p73 = scmp.ne.s32.totalorder %s65, %s68
      %p74 = scmp.eq.s32.totalorder %s15, 0
      %p75 = por %p73, %p74
      %p76 = scmp.ne.s32.totalorder %s65, %s68
      %p77 = scmp.eq.s32.totalorder %s20, 15
      %p78 = por %p76, %p77
      %p79 = scmp.ne.s32.totalorder %s68, %s69
      %p80 = scmp.eq.s32.totalorder %s20, 0
      %p81 = por %p79, %p80
      %p82 = scmp.ne.s32.totalorder %s68, %s69
      %p83 = scmp.eq.s32.totalorder %s21, 15
      %p84 = por %p82, %p83
      %p86 = scmp.ne.s32.totalorder %s69, %s85
      %p87 = scmp.eq.s32.totalorder %s21, 0
      %p88 = por %p86, %p87
      %s89 = ssub.s32 %s22, %s34
      %p90 = scmp.eq.s32.totalorder %s89, 0
      %s92 = sadd.s32 %s91, 1
      %s93 = scalar_select %p90, %s91, %s92
      %p96 = pneg %p90
      %p97 = scmp.eq.s32.totalorder %s15, 15
      %p98 = por %p96, %p97
      %p99 = scmp.ne.s32.totalorder %s91, %s94
      %p100 = scmp.eq.s32.totalorder %s15, 0
      %p101 = por %p99, %p100
      %p102 = scmp.ne.s32.totalorder %s91, %s94
      %p103 = scmp.eq.s32.totalorder %s20, 15
      %p104 = por %p102, %p103
      %p105 = scmp.ne.s32.totalorder %s94, %s95
      %p106 = scmp.eq.s32.totalorder %s20, 0
      %p107 = por %p105, %p106
      %p108 = scmp.ne.s32.totalorder %s94, %s95
      %p109 = scmp.eq.s32.totalorder %s21, 15
      %p110 = por %p108, %p109
      %p112 = scmp.ne.s32.totalorder %s95, %s111
      %p113 = scmp.eq.s32.totalorder %s21, 0
      %p114 = por %p112, %p113
      %s115 = ssub.s32 %s22, %s34
      %p116 = scmp.eq.s32.totalorder %s115, 0
      %s118 = sadd.s32 %s117, 1
      %s119 = scalar_select %p116, %s117, %s118
      %p122 = pneg %p116
      %p123 = scmp.eq.s32.totalorder %s15, 15
      %p124 = por %p122, %p123
      %p125 = scmp.ne.s32.totalorder %s117, %s120
      %p126 = scmp.eq.s32.totalorder %s15, 0
      %p127 = por %p125, %p126
      %p128 = scmp.ne.s32.totalorder %s117, %s120
      %p129 = scmp.eq.s32.totalorder %s20, 15
      %p130 = por %p128, %p129
      %p131 = scmp.ne.s32.totalorder %s120, %s121
      %p132 = scmp.eq.s32.totalorder %s20, 0
      %p133 = por %p131, %p132
      %p134 = scmp.ne.s32.totalorder %s120, %s121
      %p135 = scmp.eq.s32.totalorder %s21, 15
      %p136 = por %p134, %p135
      %p138 = scmp.ne.s32.totalorder %s121, %s137
      %p139 = scmp.eq.s32.totalorder %s21, 0
      %p140 = por %p138, %p139
      %p141 = scmp.le.s32.totalorder 1, %s15
      %p142 = scmp.lt.s32.totalorder %s15, 17
      %p143 = pnand %p141, %p142
      %p144 = pneg %p143
      // Predicated region
      $region9: #{encoder_share_forward.2} parent=5 // pred_check
        _
      $region10: #{encoder_share_forward.2} parent=5 // pred_check_branch
        %146 = sbr.rel (%p143) target = $region12
      $region11: #{encoder_share_forward.2} parent=5 // pred_region
        %s147 = ssub.s32 %s15, 1
      $region12: #{encoder_share_forward.2} parent=5 // pred_fallthru
        _
      %p148 = scmp.lt.s32.totalorder %s15, 16
      // Predicated region
      $region13: #{encoder_share_forward.2} parent=5 // pred_check
        %p149 = pneg %p148
      $region14: #{encoder_share_forward.2} parent=5 // pred_check_branch
        %151 = sbr.rel (%p149) target = $region16
      $region15: #{encoder_share_forward.2} parent=5 // pred_region
        // Predicated region
        $region17: #{encoder_share_forward.2} parent=15 // pred_check
          %p152 = pneg %p47
        $region18: #{encoder_share_forward.2} parent=15 // pred_check_branch
          %154 = sbr.rel (%p152) target = $region20
        $region19: #{encoder_share_forward.2} parent=15 // pred_region
          %s155 = smul.u32 36, %s23
          %p156 = scmp.lt.s32.totalorder %s155, 287
          %s157 = scalar_select %p156, %s155, 287
          %s158 = scalar_lea.vmem %s0, %s157
          %s159 = smul.u32 36, %s23
        $region20: #{encoder_share_forward.2} parent=15 // pred_fallthru
          _
        // Predicated region
        $region21: #{encoder_share_forward.2} parent=15 // pred_check
          %p160 = pneg %p75
        $region22: #{encoder_share_forward.2} parent=15 // pred_check_branch
          %162 = sbr.rel (%p160) target = $region24
        $region23: #{encoder_share_forward.2} parent=15 // pred_region
          %s163 = sand.u32 %s65, 1
          %s164 = scalar_lea.sflag [#allocation4], %s163
          %s165 = sand.u32 %s65, 1
          %s166 = smul.addr %s165, 9216
          %s167 = scalar_lea.vmem [#allocation3], %s166
          %s168 = smul.u32 576, %s23
          %s169 = smul.u32 4, %s22
          %s171 = ssub.s32 147456, 147456
          %172 = vsyncadd %s164, %s171
          %s173 = smul.addr %s168, 8
          %s174 = sadd.s32 %s169, %s173
          %s175 = smul.addr %s174, 64
          %s176 = scalar_lea.hbm %s1, %s175
          %s177 = sshll.u32 %s167, 4
          %s178 = int_to_ptr.vmem [resolvable:$true] %s177
          %183 = dma.hbm_to_vmem [thread:$0]  %s176, 147456, %s178, %s164, 512, 256, 16
        $region24: #{encoder_share_forward.2} parent=15 // pred_fallthru
          _
        // Predicated region
        $region25: #{encoder_share_forward.2} parent=15 // pred_check
          %p184 = pneg %p101
        $region26: #{encoder_share_forward.2} parent=15 // pred_check_branch
          %186 = sbr.rel (%p184) target = $region28
        $region27: #{encoder_share_forward.2} parent=15 // pred_region
          %s187 = sand.u32 %s91, 1
          %s188 = scalar_lea.sflag [#allocation6], %s187
          %s189 = sand.u32 %s91, 1
          %s190 = smul.addr %s189, 4
          %s191 = scalar_lea.vmem [#allocation5], %s190
          %s192 = smul.u32 4, %s22
          %s194 = ssub.s32 64, 64
          %195 = vsyncadd %s188, %s194
          %s196 = smul.addr %s192, 16
          %s197 = scalar_lea.hbm %s2, %s196
          %s199 = sshll.u32 %s191, 4
          %s200 = int_to_ptr.vmem [resolvable:$true] %s199
          %202 = dma.hbm_to_vmem [thread:$0]  %s197, 64, %s200, %s188
        $region28: #{encoder_share_forward.2} parent=15 // pred_fallthru
          _
      $region16: #{encoder_share_forward.2} parent=5 // pred_fallthru
        _
      %p203 = scmp.le.s32.totalorder 1, %s15
      %p204 = scmp.lt.s32.totalorder %s15, 17
      %p205 = pnand %p203, %p204
      %p206 = pneg %p205
      // Predicated region
      $region29: #{encoder_share_forward.2} parent=5 // pred_check
        _
      $region30: #{encoder_share_forward.2} parent=5 // pred_check_branch
        %208 = sbr.rel (%p205) target = $region32
      $region31: #{encoder_share_forward.2} parent=5 // pred_region
        %s209 = ssub.s32 %s15, 1
        %s210 = sand.u32 %s68, 1
        %s211 = scalar_lea.sflag [#allocation4], %s210
        %s212 = sand.u32 %s68, 1
        %s213 = smul.addr %s212, 9216
        %s214 = scalar_lea.vmem [#allocation3], %s213
        // Predicated region
        $region33: #{encoder_share_forward.2} parent=31 // pred_check
          %p215 = pneg %p81
        $region34: #{encoder_share_forward.2} parent=31 // pred_check_branch
          %217 = sbr.rel (%p215) target = $region36
        $region35: #{encoder_share_forward.2} parent=31 // pred_region
          %218 = dma.done %s211, 147456
        $region36: #{encoder_share_forward.2} parent=31 // pred_fallthru
          _
        %s219 = sand.u32 %s94, 1
        %s220 = scalar_lea.sflag [#allocation6], %s219
        %s221 = sand.u32 %s94, 1
        %s222 = smul.addr %s221, 4
        %s223 = scalar_lea.vmem [#allocation5], %s222
        // Predicated region
        $region37: #{encoder_share_forward.2} parent=31 // pred_check
          %p224 = pneg %p107
        $region38: #{encoder_share_forward.2} parent=31 // pred_check_branch
          %226 = sbr.rel (%p224) target = $region40
        $region39: #{encoder_share_forward.2} parent=31 // pred_region
          %227 = dma.done %s220, 64
        $region40: #{encoder_share_forward.2} parent=31 // pred_fallthru
          _
        %s228 = smul.u32 36, %s25
        %p229 = scmp.lt.s32.totalorder %s228, 287
        %s230 = scalar_select %p229, %s228, 287
        %s231 = scalar_lea.vmem %s0, %s230
        %p232 = pneg %p53
        %p233 = pneg %p50
        %s234 = sand.u32 %s68, 1
        %s235 = scalar_lea.sflag [#allocation4], %s234
        %s236 = sand.u32 %s68, 1
        %s237 = smul.addr %s236, 9216
        %s238 = scalar_lea.vmem [#allocation3], %s237
        %p239 = pneg %p81
        %p240 = pneg %p78
        %s241 = sand.u32 %s94, 1
        %s242 = scalar_lea.sflag [#allocation6], %s241
        %s243 = sand.u32 %s94, 1
        %s244 = smul.addr %s243, 4
        %s245 = scalar_lea.vmem [#allocation5], %s244
        %p246 = pneg %p107
        %p247 = pneg %p104
        %p248 = pneg %p133
        %p249 = pneg %p130
        %s250 = smul.u32 4, %s24
        %p251 = scmp.lt.s32.totalorder %s250, 7
        %s252 = scalar_select %p251, %s250, 7
        %s253 = smul.addr %s252, 2
        %s254 = scalar_lea.vmem %s3, %s253
        %s255 = smul.u32 36, %s25
        %p256 = scmp.lt.s32.totalorder %s255, 287
        %s257 = scalar_select %p256, %s255, 287
        %s258 = scalar_lea.vmem %s0, %s257
        %s259 = smul.u32 36, %s25
        %s260 = smul.u32 576, %s25
        %s261 = smul.u32 4, %s24
        %s262 = smul.u32 4, %s24
        %s263 = smul.u32 4, %s24
        %p264 = scmp.lt.s32.totalorder %s263, 7
        %s265 = scalar_select %p264, %s263, 7
        %s266 = smul.addr %s265, 2
        %s267 = scalar_lea.vmem %s3, %s266
        %s268 = smul.u32 4, %s24
        %p269 = scmp.eq.s32.totalorder %s25, 0
        // Predicated region
        $region41: #{encoder_share_forward.2} parent=31 // pred_check
          %p270 = pneg %p269
        $region42: #{encoder_share_forward.2} parent=31 // pred_check_branch
          %272 = sbr.rel (%p270) target = $region44
        $region43: #{encoder_share_forward.2} parent=31 // pred_region
          %273 = vst [vmem:[#allocation2] sm:$0xff] 0.0
        $region44: #{encoder_share_forward.2} parent=31 // pred_fallthru
          _
        %v274 = vld [vmem:[#allocation2] sm:$0xff]
        %v275 = vld [vmem:[%s258] sm:$0xff]
        %v276 = vld [vmem:[%s258 + $0x8] sm:$0xff]
        %v277 = vld [vmem:[%s258 + $0x10] sm:$0xff]
        %v278 = vld [vmem:[%s258 + $0x18] sm:$0xff]
        %v279 = vld [vmem:[%s258 + $0x20] sm:$0xf]
        %v280 = vld [vmem:[%s214] sm:$0xff]
        %v281 = vld [vmem:[%s214 + $0x8] sm:$0xff]
        %v282 = vld [vmem:[%s214 + $0x10] sm:$0xff]
        %v283 = vld [vmem:[%s214 + $0x18] sm:$0xff]
        %v284 = vld [vmem:[%s214 + $0x20] sm:$0xff]
        %v285 = vld [vmem:[%s214 + $0x28] sm:$0xff]
        %v286 = vld [vmem:[%s214 + $0x30] sm:$0xff]
        %v287 = vld [vmem:[%s214 + $0x38] sm:$0xff]
        %v288 = vld [vmem:[%s214 + $0x40] sm:$0xff]
        %v289 = vld [vmem:[%s214 + $0x48] sm:$0xff]
        %v290 = vld [vmem:[%s214 + $0x50] sm:$0xff]
        %v291 = vld [vmem:[%s214 + $0x58] sm:$0xff]
        %v292 = vld [vmem:[%s214 + $0x60] sm:$0xff]
        %v293 = vld [vmem:[%s214 + $0x68] sm:$0xff]
        %v294 = vld [vmem:[%s214 + $0x70] sm:$0xff]
        %v295 = vld [vmem:[%s214 + $0x78] sm:$0xff]
        %v296 = vld [vmem:[%s214 + $0x80] sm:$0xff]
        %v297 = vld [vmem:[%s214 + $0x88] sm:$0xff]
        %v298 = vld [vmem:[%s214 + $0x90] sm:$0xff]
        %v299 = vld [vmem:[%s214 + $0x98] sm:$0xff]
        %v300 = vld [vmem:[%s214 + $0xa0] sm:$0xff]
        %v301 = vld [vmem:[%s214 + $0xa8] sm:$0xff]
        %v302 = vld [vmem:[%s214 + $0xb0] sm:$0xff]
        %v303 = vld [vmem:[%s214 + $0xb8] sm:$0xff]
        %v304 = vld [vmem:[%s214 + $0xc0] sm:$0xff]
        %v305 = vld [vmem:[%s214 + $0xc8] sm:$0xff]
        %v306 = vld [vmem:[%s214 + $0xd0] sm:$0xff]
        %v307 = vld [vmem:[%s214 + $0xd8] sm:$0xff]
        %v308 = vld [vmem:[%s214 + $0xe0] sm:$0xff]
        %v309 = vld [vmem:[%s214 + $0xe8] sm:$0xff]
        %v310 = vld [vmem:[%s214 + $0xf0] sm:$0xff]
        %v311 = vld [vmem:[%s214 + $0xf8] sm:$0xff]
        %v312 = vld [vmem:[%s214 + $0x100] sm:$0xff]
        %v313 = vld [vmem:[%s214 + $0x108] sm:$0xff]
        %v314 = vld [vmem:[%s214 + $0x110] sm:$0xff]
        %v315 = vld [vmem:[%s214 + $0x118] sm:$0xff]
        %v316 = vld [vmem:[%s214 + $0x120] sm:$0xff]
        %v317 = vld [vmem:[%s214 + $0x128] sm:$0xff]
        %v318 = vld [vmem:[%s214 + $0x130] sm:$0xff]
        %v319 = vld [vmem:[%s214 + $0x138] sm:$0xff]
        %v320 = vld [vmem:[%s214 + $0x140] sm:$0xff]
        %v321 = vld [vmem:[%s214 + $0x148] sm:$0xff]
        %v322 = vld [vmem:[%s214 + $0x150] sm:$0xff]
        %v323 = vld [vmem:[%s214 + $0x158] sm:$0xff]
        %v324 = vld [vmem:[%s214 + $0x160] sm:$0xff]
        %v325 = vld [vmem:[%s214 + $0x168] sm:$0xff]
        %v326 = vld [vmem:[%s214 + $0x170] sm:$0xff]
        %v327 = vld [vmem:[%s214 + $0x178] sm:$0xff]
        %v328 = vld [vmem:[%s214 + $0x180] sm:$0xff]
        %v329 = vld [vmem:[%s214 + $0x188] sm:$0xff]
        %v330 = vld [vmem:[%s214 + $0x190] sm:$0xff]
        %v331 = vld [vmem:[%s214 + $0x198] sm:$0xff]
        %v332 = vld [vmem:[%s214 + $0x1a0] sm:$0xff]
        %v333 = vld [vmem:[%s214 + $0x1a8] sm:$0xff]
        %v334 = vld [vmem:[%s214 + $0x1b0] sm:$0xff]
        %v335 = vld [vmem:[%s214 + $0x1b8] sm:$0xff]
        %v336 = vld [vmem:[%s214 + $0x1c0] sm:$0xff]
        %v337 = vld [vmem:[%s214 + $0x1c8] sm:$0xff]
        %v338 = vld [vmem:[%s214 + $0x1d0] sm:$0xff]
        %v339 = vld [vmem:[%s214 + $0x1d8] sm:$0xff]
        %v340 = vld [vmem:[%s214 + $0x1e0] sm:$0xff]
        %v341 = vld [vmem:[%s214 + $0x1e8] sm:$0xff]
        %v342 = vld [vmem:[%s214 + $0x1f0] sm:$0xff]
        %v343 = vld [vmem:[%s214 + $0x1f8] sm:$0xff]
        %v344 = vld [vmem:[%s214 + $0x200] sm:$0xff]
        %v345 = vld [vmem:[%s214 + $0x208] sm:$0xff]
        %v346 = vld [vmem:[%s214 + $0x210] sm:$0xff]
        %v347 = vld [vmem:[%s214 + $0x218] sm:$0xff]
        %v348 = vld [vmem:[%s214 + $0x220] sm:$0xff]
        %v349 = vld [vmem:[%s214 + $0x228] sm:$0xff]
        %v350 = vld [vmem:[%s214 + $0x230] sm:$0xff]
        %v351 = vld [vmem:[%s214 + $0x238] sm:$0xff]
        %v352 = vld [vmem:[%s214 + $0x240] sm:$0xff]
        %v353 = vld [vmem:[%s214 + $0x248] sm:$0xff]
        %v354 = vld [vmem:[%s214 + $0x250] sm:$0xff]
        %v355 = vld [vmem:[%s214 + $0x258] sm:$0xff]
        %v356 = vld [vmem:[%s214 + $0x260] sm:$0xff]
        %v357 = vld [vmem:[%s214 + $0x268] sm:$0xff]
        %v358 = vld [vmem:[%s214 + $0x270] sm:$0xff]
        %v359 = vld [vmem:[%s214 + $0x278] sm:$0xff]
        %v360 = vld [vmem:[%s214 + $0x280] sm:$0xff]
        %v361 = vld [vmem:[%s214 + $0x288] sm:$0xff]
        %v362 = vld [vmem:[%s214 + $0x290] sm:$0xff]
        %v363 = vld [vmem:[%s214 + $0x298] sm:$0xff]
        %v364 = vld [vmem:[%s214 + $0x2a0] sm:$0xff]
        %v365 = vld [vmem:[%s214 + $0x2a8] sm:$0xff]
        %v366 = vld [vmem:[%s214 + $0x2b0] sm:$0xff]
        %v367 = vld [vmem:[%s214 + $0x2b8] sm:$0xff]
        %v368 = vld [vmem:[%s214 + $0x2c0] sm:$0xff]
        %v369 = vld [vmem:[%s214 + $0x2c8] sm:$0xff]
        %v370 = vld [vmem:[%s214 + $0x2d0] sm:$0xff]
        %v371 = vld [vmem:[%s214 + $0x2d8] sm:$0xff]
        %v372 = vld [vmem:[%s214 + $0x2e0] sm:$0xff]
        %v373 = vld [vmem:[%s214 + $0x2e8] sm:$0xff]
        %v374 = vld [vmem:[%s214 + $0x2f0] sm:$0xff]
        %v375 = vld [vmem:[%s214 + $0x2f8] sm:$0xff]
        %v376 = vld [vmem:[%s214 + $0x300] sm:$0xff]
        %v377 = vld [vmem:[%s214 + $0x308] sm:$0xff]
        %v378 = vld [vmem:[%s214 + $0x310] sm:$0xff]
        %v379 = vld [vmem:[%s214 + $0x318] sm:$0xff]
        %v380 = vld [vmem:[%s214 + $0x320] sm:$0xff]
        %v381 = vld [vmem:[%s214 + $0x328] sm:$0xff]
        %v382 = vld [vmem:[%s214 + $0x330] sm:$0xff]
        %v383 = vld [vmem:[%s214 + $0x338] sm:$0xff]
        %v384 = vld [vmem:[%s214 + $0x340] sm:$0xff]
        %v385 = vld [vmem:[%s214 + $0x348] sm:$0xff]
        %v386 = vld [vmem:[%s214 + $0x350] sm:$0xff]
        %v387 = vld [vmem:[%s214 + $0x358] sm:$0xff]
        %v388 = vld [vmem:[%s214 + $0x360] sm:$0xff]
        %v389 = vld [vmem:[%s214 + $0x368] sm:$0xff]
        %v390 = vld [vmem:[%s214 + $0x370] sm:$0xff]
        %v391 = vld [vmem:[%s214 + $0x378] sm:$0xff]
        %v392 = vld [vmem:[%s214 + $0x380] sm:$0xff]
        %v393 = vld [vmem:[%s214 + $0x388] sm:$0xff]
        %v394 = vld [vmem:[%s214 + $0x390] sm:$0xff]
        %v395 = vld [vmem:[%s214 + $0x398] sm:$0xff]
        %v396 = vld [vmem:[%s214 + $0x3a0] sm:$0xff]
        %v397 = vld [vmem:[%s214 + $0x3a8] sm:$0xff]
        %v398 = vld [vmem:[%s214 + $0x3b0] sm:$0xff]
        %v399 = vld [vmem:[%s214 + $0x3b8] sm:$0xff]
        %v400 = vld [vmem:[%s214 + $0x3c0] sm:$0xff]
        %v401 = vld [vmem:[%s214 + $0x3c8] sm:$0xff]
        %v402 = vld [vmem:[%s214 + $0x3d0] sm:$0xff]
        %v403 = vld [vmem:[%s214 + $0x3d8] sm:$0xff]
        %v404 = vld [vmem:[%s214 + $0x3e0] sm:$0xff]
        %v405 = vld [vmem:[%s214 + $0x3e8] sm:$0xff]
        %v406 = vld [vmem:[%s214 + $0x3f0] sm:$0xff]
        %v407 = vld [vmem:[%s214 + $0x3f8] sm:$0xff]
        %v408 = vld [vmem:[%s214 + $0x400] sm:$0xff]
        %v409 = vld [vmem:[%s214 + $0x408] sm:$0xff]
        %v410 = vld [vmem:[%s214 + $0x410] sm:$0xff]
        %v411 = vld [vmem:[%s214 + $0x418] sm:$0xff]
        %v412 = vld [vmem:[%s214 + $0x420] sm:$0xff]
        %v413 = vld [vmem:[%s214 + $0x428] sm:$0xff]
        %v414 = vld [vmem:[%s214 + $0x430] sm:$0xff]
        %v415 = vld [vmem:[%s214 + $0x438] sm:$0xff]
        %v416 = vld [vmem:[%s214 + $0x440] sm:$0xff]
        %v417 = vld [vmem:[%s214 + $0x448] sm:$0xff]
        %v418 = vld [vmem:[%s214 + $0x450] sm:$0xff]
        %v419 = vld [vmem:[%s214 + $0x458] sm:$0xff]
        %v420 = vld [vmem:[%s214 + $0x460] sm:$0xff]
        %v421 = vld [vmem:[%s214 + $0x468] sm:$0xff]
        %v422 = vld [vmem:[%s214 + $0x470] sm:$0xff]
        %v423 = vld [vmem:[%s214 + $0x478] sm:$0xff]
        %v424 = vld [vmem:[%s214 + $0x480] sm:$0xff]
        %v425 = vld [vmem:[%s214 + $0x488] sm:$0xff]
        %v426 = vld [vmem:[%s214 + $0x490] sm:$0xff]
        %v427 = vld [vmem:[%s214 + $0x498] sm:$0xff]
        %v428 = vld [vmem:[%s214 + $0x4a0] sm:$0xff]
        %v429 = vld [vmem:[%s214 + $0x4a8] sm:$0xff]
        %v430 = vld [vmem:[%s214 + $0x4b0] sm:$0xff]
        %v431 = vld [vmem:[%s214 + $0x4b8] sm:$0xff]
        %v432 = vld [vmem:[%s214 + $0x4c0] sm:$0xff]
        %v433 = vld [vmem:[%s214 + $0x4c8] sm:$0xff]
        %v434 = vld [vmem:[%s214 + $0x4d0] sm:$0xff]
        %v435 = vld [vmem:[%s214 + $0x4d8] sm:$0xff]
        %v436 = vld [vmem:[%s214 + $0x4e0] sm:$0xff]
        %v437 = vld [vmem:[%s214 + $0x4e8] sm:$0xff]
        %v438 = vld [vmem:[%s214 + $0x4f0] sm:$0xff]
        %v439 = vld [vmem:[%s214 + $0x4f8] sm:$0xff]
        %v440 = vld [vmem:[%s214 + $0x500] sm:$0xff]
        %v441 = vld [vmem:[%s214 + $0x508] sm:$0xff]
        %v442 = vld [vmem:[%s214 + $0x510] sm:$0xff]
        %v443 = vld [vmem:[%s214 + $0x518] sm:$0xff]
        %v444 = vld [vmem:[%s214 + $0x520] sm:$0xff]
        %v445 = vld [vmem:[%s214 + $0x528] sm:$0xff]
        %v446 = vld [vmem:[%s214 + $0x530] sm:$0xff]
        %v447 = vld [vmem:[%s214 + $0x538] sm:$0xff]
        %v448 = vld [vmem:[%s214 + $0x540] sm:$0xff]
        %v449 = vld [vmem:[%s214 + $0x548] sm:$0xff]
        %v450 = vld [vmem:[%s214 + $0x550] sm:$0xff]
        %v451 = vld [vmem:[%s214 + $0x558] sm:$0xff]
        %v452 = vld [vmem:[%s214 + $0x560] sm:$0xff]
        %v453 = vld [vmem:[%s214 + $0x568] sm:$0xff]
        %v454 = vld [vmem:[%s214 + $0x570] sm:$0xff]
        %v455 = vld [vmem:[%s214 + $0x578] sm:$0xff]
        %v456 = vld [vmem:[%s214 + $0x580] sm:$0xff]
        %v457 = vld [vmem:[%s214 + $0x588] sm:$0xff]
        %v458 = vld [vmem:[%s214 + $0x590] sm:$0xff]
        %v459 = vld [vmem:[%s214 + $0x598] sm:$0xff]
        %v460 = vld [vmem:[%s214 + $0x5a0] sm:$0xff]
        %v461 = vld [vmem:[%s214 + $0x5a8] sm:$0xff]
        %v462 = vld [vmem:[%s214 + $0x5b0] sm:$0xff]
        %v463 = vld [vmem:[%s214 + $0x5b8] sm:$0xff]
        %v464 = vld [vmem:[%s214 + $0x5c0] sm:$0xff]
        %v465 = vld [vmem:[%s214 + $0x5c8] sm:$0xff]
        %v466 = vld [vmem:[%s214 + $0x5d0] sm:$0xff]
        %v467 = vld [vmem:[%s214 + $0x5d8] sm:$0xff]
        %v468 = vld [vmem:[%s214 + $0x5e0] sm:$0xff]
        %v469 = vld [vmem:[%s214 + $0x5e8] sm:$0xff]
        %v470 = vld [vmem:[%s214 + $0x5f0] sm:$0xff]
        %v471 = vld [vmem:[%s214 + $0x5f8] sm:$0xff]
        %v472 = vld [vmem:[%s214 + $0x600] sm:$0xff]
        %v473 = vld [vmem:[%s214 + $0x608] sm:$0xff]
        %v474 = vld [vmem:[%s214 + $0x610] sm:$0xff]
        %v475 = vld [vmem:[%s214 + $0x618] sm:$0xff]
        %v476 = vld [vmem:[%s214 + $0x620] sm:$0xff]
        %v477 = vld [vmem:[%s214 + $0x628] sm:$0xff]
        %v478 = vld [vmem:[%s214 + $0x630] sm:$0xff]
        %v479 = vld [vmem:[%s214 + $0x638] sm:$0xff]
        %v480 = vld [vmem:[%s214 + $0x640] sm:$0xff]
        %v481 = vld [vmem:[%s214 + $0x648] sm:$0xff]
        %v482 = vld [vmem:[%s214 + $0x650] sm:$0xff]
        %v483 = vld [vmem:[%s214 + $0x658] sm:$0xff]
        %v484 = vld [vmem:[%s214 + $0x660] sm:$0xff]
        %v485 = vld [vmem:[%s214 + $0x668] sm:$0xff]
        %v486 = vld [vmem:[%s214 + $0x670] sm:$0xff]
        %v487 = vld [vmem:[%s214 + $0x678] sm:$0xff]
        %v488 = vld [vmem:[%s214 + $0x680] sm:$0xff]
        %v489 = vld [vmem:[%s214 + $0x688] sm:$0xff]
        %v490 = vld [vmem:[%s214 + $0x690] sm:$0xff]
        %v491 = vld [vmem:[%s214 + $0x698] sm:$0xff]
        %v492 = vld [vmem:[%s214 + $0x6a0] sm:$0xff]
        %v493 = vld [vmem:[%s214 + $0x6a8] sm:$0xff]
        %v494 = vld [vmem:[%s214 + $0x6b0] sm:$0xff]
        %v495 = vld [vmem:[%s214 + $0x6b8] sm:$0xff]
        %v496 = vld [vmem:[%s214 + $0x6c0] sm:$0xff]
        %v497 = vld [vmem:[%s214 + $0x6c8] sm:$0xff]
        %v498 = vld [vmem:[%s214 + $0x6d0] sm:$0xff]
        %v499 = vld [vmem:[%s214 + $0x6d8] sm:$0xff]
        %v500 = vld [vmem:[%s214 + $0x6e0] sm:$0xff]
        %v501 = vld [vmem:[%s214 + $0x6e8] sm:$0xff]
        %v502 = vld [vmem:[%s214 + $0x6f0] sm:$0xff]
        %v503 = vld [vmem:[%s214 + $0x6f8] sm:$0xff]
        %v504 = vld [vmem:[%s214 + $0x700] sm:$0xff]
        %v505 = vld [vmem:[%s214 + $0x708] sm:$0xff]
        %v506 = vld [vmem:[%s214 + $0x710] sm:$0xff]
        %v507 = vld [vmem:[%s214 + $0x718] sm:$0xff]
        %v508 = vld [vmem:[%s214 + $0x720] sm:$0xff]
        %v509 = vld [vmem:[%s214 + $0x728] sm:$0xff]
        %v510 = vld [vmem:[%s214 + $0x730] sm:$0xff]
        %v511 = vld [vmem:[%s214 + $0x738] sm:$0xff]
        %v512 = vld [vmem:[%s214 + $0x740] sm:$0xff]
        %v513 = vld [vmem:[%s214 + $0x748] sm:$0xff]
        %v514 = vld [vmem:[%s214 + $0x750] sm:$0xff]
        %v515 = vld [vmem:[%s214 + $0x758] sm:$0xff]
        %v516 = vld [vmem:[%s214 + $0x760] sm:$0xff]
        %v517 = vld [vmem:[%s214 + $0x768] sm:$0xff]
        %v518 = vld [vmem:[%s214 + $0x770] sm:$0xff]
        %v519 = vld [vmem:[%s214 + $0x778] sm:$0xff]
        %v520 = vld [vmem:[%s214 + $0x780] sm:$0xff]
        %v521 = vld [vmem:[%s214 + $0x788] sm:$0xff]
        %v522 = vld [vmem:[%s214 + $0x790] sm:$0xff]
        %v523 = vld [vmem:[%s214 + $0x798] sm:$0xff]
        %v524 = vld [vmem:[%s214 + $0x7a0] sm:$0xff]
        %v525 = vld [vmem:[%s214 + $0x7a8] sm:$0xff]
        %v526 = vld [vmem:[%s214 + $0x7b0] sm:$0xff]
        %v527 = vld [vmem:[%s214 + $0x7b8] sm:$0xff]
        %v528 = vld [vmem:[%s214 + $0x7c0] sm:$0xff]
        %v529 = vld [vmem:[%s214 + $0x7c8] sm:$0xff]
        %v530 = vld [vmem:[%s214 + $0x7d0] sm:$0xff]
        %v531 = vld [vmem:[%s214 + $0x7d8] sm:$0xff]
        %v532 = vld [vmem:[%s214 + $0x7e0] sm:$0xff]
        %v533 = vld [vmem:[%s214 + $0x7e8] sm:$0xff]
        %v534 = vld [vmem:[%s214 + $0x7f0] sm:$0xff]
        %v535 = vld [vmem:[%s214 + $0x7f8] sm:$0xff]
        %v536 = vld [vmem:[%s214 + $0x800] sm:$0xff]
        %v537 = vld [vmem:[%s214 + $0x808] sm:$0xff]
        %v538 = vld [vmem:[%s214 + $0x810] sm:$0xff]
        %v539 = vld [vmem:[%s214 + $0x818] sm:$0xff]
        %v540 = vld [vmem:[%s214 + $0x820] sm:$0xff]
        %v541 = vld [vmem:[%s214 + $0x828] sm:$0xff]
        %v542 = vld [vmem:[%s214 + $0x830] sm:$0xff]
        %v543 = vld [vmem:[%s214 + $0x838] sm:$0xff]
        %v544 = vld [vmem:[%s214 + $0x840] sm:$0xff]
        %v545 = vld [vmem:[%s214 + $0x848] sm:$0xff]
        %v546 = vld [vmem:[%s214 + $0x850] sm:$0xff]
        %v547 = vld [vmem:[%s214 + $0x858] sm:$0xff]
        %v548 = vld [vmem:[%s214 + $0x860] sm:$0xff]
        %v549 = vld [vmem:[%s214 + $0x868] sm:$0xff]
        %v550 = vld [vmem:[%s214 + $0x870] sm:$0xff]
        %v551 = vld [vmem:[%s214 + $0x878] sm:$0xff]
        %v552 = vld [vmem:[%s214 + $0x880] sm:$0xff]
        %v553 = vld [vmem:[%s214 + $0x888] sm:$0xff]
        %v554 = vld [vmem:[%s214 + $0x890] sm:$0xff]
        %v555 = vld [vmem:[%s214 + $0x898] sm:$0xff]
        %v556 = vld [vmem:[%s214 + $0x8a0] sm:$0xff]
        %v557 = vld [vmem:[%s214 + $0x8a8] sm:$0xff]
        %v558 = vld [vmem:[%s214 + $0x8b0] sm:$0xff]
        %v559 = vld [vmem:[%s214 + $0x8b8] sm:$0xff]
        %v560 = vld [vmem:[%s214 + $0x8c0] sm:$0xff]
        %v561 = vld [vmem:[%s214 + $0x8c8] sm:$0xff]
        %v562 = vld [vmem:[%s214 + $0x8d0] sm:$0xff]
        %v563 = vld [vmem:[%s214 + $0x8d8] sm:$0xff]
        %v564 = vld [vmem:[%s214 + $0x8e0] sm:$0xff]
        %v565 = vld [vmem:[%s214 + $0x8e8] sm:$0xff]
        %v566 = vld [vmem:[%s214 + $0x8f0] sm:$0xff]
        %v567 = vld [vmem:[%s214 + $0x8f8] sm:$0xff]
        %v568 = vld [vmem:[%s214 + $0x900] sm:$0xff]
        %v569 = vld [vmem:[%s214 + $0x908] sm:$0xff]
        %v570 = vld [vmem:[%s214 + $0x910] sm:$0xff]
        %v571 = vld [vmem:[%s214 + $0x918] sm:$0xff]
        %v572 = vld [vmem:[%s214 + $0x920] sm:$0xff]
        %v573 = vld [vmem:[%s214 + $0x928] sm:$0xff]
        %v574 = vld [vmem:[%s214 + $0x930] sm:$0xff]
        %v575 = vld [vmem:[%s214 + $0x938] sm:$0xff]
        %v576 = vld [vmem:[%s214 + $0x940] sm:$0xff]
        %v577 = vld [vmem:[%s214 + $0x948] sm:$0xff]
        %v578 = vld [vmem:[%s214 + $0x950] sm:$0xff]
        %v579 = vld [vmem:[%s214 + $0x958] sm:$0xff]
        %v580 = vld [vmem:[%s214 + $0x960] sm:$0xff]
        %v581 = vld [vmem:[%s214 + $0x968] sm:$0xff]
        %v582 = vld [vmem:[%s214 + $0x970] sm:$0xff]
        %v583 = vld [vmem:[%s214 + $0x978] sm:$0xff]
        %v584 = vld [vmem:[%s214 + $0x980] sm:$0xff]
        %v585 = vld [vmem:[%s214 + $0x988] sm:$0xff]
        %v586 = vld [vmem:[%s214 + $0x990] sm:$0xff]
        %v587 = vld [vmem:[%s214 + $0x998] sm:$0xff]
        %v588 = vld [vmem:[%s214 + $0x9a0] sm:$0xff]
        %v589 = vld [vmem:[%s214 + $0x9a8] sm:$0xff]
        %v590 = vld [vmem:[%s214 + $0x9b0] sm:$0xff]
        %v591 = vld [vmem:[%s214 + $0x9b8] sm:$0xff]
        %v592 = vld [vmem:[%s214 + $0x9c0] sm:$0xff]
        %v593 = vld [vmem:[%s214 + $0x9c8] sm:$0xff]
        %v594 = vld [vmem:[%s214 + $0x9d0] sm:$0xff]
        %v595 = vld [vmem:[%s214 + $0x9d8] sm:$0xff]
        %v596 = vld [vmem:[%s214 + $0x9e0] sm:$0xff]
        %v597 = vld [vmem:[%s214 + $0x9e8] sm:$0xff]
        %v598 = vld [vmem:[%s214 + $0x9f0] sm:$0xff]
        %v599 = vld [vmem:[%s214 + $0x9f8] sm:$0xff]
        %v600 = vld [vmem:[%s214 + $0xa00] sm:$0xff]
        %v601 = vld [vmem:[%s214 + $0xa08] sm:$0xff]
        %v602 = vld [vmem:[%s214 + $0xa10] sm:$0xff]
        %v603 = vld [vmem:[%s214 + $0xa18] sm:$0xff]
        %v604 = vld [vmem:[%s214 + $0xa20] sm:$0xff]
        %v605 = vld [vmem:[%s214 + $0xa28] sm:$0xff]
        %v606 = vld [vmem:[%s214 + $0xa30] sm:$0xff]
        %v607 = vld [vmem:[%s214 + $0xa38] sm:$0xff]
        %v608 = vld [vmem:[%s214 + $0xa40] sm:$0xff]
        %v609 = vld [vmem:[%s214 + $0xa48] sm:$0xff]
        %v610 = vld [vmem:[%s214 + $0xa50] sm:$0xff]
        %v611 = vld [vmem:[%s214 + $0xa58] sm:$0xff]
        %v612 = vld [vmem:[%s214 + $0xa60] sm:$0xff]
        %v613 = vld [vmem:[%s214 + $0xa68] sm:$0xff]
        %v614 = vld [vmem:[%s214 + $0xa70] sm:$0xff]
        %v615 = vld [vmem:[%s214 + $0xa78] sm:$0xff]
        %v616 = vld [vmem:[%s214 + $0xa80] sm:$0xff]
        %v617 = vld [vmem:[%s214 + $0xa88] sm:$0xff]
        %v618 = vld [vmem:[%s214 + $0xa90] sm:$0xff]
        %v619 = vld [vmem:[%s214 + $0xa98] sm:$0xff]
        %v620 = vld [vmem:[%s214 + $0xaa0] sm:$0xff]
        %v621 = vld [vmem:[%s214 + $0xaa8] sm:$0xff]
        %v622 = vld [vmem:[%s214 + $0xab0] sm:$0xff]
        %v623 = vld [vmem:[%s214 + $0xab8] sm:$0xff]
        %v624 = vld [vmem:[%s214 + $0xac0] sm:$0xff]
        %v625 = vld [vmem:[%s214 + $0xac8] sm:$0xff]
        %v626 = vld [vmem:[%s214 + $0xad0] sm:$0xff]
        %v627 = vld [vmem:[%s214 + $0xad8] sm:$0xff]
        %v628 = vld [vmem:[%s214 + $0xae0] sm:$0xff]
        %v629 = vld [vmem:[%s214 + $0xae8] sm:$0xff]
        %v630 = vld [vmem:[%s214 + $0xaf0] sm:$0xff]
        %v631 = vld [vmem:[%s214 + $0xaf8] sm:$0xff]
        %v632 = vld [vmem:[%s214 + $0xb00] sm:$0xff]
        %v633 = vld [vmem:[%s214 + $0xb08] sm:$0xff]
        %v634 = vld [vmem:[%s214 + $0xb10] sm:$0xff]
        %v635 = vld [vmem:[%s214 + $0xb18] sm:$0xff]
        %v636 = vld [vmem:[%s214 + $0xb20] sm:$0xff]
        %v637 = vld [vmem:[%s214 + $0xb28] sm:$0xff]
        %v638 = vld [vmem:[%s214 + $0xb30] sm:$0xff]
        %v639 = vld [vmem:[%s214 + $0xb38] sm:$0xff]
        %v640 = vld [vmem:[%s214 + $0xb40] sm:$0xff]
        %v641 = vld [vmem:[%s214 + $0xb48] sm:$0xff]
        %v642 = vld [vmem:[%s214 + $0xb50] sm:$0xff]
        %v643 = vld [vmem:[%s214 + $0xb58] sm:$0xff]
        %v644 = vld [vmem:[%s214 + $0xb60] sm:$0xff]
        %v645 = vld [vmem:[%s214 + $0xb68] sm:$0xff]
        %v646 = vld [vmem:[%s214 + $0xb70] sm:$0xff]
        %v647 = vld [vmem:[%s214 + $0xb78] sm:$0xff]
        %v648 = vld [vmem:[%s214 + $0xb80] sm:$0xff]
        %v649 = vld [vmem:[%s214 + $0xb88] sm:$0xff]
        %v650 = vld [vmem:[%s214 + $0xb90] sm:$0xff]
        %v651 = vld [vmem:[%s214 + $0xb98] sm:$0xff]
        %v652 = vld [vmem:[%s214 + $0xba0] sm:$0xff]
        %v653 = vld [vmem:[%s214 + $0xba8] sm:$0xff]
        %v654 = vld [vmem:[%s214 + $0xbb0] sm:$0xff]
        %v655 = vld [vmem:[%s214 + $0xbb8] sm:$0xff]
        %v656 = vld [vmem:[%s214 + $0xbc0] sm:$0xff]
        %v657 = vld [vmem:[%s214 + $0xbc8] sm:$0xff]
        %v658 = vld [vmem:[%s214 + $0xbd0] sm:$0xff]
        %v659 = vld [vmem:[%s214 + $0xbd8] sm:$0xff]
        %v660 = vld [vmem:[%s214 + $0xbe0] sm:$0xff]
        %v661 = vld [vmem:[%s214 + $0xbe8] sm:$0xff]
        %v662 = vld [vmem:[%s214 + $0xbf0] sm:$0xff]
        %v663 = vld [vmem:[%s214 + $0xbf8] sm:$0xff]
        %v664 = vld [vmem:[%s214 + $0xc00] sm:$0xff]
        %v665 = vld [vmem:[%s214 + $0xc08] sm:$0xff]
        %v666 = vld [vmem:[%s214 + $0xc10] sm:$0xff]
        %v667 = vld [vmem:[%s214 + $0xc18] sm:$0xff]
        %v668 = vld [vmem:[%s214 + $0xc20] sm:$0xff]
        %v669 = vld [vmem:[%s214 + $0xc28] sm:$0xff]
        %v670 = vld [vmem:[%s214 + $0xc30] sm:$0xff]
        %v671 = vld [vmem:[%s214 + $0xc38] sm:$0xff]
        %v672 = vld [vmem:[%s214 + $0xc40] sm:$0xff]
        %v673 = vld [vmem:[%s214 + $0xc48] sm:$0xff]
        %v674 = vld [vmem:[%s214 + $0xc50] sm:$0xff]
        %v675 = vld [vmem:[%s214 + $0xc58] sm:$0xff]
        %v676 = vld [vmem:[%s214 + $0xc60] sm:$0xff]
        %v677 = vld [vmem:[%s214 + $0xc68] sm:$0xff]
        %v678 = vld [vmem:[%s214 + $0xc70] sm:$0xff]
        %v679 = vld [vmem:[%s214 + $0xc78] sm:$0xff]
        %v680 = vld [vmem:[%s214 + $0xc80] sm:$0xff]
        %v681 = vld [vmem:[%s214 + $0xc88] sm:$0xff]
        %v682 = vld [vmem:[%s214 + $0xc90] sm:$0xff]
        %v683 = vld [vmem:[%s214 + $0xc98] sm:$0xff]
        %v684 = vld [vmem:[%s214 + $0xca0] sm:$0xff]
        %v685 = vld [vmem:[%s214 + $0xca8] sm:$0xff]
        %v686 = vld [vmem:[%s214 + $0xcb0] sm:$0xff]
        %v687 = vld [vmem:[%s214 + $0xcb8] sm:$0xff]
        %v688 = vld [vmem:[%s214 + $0xcc0] sm:$0xff]
        %v689 = vld [vmem:[%s214 + $0xcc8] sm:$0xff]
        %v690 = vld [vmem:[%s214 + $0xcd0] sm:$0xff]
        %v691 = vld [vmem:[%s214 + $0xcd8] sm:$0xff]
        %v692 = vld [vmem:[%s214 + $0xce0] sm:$0xff]
        %v693 = vld [vmem:[%s214 + $0xce8] sm:$0xff]
        %v694 = vld [vmem:[%s214 + $0xcf0] sm:$0xff]
        %v695 = vld [vmem:[%s214 + $0xcf8] sm:$0xff]
        %v696 = vld [vmem:[%s214 + $0xd00] sm:$0xff]
        %v697 = vld [vmem:[%s214 + $0xd08] sm:$0xff]
        %v698 = vld [vmem:[%s214 + $0xd10] sm:$0xff]
        %v699 = vld [vmem:[%s214 + $0xd18] sm:$0xff]
        %v700 = vld [vmem:[%s214 + $0xd20] sm:$0xff]
        %v701 = vld [vmem:[%s214 + $0xd28] sm:$0xff]
        %v702 = vld [vmem:[%s214 + $0xd30] sm:$0xff]
        %v703 = vld [vmem:[%s214 + $0xd38] sm:$0xff]
        %v704 = vld [vmem:[%s214 + $0xd40] sm:$0xff]
        %v705 = vld [vmem:[%s214 + $0xd48] sm:$0xff]
        %v706 = vld [vmem:[%s214 + $0xd50] sm:$0xff]
        %v707 = vld [vmem:[%s214 + $0xd58] sm:$0xff]
        %v708 = vld [vmem:[%s214 + $0xd60] sm:$0xff]
        %v709 = vld [vmem:[%s214 + $0xd68] sm:$0xff]
        %v710 = vld [vmem:[%s214 + $0xd70] sm:$0xff]
        %v711 = vld [vmem:[%s214 + $0xd78] sm:$0xff]
        %v712 = vld [vmem:[%s214 + $0xd80] sm:$0xff]
        %v713 = vld [vmem:[%s214 + $0xd88] sm:$0xff]
        %v714 = vld [vmem:[%s214 + $0xd90] sm:$0xff]
        %v715 = vld [vmem:[%s214 + $0xd98] sm:$0xff]
        %v716 = vld [vmem:[%s214 + $0xda0] sm:$0xff]
        %v717 = vld [vmem:[%s214 + $0xda8] sm:$0xff]
        %v718 = vld [vmem:[%s214 + $0xdb0] sm:$0xff]
        %v719 = vld [vmem:[%s214 + $0xdb8] sm:$0xff]
        %v720 = vld [vmem:[%s214 + $0xdc0] sm:$0xff]
        %v721 = vld [vmem:[%s214 + $0xdc8] sm:$0xff]
        %v722 = vld [vmem:[%s214 + $0xdd0] sm:$0xff]
        %v723 = vld [vmem:[%s214 + $0xdd8] sm:$0xff]
        %v724 = vld [vmem:[%s214 + $0xde0] sm:$0xff]
        %v725 = vld [vmem:[%s214 + $0xde8] sm:$0xff]
        %v726 = vld [vmem:[%s214 + $0xdf0] sm:$0xff]
        %v727 = vld [vmem:[%s214 + $0xdf8] sm:$0xff]
        %v728 = vld [vmem:[%s214 + $0xe00] sm:$0xff]
        %v729 = vld [vmem:[%s214 + $0xe08] sm:$0xff]
        %v730 = vld [vmem:[%s214 + $0xe10] sm:$0xff]
        %v731 = vld [vmem:[%s214 + $0xe18] sm:$0xff]
        %v732 = vld [vmem:[%s214 + $0xe20] sm:$0xff]
        %v733 = vld [vmem:[%s214 + $0xe28] sm:$0xff]
        %v734 = vld [vmem:[%s214 + $0xe30] sm:$0xff]
        %v735 = vld [vmem:[%s214 + $0xe38] sm:$0xff]
        %v736 = vld [vmem:[%s214 + $0xe40] sm:$0xff]
        %v737 = vld [vmem:[%s214 + $0xe48] sm:$0xff]
        %v738 = vld [vmem:[%s214 + $0xe50] sm:$0xff]
        %v739 = vld [vmem:[%s214 + $0xe58] sm:$0xff]
        %v740 = vld [vmem:[%s214 + $0xe60] sm:$0xff]
        %v741 = vld [vmem:[%s214 + $0xe68] sm:$0xff]
        %v742 = vld [vmem:[%s214 + $0xe70] sm:$0xff]
        %v743 = vld [vmem:[%s214 + $0xe78] sm:$0xff]
        %v744 = vld [vmem:[%s214 + $0xe80] sm:$0xff]
        %v745 = vld [vmem:[%s214 + $0xe88] sm:$0xff]
        %v746 = vld [vmem:[%s214 + $0xe90] sm:$0xff]
        %v747 = vld [vmem:[%s214 + $0xe98] sm:$0xff]
        %v748 = vld [vmem:[%s214 + $0xea0] sm:$0xff]
        %v749 = vld [vmem:[%s214 + $0xea8] sm:$0xff]
        %v750 = vld [vmem:[%s214 + $0xeb0] sm:$0xff]
        %v751 = vld [vmem:[%s214 + $0xeb8] sm:$0xff]
        %v752 = vld [vmem:[%s214 + $0xec0] sm:$0xff]
        %v753 = vld [vmem:[%s214 + $0xec8] sm:$0xff]
        %v754 = vld [vmem:[%s214 + $0xed0] sm:$0xff]
        %v755 = vld [vmem:[%s214 + $0xed8] sm:$0xff]
        %v756 = vld [vmem:[%s214 + $0xee0] sm:$0xff]
        %v757 = vld [vmem:[%s214 + $0xee8] sm:$0xff]
        %v758 = vld [vmem:[%s214 + $0xef0] sm:$0xff]
        %v759 = vld [vmem:[%s214 + $0xef8] sm:$0xff]
        %v760 = vld [vmem:[%s214 + $0xf00] sm:$0xff]
        %v761 = vld [vmem:[%s214 + $0xf08] sm:$0xff]
        %v762 = vld [vmem:[%s214 + $0xf10] sm:$0xff]
        %v763 = vld [vmem:[%s214 + $0xf18] sm:$0xff]
        %v764 = vld [vmem:[%s214 + $0xf20] sm:$0xff]
        %v765 = vld [vmem:[%s214 + $0xf28] sm:$0xff]
        %v766 = vld [vmem:[%s214 + $0xf30] sm:$0xff]
        %v767 = vld [vmem:[%s214 + $0xf38] sm:$0xff]
        %v768 = vld [vmem:[%s214 + $0xf40] sm:$0xff]
        %v769 = vld [vmem:[%s214 + $0xf48] sm:$0xff]
        %v770 = vld [vmem:[%s214 + $0xf50] sm:$0xff]
        %v771 = vld [vmem:[%s214 + $0xf58] sm:$0xff]
        %v772 = vld [vmem:[%s214 + $0xf60] sm:$0xff]
        %v773 = vld [vmem:[%s214 + $0xf68] sm:$0xff]
        %v774 = vld [vmem:[%s214 + $0xf70] sm:$0xff]
        %v775 = vld [vmem:[%s214 + $0xf78] sm:$0xff]
        %v776 = vld [vmem:[%s214 + $0xf80] sm:$0xff]
        %v777 = vld [vmem:[%s214 + $0xf88] sm:$0xff]
        %v778 = vld [vmem:[%s214 + $0xf90] sm:$0xff]
        %v779 = vld [vmem:[%s214 + $0xf98] sm:$0xff]
        %v780 = vld [vmem:[%s214 + $0xfa0] sm:$0xff]
        %v781 = vld [vmem:[%s214 + $0xfa8] sm:$0xff]
        %v782 = vld [vmem:[%s214 + $0xfb0] sm:$0xff]
        %v783 = vld [vmem:[%s214 + $0xfb8] sm:$0xff]
        %v784 = vld [vmem:[%s214 + $0xfc0] sm:$0xff]
        %v785 = vld [vmem:[%s214 + $0xfc8] sm:$0xff]
        %v786 = vld [vmem:[%s214 + $0xfd0] sm:$0xff]
        %v787 = vld [vmem:[%s214 + $0xfd8] sm:$0xff]
        %v788 = vld [vmem:[%s214 + $0xfe0] sm:$0xff]
        %v789 = vld [vmem:[%s214 + $0xfe8] sm:$0xff]
        %v790 = vld [vmem:[%s214 + $0xff0] sm:$0xff]
        %v791 = vld [vmem:[%s214 + $0xff8] sm:$0xff]
        %v792 = vld [vmem:[%s214 + $0x1000] sm:$0xff]
        %v793 = vld [vmem:[%s214 + $0x1008] sm:$0xff]
        %v794 = vld [vmem:[%s214 + $0x1010] sm:$0xff]
        %v795 = vld [vmem:[%s214 + $0x1018] sm:$0xff]
        %v796 = vld [vmem:[%s214 + $0x1020] sm:$0xff]
        %v797 = vld [vmem:[%s214 + $0x1028] sm:$0xff]
        %v798 = vld [vmem:[%s214 + $0x1030] sm:$0xff]
        %v799 = vld [vmem:[%s214 + $0x1038] sm:$0xff]
        %v800 = vld [vmem:[%s214 + $0x1040] sm:$0xff]
        %v801 = vld [vmem:[%s214 + $0x1048] sm:$0xff]
        %v802 = vld [vmem:[%s214 + $0x1050] sm:$0xff]
        %v803 = vld [vmem:[%s214 + $0x1058] sm:$0xff]
        %v804 = vld [vmem:[%s214 + $0x1060] sm:$0xff]
        %v805 = vld [vmem:[%s214 + $0x1068] sm:$0xff]
        %v806 = vld [vmem:[%s214 + $0x1070] sm:$0xff]
        %v807 = vld [vmem:[%s214 + $0x1078] sm:$0xff]
        %v808 = vld [vmem:[%s214 + $0x1080] sm:$0xff]
        %v809 = vld [vmem:[%s214 + $0x1088] sm:$0xff]
        %v810 = vld [vmem:[%s214 + $0x1090] sm:$0xff]
        %v811 = vld [vmem:[%s214 + $0x1098] sm:$0xff]
        %v812 = vld [vmem:[%s214 + $0x10a0] sm:$0xff]
        %v813 = vld [vmem:[%s214 + $0x10a8] sm:$0xff]
        %v814 = vld [vmem:[%s214 + $0x10b0] sm:$0xff]
        %v815 = vld [vmem:[%s214 + $0x10b8] sm:$0xff]
        %v816 = vld [vmem:[%s214 + $0x10c0] sm:$0xff]
        %v817 = vld [vmem:[%s214 + $0x10c8] sm:$0xff]
        %v818 = vld [vmem:[%s214 + $0x10d0] sm:$0xff]
        %v819 = vld [vmem:[%s214 + $0x10d8] sm:$0xff]
        %v820 = vld [vmem:[%s214 + $0x10e0] sm:$0xff]
        %v821 = vld [vmem:[%s214 + $0x10e8] sm:$0xff]
        %v822 = vld [vmem:[%s214 + $0x10f0] sm:$0xff]
        %v823 = vld [vmem:[%s214 + $0x10f8] sm:$0xff]
        %v824 = vld [vmem:[%s214 + $0x1100] sm:$0xff]
        %v825 = vld [vmem:[%s214 + $0x1108] sm:$0xff]
        %v826 = vld [vmem:[%s214 + $0x1110] sm:$0xff]
        %v827 = vld [vmem:[%s214 + $0x1118] sm:$0xff]
        %v828 = vld [vmem:[%s214 + $0x1120] sm:$0xff]
        %v829 = vld [vmem:[%s214 + $0x1128] sm:$0xff]
        %v830 = vld [vmem:[%s214 + $0x1130] sm:$0xff]
        %v831 = vld [vmem:[%s214 + $0x1138] sm:$0xff]
        %v832 = vld [vmem:[%s214 + $0x1140] sm:$0xff]
        %v833 = vld [vmem:[%s214 + $0x1148] sm:$0xff]
        %v834 = vld [vmem:[%s214 + $0x1150] sm:$0xff]
        %v835 = vld [vmem:[%s214 + $0x1158] sm:$0xff]
        %v836 = vld [vmem:[%s214 + $0x1160] sm:$0xff]
        %v837 = vld [vmem:[%s214 + $0x1168] sm:$0xff]
        %v838 = vld [vmem:[%s214 + $0x1170] sm:$0xff]
        %v839 = vld [vmem:[%s214 + $0x1178] sm:$0xff]
        %v840 = vld [vmem:[%s214 + $0x1180] sm:$0xff]
        %v841 = vld [vmem:[%s214 + $0x1188] sm:$0xff]
        %v842 = vld [vmem:[%s214 + $0x1190] sm:$0xff]
        %v843 = vld [vmem:[%s214 + $0x1198] sm:$0xff]
        %v844 = vld [vmem:[%s214 + $0x11a0] sm:$0xff]
        %v845 = vld [vmem:[%s214 + $0x11a8] sm:$0xff]
        %v846 = vld [vmem:[%s214 + $0x11b0] sm:$0xff]
        %v847 = vld [vmem:[%s214 + $0x11b8] sm:$0xff]
        %v848 = vld [vmem:[%s214 + $0x11c0] sm:$0xff]
        %v849 = vld [vmem:[%s214 + $0x11c8] sm:$0xff]
        %v850 = vld [vmem:[%s214 + $0x11d0] sm:$0xff]
        %v851 = vld [vmem:[%s214 + $0x11d8] sm:$0xff]
        %v852 = vld [vmem:[%s214 + $0x11e0] sm:$0xff]
        %v853 = vld [vmem:[%s214 + $0x11e8] sm:$0xff]
        %v854 = vld [vmem:[%s214 + $0x11f0] sm:$0xff]
        %v855 = vld [vmem:[%s214 + $0x11f8] sm:$0xff]
        %v856 = vld [vmem:[%s214 + $0x1200] sm:$0xff]
        %v857 = vld [vmem:[%s214 + $0x1208] sm:$0xff]
        %v858 = vld [vmem:[%s214 + $0x1210] sm:$0xff]
        %v859 = vld [vmem:[%s214 + $0x1218] sm:$0xff]
        %v860 = vld [vmem:[%s214 + $0x1220] sm:$0xff]
        %v861 = vld [vmem:[%s214 + $0x1228] sm:$0xff]
        %v862 = vld [vmem:[%s214 + $0x1230] sm:$0xff]
        %v863 = vld [vmem:[%s214 + $0x1238] sm:$0xff]
        %v864 = vld [vmem:[%s214 + $0x1240] sm:$0xff]
        %v865 = vld [vmem:[%s214 + $0x1248] sm:$0xff]
        %v866 = vld [vmem:[%s214 + $0x1250] sm:$0xff]
        %v867 = vld [vmem:[%s214 + $0x1258] sm:$0xff]
        %v868 = vld [vmem:[%s214 + $0x1260] sm:$0xff]
        %v869 = vld [vmem:[%s214 + $0x1268] sm:$0xff]
        %v870 = vld [vmem:[%s214 + $0x1270] sm:$0xff]
        %v871 = vld [vmem:[%s214 + $0x1278] sm:$0xff]
        %v872 = vld [vmem:[%s214 + $0x1280] sm:$0xff]
        %v873 = vld [vmem:[%s214 + $0x1288] sm:$0xff]
        %v874 = vld [vmem:[%s214 + $0x1290] sm:$0xff]
        %v875 = vld [vmem:[%s214 + $0x1298] sm:$0xff]
        %v876 = vld [vmem:[%s214 + $0x12a0] sm:$0xff]
        %v877 = vld [vmem:[%s214 + $0x12a8] sm:$0xff]
        %v878 = vld [vmem:[%s214 + $0x12b0] sm:$0xff]
        %v879 = vld [vmem:[%s214 + $0x12b8] sm:$0xff]
        %v880 = vld [vmem:[%s214 + $0x12c0] sm:$0xff]
        %v881 = vld [vmem:[%s214 + $0x12c8] sm:$0xff]
        %v882 = vld [vmem:[%s214 + $0x12d0] sm:$0xff]
        %v883 = vld [vmem:[%s214 + $0x12d8] sm:$0xff]
        %v884 = vld [vmem:[%s214 + $0x12e0] sm:$0xff]
        %v885 = vld [vmem:[%s214 + $0x12e8] sm:$0xff]
        %v886 = vld [vmem:[%s214 + $0x12f0] sm:$0xff]
        %v887 = vld [vmem:[%s214 + $0x12f8] sm:$0xff]
        %v888 = vld [vmem:[%s214 + $0x1300] sm:$0xff]
        %v889 = vld [vmem:[%s214 + $0x1308] sm:$0xff]
        %v890 = vld [vmem:[%s214 + $0x1310] sm:$0xff]
        %v891 = vld [vmem:[%s214 + $0x1318] sm:$0xff]
        %v892 = vld [vmem:[%s214 + $0x1320] sm:$0xff]
        %v893 = vld [vmem:[%s214 + $0x1328] sm:$0xff]
        %v894 = vld [vmem:[%s214 + $0x1330] sm:$0xff]
        %v895 = vld [vmem:[%s214 + $0x1338] sm:$0xff]
        %v896 = vld [vmem:[%s214 + $0x1340] sm:$0xff]
        %v897 = vld [vmem:[%s214 + $0x1348] sm:$0xff]
        %v898 = vld [vmem:[%s214 + $0x1350] sm:$0xff]
        %v899 = vld [vmem:[%s214 + $0x1358] sm:$0xff]
        %v900 = vld [vmem:[%s214 + $0x1360] sm:$0xff]
        %v901 = vld [vmem:[%s214 + $0x1368] sm:$0xff]
        %v902 = vld [vmem:[%s214 + $0x1370] sm:$0xff]
        %v903 = vld [vmem:[%s214 + $0x1378] sm:$0xff]
        %v904 = vld [vmem:[%s214 + $0x1380] sm:$0xff]
        %v905 = vld [vmem:[%s214 + $0x1388] sm:$0xff]
        %v906 = vld [vmem:[%s214 + $0x1390] sm:$0xff]
        %v907 = vld [vmem:[%s214 + $0x1398] sm:$0xff]
        %v908 = vld [vmem:[%s214 + $0x13a0] sm:$0xff]
        %v909 = vld [vmem:[%s214 + $0x13a8] sm:$0xff]
        %v910 = vld [vmem:[%s214 + $0x13b0] sm:$0xff]
        %v911 = vld [vmem:[%s214 + $0x13b8] sm:$0xff]
        %v912 = vld [vmem:[%s214 + $0x13c0] sm:$0xff]
        %v913 = vld [vmem:[%s214 + $0x13c8] sm:$0xff]
        %v914 = vld [vmem:[%s214 + $0x13d0] sm:$0xff]
        %v915 = vld [vmem:[%s214 + $0x13d8] sm:$0xff]
        %v916 = vld [vmem:[%s214 + $0x13e0] sm:$0xff]
        %v917 = vld [vmem:[%s214 + $0x13e8] sm:$0xff]
        %v918 = vld [vmem:[%s214 + $0x13f0] sm:$0xff]
        %v919 = vld [vmem:[%s214 + $0x13f8] sm:$0xff]
        %v920 = vld [vmem:[%s214 + $0x1400] sm:$0xff]
        %v921 = vld [vmem:[%s214 + $0x1408] sm:$0xff]
        %v922 = vld [vmem:[%s214 + $0x1410] sm:$0xff]
        %v923 = vld [vmem:[%s214 + $0x1418] sm:$0xff]
        %v924 = vld [vmem:[%s214 + $0x1420] sm:$0xff]
        %v925 = vld [vmem:[%s214 + $0x1428] sm:$0xff]
        %v926 = vld [vmem:[%s214 + $0x1430] sm:$0xff]
        %v927 = vld [vmem:[%s214 + $0x1438] sm:$0xff]
        %v928 = vld [vmem:[%s214 + $0x1440] sm:$0xff]
        %v929 = vld [vmem:[%s214 + $0x1448] sm:$0xff]
        %v930 = vld [vmem:[%s214 + $0x1450] sm:$0xff]
        %v931 = vld [vmem:[%s214 + $0x1458] sm:$0xff]
        %v932 = vld [vmem:[%s214 + $0x1460] sm:$0xff]
        %v933 = vld [vmem:[%s214 + $0x1468] sm:$0xff]
        %v934 = vld [vmem:[%s214 + $0x1470] sm:$0xff]
        %v935 = vld [vmem:[%s214 + $0x1478] sm:$0xff]
        %v936 = vld [vmem:[%s214 + $0x1480] sm:$0xff]
        %v937 = vld [vmem:[%s214 + $0x1488] sm:$0xff]
        %v938 = vld [vmem:[%s214 + $0x1490] sm:$0xff]
        %v939 = vld [vmem:[%s214 + $0x1498] sm:$0xff]
        %v940 = vld [vmem:[%s214 + $0x14a0] sm:$0xff]
        %v941 = vld [vmem:[%s214 + $0x14a8] sm:$0xff]
        %v942 = vld [vmem:[%s214 + $0x14b0] sm:$0xff]
        %v943 = vld [vmem:[%s214 + $0x14b8] sm:$0xff]
        %v944 = vld [vmem:[%s214 + $0x14c0] sm:$0xff]
        %v945 = vld [vmem:[%s214 + $0x14c8] sm:$0xff]
        %v946 = vld [vmem:[%s214 + $0x14d0] sm:$0xff]
        %v947 = vld [vmem:[%s214 + $0x14d8] sm:$0xff]
        %v948 = vld [vmem:[%s214 + $0x14e0] sm:$0xff]
        %v949 = vld [vmem:[%s214 + $0x14e8] sm:$0xff]
        %v950 = vld [vmem:[%s214 + $0x14f0] sm:$0xff]
        %v951 = vld [vmem:[%s214 + $0x14f8] sm:$0xff]
        %v952 = vld [vmem:[%s214 + $0x1500] sm:$0xff]
        %v953 = vld [vmem:[%s214 + $0x1508] sm:$0xff]
        %v954 = vld [vmem:[%s214 + $0x1510] sm:$0xff]
        %v955 = vld [vmem:[%s214 + $0x1518] sm:$0xff]
        %v956 = vld [vmem:[%s214 + $0x1520] sm:$0xff]
        %v957 = vld [vmem:[%s214 + $0x1528] sm:$0xff]
        %v958 = vld [vmem:[%s214 + $0x1530] sm:$0xff]
        %v959 = vld [vmem:[%s214 + $0x1538] sm:$0xff]
        %v960 = vld [vmem:[%s214 + $0x1540] sm:$0xff]
        %v961 = vld [vmem:[%s214 + $0x1548] sm:$0xff]
        %v962 = vld [vmem:[%s214 + $0x1550] sm:$0xff]
        %v963 = vld [vmem:[%s214 + $0x1558] sm:$0xff]
        %v964 = vld [vmem:[%s214 + $0x1560] sm:$0xff]
        %v965 = vld [vmem:[%s214 + $0x1568] sm:$0xff]
        %v966 = vld [vmem:[%s214 + $0x1570] sm:$0xff]
        %v967 = vld [vmem:[%s214 + $0x1578] sm:$0xff]
        %v968 = vld [vmem:[%s214 + $0x1580] sm:$0xff]
        %v969 = vld [vmem:[%s214 + $0x1588] sm:$0xff]
        %v970 = vld [vmem:[%s214 + $0x1590] sm:$0xff]
        %v971 = vld [vmem:[%s214 + $0x1598] sm:$0xff]
        %v972 = vld [vmem:[%s214 + $0x15a0] sm:$0xff]
        %v973 = vld [vmem:[%s214 + $0x15a8] sm:$0xff]
        %v974 = vld [vmem:[%s214 + $0x15b0] sm:$0xff]
        %v975 = vld [vmem:[%s214 + $0x15b8] sm:$0xff]
        %v976 = vld [vmem:[%s214 + $0x15c0] sm:$0xff]
        %v977 = vld [vmem:[%s214 + $0x15c8] sm:$0xff]
        %v978 = vld [vmem:[%s214 + $0x15d0] sm:$0xff]
        %v979 = vld [vmem:[%s214 + $0x15d8] sm:$0xff]
        %v980 = vld [vmem:[%s214 + $0x15e0] sm:$0xff]
        %v981 = vld [vmem:[%s214 + $0x15e8] sm:$0xff]
        %v982 = vld [vmem:[%s214 + $0x15f0] sm:$0xff]
        %v983 = vld [vmem:[%s214 + $0x15f8] sm:$0xff]
        %v984 = vld [vmem:[%s214 + $0x1600] sm:$0xff]
        %v985 = vld [vmem:[%s214 + $0x1608] sm:$0xff]
        %v986 = vld [vmem:[%s214 + $0x1610] sm:$0xff]
        %v987 = vld [vmem:[%s214 + $0x1618] sm:$0xff]
        %v988 = vld [vmem:[%s214 + $0x1620] sm:$0xff]
        %v989 = vld [vmem:[%s214 + $0x1628] sm:$0xff]
        %v990 = vld [vmem:[%s214 + $0x1630] sm:$0xff]
        %v991 = vld [vmem:[%s214 + $0x1638] sm:$0xff]
        %v992 = vld [vmem:[%s214 + $0x1640] sm:$0xff]
        %v993 = vld [vmem:[%s214 + $0x1648] sm:$0xff]
        %v994 = vld [vmem:[%s214 + $0x1650] sm:$0xff]
        %v995 = vld [vmem:[%s214 + $0x1658] sm:$0xff]
        %v996 = vld [vmem:[%s214 + $0x1660] sm:$0xff]
        %v997 = vld [vmem:[%s214 + $0x1668] sm:$0xff]
        %v998 = vld [vmem:[%s214 + $0x1670] sm:$0xff]
        %v999 = vld [vmem:[%s214 + $0x1678] sm:$0xff]
        %v1000 = vld [vmem:[%s214 + $0x1680] sm:$0xff]
        %v1001 = vld [vmem:[%s214 + $0x1688] sm:$0xff]
        %v1002 = vld [vmem:[%s214 + $0x1690] sm:$0xff]
        %v1003 = vld [vmem:[%s214 + $0x1698] sm:$0xff]
        %v1004 = vld [vmem:[%s214 + $0x16a0] sm:$0xff]
        %v1005 = vld [vmem:[%s214 + $0x16a8] sm:$0xff]
        %v1006 = vld [vmem:[%s214 + $0x16b0] sm:$0xff]
        %v1007 = vld [vmem:[%s214 + $0x16b8] sm:$0xff]
        %v1008 = vld [vmem:[%s214 + $0x16c0] sm:$0xff]
        %v1009 = vld [vmem:[%s214 + $0x16c8] sm:$0xff]
        %v1010 = vld [vmem:[%s214 + $0x16d0] sm:$0xff]
        %v1011 = vld [vmem:[%s214 + $0x16d8] sm:$0xff]
        %v1012 = vld [vmem:[%s214 + $0x16e0] sm:$0xff]
        %v1013 = vld [vmem:[%s214 + $0x16e8] sm:$0xff]
        %v1014 = vld [vmem:[%s214 + $0x16f0] sm:$0xff]
        %v1015 = vld [vmem:[%s214 + $0x16f8] sm:$0xff]
        %v1016 = vld [vmem:[%s214 + $0x1700] sm:$0xff]
        %v1017 = vld [vmem:[%s214 + $0x1708] sm:$0xff]
        %v1018 = vld [vmem:[%s214 + $0x1710] sm:$0xff]
        %v1019 = vld [vmem:[%s214 + $0x1718] sm:$0xff]
        %v1020 = vld [vmem:[%s214 + $0x1720] sm:$0xff]
        %v1021 = vld [vmem:[%s214 + $0x1728] sm:$0xff]
        %v1022 = vld [vmem:[%s214 + $0x1730] sm:$0xff]
        %v1023 = vld [vmem:[%s214 + $0x1738] sm:$0xff]
        %v1024 = vld [vmem:[%s214 + $0x1740] sm:$0xff]
        %v1025 = vld [vmem:[%s214 + $0x1748] sm:$0xff]
        %v1026 = vld [vmem:[%s214 + $0x1750] sm:$0xff]
        %v1027 = vld [vmem:[%s214 + $0x1758] sm:$0xff]
        %v1028 = vld [vmem:[%s214 + $0x1760] sm:$0xff]
        %v1029 = vld [vmem:[%s214 + $0x1768] sm:$0xff]
        %v1030 = vld [vmem:[%s214 + $0x1770] sm:$0xff]
        %v1031 = vld [vmem:[%s214 + $0x1778] sm:$0xff]
        %v1032 = vld [vmem:[%s214 + $0x1780] sm:$0xff]
        %v1033 = vld [vmem:[%s214 + $0x1788] sm:$0xff]
        %v1034 = vld [vmem:[%s214 + $0x1790] sm:$0xff]
        %v1035 = vld [vmem:[%s214 + $0x1798] sm:$0xff]
        %v1036 = vld [vmem:[%s214 + $0x17a0] sm:$0xff]
        %v1037 = vld [vmem:[%s214 + $0x17a8] sm:$0xff]
        %v1038 = vld [vmem:[%s214 + $0x17b0] sm:$0xff]
        %v1039 = vld [vmem:[%s214 + $0x17b8] sm:$0xff]
        %v1040 = vld [vmem:[%s214 + $0x17c0] sm:$0xff]
        %v1041 = vld [vmem:[%s214 + $0x17c8] sm:$0xff]
        %v1042 = vld [vmem:[%s214 + $0x17d0] sm:$0xff]
        %v1043 = vld [vmem:[%s214 + $0x17d8] sm:$0xff]
        %v1044 = vld [vmem:[%s214 + $0x17e0] sm:$0xff]
        %v1045 = vld [vmem:[%s214 + $0x17e8] sm:$0xff]
        %v1046 = vld [vmem:[%s214 + $0x17f0] sm:$0xff]
        %v1047 = vld [vmem:[%s214 + $0x17f8] sm:$0xff]
        %v1048 = vld [vmem:[%s214 + $0x1800] sm:$0xff]
        %v1049 = vld [vmem:[%s214 + $0x1808] sm:$0xff]
        %v1050 = vld [vmem:[%s214 + $0x1810] sm:$0xff]
        %v1051 = vld [vmem:[%s214 + $0x1818] sm:$0xff]
        %v1052 = vld [vmem:[%s214 + $0x1820] sm:$0xff]
        %v1053 = vld [vmem:[%s214 + $0x1828] sm:$0xff]
        %v1054 = vld [vmem:[%s214 + $0x1830] sm:$0xff]
        %v1055 = vld [vmem:[%s214 + $0x1838] sm:$0xff]
        %v1056 = vld [vmem:[%s214 + $0x1840] sm:$0xff]
        %v1057 = vld [vmem:[%s214 + $0x1848] sm:$0xff]
        %v1058 = vld [vmem:[%s214 + $0x1850] sm:$0xff]
        %v1059 = vld [vmem:[%s214 + $0x1858] sm:$0xff]
        %v1060 = vld [vmem:[%s214 + $0x1860] sm:$0xff]
        %v1061 = vld [vmem:[%s214 + $0x1868] sm:$0xff]
        %v1062 = vld [vmem:[%s214 + $0x1870] sm:$0xff]
        %v1063 = vld [vmem:[%s214 + $0x1878] sm:$0xff]
        %v1064 = vld [vmem:[%s214 + $0x1880] sm:$0xff]
        %v1065 = vld [vmem:[%s214 + $0x1888] sm:$0xff]
        %v1066 = vld [vmem:[%s214 + $0x1890] sm:$0xff]
        %v1067 = vld [vmem:[%s214 + $0x1898] sm:$0xff]
        %v1068 = vld [vmem:[%s214 + $0x18a0] sm:$0xff]
        %v1069 = vld [vmem:[%s214 + $0x18a8] sm:$0xff]
        %v1070 = vld [vmem:[%s214 + $0x18b0] sm:$0xff]
        %v1071 = vld [vmem:[%s214 + $0x18b8] sm:$0xff]
        %v1072 = vld [vmem:[%s214 + $0x18c0] sm:$0xff]
        %v1073 = vld [vmem:[%s214 + $0x18c8] sm:$0xff]
        %v1074 = vld [vmem:[%s214 + $0x18d0] sm:$0xff]
        %v1075 = vld [vmem:[%s214 + $0x18d8] sm:$0xff]
        %v1076 = vld [vmem:[%s214 + $0x18e0] sm:$0xff]
        %v1077 = vld [vmem:[%s214 + $0x18e8] sm:$0xff]
        %v1078 = vld [vmem:[%s214 + $0x18f0] sm:$0xff]
        %v1079 = vld [vmem:[%s214 + $0x18f8] sm:$0xff]
        %v1080 = vld [vmem:[%s214 + $0x1900] sm:$0xff]
        %v1081 = vld [vmem:[%s214 + $0x1908] sm:$0xff]
        %v1082 = vld [vmem:[%s214 + $0x1910] sm:$0xff]
        %v1083 = vld [vmem:[%s214 + $0x1918] sm:$0xff]
        %v1084 = vld [vmem:[%s214 + $0x1920] sm:$0xff]
        %v1085 = vld [vmem:[%s214 + $0x1928] sm:$0xff]
        %v1086 = vld [vmem:[%s214 + $0x1930] sm:$0xff]
        %v1087 = vld [vmem:[%s214 + $0x1938] sm:$0xff]
        %v1088 = vld [vmem:[%s214 + $0x1940] sm:$0xff]
        %v1089 = vld [vmem:[%s214 + $0x1948] sm:$0xff]
        %v1090 = vld [vmem:[%s214 + $0x1950] sm:$0xff]
        %v1091 = vld [vmem:[%s214 + $0x1958] sm:$0xff]
        %v1092 = vld [vmem:[%s214 + $0x1960] sm:$0xff]
        %v1093 = vld [vmem:[%s214 + $0x1968] sm:$0xff]
        %v1094 = vld [vmem:[%s214 + $0x1970] sm:$0xff]
        %v1095 = vld [vmem:[%s214 + $0x1978] sm:$0xff]
        %v1096 = vld [vmem:[%s214 + $0x1980] sm:$0xff]
        %v1097 = vld [vmem:[%s214 + $0x1988] sm:$0xff]
        %v1098 = vld [vmem:[%s214 + $0x1990] sm:$0xff]
        %v1099 = vld [vmem:[%s214 + $0x1998] sm:$0xff]
        %v1100 = vld [vmem:[%s214 + $0x19a0] sm:$0xff]
        %v1101 = vld [vmem:[%s214 + $0x19a8] sm:$0xff]
        %v1102 = vld [vmem:[%s214 + $0x19b0] sm:$0xff]
        %v1103 = vld [vmem:[%s214 + $0x19b8] sm:$0xff]
        %v1104 = vld [vmem:[%s214 + $0x19c0] sm:$0xff]
        %v1105 = vld [vmem:[%s214 + $0x19c8] sm:$0xff]
        %v1106 = vld [vmem:[%s214 + $0x19d0] sm:$0xff]
        %v1107 = vld [vmem:[%s214 + $0x19d8] sm:$0xff]
        %v1108 = vld [vmem:[%s214 + $0x19e0] sm:$0xff]
        %v1109 = vld [vmem:[%s214 + $0x19e8] sm:$0xff]
        %v1110 = vld [vmem:[%s214 + $0x19f0] sm:$0xff]
        %v1111 = vld [vmem:[%s214 + $0x19f8] sm:$0xff]
        %v1112 = vld [vmem:[%s214 + $0x1a00] sm:$0xff]
        %v1113 = vld [vmem:[%s214 + $0x1a08] sm:$0xff]
        %v1114 = vld [vmem:[%s214 + $0x1a10] sm:$0xff]
        %v1115 = vld [vmem:[%s214 + $0x1a18] sm:$0xff]
        %v1116 = vld [vmem:[%s214 + $0x1a20] sm:$0xff]
        %v1117 = vld [vmem:[%s214 + $0x1a28] sm:$0xff]
        %v1118 = vld [vmem:[%s214 + $0x1a30] sm:$0xff]
        %v1119 = vld [vmem:[%s214 + $0x1a38] sm:$0xff]
        %v1120 = vld [vmem:[%s214 + $0x1a40] sm:$0xff]
        %v1121 = vld [vmem:[%s214 + $0x1a48] sm:$0xff]
        %v1122 = vld [vmem:[%s214 + $0x1a50] sm:$0xff]
        %v1123 = vld [vmem:[%s214 + $0x1a58] sm:$0xff]
        %v1124 = vld [vmem:[%s214 + $0x1a60] sm:$0xff]
        %v1125 = vld [vmem:[%s214 + $0x1a68] sm:$0xff]
        %v1126 = vld [vmem:[%s214 + $0x1a70] sm:$0xff]
        %v1127 = vld [vmem:[%s214 + $0x1a78] sm:$0xff]
        %v1128 = vld [vmem:[%s214 + $0x1a80] sm:$0xff]
        %v1129 = vld [vmem:[%s214 + $0x1a88] sm:$0xff]
        %v1130 = vld [vmem:[%s214 + $0x1a90] sm:$0xff]
        %v1131 = vld [vmem:[%s214 + $0x1a98] sm:$0xff]
        %v1132 = vld [vmem:[%s214 + $0x1aa0] sm:$0xff]
        %v1133 = vld [vmem:[%s214 + $0x1aa8] sm:$0xff]
        %v1134 = vld [vmem:[%s214 + $0x1ab0] sm:$0xff]
        %v1135 = vld [vmem:[%s214 + $0x1ab8] sm:$0xff]
        %v1136 = vld [vmem:[%s214 + $0x1ac0] sm:$0xff]
        %v1137 = vld [vmem:[%s214 + $0x1ac8] sm:$0xff]
        %v1138 = vld [vmem:[%s214 + $0x1ad0] sm:$0xff]
        %v1139 = vld [vmem:[%s214 + $0x1ad8] sm:$0xff]
        %v1140 = vld [vmem:[%s214 + $0x1ae0] sm:$0xff]
        %v1141 = vld [vmem:[%s214 + $0x1ae8] sm:$0xff]
        %v1142 = vld [vmem:[%s214 + $0x1af0] sm:$0xff]
        %v1143 = vld [vmem:[%s214 + $0x1af8] sm:$0xff]
        %v1144 = vld [vmem:[%s214 + $0x1b00] sm:$0xff]
        %v1145 = vld [vmem:[%s214 + $0x1b08] sm:$0xff]
        %v1146 = vld [vmem:[%s214 + $0x1b10] sm:$0xff]
        %v1147 = vld [vmem:[%s214 + $0x1b18] sm:$0xff]
        %v1148 = vld [vmem:[%s214 + $0x1b20] sm:$0xff]
        %v1149 = vld [vmem:[%s214 + $0x1b28] sm:$0xff]
        %v1150 = vld [vmem:[%s214 + $0x1b30] sm:$0xff]
        %v1151 = vld [vmem:[%s214 + $0x1b38] sm:$0xff]
        %v1152 = vld [vmem:[%s214 + $0x1b40] sm:$0xff]
        %v1153 = vld [vmem:[%s214 + $0x1b48] sm:$0xff]
        %v1154 = vld [vmem:[%s214 + $0x1b50] sm:$0xff]
        %v1155 = vld [vmem:[%s214 + $0x1b58] sm:$0xff]
        %v1156 = vld [vmem:[%s214 + $0x1b60] sm:$0xff]
        %v1157 = vld [vmem:[%s214 + $0x1b68] sm:$0xff]
        %v1158 = vld [vmem:[%s214 + $0x1b70] sm:$0xff]
        %v1159 = vld [vmem:[%s214 + $0x1b78] sm:$0xff]
        %v1160 = vld [vmem:[%s214 + $0x1b80] sm:$0xff]
        %v1161 = vld [vmem:[%s214 + $0x1b88] sm:$0xff]
        %v1162 = vld [vmem:[%s214 + $0x1b90] sm:$0xff]
        %v1163 = vld [vmem:[%s214 + $0x1b98] sm:$0xff]
        %v1164 = vld [vmem:[%s214 + $0x1ba0] sm:$0xff]
        %v1165 = vld [vmem:[%s214 + $0x1ba8] sm:$0xff]
        %v1166 = vld [vmem:[%s214 + $0x1bb0] sm:$0xff]
        %v1167 = vld [vmem:[%s214 + $0x1bb8] sm:$0xff]
        %v1168 = vld [vmem:[%s214 + $0x1bc0] sm:$0xff]
        %v1169 = vld [vmem:[%s214 + $0x1bc8] sm:$0xff]
        %v1170 = vld [vmem:[%s214 + $0x1bd0] sm:$0xff]
        %v1171 = vld [vmem:[%s214 + $0x1bd8] sm:$0xff]
        %v1172 = vld [vmem:[%s214 + $0x1be0] sm:$0xff]
        %v1173 = vld [vmem:[%s214 + $0x1be8] sm:$0xff]
        %v1174 = vld [vmem:[%s214 + $0x1bf0] sm:$0xff]
        %v1175 = vld [vmem:[%s214 + $0x1bf8] sm:$0xff]
        %v1176 = vld [vmem:[%s214 + $0x1c00] sm:$0xff]
        %v1177 = vld [vmem:[%s214 + $0x1c08] sm:$0xff]
        %v1178 = vld [vmem:[%s214 + $0x1c10] sm:$0xff]
        %v1179 = vld [vmem:[%s214 + $0x1c18] sm:$0xff]
        %v1180 = vld [vmem:[%s214 + $0x1c20] sm:$0xff]
        %v1181 = vld [vmem:[%s214 + $0x1c28] sm:$0xff]
        %v1182 = vld [vmem:[%s214 + $0x1c30] sm:$0xff]
        %v1183 = vld [vmem:[%s214 + $0x1c38] sm:$0xff]
        %v1184 = vld [vmem:[%s214 + $0x1c40] sm:$0xff]
        %v1185 = vld [vmem:[%s214 + $0x1c48] sm:$0xff]
        %v1186 = vld [vmem:[%s214 + $0x1c50] sm:$0xff]
        %v1187 = vld [vmem:[%s214 + $0x1c58] sm:$0xff]
        %v1188 = vld [vmem:[%s214 + $0x1c60] sm:$0xff]
        %v1189 = vld [vmem:[%s214 + $0x1c68] sm:$0xff]
        %v1190 = vld [vmem:[%s214 + $0x1c70] sm:$0xff]
        %v1191 = vld [vmem:[%s214 + $0x1c78] sm:$0xff]
        %v1192 = vld [vmem:[%s214 + $0x1c80] sm:$0xff]
        %v1193 = vld [vmem:[%s214 + $0x1c88] sm:$0xff]
        %v1194 = vld [vmem:[%s214 + $0x1c90] sm:$0xff]
        %v1195 = vld [vmem:[%s214 + $0x1c98] sm:$0xff]
        %v1196 = vld [vmem:[%s214 + $0x1ca0] sm:$0xff]
        %v1197 = vld [vmem:[%s214 + $0x1ca8] sm:$0xff]
        %v1198 = vld [vmem:[%s214 + $0x1cb0] sm:$0xff]
        %v1199 = vld [vmem:[%s214 + $0x1cb8] sm:$0xff]
        %v1200 = vld [vmem:[%s214 + $0x1cc0] sm:$0xff]
        %v1201 = vld [vmem:[%s214 + $0x1cc8] sm:$0xff]
        %v1202 = vld [vmem:[%s214 + $0x1cd0] sm:$0xff]
        %v1203 = vld [vmem:[%s214 + $0x1cd8] sm:$0xff]
        %v1204 = vld [vmem:[%s214 + $0x1ce0] sm:$0xff]
        %v1205 = vld [vmem:[%s214 + $0x1ce8] sm:$0xff]
        %v1206 = vld [vmem:[%s214 + $0x1cf0] sm:$0xff]
        %v1207 = vld [vmem:[%s214 + $0x1cf8] sm:$0xff]
        %v1208 = vld [vmem:[%s214 + $0x1d00] sm:$0xff]
        %v1209 = vld [vmem:[%s214 + $0x1d08] sm:$0xff]
        %v1210 = vld [vmem:[%s214 + $0x1d10] sm:$0xff]
        %v1211 = vld [vmem:[%s214 + $0x1d18] sm:$0xff]
        %v1212 = vld [vmem:[%s214 + $0x1d20] sm:$0xff]
        %v1213 = vld [vmem:[%s214 + $0x1d28] sm:$0xff]
        %v1214 = vld [vmem:[%s214 + $0x1d30] sm:$0xff]
        %v1215 = vld [vmem:[%s214 + $0x1d38] sm:$0xff]
        %v1216 = vld [vmem:[%s214 + $0x1d40] sm:$0xff]
        %v1217 = vld [vmem:[%s214 + $0x1d48] sm:$0xff]
        %v1218 = vld [vmem:[%s214 + $0x1d50] sm:$0xff]
        %v1219 = vld [vmem:[%s214 + $0x1d58] sm:$0xff]
        %v1220 = vld [vmem:[%s214 + $0x1d60] sm:$0xff]
        %v1221 = vld [vmem:[%s214 + $0x1d68] sm:$0xff]
        %v1222 = vld [vmem:[%s214 + $0x1d70] sm:$0xff]
        %v1223 = vld [vmem:[%s214 + $0x1d78] sm:$0xff]
        %v1224 = vld [vmem:[%s214 + $0x1d80] sm:$0xff]
        %v1225 = vld [vmem:[%s214 + $0x1d88] sm:$0xff]
        %v1226 = vld [vmem:[%s214 + $0x1d90] sm:$0xff]
        %v1227 = vld [vmem:[%s214 + $0x1d98] sm:$0xff]
        %v1228 = vld [vmem:[%s214 + $0x1da0] sm:$0xff]
        %v1229 = vld [vmem:[%s214 + $0x1da8] sm:$0xff]
        %v1230 = vld [vmem:[%s214 + $0x1db0] sm:$0xff]
        %v1231 = vld [vmem:[%s214 + $0x1db8] sm:$0xff]
        %v1232 = vld [vmem:[%s214 + $0x1dc0] sm:$0xff]
        %v1233 = vld [vmem:[%s214 + $0x1dc8] sm:$0xff]
        %v1234 = vld [vmem:[%s214 + $0x1dd0] sm:$0xff]
        %v1235 = vld [vmem:[%s214 + $0x1dd8] sm:$0xff]
        %v1236 = vld [vmem:[%s214 + $0x1de0] sm:$0xff]
        %v1237 = vld [vmem:[%s214 + $0x1de8] sm:$0xff]
        %v1238 = vld [vmem:[%s214 + $0x1df0] sm:$0xff]
        %v1239 = vld [vmem:[%s214 + $0x1df8] sm:$0xff]
        %v1240 = vld [vmem:[%s214 + $0x1e00] sm:$0xff]
        %v1241 = vld [vmem:[%s214 + $0x1e08] sm:$0xff]
        %v1242 = vld [vmem:[%s214 + $0x1e10] sm:$0xff]
        %v1243 = vld [vmem:[%s214 + $0x1e18] sm:$0xff]
        %v1244 = vld [vmem:[%s214 + $0x1e20] sm:$0xff]
        %v1245 = vld [vmem:[%s214 + $0x1e28] sm:$0xff]
        %v1246 = vld [vmem:[%s214 + $0x1e30] sm:$0xff]
        %v1247 = vld [vmem:[%s214 + $0x1e38] sm:$0xff]
        %v1248 = vld [vmem:[%s214 + $0x1e40] sm:$0xff]
        %v1249 = vld [vmem:[%s214 + $0x1e48] sm:$0xff]
        %v1250 = vld [vmem:[%s214 + $0x1e50] sm:$0xff]
        %v1251 = vld [vmem:[%s214 + $0x1e58] sm:$0xff]
        %v1252 = vld [vmem:[%s214 + $0x1e60] sm:$0xff]
        %v1253 = vld [vmem:[%s214 + $0x1e68] sm:$0xff]
        %v1254 = vld [vmem:[%s214 + $0x1e70] sm:$0xff]
        %v1255 = vld [vmem:[%s214 + $0x1e78] sm:$0xff]
        %v1256 = vld [vmem:[%s214 + $0x1e80] sm:$0xff]
        %v1257 = vld [vmem:[%s214 + $0x1e88] sm:$0xff]
        %v1258 = vld [vmem:[%s214 + $0x1e90] sm:$0xff]
        %v1259 = vld [vmem:[%s214 + $0x1e98] sm:$0xff]
        %v1260 = vld [vmem:[%s214 + $0x1ea0] sm:$0xff]
        %v1261 = vld [vmem:[%s214 + $0x1ea8] sm:$0xff]
        %v1262 = vld [vmem:[%s214 + $0x1eb0] sm:$0xff]
        %v1263 = vld [vmem:[%s214 + $0x1eb8] sm:$0xff]
        %v1264 = vld [vmem:[%s214 + $0x1ec0] sm:$0xff]
        %v1265 = vld [vmem:[%s214 + $0x1ec8] sm:$0xff]
        %v1266 = vld [vmem:[%s214 + $0x1ed0] sm:$0xff]
        %v1267 = vld [vmem:[%s214 + $0x1ed8] sm:$0xff]
        %v1268 = vld [vmem:[%s214 + $0x1ee0] sm:$0xff]
        %v1269 = vld [vmem:[%s214 + $0x1ee8] sm:$0xff]
        %v1270 = vld [vmem:[%s214 + $0x1ef0] sm:$0xff]
        %v1271 = vld [vmem:[%s214 + $0x1ef8] sm:$0xff]
        %v1272 = vld [vmem:[%s214 + $0x1f00] sm:$0xff]
        %v1273 = vld [vmem:[%s214 + $0x1f08] sm:$0xff]
        %v1274 = vld [vmem:[%s214 + $0x1f10] sm:$0xff]
        %v1275 = vld [vmem:[%s214 + $0x1f18] sm:$0xff]
        %v1276 = vld [vmem:[%s214 + $0x1f20] sm:$0xff]
        %v1277 = vld [vmem:[%s214 + $0x1f28] sm:$0xff]
        %v1278 = vld [vmem:[%s214 + $0x1f30] sm:$0xff]
        %v1279 = vld [vmem:[%s214 + $0x1f38] sm:$0xff]
        %v1280 = vld [vmem:[%s214 + $0x1f40] sm:$0xff]
        %v1281 = vld [vmem:[%s214 + $0x1f48] sm:$0xff]
        %v1282 = vld [vmem:[%s214 + $0x1f50] sm:$0xff]
        %v1283 = vld [vmem:[%s214 + $0x1f58] sm:$0xff]
        %v1284 = vld [vmem:[%s214 + $0x1f60] sm:$0xff]
        %v1285 = vld [vmem:[%s214 + $0x1f68] sm:$0xff]
        %v1286 = vld [vmem:[%s214 + $0x1f70] sm:$0xff]
        %v1287 = vld [vmem:[%s214 + $0x1f78] sm:$0xff]
        %v1288 = vld [vmem:[%s214 + $0x1f80] sm:$0xff]
        %v1289 = vld [vmem:[%s214 + $0x1f88] sm:$0xff]
        %v1290 = vld [vmem:[%s214 + $0x1f90] sm:$0xff]
        %v1291 = vld [vmem:[%s214 + $0x1f98] sm:$0xff]
        %v1292 = vld [vmem:[%s214 + $0x1fa0] sm:$0xff]
        %v1293 = vld [vmem:[%s214 + $0x1fa8] sm:$0xff]
        %v1294 = vld [vmem:[%s214 + $0x1fb0] sm:$0xff]
        %v1295 = vld [vmem:[%s214 + $0x1fb8] sm:$0xff]
        %v1296 = vld [vmem:[%s214 + $0x1fc0] sm:$0xff]
        %v1297 = vld [vmem:[%s214 + $0x1fc8] sm:$0xff]
        %v1298 = vld [vmem:[%s214 + $0x1fd0] sm:$0xff]
        %v1299 = vld [vmem:[%s214 + $0x1fd8] sm:$0xff]
        %v1300 = vld [vmem:[%s214 + $0x1fe0] sm:$0xff]
        %v1301 = vld [vmem:[%s214 + $0x1fe8] sm:$0xff]
        %v1302 = vld [vmem:[%s214 + $0x1ff0] sm:$0xff]
        %v1303 = vld [vmem:[%s214 + $0x1ff8] sm:$0xff]
        %v1304 = vld [vmem:[%s214 + $0x2000] sm:$0xff]
        %v1305 = vld [vmem:[%s214 + $0x2008] sm:$0xff]
        %v1306 = vld [vmem:[%s214 + $0x2010] sm:$0xff]
        %v1307 = vld [vmem:[%s214 + $0x2018] sm:$0xff]
        %v1308 = vld [vmem:[%s214 + $0x2020] sm:$0xff]
        %v1309 = vld [vmem:[%s214 + $0x2028] sm:$0xff]
        %v1310 = vld [vmem:[%s214 + $0x2030] sm:$0xff]
        %v1311 = vld [vmem:[%s214 + $0x2038] sm:$0xff]
        %v1312 = vld [vmem:[%s214 + $0x2040] sm:$0xff]
        %v1313 = vld [vmem:[%s214 + $0x2048] sm:$0xff]
        %v1314 = vld [vmem:[%s214 + $0x2050] sm:$0xff]
        %v1315 = vld [vmem:[%s214 + $0x2058] sm:$0xff]
        %v1316 = vld [vmem:[%s214 + $0x2060] sm:$0xff]
        %v1317 = vld [vmem:[%s214 + $0x2068] sm:$0xff]
        %v1318 = vld [vmem:[%s214 + $0x2070] sm:$0xff]
        %v1319 = vld [vmem:[%s214 + $0x2078] sm:$0xff]
        %v1320 = vld [vmem:[%s214 + $0x2080] sm:$0xff]
        %v1321 = vld [vmem:[%s214 + $0x2088] sm:$0xff]
        %v1322 = vld [vmem:[%s214 + $0x2090] sm:$0xff]
        %v1323 = vld [vmem:[%s214 + $0x2098] sm:$0xff]
        %v1324 = vld [vmem:[%s214 + $0x20a0] sm:$0xff]
        %v1325 = vld [vmem:[%s214 + $0x20a8] sm:$0xff]
        %v1326 = vld [vmem:[%s214 + $0x20b0] sm:$0xff]
        %v1327 = vld [vmem:[%s214 + $0x20b8] sm:$0xff]
        %v1328 = vld [vmem:[%s214 + $0x20c0] sm:$0xff]
        %v1329 = vld [vmem:[%s214 + $0x20c8] sm:$0xff]
        %v1330 = vld [vmem:[%s214 + $0x20d0] sm:$0xff]
        %v1331 = vld [vmem:[%s214 + $0x20d8] sm:$0xff]
        %v1332 = vld [vmem:[%s214 + $0x20e0] sm:$0xff]
        %v1333 = vld [vmem:[%s214 + $0x20e8] sm:$0xff]
        %v1334 = vld [vmem:[%s214 + $0x20f0] sm:$0xff]
        %v1335 = vld [vmem:[%s214 + $0x20f8] sm:$0xff]
        %v1336 = vld [vmem:[%s214 + $0x2100] sm:$0xff]
        %v1337 = vld [vmem:[%s214 + $0x2108] sm:$0xff]
        %v1338 = vld [vmem:[%s214 + $0x2110] sm:$0xff]
        %v1339 = vld [vmem:[%s214 + $0x2118] sm:$0xff]
        %v1340 = vld [vmem:[%s214 + $0x2120] sm:$0xff]
        %v1341 = vld [vmem:[%s214 + $0x2128] sm:$0xff]
        %v1342 = vld [vmem:[%s214 + $0x2130] sm:$0xff]
        %v1343 = vld [vmem:[%s214 + $0x2138] sm:$0xff]
        %v1344 = vld [vmem:[%s214 + $0x2140] sm:$0xff]
        %v1345 = vld [vmem:[%s214 + $0x2148] sm:$0xff]
        %v1346 = vld [vmem:[%s214 + $0x2150] sm:$0xff]
        %v1347 = vld [vmem:[%s214 + $0x2158] sm:$0xff]
        %v1348 = vld [vmem:[%s214 + $0x2160] sm:$0xff]
        %v1349 = vld [vmem:[%s214 + $0x2168] sm:$0xff]
        %v1350 = vld [vmem:[%s214 + $0x2170] sm:$0xff]
        %v1351 = vld [vmem:[%s214 + $0x2178] sm:$0xff]
        %v1352 = vld [vmem:[%s214 + $0x2180] sm:$0xff]
        %v1353 = vld [vmem:[%s214 + $0x2188] sm:$0xff]
        %v1354 = vld [vmem:[%s214 + $0x2190] sm:$0xff]
        %v1355 = vld [vmem:[%s214 + $0x2198] sm:$0xff]
        %v1356 = vld [vmem:[%s214 + $0x21a0] sm:$0xff]
        %v1357 = vld [vmem:[%s214 + $0x21a8] sm:$0xff]
        %v1358 = vld [vmem:[%s214 + $0x21b0] sm:$0xff]
        %v1359 = vld [vmem:[%s214 + $0x21b8] sm:$0xff]
        %v1360 = vld [vmem:[%s214 + $0x21c0] sm:$0xff]
        %v1361 = vld [vmem:[%s214 + $0x21c8] sm:$0xff]
        %v1362 = vld [vmem:[%s214 + $0x21d0] sm:$0xff]
        %v1363 = vld [vmem:[%s214 + $0x21d8] sm:$0xff]
        %v1364 = vld [vmem:[%s214 + $0x21e0] sm:$0xff]
        %v1365 = vld [vmem:[%s214 + $0x21e8] sm:$0xff]
        %v1366 = vld [vmem:[%s214 + $0x21f0] sm:$0xff]
        %v1367 = vld [vmem:[%s214 + $0x21f8] sm:$0xff]
        %v1368 = vld [vmem:[%s214 + $0x2200] sm:$0xff]
        %v1369 = vld [vmem:[%s214 + $0x2208] sm:$0xff]
        %v1370 = vld [vmem:[%s214 + $0x2210] sm:$0xff]
        %v1371 = vld [vmem:[%s214 + $0x2218] sm:$0xff]
        %v1372 = vld [vmem:[%s214 + $0x2220] sm:$0xff]
        %v1373 = vld [vmem:[%s214 + $0x2228] sm:$0xff]
        %v1374 = vld [vmem:[%s214 + $0x2230] sm:$0xff]
        %v1375 = vld [vmem:[%s214 + $0x2238] sm:$0xff]
        %v1376 = vld [vmem:[%s214 + $0x2240] sm:$0xff]
        %v1377 = vld [vmem:[%s214 + $0x2248] sm:$0xff]
        %v1378 = vld [vmem:[%s214 + $0x2250] sm:$0xff]
        %v1379 = vld [vmem:[%s214 + $0x2258] sm:$0xff]
        %v1380 = vld [vmem:[%s214 + $0x2260] sm:$0xff]
        %v1381 = vld [vmem:[%s214 + $0x2268] sm:$0xff]
        %v1382 = vld [vmem:[%s214 + $0x2270] sm:$0xff]
        %v1383 = vld [vmem:[%s214 + $0x2278] sm:$0xff]
        %v1384 = vld [vmem:[%s214 + $0x2280] sm:$0xff]
        %v1385 = vld [vmem:[%s214 + $0x2288] sm:$0xff]
        %v1386 = vld [vmem:[%s214 + $0x2290] sm:$0xff]
        %v1387 = vld [vmem:[%s214 + $0x2298] sm:$0xff]
        %v1388 = vld [vmem:[%s214 + $0x22a0] sm:$0xff]
        %v1389 = vld [vmem:[%s214 + $0x22a8] sm:$0xff]
        %v1390 = vld [vmem:[%s214 + $0x22b0] sm:$0xff]
        %v1391 = vld [vmem:[%s214 + $0x22b8] sm:$0xff]
        %v1392 = vld [vmem:[%s214 + $0x22c0] sm:$0xff]
        %v1393 = vld [vmem:[%s214 + $0x22c8] sm:$0xff]
        %v1394 = vld [vmem:[%s214 + $0x22d0] sm:$0xff]
        %v1395 = vld [vmem:[%s214 + $0x22d8] sm:$0xff]
        %v1396 = vld [vmem:[%s214 + $0x22e0] sm:$0xff]
        %v1397 = vld [vmem:[%s214 + $0x22e8] sm:$0xff]
        %v1398 = vld [vmem:[%s214 + $0x22f0] sm:$0xff]
        %v1399 = vld [vmem:[%s214 + $0x22f8] sm:$0xff]
        %v1400 = vld [vmem:[%s214 + $0x2300] sm:$0xff]
        %v1401 = vld [vmem:[%s214 + $0x2308] sm:$0xff]
        %v1402 = vld [vmem:[%s214 + $0x2310] sm:$0xff]
        %v1403 = vld [vmem:[%s214 + $0x2318] sm:$0xff]
        %v1404 = vld [vmem:[%s214 + $0x2320] sm:$0xff]
        %v1405 = vld [vmem:[%s214 + $0x2328] sm:$0xff]
        %v1406 = vld [vmem:[%s214 + $0x2330] sm:$0xff]
        %v1407 = vld [vmem:[%s214 + $0x2338] sm:$0xff]
        %v1408 = vld [vmem:[%s214 + $0x2340] sm:$0xff]
        %v1409 = vld [vmem:[%s214 + $0x2348] sm:$0xff]
        %v1410 = vld [vmem:[%s214 + $0x2350] sm:$0xff]
        %v1411 = vld [vmem:[%s214 + $0x2358] sm:$0xff]
        %v1412 = vld [vmem:[%s214 + $0x2360] sm:$0xff]
        %v1413 = vld [vmem:[%s214 + $0x2368] sm:$0xff]
        %v1414 = vld [vmem:[%s214 + $0x2370] sm:$0xff]
        %v1415 = vld [vmem:[%s214 + $0x2378] sm:$0xff]
        %v1416 = vld [vmem:[%s214 + $0x2380] sm:$0xff]
        %v1417 = vld [vmem:[%s214 + $0x2388] sm:$0xff]
        %v1418 = vld [vmem:[%s214 + $0x2390] sm:$0xff]
        %v1419 = vld [vmem:[%s214 + $0x2398] sm:$0xff]
        %v1420 = vld [vmem:[%s214 + $0x23a0] sm:$0xff]
        %v1421 = vld [vmem:[%s214 + $0x23a8] sm:$0xff]
        %v1422 = vld [vmem:[%s214 + $0x23b0] sm:$0xff]
        %v1423 = vld [vmem:[%s214 + $0x23b8] sm:$0xff]
        %v1424 = vld [vmem:[%s214 + $0x23c0] sm:$0xff]
        %v1425 = vld [vmem:[%s214 + $0x23c8] sm:$0xff]
        %v1426 = vld [vmem:[%s214 + $0x23d0] sm:$0xff]
        %v1427 = vld [vmem:[%s214 + $0x23d8] sm:$0xff]
        %v1428 = vld [vmem:[%s214 + $0x23e0] sm:$0xff]
        %v1429 = vld [vmem:[%s214 + $0x23e8] sm:$0xff]
        %v1430 = vld [vmem:[%s214 + $0x23f0] sm:$0xff]
        %v1431 = vld [vmem:[%s214 + $0x23f8] sm:$0xff]
        %v1437 = vcombine.high %v275, %v275
        %v1439 = vunpack.c.l.s4 1966171168
        %v1440 = vunpack.c.0.s8 %v1439
        %v1441 = vlaneseq
        %v1442 = vshrl.u32 %v1441, 7
        %v1443 = vsub.s32 %v1440, %v1442
        %v1444 = vrot.slane %v275, %v1443
        %v1446 = vunpack.c.l.s4 1966171168
        %v1447 = vunpack.c.0.s8 %v1446
        %v1448 = vlaneseq
        %v1449 = vshrl.u32 %v1448, 7
        %v1450 = vsub.s32 %v1447, %v1449
        %v1451 = vrot.slane %v1437, %v1450
        %v1452 = vcombine.high %v1444, %v1444
        %v1453 = vcombine.high %v1451, %v1451
        %v1455 = vunpack.c.l.s4 1966171168
        %v1456 = vunpack.c.0.s8 %v1455
        %v1457 = vlaneseq
        %v1458 = vshrl.u32 %v1457, 7
        %v1459 = vsub.s32 %v1456, %v1458
        %v1460 = vrot.slane %v1444, %v1459
        %v1462 = vunpack.c.l.s4 1966171168
        %v1463 = vunpack.c.0.s8 %v1462
        %v1464 = vlaneseq
        %v1465 = vshrl.u32 %v1464, 7
        %v1466 = vsub.s32 %v1463, %v1465
        %v1467 = vrot.slane %v1451, %v1466
        %v1469 = vunpack.c.l.s4 1966171168
        %v1470 = vunpack.c.0.s8 %v1469
        %v1471 = vlaneseq
        %v1472 = vshrl.u32 %v1471, 7
        %v1473 = vsub.s32 %v1470, %v1472
        %v1474 = vrot.slane %v1452, %v1473
        %v1476 = vunpack.c.l.s4 1966171168
        %v1477 = vunpack.c.0.s8 %v1476
        %v1478 = vlaneseq
        %v1479 = vshrl.u32 %v1478, 7
        %v1480 = vsub.s32 %v1477, %v1479
        %v1481 = vrot.slane %v1453, %v1480
        %v1482 = vcombine.high %v1460, %v1460
        %v1483 = vcombine.high %v1467, %v1467
        %v1484 = vcombine.high %v1474, %v1474
        %v1485 = vcombine.high %v1481, %v1481
        %v1486 = vcombine.high %v276, %v276
        %v1488 = vunpack.c.l.s4 1966171168
        %v1489 = vunpack.c.0.s8 %v1488
        %v1490 = vlaneseq
        %v1491 = vshrl.u32 %v1490, 7
        %v1492 = vsub.s32 %v1489, %v1491
        %v1493 = vrot.slane %v276, %v1492
        %v1495 = vunpack.c.l.s4 1966171168
        %v1496 = vunpack.c.0.s8 %v1495
        %v1497 = vlaneseq
        %v1498 = vshrl.u32 %v1497, 7
        %v1499 = vsub.s32 %v1496, %v1498
        %v1500 = vrot.slane %v1486, %v1499
        %v1501 = vcombine.high %v1493, %v1493
        %v1502 = vcombine.high %v1500, %v1500
        %v1504 = vunpack.c.l.s4 1966171168
        %v1505 = vunpack.c.0.s8 %v1504
        %v1506 = vlaneseq
        %v1507 = vshrl.u32 %v1506, 7
        %v1508 = vsub.s32 %v1505, %v1507
        %v1509 = vrot.slane %v1493, %v1508
        %v1511 = vunpack.c.l.s4 1966171168
        %v1512 = vunpack.c.0.s8 %v1511
        %v1513 = vlaneseq
        %v1514 = vshrl.u32 %v1513, 7
        %v1515 = vsub.s32 %v1512, %v1514
        %v1516 = vrot.slane %v1500, %v1515
        %v1518 = vunpack.c.l.s4 1966171168
        %v1519 = vunpack.c.0.s8 %v1518
        %v1520 = vlaneseq
        %v1521 = vshrl.u32 %v1520, 7
        %v1522 = vsub.s32 %v1519, %v1521
        %v1523 = vrot.slane %v1501, %v1522
        %v1525 = vunpack.c.l.s4 1966171168
        %v1526 = vunpack.c.0.s8 %v1525
        %v1527 = vlaneseq
        %v1528 = vshrl.u32 %v1527, 7
        %v1529 = vsub.s32 %v1526, %v1528
        %v1530 = vrot.slane %v1502, %v1529
        %v1531 = vcombine.high %v1509, %v1509
        %v1532 = vcombine.high %v1516, %v1516
        %v1533 = vcombine.high %v1523, %v1523
        %v1534 = vcombine.high %v1530, %v1530
        %v1535 = vcombine.high %v277, %v277
        %v1537 = vunpack.c.l.s4 1966171168
        %v1538 = vunpack.c.0.s8 %v1537
        %v1539 = vlaneseq
        %v1540 = vshrl.u32 %v1539, 7
        %v1541 = vsub.s32 %v1538, %v1540
        %v1542 = vrot.slane %v277, %v1541
        %v1544 = vunpack.c.l.s4 1966171168
        %v1545 = vunpack.c.0.s8 %v1544
        %v1546 = vlaneseq
        %v1547 = vshrl.u32 %v1546, 7
        %v1548 = vsub.s32 %v1545, %v1547
        %v1549 = vrot.slane %v1535, %v1548
        %v1550 = vcombine.high %v1542, %v1542
        %v1551 = vcombine.high %v1549, %v1549
        %v1553 = vunpack.c.l.s4 1966171168
        %v1554 = vunpack.c.0.s8 %v1553
        %v1555 = vlaneseq
        %v1556 = vshrl.u32 %v1555, 7
        %v1557 = vsub.s32 %v1554, %v1556
        %v1558 = vrot.slane %v1542, %v1557
        %v1560 = vunpack.c.l.s4 1966171168
        %v1561 = vunpack.c.0.s8 %v1560
        %v1562 = vlaneseq
        %v1563 = vshrl.u32 %v1562, 7
        %v1564 = vsub.s32 %v1561, %v1563
        %v1565 = vrot.slane %v1549, %v1564
        %v1567 = vunpack.c.l.s4 1966171168
        %v1568 = vunpack.c.0.s8 %v1567
        %v1569 = vlaneseq
        %v1570 = vshrl.u32 %v1569, 7
        %v1571 = vsub.s32 %v1568, %v1570
        %v1572 = vrot.slane %v1550, %v1571
        %v1574 = vunpack.c.l.s4 1966171168
        %v1575 = vunpack.c.0.s8 %v1574
        %v1576 = vlaneseq
        %v1577 = vshrl.u32 %v1576, 7
        %v1578 = vsub.s32 %v1575, %v1577
        %v1579 = vrot.slane %v1551, %v1578
        %v1580 = vcombine.high %v1558, %v1558
        %v1581 = vcombine.high %v1565, %v1565
        %v1582 = vcombine.high %v1572, %v1572
        %v1583 = vcombine.high %v1579, %v1579
        %v1584 = vcombine.high %v278, %v278
        %v1586 = vunpack.c.l.s4 1966171168
        %v1587 = vunpack.c.0.s8 %v1586
        %v1588 = vlaneseq
        %v1589 = vshrl.u32 %v1588, 7
        %v1590 = vsub.s32 %v1587, %v1589
        %v1591 = vrot.slane %v278, %v1590
        %v1593 = vunpack.c.l.s4 1966171168
        %v1594 = vunpack.c.0.s8 %v1593
        %v1595 = vlaneseq
        %v1596 = vshrl.u32 %v1595, 7
        %v1597 = vsub.s32 %v1594, %v1596
        %v1598 = vrot.slane %v1584, %v1597
        %v1599 = vcombine.high %v1591, %v1591
        %v1600 = vcombine.high %v1598, %v1598
        %v1602 = vunpack.c.l.s4 1966171168
        %v1603 = vunpack.c.0.s8 %v1602
        %v1604 = vlaneseq
        %v1605 = vshrl.u32 %v1604, 7
        %v1606 = vsub.s32 %v1603, %v1605
        %v1607 = vrot.slane %v1591, %v1606
        %v1609 = vunpack.c.l.s4 1966171168
        %v1610 = vunpack.c.0.s8 %v1609
        %v1611 = vlaneseq
        %v1612 = vshrl.u32 %v1611, 7
        %v1613 = vsub.s32 %v1610, %v1612
        %v1614 = vrot.slane %v1598, %v1613
        %v1616 = vunpack.c.l.s4 1966171168
        %v1617 = vunpack.c.0.s8 %v1616
        %v1618 = vlaneseq
        %v1619 = vshrl.u32 %v1618, 7
        %v1620 = vsub.s32 %v1617, %v1619
        %v1621 = vrot.slane %v1599, %v1620
        %v1623 = vunpack.c.l.s4 1966171168
        %v1624 = vunpack.c.0.s8 %v1623
        %v1625 = vlaneseq
        %v1626 = vshrl.u32 %v1625, 7
        %v1627 = vsub.s32 %v1624, %v1626
        %v1628 = vrot.slane %v1600, %v1627
        %v1629 = vcombine.high %v1607, %v1607
        %v1630 = vcombine.high %v1614, %v1614
        %v1631 = vcombine.high %v1621, %v1621
        %v1632 = vcombine.high %v1628, %v1628
        %v1634 = vunpack.c.l.s4 1966171168
        %v1635 = vunpack.c.0.s8 %v1634
        %v1636 = vlaneseq
        %v1637 = vshrl.u32 %v1636, 7
        %v1638 = vsub.s32 %v1635, %v1637
        %v1639 = vrot.slane %v279, %v1638
        %v1640 = vcombine.high %v1639, %v1639
        %v1642 = vunpack.c.l.s4 1966171168
        %v1643 = vunpack.c.0.s8 %v1642
        %v1644 = vlaneseq
        %v1645 = vshrl.u32 %v1644, 7
        %v1646 = vsub.s32 %v1643, %v1645
        %v1647 = vrot.slane %v1639, %v1646
        %v1649 = vunpack.c.l.s4 1966171168
        %v1650 = vunpack.c.0.s8 %v1649
        %v1651 = vlaneseq
        %v1652 = vshrl.u32 %v1651, 7
        %v1653 = vsub.s32 %v1650, %v1652
        %v1654 = vrot.slane %v1640, %v1653
        %v1655 = vcombine.high %v1647, %v1647
        %v1656 = vcombine.high %v1654, %v1654
        %v2845 = vunpack.c.l.b16 %v280
        %v2846 = vunpack.c.h.b16 %v280
        %v2847 = vunpack.c.l.b16 %v281
        %v2848 = vunpack.c.h.b16 %v281
        %v2849 = vunpack.c.l.b16 %v282
        %v2850 = vunpack.c.h.b16 %v282
        %v2851 = vunpack.c.l.b16 %v283
        %v2852 = vunpack.c.h.b16 %v283
        %v2853 = vunpack.c.l.b16 %v284
        %v2854 = vunpack.c.h.b16 %v284
        %v2855 = vunpack.c.l.b16 %v285
        %v2856 = vunpack.c.h.b16 %v285
        %v2857 = vunpack.c.l.b16 %v286
        %v2858 = vunpack.c.h.b16 %v286
        %v2859 = vunpack.c.l.b16 %v287
        %v2860 = vunpack.c.h.b16 %v287
        %v2861 = vunpack.c.l.b16 %v288
        %v2862 = vunpack.c.h.b16 %v288
        %v2863 = vunpack.c.l.b16 %v289
        %v2864 = vunpack.c.h.b16 %v289
        %v2865 = vunpack.c.l.b16 %v290
        %v2866 = vunpack.c.h.b16 %v290
        %v2867 = vunpack.c.l.b16 %v291
        %v2868 = vunpack.c.h.b16 %v291
        %v2869 = vunpack.c.l.b16 %v292
        %v2870 = vunpack.c.h.b16 %v292
        %v2871 = vunpack.c.l.b16 %v293
        %v2872 = vunpack.c.h.b16 %v293
        %v2873 = vunpack.c.l.b16 %v294
        %v2874 = vunpack.c.h.b16 %v294
        %v2875 = vunpack.c.l.b16 %v295
        %v2876 = vunpack.c.h.b16 %v295
        %v2877 = vunpack.c.l.b16 %v296
        %v2878 = vunpack.c.h.b16 %v296
        %v2879 = vunpack.c.l.b16 %v297
        %v2880 = vunpack.c.h.b16 %v297
        %v2881 = vunpack.c.l.b16 %v298
        %v2882 = vunpack.c.h.b16 %v298
        %v2883 = vunpack.c.l.b16 %v299
        %v2884 = vunpack.c.h.b16 %v299
        %v2885 = vunpack.c.l.b16 %v300
        %v2886 = vunpack.c.h.b16 %v300
        %v2887 = vunpack.c.l.b16 %v301
        %v2888 = vunpack.c.h.b16 %v301
        %v2889 = vunpack.c.l.b16 %v302
        %v2890 = vunpack.c.h.b16 %v302
        %v2891 = vunpack.c.l.b16 %v303
        %v2892 = vunpack.c.h.b16 %v303
        %v2893 = vunpack.c.l.b16 %v304
        %v2894 = vunpack.c.h.b16 %v304
        %v2895 = vunpack.c.l.b16 %v305
        %v2896 = vunpack.c.h.b16 %v305
        %v2897 = vunpack.c.l.b16 %v306
        %v2898 = vunpack.c.h.b16 %v306
        %v2899 = vunpack.c.l.b16 %v307
        %v2900 = vunpack.c.h.b16 %v307
        %v2901 = vunpack.c.l.b16 %v308
        %v2902 = vunpack.c.h.b16 %v308
        %v2903 = vunpack.c.l.b16 %v309
        %v2904 = vunpack.c.h.b16 %v309
        %v2905 = vunpack.c.l.b16 %v310
        %v2906 = vunpack.c.h.b16 %v310
        %v2907 = vunpack.c.l.b16 %v311
        %v2908 = vunpack.c.h.b16 %v311
        %v2909 = vunpack.c.l.b16 %v312
        %v2910 = vunpack.c.h.b16 %v312
        %v2911 = vunpack.c.l.b16 %v313
        %v2912 = vunpack.c.h.b16 %v313
        %v2913 = vunpack.c.l.b16 %v314
        %v2914 = vunpack.c.h.b16 %v314
        %v2915 = vunpack.c.l.b16 %v315
        %v2916 = vunpack.c.h.b16 %v315
        %v2917 = vunpack.c.l.b16 %v316
        %v2918 = vunpack.c.h.b16 %v316
        %v2919 = vunpack.c.l.b16 %v317
        %v2920 = vunpack.c.h.b16 %v317
        %v2921 = vunpack.c.l.b16 %v318
        %v2922 = vunpack.c.h.b16 %v318
        %v2923 = vunpack.c.l.b16 %v319
        %v2924 = vunpack.c.h.b16 %v319
        %v2925 = vunpack.c.l.b16 %v320
        %v2926 = vunpack.c.h.b16 %v320
        %v2927 = vunpack.c.l.b16 %v321
        %v2928 = vunpack.c.h.b16 %v321
        %v2929 = vunpack.c.l.b16 %v322
        %v2930 = vunpack.c.h.b16 %v322
        %v2931 = vunpack.c.l.b16 %v323
        %v2932 = vunpack.c.h.b16 %v323
        %v2933 = vunpack.c.l.b16 %v324
        %v2934 = vunpack.c.h.b16 %v324
        %v2935 = vunpack.c.l.b16 %v325
        %v2936 = vunpack.c.h.b16 %v325
        %v2937 = vunpack.c.l.b16 %v326
        %v2938 = vunpack.c.h.b16 %v326
        %v2939 = vunpack.c.l.b16 %v327
        %v2940 = vunpack.c.h.b16 %v327
        %v2941 = vunpack.c.l.b16 %v328
        %v2942 = vunpack.c.h.b16 %v328
        %v2943 = vunpack.c.l.b16 %v329
        %v2944 = vunpack.c.h.b16 %v329
        %v2945 = vunpack.c.l.b16 %v330
        %v2946 = vunpack.c.h.b16 %v330
        %v2947 = vunpack.c.l.b16 %v331
        %v2948 = vunpack.c.h.b16 %v331
        %v2949 = vunpack.c.l.b16 %v332
        %v2950 = vunpack.c.h.b16 %v332
        %v2951 = vunpack.c.l.b16 %v333
        %v2952 = vunpack.c.h.b16 %v333
        %v2953 = vunpack.c.l.b16 %v334
        %v2954 = vunpack.c.h.b16 %v334
        %v2955 = vunpack.c.l.b16 %v335
        %v2956 = vunpack.c.h.b16 %v335
        %v2957 = vunpack.c.l.b16 %v336
        %v2958 = vunpack.c.h.b16 %v336
        %v2959 = vunpack.c.l.b16 %v337
        %v2960 = vunpack.c.h.b16 %v337
        %v2961 = vunpack.c.l.b16 %v338
        %v2962 = vunpack.c.h.b16 %v338
        %v2963 = vunpack.c.l.b16 %v339
        %v2964 = vunpack.c.h.b16 %v339
        %v2965 = vunpack.c.l.b16 %v340
        %v2966 = vunpack.c.h.b16 %v340
        %v2967 = vunpack.c.l.b16 %v341
        %v2968 = vunpack.c.h.b16 %v341
        %v2969 = vunpack.c.l.b16 %v342
        %v2970 = vunpack.c.h.b16 %v342
        %v2971 = vunpack.c.l.b16 %v343
        %v2972 = vunpack.c.h.b16 %v343
        %v2973 = vunpack.c.l.b16 %v344
        %v2974 = vunpack.c.h.b16 %v344
        %v2975 = vunpack.c.l.b16 %v345
        %v2976 = vunpack.c.h.b16 %v345
        %v2977 = vunpack.c.l.b16 %v346
        %v2978 = vunpack.c.h.b16 %v346
        %v2979 = vunpack.c.l.b16 %v347
        %v2980 = vunpack.c.h.b16 %v347
        %v2981 = vunpack.c.l.b16 %v348
        %v2982 = vunpack.c.h.b16 %v348
        %v2983 = vunpack.c.l.b16 %v349
        %v2984 = vunpack.c.h.b16 %v349
        %v2985 = vunpack.c.l.b16 %v350
        %v2986 = vunpack.c.h.b16 %v350
        %v2987 = vunpack.c.l.b16 %v351
        %v2988 = vunpack.c.h.b16 %v351
        %v2989 = vunpack.c.l.b16 %v352
        %v2990 = vunpack.c.h.b16 %v352
        %v2991 = vunpack.c.l.b16 %v353
        %v2992 = vunpack.c.h.b16 %v353
        %v2993 = vunpack.c.l.b16 %v354
        %v2994 = vunpack.c.h.b16 %v354
        %v2995 = vunpack.c.l.b16 %v355
        %v2996 = vunpack.c.h.b16 %v355
        %v2997 = vunpack.c.l.b16 %v356
        %v2998 = vunpack.c.h.b16 %v356
        %v2999 = vunpack.c.l.b16 %v357
        %v3000 = vunpack.c.h.b16 %v357
        %v3001 = vunpack.c.l.b16 %v358
        %v3002 = vunpack.c.h.b16 %v358
        %v3003 = vunpack.c.l.b16 %v359
        %v3004 = vunpack.c.h.b16 %v359
        %v3005 = vunpack.c.l.b16 %v360
        %v3006 = vunpack.c.h.b16 %v360
        %v3007 = vunpack.c.l.b16 %v361
        %v3008 = vunpack.c.h.b16 %v361
        %v3009 = vunpack.c.l.b16 %v362
        %v3010 = vunpack.c.h.b16 %v362
        %v3011 = vunpack.c.l.b16 %v363
        %v3012 = vunpack.c.h.b16 %v363
        %v3013 = vunpack.c.l.b16 %v364
        %v3014 = vunpack.c.h.b16 %v364
        %v3015 = vunpack.c.l.b16 %v365
        %v3016 = vunpack.c.h.b16 %v365
        %v3017 = vunpack.c.l.b16 %v366
        %v3018 = vunpack.c.h.b16 %v366
        %v3019 = vunpack.c.l.b16 %v367
        %v3020 = vunpack.c.h.b16 %v367
        %v3021 = vunpack.c.l.b16 %v368
        %v3022 = vunpack.c.h.b16 %v368
        %v3023 = vunpack.c.l.b16 %v369
        %v3024 = vunpack.c.h.b16 %v369
        %v3025 = vunpack.c.l.b16 %v370
        %v3026 = vunpack.c.h.b16 %v370
        %v3027 = vunpack.c.l.b16 %v371
        %v3028 = vunpack.c.h.b16 %v371
        %v3029 = vunpack.c.l.b16 %v372
        %v3030 = vunpack.c.h.b16 %v372
        %v3031 = vunpack.c.l.b16 %v373
        %v3032 = vunpack.c.h.b16 %v373
        %v3033 = vunpack.c.l.b16 %v374
        %v3034 = vunpack.c.h.b16 %v374
        %v3035 = vunpack.c.l.b16 %v375
        %v3036 = vunpack.c.h.b16 %v375
        %v3037 = vunpack.c.l.b16 %v376
        %v3038 = vunpack.c.h.b16 %v376
        %v3039 = vunpack.c.l.b16 %v377
        %v3040 = vunpack.c.h.b16 %v377
        %v3041 = vunpack.c.l.b16 %v378
        %v3042 = vunpack.c.h.b16 %v378
        %v3043 = vunpack.c.l.b16 %v379
        %v3044 = vunpack.c.h.b16 %v379
        %v3045 = vunpack.c.l.b16 %v380
        %v3046 = vunpack.c.h.b16 %v380
        %v3047 = vunpack.c.l.b16 %v381
        %v3048 = vunpack.c.h.b16 %v381
        %v3049 = vunpack.c.l.b16 %v382
        %v3050 = vunpack.c.h.b16 %v382
        %v3051 = vunpack.c.l.b16 %v383
        %v3052 = vunpack.c.h.b16 %v383
        %v3053 = vunpack.c.l.b16 %v384
        %v3054 = vunpack.c.h.b16 %v384
        %v3055 = vunpack.c.l.b16 %v385
        %v3056 = vunpack.c.h.b16 %v385
        %v3057 = vunpack.c.l.b16 %v386
        %v3058 = vunpack.c.h.b16 %v386
        %v3059 = vunpack.c.l.b16 %v387
        %v3060 = vunpack.c.h.b16 %v387
        %v3061 = vunpack.c.l.b16 %v388
        %v3062 = vunpack.c.h.b16 %v388
        %v3063 = vunpack.c.l.b16 %v389
        %v3064 = vunpack.c.h.b16 %v389
        %v3065 = vunpack.c.l.b16 %v390
        %v3066 = vunpack.c.h.b16 %v390
        %v3067 = vunpack.c.l.b16 %v391
        %v3068 = vunpack.c.h.b16 %v391
        %v3069 = vunpack.c.l.b16 %v392
        %v3070 = vunpack.c.h.b16 %v392
        %v3071 = vunpack.c.l.b16 %v393
        %v3072 = vunpack.c.h.b16 %v393
        %v3073 = vunpack.c.l.b16 %v394
        %v3074 = vunpack.c.h.b16 %v394
        %v3075 = vunpack.c.l.b16 %v395
        %v3076 = vunpack.c.h.b16 %v395
        %v3077 = vunpack.c.l.b16 %v396
        %v3078 = vunpack.c.h.b16 %v396
        %v3079 = vunpack.c.l.b16 %v397
        %v3080 = vunpack.c.h.b16 %v397
        %v3081 = vunpack.c.l.b16 %v398
        %v3082 = vunpack.c.h.b16 %v398
        %v3083 = vunpack.c.l.b16 %v399
        %v3084 = vunpack.c.h.b16 %v399
        %v3085 = vunpack.c.l.b16 %v400
        %v3086 = vunpack.c.h.b16 %v400
        %v3087 = vunpack.c.l.b16 %v401
        %v3088 = vunpack.c.h.b16 %v401
        %v3089 = vunpack.c.l.b16 %v402
        %v3090 = vunpack.c.h.b16 %v402
        %v3091 = vunpack.c.l.b16 %v403
        %v3092 = vunpack.c.h.b16 %v403
        %v3093 = vunpack.c.l.b16 %v404
        %v3094 = vunpack.c.h.b16 %v404
        %v3095 = vunpack.c.l.b16 %v405
        %v3096 = vunpack.c.h.b16 %v405
        %v3097 = vunpack.c.l.b16 %v406
        %v3098 = vunpack.c.h.b16 %v406
        %v3099 = vunpack.c.l.b16 %v407
        %v3100 = vunpack.c.h.b16 %v407
        %v3101 = vunpack.c.l.b16 %v408
        %v3102 = vunpack.c.h.b16 %v408
        %v3103 = vunpack.c.l.b16 %v409
        %v3104 = vunpack.c.h.b16 %v409
        %v3105 = vunpack.c.l.b16 %v410
        %v3106 = vunpack.c.h.b16 %v410
        %v3107 = vunpack.c.l.b16 %v411
        %v3108 = vunpack.c.h.b16 %v411
        %v3109 = vunpack.c.l.b16 %v412
        %v3110 = vunpack.c.h.b16 %v412
        %v3111 = vunpack.c.l.b16 %v413
        %v3112 = vunpack.c.h.b16 %v413
        %v3113 = vunpack.c.l.b16 %v414
        %v3114 = vunpack.c.h.b16 %v414
        %v3115 = vunpack.c.l.b16 %v415
        %v3116 = vunpack.c.h.b16 %v415
        %v3117 = vunpack.c.l.b16 %v416
        %v3118 = vunpack.c.h.b16 %v416
        %v3119 = vunpack.c.l.b16 %v417
        %v3120 = vunpack.c.h.b16 %v417
        %v3121 = vunpack.c.l.b16 %v418
        %v3122 = vunpack.c.h.b16 %v418
        %v3123 = vunpack.c.l.b16 %v419
        %v3124 = vunpack.c.h.b16 %v419
        %v3125 = vunpack.c.l.b16 %v420
        %v3126 = vunpack.c.h.b16 %v420
        %v3127 = vunpack.c.l.b16 %v421
        %v3128 = vunpack.c.h.b16 %v421
        %v3129 = vunpack.c.l.b16 %v422
        %v3130 = vunpack.c.h.b16 %v422
        %v3131 = vunpack.c.l.b16 %v423
        %v3132 = vunpack.c.h.b16 %v423
        %v3133 = vunpack.c.l.b16 %v424
        %v3134 = vunpack.c.h.b16 %v424
        %v3135 = vunpack.c.l.b16 %v425
        %v3136 = vunpack.c.h.b16 %v425
        %v3137 = vunpack.c.l.b16 %v426
        %v3138 = vunpack.c.h.b16 %v426
        %v3139 = vunpack.c.l.b16 %v427
        %v3140 = vunpack.c.h.b16 %v427
        %v3141 = vunpack.c.l.b16 %v428
        %v3142 = vunpack.c.h.b16 %v428
        %v3143 = vunpack.c.l.b16 %v429
        %v3144 = vunpack.c.h.b16 %v429
        %v3145 = vunpack.c.l.b16 %v430
        %v3146 = vunpack.c.h.b16 %v430
        %v3147 = vunpack.c.l.b16 %v431
        %v3148 = vunpack.c.h.b16 %v431
        %v3149 = vunpack.c.l.b16 %v432
        %v3150 = vunpack.c.h.b16 %v432
        %v3151 = vunpack.c.l.b16 %v433
        %v3152 = vunpack.c.h.b16 %v433
        %v3153 = vunpack.c.l.b16 %v434
        %v3154 = vunpack.c.h.b16 %v434
        %v3155 = vunpack.c.l.b16 %v435
        %v3156 = vunpack.c.h.b16 %v435
        %v3157 = vunpack.c.l.b16 %v436
        %v3158 = vunpack.c.h.b16 %v436
        %v3159 = vunpack.c.l.b16 %v437
        %v3160 = vunpack.c.h.b16 %v437
        %v3161 = vunpack.c.l.b16 %v438
        %v3162 = vunpack.c.h.b16 %v438
        %v3163 = vunpack.c.l.b16 %v439
        %v3164 = vunpack.c.h.b16 %v439
        %v3165 = vunpack.c.l.b16 %v440
        %v3166 = vunpack.c.h.b16 %v440
        %v3167 = vunpack.c.l.b16 %v441
        %v3168 = vunpack.c.h.b16 %v441
        %v3169 = vunpack.c.l.b16 %v442
        %v3170 = vunpack.c.h.b16 %v442
        %v3171 = vunpack.c.l.b16 %v443
        %v3172 = vunpack.c.h.b16 %v443
        %v3173 = vunpack.c.l.b16 %v444
        %v3174 = vunpack.c.h.b16 %v444
        %v3175 = vunpack.c.l.b16 %v445
        %v3176 = vunpack.c.h.b16 %v445
        %v3177 = vunpack.c.l.b16 %v446
        %v3178 = vunpack.c.h.b16 %v446
        %v3179 = vunpack.c.l.b16 %v447
        %v3180 = vunpack.c.h.b16 %v447
        %v3181 = vunpack.c.l.b16 %v448
        %v3182 = vunpack.c.h.b16 %v448
        %v3183 = vunpack.c.l.b16 %v449
        %v3184 = vunpack.c.h.b16 %v449
        %v3185 = vunpack.c.l.b16 %v450
        %v3186 = vunpack.c.h.b16 %v450
        %v3187 = vunpack.c.l.b16 %v451
        %v3188 = vunpack.c.h.b16 %v451
        %v3189 = vunpack.c.l.b16 %v452
        %v3190 = vunpack.c.h.b16 %v452
        %v3191 = vunpack.c.l.b16 %v453
        %v3192 = vunpack.c.h.b16 %v453
        %v3193 = vunpack.c.l.b16 %v454
        %v3194 = vunpack.c.h.b16 %v454
        %v3195 = vunpack.c.l.b16 %v455
        %v3196 = vunpack.c.h.b16 %v455
        %v3197 = vunpack.c.l.b16 %v456
        %v3198 = vunpack.c.h.b16 %v456
        %v3199 = vunpack.c.l.b16 %v457
        %v3200 = vunpack.c.h.b16 %v457
        %v3201 = vunpack.c.l.b16 %v458
        %v3202 = vunpack.c.h.b16 %v458
        %v3203 = vunpack.c.l.b16 %v459
        %v3204 = vunpack.c.h.b16 %v459
        %v3205 = vunpack.c.l.b16 %v460
        %v3206 = vunpack.c.h.b16 %v460
        %v3207 = vunpack.c.l.b16 %v461
        %v3208 = vunpack.c.h.b16 %v461
        %v3209 = vunpack.c.l.b16 %v462
        %v3210 = vunpack.c.h.b16 %v462
        %v3211 = vunpack.c.l.b16 %v463
        %v3212 = vunpack.c.h.b16 %v463
        %v3213 = vunpack.c.l.b16 %v464
        %v3214 = vunpack.c.h.b16 %v464
        %v3215 = vunpack.c.l.b16 %v465
        %v3216 = vunpack.c.h.b16 %v465
        %v3217 = vunpack.c.l.b16 %v466
        %v3218 = vunpack.c.h.b16 %v466
        %v3219 = vunpack.c.l.b16 %v467
        %v3220 = vunpack.c.h.b16 %v467
        %v3221 = vunpack.c.l.b16 %v468
        %v3222 = vunpack.c.h.b16 %v468
        %v3223 = vunpack.c.l.b16 %v469
        %v3224 = vunpack.c.h.b16 %v469
        %v3225 = vunpack.c.l.b16 %v470
        %v3226 = vunpack.c.h.b16 %v470
        %v3227 = vunpack.c.l.b16 %v471
        %v3228 = vunpack.c.h.b16 %v471
        %v3229 = vunpack.c.l.b16 %v472
        %v3230 = vunpack.c.h.b16 %v472
        %v3231 = vunpack.c.l.b16 %v473
        %v3232 = vunpack.c.h.b16 %v473
        %v3233 = vunpack.c.l.b16 %v474
        %v3234 = vunpack.c.h.b16 %v474
        %v3235 = vunpack.c.l.b16 %v475
        %v3236 = vunpack.c.h.b16 %v475
        %v3237 = vunpack.c.l.b16 %v476
        %v3238 = vunpack.c.h.b16 %v476
        %v3239 = vunpack.c.l.b16 %v477
        %v3240 = vunpack.c.h.b16 %v477
        %v3241 = vunpack.c.l.b16 %v478
        %v3242 = vunpack.c.h.b16 %v478
        %v3243 = vunpack.c.l.b16 %v479
        %v3244 = vunpack.c.h.b16 %v479
        %v3245 = vunpack.c.l.b16 %v480
        %v3246 = vunpack.c.h.b16 %v480
        %v3247 = vunpack.c.l.b16 %v481
        %v3248 = vunpack.c.h.b16 %v481
        %v3249 = vunpack.c.l.b16 %v482
        %v3250 = vunpack.c.h.b16 %v482
        %v3251 = vunpack.c.l.b16 %v483
        %v3252 = vunpack.c.h.b16 %v483
        %v3253 = vunpack.c.l.b16 %v484
        %v3254 = vunpack.c.h.b16 %v484
        %v3255 = vunpack.c.l.b16 %v485
        %v3256 = vunpack.c.h.b16 %v485
        %v3257 = vunpack.c.l.b16 %v486
        %v3258 = vunpack.c.h.b16 %v486
        %v3259 = vunpack.c.l.b16 %v487
        %v3260 = vunpack.c.h.b16 %v487
        %v3261 = vunpack.c.l.b16 %v488
        %v3262 = vunpack.c.h.b16 %v488
        %v3263 = vunpack.c.l.b16 %v489
        %v3264 = vunpack.c.h.b16 %v489
        %v3265 = vunpack.c.l.b16 %v490
        %v3266 = vunpack.c.h.b16 %v490
        %v3267 = vunpack.c.l.b16 %v491
        %v3268 = vunpack.c.h.b16 %v491
        %v3269 = vunpack.c.l.b16 %v492
        %v3270 = vunpack.c.h.b16 %v492
        %v3271 = vunpack.c.l.b16 %v493
        %v3272 = vunpack.c.h.b16 %v493
        %v3273 = vunpack.c.l.b16 %v494
        %v3274 = vunpack.c.h.b16 %v494
        %v3275 = vunpack.c.l.b16 %v495
        %v3276 = vunpack.c.h.b16 %v495
        %v3277 = vunpack.c.l.b16 %v496
        %v3278 = vunpack.c.h.b16 %v496
        %v3279 = vunpack.c.l.b16 %v497
        %v3280 = vunpack.c.h.b16 %v497
        %v3281 = vunpack.c.l.b16 %v498
        %v3282 = vunpack.c.h.b16 %v498
        %v3283 = vunpack.c.l.b16 %v499
        %v3284 = vunpack.c.h.b16 %v499
        %v3285 = vunpack.c.l.b16 %v500
        %v3286 = vunpack.c.h.b16 %v500
        %v3287 = vunpack.c.l.b16 %v501
        %v3288 = vunpack.c.h.b16 %v501
        %v3289 = vunpack.c.l.b16 %v502
        %v3290 = vunpack.c.h.b16 %v502
        %v3291 = vunpack.c.l.b16 %v503
        %v3292 = vunpack.c.h.b16 %v503
        %v3293 = vunpack.c.l.b16 %v504
        %v3294 = vunpack.c.h.b16 %v504
        %v3295 = vunpack.c.l.b16 %v505
        %v3296 = vunpack.c.h.b16 %v505
        %v3297 = vunpack.c.l.b16 %v506
        %v3298 = vunpack.c.h.b16 %v506
        %v3299 = vunpack.c.l.b16 %v507
        %v3300 = vunpack.c.h.b16 %v507
        %v3301 = vunpack.c.l.b16 %v508
        %v3302 = vunpack.c.h.b16 %v508
        %v3303 = vunpack.c.l.b16 %v509
        %v3304 = vunpack.c.h.b16 %v509
        %v3305 = vunpack.c.l.b16 %v510
        %v3306 = vunpack.c.h.b16 %v510
        %v3307 = vunpack.c.l.b16 %v511
        %v3308 = vunpack.c.h.b16 %v511
        %v3309 = vunpack.c.l.b16 %v512
        %v3310 = vunpack.c.h.b16 %v512
        %v3311 = vunpack.c.l.b16 %v513
        %v3312 = vunpack.c.h.b16 %v513
        %v3313 = vunpack.c.l.b16 %v514
        %v3314 = vunpack.c.h.b16 %v514
        %v3315 = vunpack.c.l.b16 %v515
        %v3316 = vunpack.c.h.b16 %v515
        %v3317 = vunpack.c.l.b16 %v516
        %v3318 = vunpack.c.h.b16 %v516
        %v3319 = vunpack.c.l.b16 %v517
        %v3320 = vunpack.c.h.b16 %v517
        %v3321 = vunpack.c.l.b16 %v518
        %v3322 = vunpack.c.h.b16 %v518
        %v3323 = vunpack.c.l.b16 %v519
        %v3324 = vunpack.c.h.b16 %v519
        %v3325 = vunpack.c.l.b16 %v520
        %v3326 = vunpack.c.h.b16 %v520
        %v3327 = vunpack.c.l.b16 %v521
        %v3328 = vunpack.c.h.b16 %v521
        %v3329 = vunpack.c.l.b16 %v522
        %v3330 = vunpack.c.h.b16 %v522
        %v3331 = vunpack.c.l.b16 %v523
        %v3332 = vunpack.c.h.b16 %v523
        %v3333 = vunpack.c.l.b16 %v524
        %v3334 = vunpack.c.h.b16 %v524
        %v3335 = vunpack.c.l.b16 %v525
        %v3336 = vunpack.c.h.b16 %v525
        %v3337 = vunpack.c.l.b16 %v526
        %v3338 = vunpack.c.h.b16 %v526
        %v3339 = vunpack.c.l.b16 %v527
        %v3340 = vunpack.c.h.b16 %v527
        %v3341 = vunpack.c.l.b16 %v528
        %v3342 = vunpack.c.h.b16 %v528
        %v3343 = vunpack.c.l.b16 %v529
        %v3344 = vunpack.c.h.b16 %v529
        %v3345 = vunpack.c.l.b16 %v530
        %v3346 = vunpack.c.h.b16 %v530
        %v3347 = vunpack.c.l.b16 %v531
        %v3348 = vunpack.c.h.b16 %v531
        %v3349 = vunpack.c.l.b16 %v532
        %v3350 = vunpack.c.h.b16 %v532
        %v3351 = vunpack.c.l.b16 %v533
        %v3352 = vunpack.c.h.b16 %v533
        %v3353 = vunpack.c.l.b16 %v534
        %v3354 = vunpack.c.h.b16 %v534
        %v3355 = vunpack.c.l.b16 %v535
        %v3356 = vunpack.c.h.b16 %v535
        %v3357 = vunpack.c.l.b16 %v536
        %v3358 = vunpack.c.h.b16 %v536
        %v3359 = vunpack.c.l.b16 %v537
        %v3360 = vunpack.c.h.b16 %v537
        %v3361 = vunpack.c.l.b16 %v538
        %v3362 = vunpack.c.h.b16 %v538
        %v3363 = vunpack.c.l.b16 %v539
        %v3364 = vunpack.c.h.b16 %v539
        %v3365 = vunpack.c.l.b16 %v540
        %v3366 = vunpack.c.h.b16 %v540
        %v3367 = vunpack.c.l.b16 %v541
        %v3368 = vunpack.c.h.b16 %v541
        %v3369 = vunpack.c.l.b16 %v542
        %v3370 = vunpack.c.h.b16 %v542
        %v3371 = vunpack.c.l.b16 %v543
        %v3372 = vunpack.c.h.b16 %v543
        %v3373 = vunpack.c.l.b16 %v544
        %v3374 = vunpack.c.h.b16 %v544
        %v3375 = vunpack.c.l.b16 %v545
        %v3376 = vunpack.c.h.b16 %v545
        %v3377 = vunpack.c.l.b16 %v546
        %v3378 = vunpack.c.h.b16 %v546
        %v3379 = vunpack.c.l.b16 %v547
        %v3380 = vunpack.c.h.b16 %v547
        %v3381 = vunpack.c.l.b16 %v548
        %v3382 = vunpack.c.h.b16 %v548
        %v3383 = vunpack.c.l.b16 %v549
        %v3384 = vunpack.c.h.b16 %v549
        %v3385 = vunpack.c.l.b16 %v550
        %v3386 = vunpack.c.h.b16 %v550
        %v3387 = vunpack.c.l.b16 %v551
        %v3388 = vunpack.c.h.b16 %v551
        %v3389 = vunpack.c.l.b16 %v552
        %v3390 = vunpack.c.h.b16 %v552
        %v3391 = vunpack.c.l.b16 %v553
        %v3392 = vunpack.c.h.b16 %v553
        %v3393 = vunpack.c.l.b16 %v554
        %v3394 = vunpack.c.h.b16 %v554
        %v3395 = vunpack.c.l.b16 %v555
        %v3396 = vunpack.c.h.b16 %v555
        %v3397 = vunpack.c.l.b16 %v556
        %v3398 = vunpack.c.h.b16 %v556
        %v3399 = vunpack.c.l.b16 %v557
        %v3400 = vunpack.c.h.b16 %v557
        %v3401 = vunpack.c.l.b16 %v558
        %v3402 = vunpack.c.h.b16 %v558
        %v3403 = vunpack.c.l.b16 %v559
        %v3404 = vunpack.c.h.b16 %v559
        %v3405 = vunpack.c.l.b16 %v560
        %v3406 = vunpack.c.h.b16 %v560
        %v3407 = vunpack.c.l.b16 %v561
        %v3408 = vunpack.c.h.b16 %v561
        %v3409 = vunpack.c.l.b16 %v562
        %v3410 = vunpack.c.h.b16 %v562
        %v3411 = vunpack.c.l.b16 %v563
        %v3412 = vunpack.c.h.b16 %v563
        %v3413 = vunpack.c.l.b16 %v564
        %v3414 = vunpack.c.h.b16 %v564
        %v3415 = vunpack.c.l.b16 %v565
        %v3416 = vunpack.c.h.b16 %v565
        %v3417 = vunpack.c.l.b16 %v566
        %v3418 = vunpack.c.h.b16 %v566
        %v3419 = vunpack.c.l.b16 %v567
        %v3420 = vunpack.c.h.b16 %v567
        %v3421 = vunpack.c.l.b16 %v568
        %v3422 = vunpack.c.h.b16 %v568
        %v3423 = vunpack.c.l.b16 %v569
        %v3424 = vunpack.c.h.b16 %v569
        %v3425 = vunpack.c.l.b16 %v570
        %v3426 = vunpack.c.h.b16 %v570
        %v3427 = vunpack.c.l.b16 %v571
        %v3428 = vunpack.c.h.b16 %v571
        %v3429 = vunpack.c.l.b16 %v572
        %v3430 = vunpack.c.h.b16 %v572
        %v3431 = vunpack.c.l.b16 %v573
        %v3432 = vunpack.c.h.b16 %v573
        %v3433 = vunpack.c.l.b16 %v574
        %v3434 = vunpack.c.h.b16 %v574
        %v3435 = vunpack.c.l.b16 %v575
        %v3436 = vunpack.c.h.b16 %v575
        %v3437 = vunpack.c.l.b16 %v576
        %v3438 = vunpack.c.h.b16 %v576
        %v3439 = vunpack.c.l.b16 %v577
        %v3440 = vunpack.c.h.b16 %v577
        %v3441 = vunpack.c.l.b16 %v578
        %v3442 = vunpack.c.h.b16 %v578
        %v3443 = vunpack.c.l.b16 %v579
        %v3444 = vunpack.c.h.b16 %v579
        %v3445 = vunpack.c.l.b16 %v580
        %v3446 = vunpack.c.h.b16 %v580
        %v3447 = vunpack.c.l.b16 %v581
        %v3448 = vunpack.c.h.b16 %v581
        %v3449 = vunpack.c.l.b16 %v582
        %v3450 = vunpack.c.h.b16 %v582
        %v3451 = vunpack.c.l.b16 %v583
        %v3452 = vunpack.c.h.b16 %v583
        %v3453 = vunpack.c.l.b16 %v584
        %v3454 = vunpack.c.h.b16 %v584
        %v3455 = vunpack.c.l.b16 %v585
        %v3456 = vunpack.c.h.b16 %v585
        %v3457 = vunpack.c.l.b16 %v586
        %v3458 = vunpack.c.h.b16 %v586
        %v3459 = vunpack.c.l.b16 %v587
        %v3460 = vunpack.c.h.b16 %v587
        %v3461 = vunpack.c.l.b16 %v588
        %v3462 = vunpack.c.h.b16 %v588
        %v3463 = vunpack.c.l.b16 %v589
        %v3464 = vunpack.c.h.b16 %v589
        %v3465 = vunpack.c.l.b16 %v590
        %v3466 = vunpack.c.h.b16 %v590
        %v3467 = vunpack.c.l.b16 %v591
        %v3468 = vunpack.c.h.b16 %v591
        %v3469 = vunpack.c.l.b16 %v592
        %v3470 = vunpack.c.h.b16 %v592
        %v3471 = vunpack.c.l.b16 %v593
        %v3472 = vunpack.c.h.b16 %v593
        %v3473 = vunpack.c.l.b16 %v594
        %v3474 = vunpack.c.h.b16 %v594
        %v3475 = vunpack.c.l.b16 %v595
        %v3476 = vunpack.c.h.b16 %v595
        %v3477 = vunpack.c.l.b16 %v596
        %v3478 = vunpack.c.h.b16 %v596
        %v3479 = vunpack.c.l.b16 %v597
        %v3480 = vunpack.c.h.b16 %v597
        %v3481 = vunpack.c.l.b16 %v598
        %v3482 = vunpack.c.h.b16 %v598
        %v3483 = vunpack.c.l.b16 %v599
        %v3484 = vunpack.c.h.b16 %v599
        %v3485 = vunpack.c.l.b16 %v600
        %v3486 = vunpack.c.h.b16 %v600
        %v3487 = vunpack.c.l.b16 %v601
        %v3488 = vunpack.c.h.b16 %v601
        %v3489 = vunpack.c.l.b16 %v602
        %v3490 = vunpack.c.h.b16 %v602
        %v3491 = vunpack.c.l.b16 %v603
        %v3492 = vunpack.c.h.b16 %v603
        %v3493 = vunpack.c.l.b16 %v604
        %v3494 = vunpack.c.h.b16 %v604
        %v3495 = vunpack.c.l.b16 %v605
        %v3496 = vunpack.c.h.b16 %v605
        %v3497 = vunpack.c.l.b16 %v606
        %v3498 = vunpack.c.h.b16 %v606
        %v3499 = vunpack.c.l.b16 %v607
        %v3500 = vunpack.c.h.b16 %v607
        %v3501 = vunpack.c.l.b16 %v608
        %v3502 = vunpack.c.h.b16 %v608
        %v3503 = vunpack.c.l.b16 %v609
        %v3504 = vunpack.c.h.b16 %v609
        %v3505 = vunpack.c.l.b16 %v610
        %v3506 = vunpack.c.h.b16 %v610
        %v3507 = vunpack.c.l.b16 %v611
        %v3508 = vunpack.c.h.b16 %v611
        %v3509 = vunpack.c.l.b16 %v612
        %v3510 = vunpack.c.h.b16 %v612
        %v3511 = vunpack.c.l.b16 %v613
        %v3512 = vunpack.c.h.b16 %v613
        %v3513 = vunpack.c.l.b16 %v614
        %v3514 = vunpack.c.h.b16 %v614
        %v3515 = vunpack.c.l.b16 %v615
        %v3516 = vunpack.c.h.b16 %v615
        %v3517 = vunpack.c.l.b16 %v616
        %v3518 = vunpack.c.h.b16 %v616
        %v3519 = vunpack.c.l.b16 %v617
        %v3520 = vunpack.c.h.b16 %v617
        %v3521 = vunpack.c.l.b16 %v618
        %v3522 = vunpack.c.h.b16 %v618
        %v3523 = vunpack.c.l.b16 %v619
        %v3524 = vunpack.c.h.b16 %v619
        %v3525 = vunpack.c.l.b16 %v620
        %v3526 = vunpack.c.h.b16 %v620
        %v3527 = vunpack.c.l.b16 %v621
        %v3528 = vunpack.c.h.b16 %v621
        %v3529 = vunpack.c.l.b16 %v622
        %v3530 = vunpack.c.h.b16 %v622
        %v3531 = vunpack.c.l.b16 %v623
        %v3532 = vunpack.c.h.b16 %v623
        %v3533 = vunpack.c.l.b16 %v624
        %v3534 = vunpack.c.h.b16 %v624
        %v3535 = vunpack.c.l.b16 %v625
        %v3536 = vunpack.c.h.b16 %v625
        %v3537 = vunpack.c.l.b16 %v626
        %v3538 = vunpack.c.h.b16 %v626
        %v3539 = vunpack.c.l.b16 %v627
        %v3540 = vunpack.c.h.b16 %v627
        %v3541 = vunpack.c.l.b16 %v628
        %v3542 = vunpack.c.h.b16 %v628
        %v3543 = vunpack.c.l.b16 %v629
        %v3544 = vunpack.c.h.b16 %v629
        %v3545 = vunpack.c.l.b16 %v630
        %v3546 = vunpack.c.h.b16 %v630
        %v3547 = vunpack.c.l.b16 %v631
        %v3548 = vunpack.c.h.b16 %v631
        %v3549 = vunpack.c.l.b16 %v632
        %v3550 = vunpack.c.h.b16 %v632
        %v3551 = vunpack.c.l.b16 %v633
        %v3552 = vunpack.c.h.b16 %v633
        %v3553 = vunpack.c.l.b16 %v634
        %v3554 = vunpack.c.h.b16 %v634
        %v3555 = vunpack.c.l.b16 %v635
        %v3556 = vunpack.c.h.b16 %v635
        %v3557 = vunpack.c.l.b16 %v636
        %v3558 = vunpack.c.h.b16 %v636
        %v3559 = vunpack.c.l.b16 %v637
        %v3560 = vunpack.c.h.b16 %v637
        %v3561 = vunpack.c.l.b16 %v638
        %v3562 = vunpack.c.h.b16 %v638
        %v3563 = vunpack.c.l.b16 %v639
        %v3564 = vunpack.c.h.b16 %v639
        %v3565 = vunpack.c.l.b16 %v640
        %v3566 = vunpack.c.h.b16 %v640
        %v3567 = vunpack.c.l.b16 %v641
        %v3568 = vunpack.c.h.b16 %v641
        %v3569 = vunpack.c.l.b16 %v642
        %v3570 = vunpack.c.h.b16 %v642
        %v3571 = vunpack.c.l.b16 %v643
        %v3572 = vunpack.c.h.b16 %v643
        %v3573 = vunpack.c.l.b16 %v644
        %v3574 = vunpack.c.h.b16 %v644
        %v3575 = vunpack.c.l.b16 %v645
        %v3576 = vunpack.c.h.b16 %v645
        %v3577 = vunpack.c.l.b16 %v646
        %v3578 = vunpack.c.h.b16 %v646
        %v3579 = vunpack.c.l.b16 %v647
        %v3580 = vunpack.c.h.b16 %v647
        %v3581 = vunpack.c.l.b16 %v648
        %v3582 = vunpack.c.h.b16 %v648
        %v3583 = vunpack.c.l.b16 %v649
        %v3584 = vunpack.c.h.b16 %v649
        %v3585 = vunpack.c.l.b16 %v650
        %v3586 = vunpack.c.h.b16 %v650
        %v3587 = vunpack.c.l.b16 %v651
        %v3588 = vunpack.c.h.b16 %v651
        %v3589 = vunpack.c.l.b16 %v652
        %v3590 = vunpack.c.h.b16 %v652
        %v3591 = vunpack.c.l.b16 %v653
        %v3592 = vunpack.c.h.b16 %v653
        %v3593 = vunpack.c.l.b16 %v654
        %v3594 = vunpack.c.h.b16 %v654
        %v3595 = vunpack.c.l.b16 %v655
        %v3596 = vunpack.c.h.b16 %v655
        %v3597 = vunpack.c.l.b16 %v656
        %v3598 = vunpack.c.h.b16 %v656
        %v3599 = vunpack.c.l.b16 %v657
        %v3600 = vunpack.c.h.b16 %v657
        %v3601 = vunpack.c.l.b16 %v658
        %v3602 = vunpack.c.h.b16 %v658
        %v3603 = vunpack.c.l.b16 %v659
        %v3604 = vunpack.c.h.b16 %v659
        %v3605 = vunpack.c.l.b16 %v660
        %v3606 = vunpack.c.h.b16 %v660
        %v3607 = vunpack.c.l.b16 %v661
        %v3608 = vunpack.c.h.b16 %v661
        %v3609 = vunpack.c.l.b16 %v662
        %v3610 = vunpack.c.h.b16 %v662
        %v3611 = vunpack.c.l.b16 %v663
        %v3612 = vunpack.c.h.b16 %v663
        %v3613 = vunpack.c.l.b16 %v664
        %v3614 = vunpack.c.h.b16 %v664
        %v3615 = vunpack.c.l.b16 %v665
        %v3616 = vunpack.c.h.b16 %v665
        %v3617 = vunpack.c.l.b16 %v666
        %v3618 = vunpack.c.h.b16 %v666
        %v3619 = vunpack.c.l.b16 %v667
        %v3620 = vunpack.c.h.b16 %v667
        %v3621 = vunpack.c.l.b16 %v668
        %v3622 = vunpack.c.h.b16 %v668
        %v3623 = vunpack.c.l.b16 %v669
        %v3624 = vunpack.c.h.b16 %v669
        %v3625 = vunpack.c.l.b16 %v670
        %v3626 = vunpack.c.h.b16 %v670
        %v3627 = vunpack.c.l.b16 %v671
        %v3628 = vunpack.c.h.b16 %v671
        %v3629 = vunpack.c.l.b16 %v672
        %v3630 = vunpack.c.h.b16 %v672
        %v3631 = vunpack.c.l.b16 %v673
        %v3632 = vunpack.c.h.b16 %v673
        %v3633 = vunpack.c.l.b16 %v674
        %v3634 = vunpack.c.h.b16 %v674
        %v3635 = vunpack.c.l.b16 %v675
        %v3636 = vunpack.c.h.b16 %v675
        %v3637 = vunpack.c.l.b16 %v676
        %v3638 = vunpack.c.h.b16 %v676
        %v3639 = vunpack.c.l.b16 %v677
        %v3640 = vunpack.c.h.b16 %v677
        %v3641 = vunpack.c.l.b16 %v678
        %v3642 = vunpack.c.h.b16 %v678
        %v3643 = vunpack.c.l.b16 %v679
        %v3644 = vunpack.c.h.b16 %v679
        %v3645 = vunpack.c.l.b16 %v680
        %v3646 = vunpack.c.h.b16 %v680
        %v3647 = vunpack.c.l.b16 %v681
        %v3648 = vunpack.c.h.b16 %v681
        %v3649 = vunpack.c.l.b16 %v682
        %v3650 = vunpack.c.h.b16 %v682
        %v3651 = vunpack.c.l.b16 %v683
        %v3652 = vunpack.c.h.b16 %v683
        %v3653 = vunpack.c.l.b16 %v684
        %v3654 = vunpack.c.h.b16 %v684
        %v3655 = vunpack.c.l.b16 %v685
        %v3656 = vunpack.c.h.b16 %v685
        %v3657 = vunpack.c.l.b16 %v686
        %v3658 = vunpack.c.h.b16 %v686
        %v3659 = vunpack.c.l.b16 %v687
        %v3660 = vunpack.c.h.b16 %v687
        %v3661 = vunpack.c.l.b16 %v688
        %v3662 = vunpack.c.h.b16 %v688
        %v3663 = vunpack.c.l.b16 %v689
        %v3664 = vunpack.c.h.b16 %v689
        %v3665 = vunpack.c.l.b16 %v690
        %v3666 = vunpack.c.h.b16 %v690
        %v3667 = vunpack.c.l.b16 %v691
        %v3668 = vunpack.c.h.b16 %v691
        %v3669 = vunpack.c.l.b16 %v692
        %v3670 = vunpack.c.h.b16 %v692
        %v3671 = vunpack.c.l.b16 %v693
        %v3672 = vunpack.c.h.b16 %v693
        %v3673 = vunpack.c.l.b16 %v694
        %v3674 = vunpack.c.h.b16 %v694
        %v3675 = vunpack.c.l.b16 %v695
        %v3676 = vunpack.c.h.b16 %v695
        %v3677 = vunpack.c.l.b16 %v696
        %v3678 = vunpack.c.h.b16 %v696
        %v3679 = vunpack.c.l.b16 %v697
        %v3680 = vunpack.c.h.b16 %v697
        %v3681 = vunpack.c.l.b16 %v698
        %v3682 = vunpack.c.h.b16 %v698
        %v3683 = vunpack.c.l.b16 %v699
        %v3684 = vunpack.c.h.b16 %v699
        %v3685 = vunpack.c.l.b16 %v700
        %v3686 = vunpack.c.h.b16 %v700
        %v3687 = vunpack.c.l.b16 %v701
        %v3688 = vunpack.c.h.b16 %v701
        %v3689 = vunpack.c.l.b16 %v702
        %v3690 = vunpack.c.h.b16 %v702
        %v3691 = vunpack.c.l.b16 %v703
        %v3692 = vunpack.c.h.b16 %v703
        %v3693 = vunpack.c.l.b16 %v704
        %v3694 = vunpack.c.h.b16 %v704
        %v3695 = vunpack.c.l.b16 %v705
        %v3696 = vunpack.c.h.b16 %v705
        %v3697 = vunpack.c.l.b16 %v706
        %v3698 = vunpack.c.h.b16 %v706
        %v3699 = vunpack.c.l.b16 %v707
        %v3700 = vunpack.c.h.b16 %v707
        %v3701 = vunpack.c.l.b16 %v708
        %v3702 = vunpack.c.h.b16 %v708
        %v3703 = vunpack.c.l.b16 %v709
        %v3704 = vunpack.c.h.b16 %v709
        %v3705 = vunpack.c.l.b16 %v710
        %v3706 = vunpack.c.h.b16 %v710
        %v3707 = vunpack.c.l.b16 %v711
        %v3708 = vunpack.c.h.b16 %v711
        %v3709 = vunpack.c.l.b16 %v712
        %v3710 = vunpack.c.h.b16 %v712
        %v3711 = vunpack.c.l.b16 %v713
        %v3712 = vunpack.c.h.b16 %v713
        %v3713 = vunpack.c.l.b16 %v714
        %v3714 = vunpack.c.h.b16 %v714
        %v3715 = vunpack.c.l.b16 %v715
        %v3716 = vunpack.c.h.b16 %v715
        %v3717 = vunpack.c.l.b16 %v716
        %v3718 = vunpack.c.h.b16 %v716
        %v3719 = vunpack.c.l.b16 %v717
        %v3720 = vunpack.c.h.b16 %v717
        %v3721 = vunpack.c.l.b16 %v718
        %v3722 = vunpack.c.h.b16 %v718
        %v3723 = vunpack.c.l.b16 %v719
        %v3724 = vunpack.c.h.b16 %v719
        %v3725 = vunpack.c.l.b16 %v720
        %v3726 = vunpack.c.h.b16 %v720
        %v3727 = vunpack.c.l.b16 %v721
        %v3728 = vunpack.c.h.b16 %v721
        %v3729 = vunpack.c.l.b16 %v722
        %v3730 = vunpack.c.h.b16 %v722
        %v3731 = vunpack.c.l.b16 %v723
        %v3732 = vunpack.c.h.b16 %v723
        %v3733 = vunpack.c.l.b16 %v724
        %v3734 = vunpack.c.h.b16 %v724
        %v3735 = vunpack.c.l.b16 %v725
        %v3736 = vunpack.c.h.b16 %v725
        %v3737 = vunpack.c.l.b16 %v726
        %v3738 = vunpack.c.h.b16 %v726
        %v3739 = vunpack.c.l.b16 %v727
        %v3740 = vunpack.c.h.b16 %v727
        %v3741 = vunpack.c.l.b16 %v728
        %v3742 = vunpack.c.h.b16 %v728
        %v3743 = vunpack.c.l.b16 %v729
        %v3744 = vunpack.c.h.b16 %v729
        %v3745 = vunpack.c.l.b16 %v730
        %v3746 = vunpack.c.h.b16 %v730
        %v3747 = vunpack.c.l.b16 %v731
        %v3748 = vunpack.c.h.b16 %v731
        %v3749 = vunpack.c.l.b16 %v732
        %v3750 = vunpack.c.h.b16 %v732
        %v3751 = vunpack.c.l.b16 %v733
        %v3752 = vunpack.c.h.b16 %v733
        %v3753 = vunpack.c.l.b16 %v734
        %v3754 = vunpack.c.h.b16 %v734
        %v3755 = vunpack.c.l.b16 %v735
        %v3756 = vunpack.c.h.b16 %v735
        %v3757 = vunpack.c.l.b16 %v736
        %v3758 = vunpack.c.h.b16 %v736
        %v3759 = vunpack.c.l.b16 %v737
        %v3760 = vunpack.c.h.b16 %v737
        %v3761 = vunpack.c.l.b16 %v738
        %v3762 = vunpack.c.h.b16 %v738
        %v3763 = vunpack.c.l.b16 %v739
        %v3764 = vunpack.c.h.b16 %v739
        %v3765 = vunpack.c.l.b16 %v740
        %v3766 = vunpack.c.h.b16 %v740
        %v3767 = vunpack.c.l.b16 %v741
        %v3768 = vunpack.c.h.b16 %v741
        %v3769 = vunpack.c.l.b16 %v742
        %v3770 = vunpack.c.h.b16 %v742
        %v3771 = vunpack.c.l.b16 %v743
        %v3772 = vunpack.c.h.b16 %v743
        %v3773 = vunpack.c.l.b16 %v744
        %v3774 = vunpack.c.h.b16 %v744
        %v3775 = vunpack.c.l.b16 %v745
        %v3776 = vunpack.c.h.b16 %v745
        %v3777 = vunpack.c.l.b16 %v746
        %v3778 = vunpack.c.h.b16 %v746
        %v3779 = vunpack.c.l.b16 %v747
        %v3780 = vunpack.c.h.b16 %v747
        %v3781 = vunpack.c.l.b16 %v748
        %v3782 = vunpack.c.h.b16 %v748
        %v3783 = vunpack.c.l.b16 %v749
        %v3784 = vunpack.c.h.b16 %v749
        %v3785 = vunpack.c.l.b16 %v750
        %v3786 = vunpack.c.h.b16 %v750
        %v3787 = vunpack.c.l.b16 %v751
        %v3788 = vunpack.c.h.b16 %v751
        %v3789 = vunpack.c.l.b16 %v752
        %v3790 = vunpack.c.h.b16 %v752
        %v3791 = vunpack.c.l.b16 %v753
        %v3792 = vunpack.c.h.b16 %v753
        %v3793 = vunpack.c.l.b16 %v754
        %v3794 = vunpack.c.h.b16 %v754
        %v3795 = vunpack.c.l.b16 %v755
        %v3796 = vunpack.c.h.b16 %v755
        %v3797 = vunpack.c.l.b16 %v756
        %v3798 = vunpack.c.h.b16 %v756
        %v3799 = vunpack.c.l.b16 %v757
        %v3800 = vunpack.c.h.b16 %v757
        %v3801 = vunpack.c.l.b16 %v758
        %v3802 = vunpack.c.h.b16 %v758
        %v3803 = vunpack.c.l.b16 %v759
        %v3804 = vunpack.c.h.b16 %v759
        %v3805 = vunpack.c.l.b16 %v760
        %v3806 = vunpack.c.h.b16 %v760
        %v3807 = vunpack.c.l.b16 %v761
        %v3808 = vunpack.c.h.b16 %v761
        %v3809 = vunpack.c.l.b16 %v762
        %v3810 = vunpack.c.h.b16 %v762
        %v3811 = vunpack.c.l.b16 %v763
        %v3812 = vunpack.c.h.b16 %v763
        %v3813 = vunpack.c.l.b16 %v764
        %v3814 = vunpack.c.h.b16 %v764
        %v3815 = vunpack.c.l.b16 %v765
        %v3816 = vunpack.c.h.b16 %v765
        %v3817 = vunpack.c.l.b16 %v766
        %v3818 = vunpack.c.h.b16 %v766
        %v3819 = vunpack.c.l.b16 %v767
        %v3820 = vunpack.c.h.b16 %v767
        %v3821 = vunpack.c.l.b16 %v768
        %v3822 = vunpack.c.h.b16 %v768
        %v3823 = vunpack.c.l.b16 %v769
        %v3824 = vunpack.c.h.b16 %v769
        %v3825 = vunpack.c.l.b16 %v770
        %v3826 = vunpack.c.h.b16 %v770
        %v3827 = vunpack.c.l.b16 %v771
        %v3828 = vunpack.c.h.b16 %v771
        %v3829 = vunpack.c.l.b16 %v772
        %v3830 = vunpack.c.h.b16 %v772
        %v3831 = vunpack.c.l.b16 %v773
        %v3832 = vunpack.c.h.b16 %v773
        %v3833 = vunpack.c.l.b16 %v774
        %v3834 = vunpack.c.h.b16 %v774
        %v3835 = vunpack.c.l.b16 %v775
        %v3836 = vunpack.c.h.b16 %v775
        %v3837 = vunpack.c.l.b16 %v776
        %v3838 = vunpack.c.h.b16 %v776
        %v3839 = vunpack.c.l.b16 %v777
        %v3840 = vunpack.c.h.b16 %v777
        %v3841 = vunpack.c.l.b16 %v778
        %v3842 = vunpack.c.h.b16 %v778
        %v3843 = vunpack.c.l.b16 %v779
        %v3844 = vunpack.c.h.b16 %v779
        %v3845 = vunpack.c.l.b16 %v780
        %v3846 = vunpack.c.h.b16 %v780
        %v3847 = vunpack.c.l.b16 %v781
        %v3848 = vunpack.c.h.b16 %v781
        %v3849 = vunpack.c.l.b16 %v782
        %v3850 = vunpack.c.h.b16 %v782
        %v3851 = vunpack.c.l.b16 %v783
        %v3852 = vunpack.c.h.b16 %v783
        %v3853 = vunpack.c.l.b16 %v784
        %v3854 = vunpack.c.h.b16 %v784
        %v3855 = vunpack.c.l.b16 %v785
        %v3856 = vunpack.c.h.b16 %v785
        %v3857 = vunpack.c.l.b16 %v786
        %v3858 = vunpack.c.h.b16 %v786
        %v3859 = vunpack.c.l.b16 %v787
        %v3860 = vunpack.c.h.b16 %v787
        %v3861 = vunpack.c.l.b16 %v788
        %v3862 = vunpack.c.h.b16 %v788
        %v3863 = vunpack.c.l.b16 %v789
        %v3864 = vunpack.c.h.b16 %v789
        %v3865 = vunpack.c.l.b16 %v790
        %v3866 = vunpack.c.h.b16 %v790
        %v3867 = vunpack.c.l.b16 %v791
        %v3868 = vunpack.c.h.b16 %v791
        %v3869 = vunpack.c.l.b16 %v792
        %v3870 = vunpack.c.h.b16 %v792
        %v3871 = vunpack.c.l.b16 %v793
        %v3872 = vunpack.c.h.b16 %v793
        %v3873 = vunpack.c.l.b16 %v794
        %v3874 = vunpack.c.h.b16 %v794
        %v3875 = vunpack.c.l.b16 %v795
        %v3876 = vunpack.c.h.b16 %v795
        %v3877 = vunpack.c.l.b16 %v796
        %v3878 = vunpack.c.h.b16 %v796
        %v3879 = vunpack.c.l.b16 %v797
        %v3880 = vunpack.c.h.b16 %v797
        %v3881 = vunpack.c.l.b16 %v798
        %v3882 = vunpack.c.h.b16 %v798
        %v3883 = vunpack.c.l.b16 %v799
        %v3884 = vunpack.c.h.b16 %v799
        %v3885 = vunpack.c.l.b16 %v800
        %v3886 = vunpack.c.h.b16 %v800
        %v3887 = vunpack.c.l.b16 %v801
        %v3888 = vunpack.c.h.b16 %v801
        %v3889 = vunpack.c.l.b16 %v802
        %v3890 = vunpack.c.h.b16 %v802
        %v3891 = vunpack.c.l.b16 %v803
        %v3892 = vunpack.c.h.b16 %v803
        %v3893 = vunpack.c.l.b16 %v804
        %v3894 = vunpack.c.h.b16 %v804
        %v3895 = vunpack.c.l.b16 %v805
        %v3896 = vunpack.c.h.b16 %v805
        %v3897 = vunpack.c.l.b16 %v806
        %v3898 = vunpack.c.h.b16 %v806
        %v3899 = vunpack.c.l.b16 %v807
        %v3900 = vunpack.c.h.b16 %v807
        %v3901 = vunpack.c.l.b16 %v808
        %v3902 = vunpack.c.h.b16 %v808
        %v3903 = vunpack.c.l.b16 %v809
        %v3904 = vunpack.c.h.b16 %v809
        %v3905 = vunpack.c.l.b16 %v810
        %v3906 = vunpack.c.h.b16 %v810
        %v3907 = vunpack.c.l.b16 %v811
        %v3908 = vunpack.c.h.b16 %v811
        %v3909 = vunpack.c.l.b16 %v812
        %v3910 = vunpack.c.h.b16 %v812
        %v3911 = vunpack.c.l.b16 %v813
        %v3912 = vunpack.c.h.b16 %v813
        %v3913 = vunpack.c.l.b16 %v814
        %v3914 = vunpack.c.h.b16 %v814
        %v3915 = vunpack.c.l.b16 %v815
        %v3916 = vunpack.c.h.b16 %v815
        %v3917 = vunpack.c.l.b16 %v816
        %v3918 = vunpack.c.h.b16 %v816
        %v3919 = vunpack.c.l.b16 %v817
        %v3920 = vunpack.c.h.b16 %v817
        %v3921 = vunpack.c.l.b16 %v818
        %v3922 = vunpack.c.h.b16 %v818
        %v3923 = vunpack.c.l.b16 %v819
        %v3924 = vunpack.c.h.b16 %v819
        %v3925 = vunpack.c.l.b16 %v820
        %v3926 = vunpack.c.h.b16 %v820
        %v3927 = vunpack.c.l.b16 %v821
        %v3928 = vunpack.c.h.b16 %v821
        %v3929 = vunpack.c.l.b16 %v822
        %v3930 = vunpack.c.h.b16 %v822
        %v3931 = vunpack.c.l.b16 %v823
        %v3932 = vunpack.c.h.b16 %v823
        %v3933 = vunpack.c.l.b16 %v824
        %v3934 = vunpack.c.h.b16 %v824
        %v3935 = vunpack.c.l.b16 %v825
        %v3936 = vunpack.c.h.b16 %v825
        %v3937 = vunpack.c.l.b16 %v826
        %v3938 = vunpack.c.h.b16 %v826
        %v3939 = vunpack.c.l.b16 %v827
        %v3940 = vunpack.c.h.b16 %v827
        %v3941 = vunpack.c.l.b16 %v828
        %v3942 = vunpack.c.h.b16 %v828
        %v3943 = vunpack.c.l.b16 %v829
        %v3944 = vunpack.c.h.b16 %v829
        %v3945 = vunpack.c.l.b16 %v830
        %v3946 = vunpack.c.h.b16 %v830
        %v3947 = vunpack.c.l.b16 %v831
        %v3948 = vunpack.c.h.b16 %v831
        %v3949 = vunpack.c.l.b16 %v832
        %v3950 = vunpack.c.h.b16 %v832
        %v3951 = vunpack.c.l.b16 %v833
        %v3952 = vunpack.c.h.b16 %v833
        %v3953 = vunpack.c.l.b16 %v834
        %v3954 = vunpack.c.h.b16 %v834
        %v3955 = vunpack.c.l.b16 %v835
        %v3956 = vunpack.c.h.b16 %v835
        %v3957 = vunpack.c.l.b16 %v836
        %v3958 = vunpack.c.h.b16 %v836
        %v3959 = vunpack.c.l.b16 %v837
        %v3960 = vunpack.c.h.b16 %v837
        %v3961 = vunpack.c.l.b16 %v838
        %v3962 = vunpack.c.h.b16 %v838
        %v3963 = vunpack.c.l.b16 %v839
        %v3964 = vunpack.c.h.b16 %v839
        %v3965 = vunpack.c.l.b16 %v840
        %v3966 = vunpack.c.h.b16 %v840
        %v3967 = vunpack.c.l.b16 %v841
        %v3968 = vunpack.c.h.b16 %v841
        %v3969 = vunpack.c.l.b16 %v842
        %v3970 = vunpack.c.h.b16 %v842
        %v3971 = vunpack.c.l.b16 %v843
        %v3972 = vunpack.c.h.b16 %v843
        %v3973 = vunpack.c.l.b16 %v844
        %v3974 = vunpack.c.h.b16 %v844
        %v3975 = vunpack.c.l.b16 %v845
        %v3976 = vunpack.c.h.b16 %v845
        %v3977 = vunpack.c.l.b16 %v846
        %v3978 = vunpack.c.h.b16 %v846
        %v3979 = vunpack.c.l.b16 %v847
        %v3980 = vunpack.c.h.b16 %v847
        %v3981 = vunpack.c.l.b16 %v848
        %v3982 = vunpack.c.h.b16 %v848
        %v3983 = vunpack.c.l.b16 %v849
        %v3984 = vunpack.c.h.b16 %v849
        %v3985 = vunpack.c.l.b16 %v850
        %v3986 = vunpack.c.h.b16 %v850
        %v3987 = vunpack.c.l.b16 %v851
        %v3988 = vunpack.c.h.b16 %v851
        %v3989 = vunpack.c.l.b16 %v852
        %v3990 = vunpack.c.h.b16 %v852
        %v3991 = vunpack.c.l.b16 %v853
        %v3992 = vunpack.c.h.b16 %v853
        %v3993 = vunpack.c.l.b16 %v854
        %v3994 = vunpack.c.h.b16 %v854
        %v3995 = vunpack.c.l.b16 %v855
        %v3996 = vunpack.c.h.b16 %v855
        %v3997 = vunpack.c.l.b16 %v856
        %v3998 = vunpack.c.h.b16 %v856
        %v3999 = vunpack.c.l.b16 %v857
        %v4000 = vunpack.c.h.b16 %v857
        %v4001 = vunpack.c.l.b16 %v858
        %v4002 = vunpack.c.h.b16 %v858
        %v4003 = vunpack.c.l.b16 %v859
        %v4004 = vunpack.c.h.b16 %v859
        %v4005 = vunpack.c.l.b16 %v860
        %v4006 = vunpack.c.h.b16 %v860
        %v4007 = vunpack.c.l.b16 %v861
        %v4008 = vunpack.c.h.b16 %v861
        %v4009 = vunpack.c.l.b16 %v862
        %v4010 = vunpack.c.h.b16 %v862
        %v4011 = vunpack.c.l.b16 %v863
        %v4012 = vunpack.c.h.b16 %v863
        %v4013 = vunpack.c.l.b16 %v864
        %v4014 = vunpack.c.h.b16 %v864
        %v4015 = vunpack.c.l.b16 %v865
        %v4016 = vunpack.c.h.b16 %v865
        %v4017 = vunpack.c.l.b16 %v866
        %v4018 = vunpack.c.h.b16 %v866
        %v4019 = vunpack.c.l.b16 %v867
        %v4020 = vunpack.c.h.b16 %v867
        %v4021 = vunpack.c.l.b16 %v868
        %v4022 = vunpack.c.h.b16 %v868
        %v4023 = vunpack.c.l.b16 %v869
        %v4024 = vunpack.c.h.b16 %v869
        %v4025 = vunpack.c.l.b16 %v870
        %v4026 = vunpack.c.h.b16 %v870
        %v4027 = vunpack.c.l.b16 %v871
        %v4028 = vunpack.c.h.b16 %v871
        %v4029 = vunpack.c.l.b16 %v872
        %v4030 = vunpack.c.h.b16 %v872
        %v4031 = vunpack.c.l.b16 %v873
        %v4032 = vunpack.c.h.b16 %v873
        %v4033 = vunpack.c.l.b16 %v874
        %v4034 = vunpack.c.h.b16 %v874
        %v4035 = vunpack.c.l.b16 %v875
        %v4036 = vunpack.c.h.b16 %v875
        %v4037 = vunpack.c.l.b16 %v876
        %v4038 = vunpack.c.h.b16 %v876
        %v4039 = vunpack.c.l.b16 %v877
        %v4040 = vunpack.c.h.b16 %v877
        %v4041 = vunpack.c.l.b16 %v878
        %v4042 = vunpack.c.h.b16 %v878
        %v4043 = vunpack.c.l.b16 %v879
        %v4044 = vunpack.c.h.b16 %v879
        %v4045 = vunpack.c.l.b16 %v880
        %v4046 = vunpack.c.h.b16 %v880
        %v4047 = vunpack.c.l.b16 %v881
        %v4048 = vunpack.c.h.b16 %v881
        %v4049 = vunpack.c.l.b16 %v882
        %v4050 = vunpack.c.h.b16 %v882
        %v4051 = vunpack.c.l.b16 %v883
        %v4052 = vunpack.c.h.b16 %v883
        %v4053 = vunpack.c.l.b16 %v884
        %v4054 = vunpack.c.h.b16 %v884
        %v4055 = vunpack.c.l.b16 %v885
        %v4056 = vunpack.c.h.b16 %v885
        %v4057 = vunpack.c.l.b16 %v886
        %v4058 = vunpack.c.h.b16 %v886
        %v4059 = vunpack.c.l.b16 %v887
        %v4060 = vunpack.c.h.b16 %v887
        %v4061 = vunpack.c.l.b16 %v888
        %v4062 = vunpack.c.h.b16 %v888
        %v4063 = vunpack.c.l.b16 %v889
        %v4064 = vunpack.c.h.b16 %v889
        %v4065 = vunpack.c.l.b16 %v890
        %v4066 = vunpack.c.h.b16 %v890
        %v4067 = vunpack.c.l.b16 %v891
        %v4068 = vunpack.c.h.b16 %v891
        %v4069 = vunpack.c.l.b16 %v892
        %v4070 = vunpack.c.h.b16 %v892
        %v4071 = vunpack.c.l.b16 %v893
        %v4072 = vunpack.c.h.b16 %v893
        %v4073 = vunpack.c.l.b16 %v894
        %v4074 = vunpack.c.h.b16 %v894
        %v4075 = vunpack.c.l.b16 %v895
        %v4076 = vunpack.c.h.b16 %v895
        %v4077 = vunpack.c.l.b16 %v896
        %v4078 = vunpack.c.h.b16 %v896
        %v4079 = vunpack.c.l.b16 %v897
        %v4080 = vunpack.c.h.b16 %v897
        %v4081 = vunpack.c.l.b16 %v898
        %v4082 = vunpack.c.h.b16 %v898
        %v4083 = vunpack.c.l.b16 %v899
        %v4084 = vunpack.c.h.b16 %v899
        %v4085 = vunpack.c.l.b16 %v900
        %v4086 = vunpack.c.h.b16 %v900
        %v4087 = vunpack.c.l.b16 %v901
        %v4088 = vunpack.c.h.b16 %v901
        %v4089 = vunpack.c.l.b16 %v902
        %v4090 = vunpack.c.h.b16 %v902
        %v4091 = vunpack.c.l.b16 %v903
        %v4092 = vunpack.c.h.b16 %v903
        %v4093 = vunpack.c.l.b16 %v904
        %v4094 = vunpack.c.h.b16 %v904
        %v4095 = vunpack.c.l.b16 %v905
        %v4096 = vunpack.c.h.b16 %v905
        %v4097 = vunpack.c.l.b16 %v906
        %v4098 = vunpack.c.h.b16 %v906
        %v4099 = vunpack.c.l.b16 %v907
        %v4100 = vunpack.c.h.b16 %v907
        %v4101 = vunpack.c.l.b16 %v908
        %v4102 = vunpack.c.h.b16 %v908
        %v4103 = vunpack.c.l.b16 %v909
        %v4104 = vunpack.c.h.b16 %v909
        %v4105 = vunpack.c.l.b16 %v910
        %v4106 = vunpack.c.h.b16 %v910
        %v4107 = vunpack.c.l.b16 %v911
        %v4108 = vunpack.c.h.b16 %v911
        %v4109 = vunpack.c.l.b16 %v912
        %v4110 = vunpack.c.h.b16 %v912
        %v4111 = vunpack.c.l.b16 %v913
        %v4112 = vunpack.c.h.b16 %v913
        %v4113 = vunpack.c.l.b16 %v914
        %v4114 = vunpack.c.h.b16 %v914
        %v4115 = vunpack.c.l.b16 %v915
        %v4116 = vunpack.c.h.b16 %v915
        %v4117 = vunpack.c.l.b16 %v916
        %v4118 = vunpack.c.h.b16 %v916
        %v4119 = vunpack.c.l.b16 %v917
        %v4120 = vunpack.c.h.b16 %v917
        %v4121 = vunpack.c.l.b16 %v918
        %v4122 = vunpack.c.h.b16 %v918
        %v4123 = vunpack.c.l.b16 %v919
        %v4124 = vunpack.c.h.b16 %v919
        %v4125 = vunpack.c.l.b16 %v920
        %v4126 = vunpack.c.h.b16 %v920
        %v4127 = vunpack.c.l.b16 %v921
        %v4128 = vunpack.c.h.b16 %v921
        %v4129 = vunpack.c.l.b16 %v922
        %v4130 = vunpack.c.h.b16 %v922
        %v4131 = vunpack.c.l.b16 %v923
        %v4132 = vunpack.c.h.b16 %v923
        %v4133 = vunpack.c.l.b16 %v924
        %v4134 = vunpack.c.h.b16 %v924
        %v4135 = vunpack.c.l.b16 %v925
        %v4136 = vunpack.c.h.b16 %v925
        %v4137 = vunpack.c.l.b16 %v926
        %v4138 = vunpack.c.h.b16 %v926
        %v4139 = vunpack.c.l.b16 %v927
        %v4140 = vunpack.c.h.b16 %v927
        %v4141 = vunpack.c.l.b16 %v928
        %v4142 = vunpack.c.h.b16 %v928
        %v4143 = vunpack.c.l.b16 %v929
        %v4144 = vunpack.c.h.b16 %v929
        %v4145 = vunpack.c.l.b16 %v930
        %v4146 = vunpack.c.h.b16 %v930
        %v4147 = vunpack.c.l.b16 %v931
        %v4148 = vunpack.c.h.b16 %v931
        %v4149 = vunpack.c.l.b16 %v932
        %v4150 = vunpack.c.h.b16 %v932
        %v4151 = vunpack.c.l.b16 %v933
        %v4152 = vunpack.c.h.b16 %v933
        %v4153 = vunpack.c.l.b16 %v934
        %v4154 = vunpack.c.h.b16 %v934
        %v4155 = vunpack.c.l.b16 %v935
        %v4156 = vunpack.c.h.b16 %v935
        %v4157 = vunpack.c.l.b16 %v936
        %v4158 = vunpack.c.h.b16 %v936
        %v4159 = vunpack.c.l.b16 %v937
        %v4160 = vunpack.c.h.b16 %v937
        %v4161 = vunpack.c.l.b16 %v938
        %v4162 = vunpack.c.h.b16 %v938
        %v4163 = vunpack.c.l.b16 %v939
        %v4164 = vunpack.c.h.b16 %v939
        %v4165 = vunpack.c.l.b16 %v940
        %v4166 = vunpack.c.h.b16 %v940
        %v4167 = vunpack.c.l.b16 %v941
        %v4168 = vunpack.c.h.b16 %v941
        %v4169 = vunpack.c.l.b16 %v942
        %v4170 = vunpack.c.h.b16 %v942
        %v4171 = vunpack.c.l.b16 %v943
        %v4172 = vunpack.c.h.b16 %v943
        %v4173 = vunpack.c.l.b16 %v944
        %v4174 = vunpack.c.h.b16 %v944
        %v4175 = vunpack.c.l.b16 %v945
        %v4176 = vunpack.c.h.b16 %v945
        %v4177 = vunpack.c.l.b16 %v946
        %v4178 = vunpack.c.h.b16 %v946
        %v4179 = vunpack.c.l.b16 %v947
        %v4180 = vunpack.c.h.b16 %v947
        %v4181 = vunpack.c.l.b16 %v948
        %v4182 = vunpack.c.h.b16 %v948
        %v4183 = vunpack.c.l.b16 %v949
        %v4184 = vunpack.c.h.b16 %v949
        %v4185 = vunpack.c.l.b16 %v950
        %v4186 = vunpack.c.h.b16 %v950
        %v4187 = vunpack.c.l.b16 %v951
        %v4188 = vunpack.c.h.b16 %v951
        %v4189 = vunpack.c.l.b16 %v952
        %v4190 = vunpack.c.h.b16 %v952
        %v4191 = vunpack.c.l.b16 %v953
        %v4192 = vunpack.c.h.b16 %v953
        %v4193 = vunpack.c.l.b16 %v954
        %v4194 = vunpack.c.h.b16 %v954
        %v4195 = vunpack.c.l.b16 %v955
        %v4196 = vunpack.c.h.b16 %v955
        %v4197 = vunpack.c.l.b16 %v956
        %v4198 = vunpack.c.h.b16 %v956
        %v4199 = vunpack.c.l.b16 %v957
        %v4200 = vunpack.c.h.b16 %v957
        %v4201 = vunpack.c.l.b16 %v958
        %v4202 = vunpack.c.h.b16 %v958
        %v4203 = vunpack.c.l.b16 %v959
        %v4204 = vunpack.c.h.b16 %v959
        %v4205 = vunpack.c.l.b16 %v960
        %v4206 = vunpack.c.h.b16 %v960
        %v4207 = vunpack.c.l.b16 %v961
        %v4208 = vunpack.c.h.b16 %v961
        %v4209 = vunpack.c.l.b16 %v962
        %v4210 = vunpack.c.h.b16 %v962
        %v4211 = vunpack.c.l.b16 %v963
        %v4212 = vunpack.c.h.b16 %v963
        %v4213 = vunpack.c.l.b16 %v964
        %v4214 = vunpack.c.h.b16 %v964
        %v4215 = vunpack.c.l.b16 %v965
        %v4216 = vunpack.c.h.b16 %v965
        %v4217 = vunpack.c.l.b16 %v966
        %v4218 = vunpack.c.h.b16 %v966
        %v4219 = vunpack.c.l.b16 %v967
        %v4220 = vunpack.c.h.b16 %v967
        %v4221 = vunpack.c.l.b16 %v968
        %v4222 = vunpack.c.h.b16 %v968
        %v4223 = vunpack.c.l.b16 %v969
        %v4224 = vunpack.c.h.b16 %v969
        %v4225 = vunpack.c.l.b16 %v970
        %v4226 = vunpack.c.h.b16 %v970
        %v4227 = vunpack.c.l.b16 %v971
        %v4228 = vunpack.c.h.b16 %v971
        %v4229 = vunpack.c.l.b16 %v972
        %v4230 = vunpack.c.h.b16 %v972
        %v4231 = vunpack.c.l.b16 %v973
        %v4232 = vunpack.c.h.b16 %v973
        %v4233 = vunpack.c.l.b16 %v974
        %v4234 = vunpack.c.h.b16 %v974
        %v4235 = vunpack.c.l.b16 %v975
        %v4236 = vunpack.c.h.b16 %v975
        %v4237 = vunpack.c.l.b16 %v976
        %v4238 = vunpack.c.h.b16 %v976
        %v4239 = vunpack.c.l.b16 %v977
        %v4240 = vunpack.c.h.b16 %v977
        %v4241 = vunpack.c.l.b16 %v978
        %v4242 = vunpack.c.h.b16 %v978
        %v4243 = vunpack.c.l.b16 %v979
        %v4244 = vunpack.c.h.b16 %v979
        %v4245 = vunpack.c.l.b16 %v980
        %v4246 = vunpack.c.h.b16 %v980
        %v4247 = vunpack.c.l.b16 %v981
        %v4248 = vunpack.c.h.b16 %v981
        %v4249 = vunpack.c.l.b16 %v982
        %v4250 = vunpack.c.h.b16 %v982
        %v4251 = vunpack.c.l.b16 %v983
        %v4252 = vunpack.c.h.b16 %v983
        %v4253 = vunpack.c.l.b16 %v984
        %v4254 = vunpack.c.h.b16 %v984
        %v4255 = vunpack.c.l.b16 %v985
        %v4256 = vunpack.c.h.b16 %v985
        %v4257 = vunpack.c.l.b16 %v986
        %v4258 = vunpack.c.h.b16 %v986
        %v4259 = vunpack.c.l.b16 %v987
        %v4260 = vunpack.c.h.b16 %v987
        %v4261 = vunpack.c.l.b16 %v988
        %v4262 = vunpack.c.h.b16 %v988
        %v4263 = vunpack.c.l.b16 %v989
        %v4264 = vunpack.c.h.b16 %v989
        %v4265 = vunpack.c.l.b16 %v990
        %v4266 = vunpack.c.h.b16 %v990
        %v4267 = vunpack.c.l.b16 %v991
        %v4268 = vunpack.c.h.b16 %v991
        %v4269 = vunpack.c.l.b16 %v992
        %v4270 = vunpack.c.h.b16 %v992
        %v4271 = vunpack.c.l.b16 %v993
        %v4272 = vunpack.c.h.b16 %v993
        %v4273 = vunpack.c.l.b16 %v994
        %v4274 = vunpack.c.h.b16 %v994
        %v4275 = vunpack.c.l.b16 %v995
        %v4276 = vunpack.c.h.b16 %v995
        %v4277 = vunpack.c.l.b16 %v996
        %v4278 = vunpack.c.h.b16 %v996
        %v4279 = vunpack.c.l.b16 %v997
        %v4280 = vunpack.c.h.b16 %v997
        %v4281 = vunpack.c.l.b16 %v998
        %v4282 = vunpack.c.h.b16 %v998
        %v4283 = vunpack.c.l.b16 %v999
        %v4284 = vunpack.c.h.b16 %v999
        %v4285 = vunpack.c.l.b16 %v1000
        %v4286 = vunpack.c.h.b16 %v1000
        %v4287 = vunpack.c.l.b16 %v1001
        %v4288 = vunpack.c.h.b16 %v1001
        %v4289 = vunpack.c.l.b16 %v1002
        %v4290 = vunpack.c.h.b16 %v1002
        %v4291 = vunpack.c.l.b16 %v1003
        %v4292 = vunpack.c.h.b16 %v1003
        %v4293 = vunpack.c.l.b16 %v1004
        %v4294 = vunpack.c.h.b16 %v1004
        %v4295 = vunpack.c.l.b16 %v1005
        %v4296 = vunpack.c.h.b16 %v1005
        %v4297 = vunpack.c.l.b16 %v1006
        %v4298 = vunpack.c.h.b16 %v1006
        %v4299 = vunpack.c.l.b16 %v1007
        %v4300 = vunpack.c.h.b16 %v1007
        %v4301 = vunpack.c.l.b16 %v1008
        %v4302 = vunpack.c.h.b16 %v1008
        %v4303 = vunpack.c.l.b16 %v1009
        %v4304 = vunpack.c.h.b16 %v1009
        %v4305 = vunpack.c.l.b16 %v1010
        %v4306 = vunpack.c.h.b16 %v1010
        %v4307 = vunpack.c.l.b16 %v1011
        %v4308 = vunpack.c.h.b16 %v1011
        %v4309 = vunpack.c.l.b16 %v1012
        %v4310 = vunpack.c.h.b16 %v1012
        %v4311 = vunpack.c.l.b16 %v1013
        %v4312 = vunpack.c.h.b16 %v1013
        %v4313 = vunpack.c.l.b16 %v1014
        %v4314 = vunpack.c.h.b16 %v1014
        %v4315 = vunpack.c.l.b16 %v1015
        %v4316 = vunpack.c.h.b16 %v1015
        %v4317 = vunpack.c.l.b16 %v1016
        %v4318 = vunpack.c.h.b16 %v1016
        %v4319 = vunpack.c.l.b16 %v1017
        %v4320 = vunpack.c.h.b16 %v1017
        %v4321 = vunpack.c.l.b16 %v1018
        %v4322 = vunpack.c.h.b16 %v1018
        %v4323 = vunpack.c.l.b16 %v1019
        %v4324 = vunpack.c.h.b16 %v1019
        %v4325 = vunpack.c.l.b16 %v1020
        %v4326 = vunpack.c.h.b16 %v1020
        %v4327 = vunpack.c.l.b16 %v1021
        %v4328 = vunpack.c.h.b16 %v1021
        %v4329 = vunpack.c.l.b16 %v1022
        %v4330 = vunpack.c.h.b16 %v1022
        %v4331 = vunpack.c.l.b16 %v1023
        %v4332 = vunpack.c.h.b16 %v1023
        %v4333 = vunpack.c.l.b16 %v1024
        %v4334 = vunpack.c.h.b16 %v1024
        %v4335 = vunpack.c.l.b16 %v1025
        %v4336 = vunpack.c.h.b16 %v1025
        %v4337 = vunpack.c.l.b16 %v1026
        %v4338 = vunpack.c.h.b16 %v1026
        %v4339 = vunpack.c.l.b16 %v1027
        %v4340 = vunpack.c.h.b16 %v1027
        %v4341 = vunpack.c.l.b16 %v1028
        %v4342 = vunpack.c.h.b16 %v1028
        %v4343 = vunpack.c.l.b16 %v1029
        %v4344 = vunpack.c.h.b16 %v1029
        %v4345 = vunpack.c.l.b16 %v1030
        %v4346 = vunpack.c.h.b16 %v1030
        %v4347 = vunpack.c.l.b16 %v1031
        %v4348 = vunpack.c.h.b16 %v1031
        %v4349 = vunpack.c.l.b16 %v1032
        %v4350 = vunpack.c.h.b16 %v1032
        %v4351 = vunpack.c.l.b16 %v1033
        %v4352 = vunpack.c.h.b16 %v1033
        %v4353 = vunpack.c.l.b16 %v1034
        %v4354 = vunpack.c.h.b16 %v1034
        %v4355 = vunpack.c.l.b16 %v1035
        %v4356 = vunpack.c.h.b16 %v1035
        %v4357 = vunpack.c.l.b16 %v1036
        %v4358 = vunpack.c.h.b16 %v1036
        %v4359 = vunpack.c.l.b16 %v1037
        %v4360 = vunpack.c.h.b16 %v1037
        %v4361 = vunpack.c.l.b16 %v1038
        %v4362 = vunpack.c.h.b16 %v1038
        %v4363 = vunpack.c.l.b16 %v1039
        %v4364 = vunpack.c.h.b16 %v1039
        %v4365 = vunpack.c.l.b16 %v1040
        %v4366 = vunpack.c.h.b16 %v1040
        %v4367 = vunpack.c.l.b16 %v1041
        %v4368 = vunpack.c.h.b16 %v1041
        %v4369 = vunpack.c.l.b16 %v1042
        %v4370 = vunpack.c.h.b16 %v1042
        %v4371 = vunpack.c.l.b16 %v1043
        %v4372 = vunpack.c.h.b16 %v1043
        %v4373 = vunpack.c.l.b16 %v1044
        %v4374 = vunpack.c.h.b16 %v1044
        %v4375 = vunpack.c.l.b16 %v1045
        %v4376 = vunpack.c.h.b16 %v1045
        %v4377 = vunpack.c.l.b16 %v1046
        %v4378 = vunpack.c.h.b16 %v1046
        %v4379 = vunpack.c.l.b16 %v1047
        %v4380 = vunpack.c.h.b16 %v1047
        %v4381 = vunpack.c.l.b16 %v1048
        %v4382 = vunpack.c.h.b16 %v1048
        %v4383 = vunpack.c.l.b16 %v1049
        %v4384 = vunpack.c.h.b16 %v1049
        %v4385 = vunpack.c.l.b16 %v1050
        %v4386 = vunpack.c.h.b16 %v1050
        %v4387 = vunpack.c.l.b16 %v1051
        %v4388 = vunpack.c.h.b16 %v1051
        %v4389 = vunpack.c.l.b16 %v1052
        %v4390 = vunpack.c.h.b16 %v1052
        %v4391 = vunpack.c.l.b16 %v1053
        %v4392 = vunpack.c.h.b16 %v1053
        %v4393 = vunpack.c.l.b16 %v1054
        %v4394 = vunpack.c.h.b16 %v1054
        %v4395 = vunpack.c.l.b16 %v1055
        %v4396 = vunpack.c.h.b16 %v1055
        %v4397 = vunpack.c.l.b16 %v1056
        %v4398 = vunpack.c.h.b16 %v1056
        %v4399 = vunpack.c.l.b16 %v1057
        %v4400 = vunpack.c.h.b16 %v1057
        %v4401 = vunpack.c.l.b16 %v1058
        %v4402 = vunpack.c.h.b16 %v1058
        %v4403 = vunpack.c.l.b16 %v1059
        %v4404 = vunpack.c.h.b16 %v1059
        %v4405 = vunpack.c.l.b16 %v1060
        %v4406 = vunpack.c.h.b16 %v1060
        %v4407 = vunpack.c.l.b16 %v1061
        %v4408 = vunpack.c.h.b16 %v1061
        %v4409 = vunpack.c.l.b16 %v1062
        %v4410 = vunpack.c.h.b16 %v1062
        %v4411 = vunpack.c.l.b16 %v1063
        %v4412 = vunpack.c.h.b16 %v1063
        %v4413 = vunpack.c.l.b16 %v1064
        %v4414 = vunpack.c.h.b16 %v1064
        %v4415 = vunpack.c.l.b16 %v1065
        %v4416 = vunpack.c.h.b16 %v1065
        %v4417 = vunpack.c.l.b16 %v1066
        %v4418 = vunpack.c.h.b16 %v1066
        %v4419 = vunpack.c.l.b16 %v1067
        %v4420 = vunpack.c.h.b16 %v1067
        %v4421 = vunpack.c.l.b16 %v1068
        %v4422 = vunpack.c.h.b16 %v1068
        %v4423 = vunpack.c.l.b16 %v1069
        %v4424 = vunpack.c.h.b16 %v1069
        %v4425 = vunpack.c.l.b16 %v1070
        %v4426 = vunpack.c.h.b16 %v1070
        %v4427 = vunpack.c.l.b16 %v1071
        %v4428 = vunpack.c.h.b16 %v1071
        %v4429 = vunpack.c.l.b16 %v1072
        %v4430 = vunpack.c.h.b16 %v1072
        %v4431 = vunpack.c.l.b16 %v1073
        %v4432 = vunpack.c.h.b16 %v1073
        %v4433 = vunpack.c.l.b16 %v1074
        %v4434 = vunpack.c.h.b16 %v1074
        %v4435 = vunpack.c.l.b16 %v1075
        %v4436 = vunpack.c.h.b16 %v1075
        %v4437 = vunpack.c.l.b16 %v1076
        %v4438 = vunpack.c.h.b16 %v1076
        %v4439 = vunpack.c.l.b16 %v1077
        %v4440 = vunpack.c.h.b16 %v1077
        %v4441 = vunpack.c.l.b16 %v1078
        %v4442 = vunpack.c.h.b16 %v1078
        %v4443 = vunpack.c.l.b16 %v1079
        %v4444 = vunpack.c.h.b16 %v1079
        %v4445 = vunpack.c.l.b16 %v1080
        %v4446 = vunpack.c.h.b16 %v1080
        %v4447 = vunpack.c.l.b16 %v1081
        %v4448 = vunpack.c.h.b16 %v1081
        %v4449 = vunpack.c.l.b16 %v1082
        %v4450 = vunpack.c.h.b16 %v1082
        %v4451 = vunpack.c.l.b16 %v1083
        %v4452 = vunpack.c.h.b16 %v1083
        %v4453 = vunpack.c.l.b16 %v1084
        %v4454 = vunpack.c.h.b16 %v1084
        %v4455 = vunpack.c.l.b16 %v1085
        %v4456 = vunpack.c.h.b16 %v1085
        %v4457 = vunpack.c.l.b16 %v1086
        %v4458 = vunpack.c.h.b16 %v1086
        %v4459 = vunpack.c.l.b16 %v1087
        %v4460 = vunpack.c.h.b16 %v1087
        %v4461 = vunpack.c.l.b16 %v1088
        %v4462 = vunpack.c.h.b16 %v1088
        %v4463 = vunpack.c.l.b16 %v1089
        %v4464 = vunpack.c.h.b16 %v1089
        %v4465 = vunpack.c.l.b16 %v1090
        %v4466 = vunpack.c.h.b16 %v1090
        %v4467 = vunpack.c.l.b16 %v1091
        %v4468 = vunpack.c.h.b16 %v1091
        %v4469 = vunpack.c.l.b16 %v1092
        %v4470 = vunpack.c.h.b16 %v1092
        %v4471 = vunpack.c.l.b16 %v1093
        %v4472 = vunpack.c.h.b16 %v1093
        %v4473 = vunpack.c.l.b16 %v1094
        %v4474 = vunpack.c.h.b16 %v1094
        %v4475 = vunpack.c.l.b16 %v1095
        %v4476 = vunpack.c.h.b16 %v1095
        %v4477 = vunpack.c.l.b16 %v1096
        %v4478 = vunpack.c.h.b16 %v1096
        %v4479 = vunpack.c.l.b16 %v1097
        %v4480 = vunpack.c.h.b16 %v1097
        %v4481 = vunpack.c.l.b16 %v1098
        %v4482 = vunpack.c.h.b16 %v1098
        %v4483 = vunpack.c.l.b16 %v1099
        %v4484 = vunpack.c.h.b16 %v1099
        %v4485 = vunpack.c.l.b16 %v1100
        %v4486 = vunpack.c.h.b16 %v1100
        %v4487 = vunpack.c.l.b16 %v1101
        %v4488 = vunpack.c.h.b16 %v1101
        %v4489 = vunpack.c.l.b16 %v1102
        %v4490 = vunpack.c.h.b16 %v1102
        %v4491 = vunpack.c.l.b16 %v1103
        %v4492 = vunpack.c.h.b16 %v1103
        %v4493 = vunpack.c.l.b16 %v1104
        %v4494 = vunpack.c.h.b16 %v1104
        %v4495 = vunpack.c.l.b16 %v1105
        %v4496 = vunpack.c.h.b16 %v1105
        %v4497 = vunpack.c.l.b16 %v1106
        %v4498 = vunpack.c.h.b16 %v1106
        %v4499 = vunpack.c.l.b16 %v1107
        %v4500 = vunpack.c.h.b16 %v1107
        %v4501 = vunpack.c.l.b16 %v1108
        %v4502 = vunpack.c.h.b16 %v1108
        %v4503 = vunpack.c.l.b16 %v1109
        %v4504 = vunpack.c.h.b16 %v1109
        %v4505 = vunpack.c.l.b16 %v1110
        %v4506 = vunpack.c.h.b16 %v1110
        %v4507 = vunpack.c.l.b16 %v1111
        %v4508 = vunpack.c.h.b16 %v1111
        %v4509 = vunpack.c.l.b16 %v1112
        %v4510 = vunpack.c.h.b16 %v1112
        %v4511 = vunpack.c.l.b16 %v1113
        %v4512 = vunpack.c.h.b16 %v1113
        %v4513 = vunpack.c.l.b16 %v1114
        %v4514 = vunpack.c.h.b16 %v1114
        %v4515 = vunpack.c.l.b16 %v1115
        %v4516 = vunpack.c.h.b16 %v1115
        %v4517 = vunpack.c.l.b16 %v1116
        %v4518 = vunpack.c.h.b16 %v1116
        %v4519 = vunpack.c.l.b16 %v1117
        %v4520 = vunpack.c.h.b16 %v1117
        %v4521 = vunpack.c.l.b16 %v1118
        %v4522 = vunpack.c.h.b16 %v1118
        %v4523 = vunpack.c.l.b16 %v1119
        %v4524 = vunpack.c.h.b16 %v1119
        %v4525 = vunpack.c.l.b16 %v1120
        %v4526 = vunpack.c.h.b16 %v1120
        %v4527 = vunpack.c.l.b16 %v1121
        %v4528 = vunpack.c.h.b16 %v1121
        %v4529 = vunpack.c.l.b16 %v1122
        %v4530 = vunpack.c.h.b16 %v1122
        %v4531 = vunpack.c.l.b16 %v1123
        %v4532 = vunpack.c.h.b16 %v1123
        %v4533 = vunpack.c.l.b16 %v1124
        %v4534 = vunpack.c.h.b16 %v1124
        %v4535 = vunpack.c.l.b16 %v1125
        %v4536 = vunpack.c.h.b16 %v1125
        %v4537 = vunpack.c.l.b16 %v1126
        %v4538 = vunpack.c.h.b16 %v1126
        %v4539 = vunpack.c.l.b16 %v1127
        %v4540 = vunpack.c.h.b16 %v1127
        %v4541 = vunpack.c.l.b16 %v1128
        %v4542 = vunpack.c.h.b16 %v1128
        %v4543 = vunpack.c.l.b16 %v1129
        %v4544 = vunpack.c.h.b16 %v1129
        %v4545 = vunpack.c.l.b16 %v1130
        %v4546 = vunpack.c.h.b16 %v1130
        %v4547 = vunpack.c.l.b16 %v1131
        %v4548 = vunpack.c.h.b16 %v1131
        %v4549 = vunpack.c.l.b16 %v1132
        %v4550 = vunpack.c.h.b16 %v1132
        %v4551 = vunpack.c.l.b16 %v1133
        %v4552 = vunpack.c.h.b16 %v1133
        %v4553 = vunpack.c.l.b16 %v1134
        %v4554 = vunpack.c.h.b16 %v1134
        %v4555 = vunpack.c.l.b16 %v1135
        %v4556 = vunpack.c.h.b16 %v1135
        %v4557 = vunpack.c.l.b16 %v1136
        %v4558 = vunpack.c.h.b16 %v1136
        %v4559 = vunpack.c.l.b16 %v1137
        %v4560 = vunpack.c.h.b16 %v1137
        %v4561 = vunpack.c.l.b16 %v1138
        %v4562 = vunpack.c.h.b16 %v1138
        %v4563 = vunpack.c.l.b16 %v1139
        %v4564 = vunpack.c.h.b16 %v1139
        %v4565 = vunpack.c.l.b16 %v1140
        %v4566 = vunpack.c.h.b16 %v1140
        %v4567 = vunpack.c.l.b16 %v1141
        %v4568 = vunpack.c.h.b16 %v1141
        %v4569 = vunpack.c.l.b16 %v1142
        %v4570 = vunpack.c.h.b16 %v1142
        %v4571 = vunpack.c.l.b16 %v1143
        %v4572 = vunpack.c.h.b16 %v1143
        %v4573 = vunpack.c.l.b16 %v1144
        %v4574 = vunpack.c.h.b16 %v1144
        %v4575 = vunpack.c.l.b16 %v1145
        %v4576 = vunpack.c.h.b16 %v1145
        %v4577 = vunpack.c.l.b16 %v1146
        %v4578 = vunpack.c.h.b16 %v1146
        %v4579 = vunpack.c.l.b16 %v1147
        %v4580 = vunpack.c.h.b16 %v1147
        %v4581 = vunpack.c.l.b16 %v1148
        %v4582 = vunpack.c.h.b16 %v1148
        %v4583 = vunpack.c.l.b16 %v1149
        %v4584 = vunpack.c.h.b16 %v1149
        %v4585 = vunpack.c.l.b16 %v1150
        %v4586 = vunpack.c.h.b16 %v1150
        %v4587 = vunpack.c.l.b16 %v1151
        %v4588 = vunpack.c.h.b16 %v1151
        %v4589 = vunpack.c.l.b16 %v1152
        %v4590 = vunpack.c.h.b16 %v1152
        %v4591 = vunpack.c.l.b16 %v1153
        %v4592 = vunpack.c.h.b16 %v1153
        %v4593 = vunpack.c.l.b16 %v1154
        %v4594 = vunpack.c.h.b16 %v1154
        %v4595 = vunpack.c.l.b16 %v1155
        %v4596 = vunpack.c.h.b16 %v1155
        %v4597 = vunpack.c.l.b16 %v1156
        %v4598 = vunpack.c.h.b16 %v1156
        %v4599 = vunpack.c.l.b16 %v1157
        %v4600 = vunpack.c.h.b16 %v1157
        %v4601 = vunpack.c.l.b16 %v1158
        %v4602 = vunpack.c.h.b16 %v1158
        %v4603 = vunpack.c.l.b16 %v1159
        %v4604 = vunpack.c.h.b16 %v1159
        %v4605 = vunpack.c.l.b16 %v1160
        %v4606 = vunpack.c.h.b16 %v1160
        %v4607 = vunpack.c.l.b16 %v1161
        %v4608 = vunpack.c.h.b16 %v1161
        %v4609 = vunpack.c.l.b16 %v1162
        %v4610 = vunpack.c.h.b16 %v1162
        %v4611 = vunpack.c.l.b16 %v1163
        %v4612 = vunpack.c.h.b16 %v1163
        %v4613 = vunpack.c.l.b16 %v1164
        %v4614 = vunpack.c.h.b16 %v1164
        %v4615 = vunpack.c.l.b16 %v1165
        %v4616 = vunpack.c.h.b16 %v1165
        %v4617 = vunpack.c.l.b16 %v1166
        %v4618 = vunpack.c.h.b16 %v1166
        %v4619 = vunpack.c.l.b16 %v1167
        %v4620 = vunpack.c.h.b16 %v1167
        %v4621 = vunpack.c.l.b16 %v1168
        %v4622 = vunpack.c.h.b16 %v1168
        %v4623 = vunpack.c.l.b16 %v1169
        %v4624 = vunpack.c.h.b16 %v1169
        %v4625 = vunpack.c.l.b16 %v1170
        %v4626 = vunpack.c.h.b16 %v1170
        %v4627 = vunpack.c.l.b16 %v1171
        %v4628 = vunpack.c.h.b16 %v1171
        %v4629 = vunpack.c.l.b16 %v1172
        %v4630 = vunpack.c.h.b16 %v1172
        %v4631 = vunpack.c.l.b16 %v1173
        %v4632 = vunpack.c.h.b16 %v1173
        %v4633 = vunpack.c.l.b16 %v1174
        %v4634 = vunpack.c.h.b16 %v1174
        %v4635 = vunpack.c.l.b16 %v1175
        %v4636 = vunpack.c.h.b16 %v1175
        %v4637 = vunpack.c.l.b16 %v1176
        %v4638 = vunpack.c.h.b16 %v1176
        %v4639 = vunpack.c.l.b16 %v1177
        %v4640 = vunpack.c.h.b16 %v1177
        %v4641 = vunpack.c.l.b16 %v1178
        %v4642 = vunpack.c.h.b16 %v1178
        %v4643 = vunpack.c.l.b16 %v1179
        %v4644 = vunpack.c.h.b16 %v1179
        %v4645 = vunpack.c.l.b16 %v1180
        %v4646 = vunpack.c.h.b16 %v1180
        %v4647 = vunpack.c.l.b16 %v1181
        %v4648 = vunpack.c.h.b16 %v1181
        %v4649 = vunpack.c.l.b16 %v1182
        %v4650 = vunpack.c.h.b16 %v1182
        %v4651 = vunpack.c.l.b16 %v1183
        %v4652 = vunpack.c.h.b16 %v1183
        %v4653 = vunpack.c.l.b16 %v1184
        %v4654 = vunpack.c.h.b16 %v1184
        %v4655 = vunpack.c.l.b16 %v1185
        %v4656 = vunpack.c.h.b16 %v1185
        %v4657 = vunpack.c.l.b16 %v1186
        %v4658 = vunpack.c.h.b16 %v1186
        %v4659 = vunpack.c.l.b16 %v1187
        %v4660 = vunpack.c.h.b16 %v1187
        %v4661 = vunpack.c.l.b16 %v1188
        %v4662 = vunpack.c.h.b16 %v1188
        %v4663 = vunpack.c.l.b16 %v1189
        %v4664 = vunpack.c.h.b16 %v1189
        %v4665 = vunpack.c.l.b16 %v1190
        %v4666 = vunpack.c.h.b16 %v1190
        %v4667 = vunpack.c.l.b16 %v1191
        %v4668 = vunpack.c.h.b16 %v1191
        %v4669 = vunpack.c.l.b16 %v1192
        %v4670 = vunpack.c.h.b16 %v1192
        %v4671 = vunpack.c.l.b16 %v1193
        %v4672 = vunpack.c.h.b16 %v1193
        %v4673 = vunpack.c.l.b16 %v1194
        %v4674 = vunpack.c.h.b16 %v1194
        %v4675 = vunpack.c.l.b16 %v1195
        %v4676 = vunpack.c.h.b16 %v1195
        %v4677 = vunpack.c.l.b16 %v1196
        %v4678 = vunpack.c.h.b16 %v1196
        %v4679 = vunpack.c.l.b16 %v1197
        %v4680 = vunpack.c.h.b16 %v1197
        %v4681 = vunpack.c.l.b16 %v1198
        %v4682 = vunpack.c.h.b16 %v1198
        %v4683 = vunpack.c.l.b16 %v1199
        %v4684 = vunpack.c.h.b16 %v1199
        %v4685 = vunpack.c.l.b16 %v1200
        %v4686 = vunpack.c.h.b16 %v1200
        %v4687 = vunpack.c.l.b16 %v1201
        %v4688 = vunpack.c.h.b16 %v1201
        %v4689 = vunpack.c.l.b16 %v1202
        %v4690 = vunpack.c.h.b16 %v1202
        %v4691 = vunpack.c.l.b16 %v1203
        %v4692 = vunpack.c.h.b16 %v1203
        %v4693 = vunpack.c.l.b16 %v1204
        %v4694 = vunpack.c.h.b16 %v1204
        %v4695 = vunpack.c.l.b16 %v1205
        %v4696 = vunpack.c.h.b16 %v1205
        %v4697 = vunpack.c.l.b16 %v1206
        %v4698 = vunpack.c.h.b16 %v1206
        %v4699 = vunpack.c.l.b16 %v1207
        %v4700 = vunpack.c.h.b16 %v1207
        %v4701 = vunpack.c.l.b16 %v1208
        %v4702 = vunpack.c.h.b16 %v1208
        %v4703 = vunpack.c.l.b16 %v1209
        %v4704 = vunpack.c.h.b16 %v1209
        %v4705 = vunpack.c.l.b16 %v1210
        %v4706 = vunpack.c.h.b16 %v1210
        %v4707 = vunpack.c.l.b16 %v1211
        %v4708 = vunpack.c.h.b16 %v1211
        %v4709 = vunpack.c.l.b16 %v1212
        %v4710 = vunpack.c.h.b16 %v1212
        %v4711 = vunpack.c.l.b16 %v1213
        %v4712 = vunpack.c.h.b16 %v1213
        %v4713 = vunpack.c.l.b16 %v1214
        %v4714 = vunpack.c.h.b16 %v1214
        %v4715 = vunpack.c.l.b16 %v1215
        %v4716 = vunpack.c.h.b16 %v1215
        %v4717 = vunpack.c.l.b16 %v1216
        %v4718 = vunpack.c.h.b16 %v1216
        %v4719 = vunpack.c.l.b16 %v1217
        %v4720 = vunpack.c.h.b16 %v1217
        %v4721 = vunpack.c.l.b16 %v1218
        %v4722 = vunpack.c.h.b16 %v1218
        %v4723 = vunpack.c.l.b16 %v1219
        %v4724 = vunpack.c.h.b16 %v1219
        %v4725 = vunpack.c.l.b16 %v1220
        %v4726 = vunpack.c.h.b16 %v1220
        %v4727 = vunpack.c.l.b16 %v1221
        %v4728 = vunpack.c.h.b16 %v1221
        %v4729 = vunpack.c.l.b16 %v1222
        %v4730 = vunpack.c.h.b16 %v1222
        %v4731 = vunpack.c.l.b16 %v1223
        %v4732 = vunpack.c.h.b16 %v1223
        %v4733 = vunpack.c.l.b16 %v1224
        %v4734 = vunpack.c.h.b16 %v1224
        %v4735 = vunpack.c.l.b16 %v1225
        %v4736 = vunpack.c.h.b16 %v1225
        %v4737 = vunpack.c.l.b16 %v1226
        %v4738 = vunpack.c.h.b16 %v1226
        %v4739 = vunpack.c.l.b16 %v1227
        %v4740 = vunpack.c.h.b16 %v1227
        %v4741 = vunpack.c.l.b16 %v1228
        %v4742 = vunpack.c.h.b16 %v1228
        %v4743 = vunpack.c.l.b16 %v1229
        %v4744 = vunpack.c.h.b16 %v1229
        %v4745 = vunpack.c.l.b16 %v1230
        %v4746 = vunpack.c.h.b16 %v1230
        %v4747 = vunpack.c.l.b16 %v1231
        %v4748 = vunpack.c.h.b16 %v1231
        %v4749 = vunpack.c.l.b16 %v1232
        %v4750 = vunpack.c.h.b16 %v1232
        %v4751 = vunpack.c.l.b16 %v1233
        %v4752 = vunpack.c.h.b16 %v1233
        %v4753 = vunpack.c.l.b16 %v1234
        %v4754 = vunpack.c.h.b16 %v1234
        %v4755 = vunpack.c.l.b16 %v1235
        %v4756 = vunpack.c.h.b16 %v1235
        %v4757 = vunpack.c.l.b16 %v1236
        %v4758 = vunpack.c.h.b16 %v1236
        %v4759 = vunpack.c.l.b16 %v1237
        %v4760 = vunpack.c.h.b16 %v1237
        %v4761 = vunpack.c.l.b16 %v1238
        %v4762 = vunpack.c.h.b16 %v1238
        %v4763 = vunpack.c.l.b16 %v1239
        %v4764 = vunpack.c.h.b16 %v1239
        %v4765 = vunpack.c.l.b16 %v1240
        %v4766 = vunpack.c.h.b16 %v1240
        %v4767 = vunpack.c.l.b16 %v1241
        %v4768 = vunpack.c.h.b16 %v1241
        %v4769 = vunpack.c.l.b16 %v1242
        %v4770 = vunpack.c.h.b16 %v1242
        %v4771 = vunpack.c.l.b16 %v1243
        %v4772 = vunpack.c.h.b16 %v1243
        %v4773 = vunpack.c.l.b16 %v1244
        %v4774 = vunpack.c.h.b16 %v1244
        %v4775 = vunpack.c.l.b16 %v1245
        %v4776 = vunpack.c.h.b16 %v1245
        %v4777 = vunpack.c.l.b16 %v1246
        %v4778 = vunpack.c.h.b16 %v1246
        %v4779 = vunpack.c.l.b16 %v1247
        %v4780 = vunpack.c.h.b16 %v1247
        %v4781 = vunpack.c.l.b16 %v1248
        %v4782 = vunpack.c.h.b16 %v1248
        %v4783 = vunpack.c.l.b16 %v1249
        %v4784 = vunpack.c.h.b16 %v1249
        %v4785 = vunpack.c.l.b16 %v1250
        %v4786 = vunpack.c.h.b16 %v1250
        %v4787 = vunpack.c.l.b16 %v1251
        %v4788 = vunpack.c.h.b16 %v1251
        %v4789 = vunpack.c.l.b16 %v1252
        %v4790 = vunpack.c.h.b16 %v1252
        %v4791 = vunpack.c.l.b16 %v1253
        %v4792 = vunpack.c.h.b16 %v1253
        %v4793 = vunpack.c.l.b16 %v1254
        %v4794 = vunpack.c.h.b16 %v1254
        %v4795 = vunpack.c.l.b16 %v1255
        %v4796 = vunpack.c.h.b16 %v1255
        %v4797 = vunpack.c.l.b16 %v1256
        %v4798 = vunpack.c.h.b16 %v1256
        %v4799 = vunpack.c.l.b16 %v1257
        %v4800 = vunpack.c.h.b16 %v1257
        %v4801 = vunpack.c.l.b16 %v1258
        %v4802 = vunpack.c.h.b16 %v1258
        %v4803 = vunpack.c.l.b16 %v1259
        %v4804 = vunpack.c.h.b16 %v1259
        %v4805 = vunpack.c.l.b16 %v1260
        %v4806 = vunpack.c.h.b16 %v1260
        %v4807 = vunpack.c.l.b16 %v1261
        %v4808 = vunpack.c.h.b16 %v1261
        %v4809 = vunpack.c.l.b16 %v1262
        %v4810 = vunpack.c.h.b16 %v1262
        %v4811 = vunpack.c.l.b16 %v1263
        %v4812 = vunpack.c.h.b16 %v1263
        %v4813 = vunpack.c.l.b16 %v1264
        %v4814 = vunpack.c.h.b16 %v1264
        %v4815 = vunpack.c.l.b16 %v1265
        %v4816 = vunpack.c.h.b16 %v1265
        %v4817 = vunpack.c.l.b16 %v1266
        %v4818 = vunpack.c.h.b16 %v1266
        %v4819 = vunpack.c.l.b16 %v1267
        %v4820 = vunpack.c.h.b16 %v1267
        %v4821 = vunpack.c.l.b16 %v1268
        %v4822 = vunpack.c.h.b16 %v1268
        %v4823 = vunpack.c.l.b16 %v1269
        %v4824 = vunpack.c.h.b16 %v1269
        %v4825 = vunpack.c.l.b16 %v1270
        %v4826 = vunpack.c.h.b16 %v1270
        %v4827 = vunpack.c.l.b16 %v1271
        %v4828 = vunpack.c.h.b16 %v1271
        %v4829 = vunpack.c.l.b16 %v1272
        %v4830 = vunpack.c.h.b16 %v1272
        %v4831 = vunpack.c.l.b16 %v1273
        %v4832 = vunpack.c.h.b16 %v1273
        %v4833 = vunpack.c.l.b16 %v1274
        %v4834 = vunpack.c.h.b16 %v1274
        %v4835 = vunpack.c.l.b16 %v1275
        %v4836 = vunpack.c.h.b16 %v1275
        %v4837 = vunpack.c.l.b16 %v1276
        %v4838 = vunpack.c.h.b16 %v1276
        %v4839 = vunpack.c.l.b16 %v1277
        %v4840 = vunpack.c.h.b16 %v1277
        %v4841 = vunpack.c.l.b16 %v1278
        %v4842 = vunpack.c.h.b16 %v1278
        %v4843 = vunpack.c.l.b16 %v1279
        %v4844 = vunpack.c.h.b16 %v1279
        %v4845 = vunpack.c.l.b16 %v1280
        %v4846 = vunpack.c.h.b16 %v1280
        %v4847 = vunpack.c.l.b16 %v1281
        %v4848 = vunpack.c.h.b16 %v1281
        %v4849 = vunpack.c.l.b16 %v1282
        %v4850 = vunpack.c.h.b16 %v1282
        %v4851 = vunpack.c.l.b16 %v1283
        %v4852 = vunpack.c.h.b16 %v1283
        %v4853 = vunpack.c.l.b16 %v1284
        %v4854 = vunpack.c.h.b16 %v1284
        %v4855 = vunpack.c.l.b16 %v1285
        %v4856 = vunpack.c.h.b16 %v1285
        %v4857 = vunpack.c.l.b16 %v1286
        %v4858 = vunpack.c.h.b16 %v1286
        %v4859 = vunpack.c.l.b16 %v1287
        %v4860 = vunpack.c.h.b16 %v1287
        %v4861 = vunpack.c.l.b16 %v1288
        %v4862 = vunpack.c.h.b16 %v1288
        %v4863 = vunpack.c.l.b16 %v1289
        %v4864 = vunpack.c.h.b16 %v1289
        %v4865 = vunpack.c.l.b16 %v1290
        %v4866 = vunpack.c.h.b16 %v1290
        %v4867 = vunpack.c.l.b16 %v1291
        %v4868 = vunpack.c.h.b16 %v1291
        %v4869 = vunpack.c.l.b16 %v1292
        %v4870 = vunpack.c.h.b16 %v1292
        %v4871 = vunpack.c.l.b16 %v1293
        %v4872 = vunpack.c.h.b16 %v1293
        %v4873 = vunpack.c.l.b16 %v1294
        %v4874 = vunpack.c.h.b16 %v1294
        %v4875 = vunpack.c.l.b16 %v1295
        %v4876 = vunpack.c.h.b16 %v1295
        %v4877 = vunpack.c.l.b16 %v1296
        %v4878 = vunpack.c.h.b16 %v1296
        %v4879 = vunpack.c.l.b16 %v1297
        %v4880 = vunpack.c.h.b16 %v1297
        %v4881 = vunpack.c.l.b16 %v1298
        %v4882 = vunpack.c.h.b16 %v1298
        %v4883 = vunpack.c.l.b16 %v1299
        %v4884 = vunpack.c.h.b16 %v1299
        %v4885 = vunpack.c.l.b16 %v1300
        %v4886 = vunpack.c.h.b16 %v1300
        %v4887 = vunpack.c.l.b16 %v1301
        %v4888 = vunpack.c.h.b16 %v1301
        %v4889 = vunpack.c.l.b16 %v1302
        %v4890 = vunpack.c.h.b16 %v1302
        %v4891 = vunpack.c.l.b16 %v1303
        %v4892 = vunpack.c.h.b16 %v1303
        %v4893 = vunpack.c.l.b16 %v1304
        %v4894 = vunpack.c.h.b16 %v1304
        %v4895 = vunpack.c.l.b16 %v1305
        %v4896 = vunpack.c.h.b16 %v1305
        %v4897 = vunpack.c.l.b16 %v1306
        %v4898 = vunpack.c.h.b16 %v1306
        %v4899 = vunpack.c.l.b16 %v1307
        %v4900 = vunpack.c.h.b16 %v1307
        %v4901 = vunpack.c.l.b16 %v1308
        %v4902 = vunpack.c.h.b16 %v1308
        %v4903 = vunpack.c.l.b16 %v1309
        %v4904 = vunpack.c.h.b16 %v1309
        %v4905 = vunpack.c.l.b16 %v1310
        %v4906 = vunpack.c.h.b16 %v1310
        %v4907 = vunpack.c.l.b16 %v1311
        %v4908 = vunpack.c.h.b16 %v1311
        %v4909 = vunpack.c.l.b16 %v1312
        %v4910 = vunpack.c.h.b16 %v1312
        %v4911 = vunpack.c.l.b16 %v1313
        %v4912 = vunpack.c.h.b16 %v1313
        %v4913 = vunpack.c.l.b16 %v1314
        %v4914 = vunpack.c.h.b16 %v1314
        %v4915 = vunpack.c.l.b16 %v1315
        %v4916 = vunpack.c.h.b16 %v1315
        %v4917 = vunpack.c.l.b16 %v1316
        %v4918 = vunpack.c.h.b16 %v1316
        %v4919 = vunpack.c.l.b16 %v1317
        %v4920 = vunpack.c.h.b16 %v1317
        %v4921 = vunpack.c.l.b16 %v1318
        %v4922 = vunpack.c.h.b16 %v1318
        %v4923 = vunpack.c.l.b16 %v1319
        %v4924 = vunpack.c.h.b16 %v1319
        %v4925 = vunpack.c.l.b16 %v1320
        %v4926 = vunpack.c.h.b16 %v1320
        %v4927 = vunpack.c.l.b16 %v1321
        %v4928 = vunpack.c.h.b16 %v1321
        %v4929 = vunpack.c.l.b16 %v1322
        %v4930 = vunpack.c.h.b16 %v1322
        %v4931 = vunpack.c.l.b16 %v1323
        %v4932 = vunpack.c.h.b16 %v1323
        %v4933 = vunpack.c.l.b16 %v1324
        %v4934 = vunpack.c.h.b16 %v1324
        %v4935 = vunpack.c.l.b16 %v1325
        %v4936 = vunpack.c.h.b16 %v1325
        %v4937 = vunpack.c.l.b16 %v1326
        %v4938 = vunpack.c.h.b16 %v1326
        %v4939 = vunpack.c.l.b16 %v1327
        %v4940 = vunpack.c.h.b16 %v1327
        %v4941 = vunpack.c.l.b16 %v1328
        %v4942 = vunpack.c.h.b16 %v1328
        %v4943 = vunpack.c.l.b16 %v1329
        %v4944 = vunpack.c.h.b16 %v1329
        %v4945 = vunpack.c.l.b16 %v1330
        %v4946 = vunpack.c.h.b16 %v1330
        %v4947 = vunpack.c.l.b16 %v1331
        %v4948 = vunpack.c.h.b16 %v1331
        %v4949 = vunpack.c.l.b16 %v1332
        %v4950 = vunpack.c.h.b16 %v1332
        %v4951 = vunpack.c.l.b16 %v1333
        %v4952 = vunpack.c.h.b16 %v1333
        %v4953 = vunpack.c.l.b16 %v1334
        %v4954 = vunpack.c.h.b16 %v1334
        %v4955 = vunpack.c.l.b16 %v1335
        %v4956 = vunpack.c.h.b16 %v1335
        %v4957 = vunpack.c.l.b16 %v1336
        %v4958 = vunpack.c.h.b16 %v1336
        %v4959 = vunpack.c.l.b16 %v1337
        %v4960 = vunpack.c.h.b16 %v1337
        %v4961 = vunpack.c.l.b16 %v1338
        %v4962 = vunpack.c.h.b16 %v1338
        %v4963 = vunpack.c.l.b16 %v1339
        %v4964 = vunpack.c.h.b16 %v1339
        %v4965 = vunpack.c.l.b16 %v1340
        %v4966 = vunpack.c.h.b16 %v1340
        %v4967 = vunpack.c.l.b16 %v1341
        %v4968 = vunpack.c.h.b16 %v1341
        %v4969 = vunpack.c.l.b16 %v1342
        %v4970 = vunpack.c.h.b16 %v1342
        %v4971 = vunpack.c.l.b16 %v1343
        %v4972 = vunpack.c.h.b16 %v1343
        %v4973 = vunpack.c.l.b16 %v1344
        %v4974 = vunpack.c.h.b16 %v1344
        %v4975 = vunpack.c.l.b16 %v1345
        %v4976 = vunpack.c.h.b16 %v1345
        %v4977 = vunpack.c.l.b16 %v1346
        %v4978 = vunpack.c.h.b16 %v1346
        %v4979 = vunpack.c.l.b16 %v1347
        %v4980 = vunpack.c.h.b16 %v1347
        %v4981 = vunpack.c.l.b16 %v1348
        %v4982 = vunpack.c.h.b16 %v1348
        %v4983 = vunpack.c.l.b16 %v1349
        %v4984 = vunpack.c.h.b16 %v1349
        %v4985 = vunpack.c.l.b16 %v1350
        %v4986 = vunpack.c.h.b16 %v1350
        %v4987 = vunpack.c.l.b16 %v1351
        %v4988 = vunpack.c.h.b16 %v1351
        %v4989 = vunpack.c.l.b16 %v1352
        %v4990 = vunpack.c.h.b16 %v1352
        %v4991 = vunpack.c.l.b16 %v1353
        %v4992 = vunpack.c.h.b16 %v1353
        %v4993 = vunpack.c.l.b16 %v1354
        %v4994 = vunpack.c.h.b16 %v1354
        %v4995 = vunpack.c.l.b16 %v1355
        %v4996 = vunpack.c.h.b16 %v1355
        %v4997 = vunpack.c.l.b16 %v1356
        %v4998 = vunpack.c.h.b16 %v1356
        %v4999 = vunpack.c.l.b16 %v1357
        %v5000 = vunpack.c.h.b16 %v1357
        %v5001 = vunpack.c.l.b16 %v1358
        %v5002 = vunpack.c.h.b16 %v1358
        %v5003 = vunpack.c.l.b16 %v1359
        %v5004 = vunpack.c.h.b16 %v1359
        %v5005 = vunpack.c.l.b16 %v1360
        %v5006 = vunpack.c.h.b16 %v1360
        %v5007 = vunpack.c.l.b16 %v1361
        %v5008 = vunpack.c.h.b16 %v1361
        %v5009 = vunpack.c.l.b16 %v1362
        %v5010 = vunpack.c.h.b16 %v1362
        %v5011 = vunpack.c.l.b16 %v1363
        %v5012 = vunpack.c.h.b16 %v1363
        %v5013 = vunpack.c.l.b16 %v1364
        %v5014 = vunpack.c.h.b16 %v1364
        %v5015 = vunpack.c.l.b16 %v1365
        %v5016 = vunpack.c.h.b16 %v1365
        %v5017 = vunpack.c.l.b16 %v1366
        %v5018 = vunpack.c.h.b16 %v1366
        %v5019 = vunpack.c.l.b16 %v1367
        %v5020 = vunpack.c.h.b16 %v1367
        %v5021 = vunpack.c.l.b16 %v1368
        %v5022 = vunpack.c.h.b16 %v1368
        %v5023 = vunpack.c.l.b16 %v1369
        %v5024 = vunpack.c.h.b16 %v1369
        %v5025 = vunpack.c.l.b16 %v1370
        %v5026 = vunpack.c.h.b16 %v1370
        %v5027 = vunpack.c.l.b16 %v1371
        %v5028 = vunpack.c.h.b16 %v1371
        %v5029 = vunpack.c.l.b16 %v1372
        %v5030 = vunpack.c.h.b16 %v1372
        %v5031 = vunpack.c.l.b16 %v1373
        %v5032 = vunpack.c.h.b16 %v1373
        %v5033 = vunpack.c.l.b16 %v1374
        %v5034 = vunpack.c.h.b16 %v1374
        %v5035 = vunpack.c.l.b16 %v1375
        %v5036 = vunpack.c.h.b16 %v1375
        %v5037 = vunpack.c.l.b16 %v1376
        %v5038 = vunpack.c.h.b16 %v1376
        %v5039 = vunpack.c.l.b16 %v1377
        %v5040 = vunpack.c.h.b16 %v1377
        %v5041 = vunpack.c.l.b16 %v1378
        %v5042 = vunpack.c.h.b16 %v1378
        %v5043 = vunpack.c.l.b16 %v1379
        %v5044 = vunpack.c.h.b16 %v1379
        %v5045 = vunpack.c.l.b16 %v1380
        %v5046 = vunpack.c.h.b16 %v1380
        %v5047 = vunpack.c.l.b16 %v1381
        %v5048 = vunpack.c.h.b16 %v1381
        %v5049 = vunpack.c.l.b16 %v1382
        %v5050 = vunpack.c.h.b16 %v1382
        %v5051 = vunpack.c.l.b16 %v1383
        %v5052 = vunpack.c.h.b16 %v1383
        %v5053 = vunpack.c.l.b16 %v1384
        %v5054 = vunpack.c.h.b16 %v1384
        %v5055 = vunpack.c.l.b16 %v1385
        %v5056 = vunpack.c.h.b16 %v1385
        %v5057 = vunpack.c.l.b16 %v1386
        %v5058 = vunpack.c.h.b16 %v1386
        %v5059 = vunpack.c.l.b16 %v1387
        %v5060 = vunpack.c.h.b16 %v1387
        %v5061 = vunpack.c.l.b16 %v1388
        %v5062 = vunpack.c.h.b16 %v1388
        %v5063 = vunpack.c.l.b16 %v1389
        %v5064 = vunpack.c.h.b16 %v1389
        %v5065 = vunpack.c.l.b16 %v1390
        %v5066 = vunpack.c.h.b16 %v1390
        %v5067 = vunpack.c.l.b16 %v1391
        %v5068 = vunpack.c.h.b16 %v1391
        %v5069 = vunpack.c.l.b16 %v1392
        %v5070 = vunpack.c.h.b16 %v1392
        %v5071 = vunpack.c.l.b16 %v1393
        %v5072 = vunpack.c.h.b16 %v1393
        %v5073 = vunpack.c.l.b16 %v1394
        %v5074 = vunpack.c.h.b16 %v1394
        %v5075 = vunpack.c.l.b16 %v1395
        %v5076 = vunpack.c.h.b16 %v1395
        %v5077 = vunpack.c.l.b16 %v1396
        %v5078 = vunpack.c.h.b16 %v1396
        %v5079 = vunpack.c.l.b16 %v1397
        %v5080 = vunpack.c.h.b16 %v1397
        %v5081 = vunpack.c.l.b16 %v1398
        %v5082 = vunpack.c.h.b16 %v1398
        %v5083 = vunpack.c.l.b16 %v1399
        %v5084 = vunpack.c.h.b16 %v1399
        %v5085 = vunpack.c.l.b16 %v1400
        %v5086 = vunpack.c.h.b16 %v1400
        %v5087 = vunpack.c.l.b16 %v1401
        %v5088 = vunpack.c.h.b16 %v1401
        %v5089 = vunpack.c.l.b16 %v1402
        %v5090 = vunpack.c.h.b16 %v1402
        %v5091 = vunpack.c.l.b16 %v1403
        %v5092 = vunpack.c.h.b16 %v1403
        %v5093 = vunpack.c.l.b16 %v1404
        %v5094 = vunpack.c.h.b16 %v1404
        %v5095 = vunpack.c.l.b16 %v1405
        %v5096 = vunpack.c.h.b16 %v1405
        %v5097 = vunpack.c.l.b16 %v1406
        %v5098 = vunpack.c.h.b16 %v1406
        %v5099 = vunpack.c.l.b16 %v1407
        %v5100 = vunpack.c.h.b16 %v1407
        %v5101 = vunpack.c.l.b16 %v1408
        %v5102 = vunpack.c.h.b16 %v1408
        %v5103 = vunpack.c.l.b16 %v1409
        %v5104 = vunpack.c.h.b16 %v1409
        %v5105 = vunpack.c.l.b16 %v1410
        %v5106 = vunpack.c.h.b16 %v1410
        %v5107 = vunpack.c.l.b16 %v1411
        %v5108 = vunpack.c.h.b16 %v1411
        %v5109 = vunpack.c.l.b16 %v1412
        %v5110 = vunpack.c.h.b16 %v1412
        %v5111 = vunpack.c.l.b16 %v1413
        %v5112 = vunpack.c.h.b16 %v1413
        %v5113 = vunpack.c.l.b16 %v1414
        %v5114 = vunpack.c.h.b16 %v1414
        %v5115 = vunpack.c.l.b16 %v1415
        %v5116 = vunpack.c.h.b16 %v1415
        %v5117 = vunpack.c.l.b16 %v1416
        %v5118 = vunpack.c.h.b16 %v1416
        %v5119 = vunpack.c.l.b16 %v1417
        %v5120 = vunpack.c.h.b16 %v1417
        %v5121 = vunpack.c.l.b16 %v1418
        %v5122 = vunpack.c.h.b16 %v1418
        %v5123 = vunpack.c.l.b16 %v1419
        %v5124 = vunpack.c.h.b16 %v1419
        %v5125 = vunpack.c.l.b16 %v1420
        %v5126 = vunpack.c.h.b16 %v1420
        %v5127 = vunpack.c.l.b16 %v1421
        %v5128 = vunpack.c.h.b16 %v1421
        %v5129 = vunpack.c.l.b16 %v1422
        %v5130 = vunpack.c.h.b16 %v1422
        %v5131 = vunpack.c.l.b16 %v1423
        %v5132 = vunpack.c.h.b16 %v1423
        %v5133 = vunpack.c.l.b16 %v1424
        %v5134 = vunpack.c.h.b16 %v1424
        %v5135 = vunpack.c.l.b16 %v1425
        %v5136 = vunpack.c.h.b16 %v1425
        %v5137 = vunpack.c.l.b16 %v1426
        %v5138 = vunpack.c.h.b16 %v1426
        %v5139 = vunpack.c.l.b16 %v1427
        %v5140 = vunpack.c.h.b16 %v1427
        %v5141 = vunpack.c.l.b16 %v1428
        %v5142 = vunpack.c.h.b16 %v1428
        %v5143 = vunpack.c.l.b16 %v1429
        %v5144 = vunpack.c.h.b16 %v1429
        %v5145 = vunpack.c.l.b16 %v1430
        %v5146 = vunpack.c.h.b16 %v1430
        %v5147 = vunpack.c.l.b16 %v1431
        %v5148 = vunpack.c.h.b16 %v1431
        %v5149 = vpack.c.b16 %v2849, %v2845
        %v5150 = vpack.c.b16 %v2850, %v2846
        %v5151 = vpack.c.b16 %v2851, %v2847
        %v5152 = vpack.c.b16 %v2852, %v2848
        %v5153 = vpack.c.b16 %v2857, %v2853
        %v5154 = vpack.c.b16 %v2858, %v2854
        %v5155 = vpack.c.b16 %v2859, %v2855
        %v5156 = vpack.c.b16 %v2860, %v2856
        %v5157 = vpack.c.b16 %v2865, %v2861
        %v5158 = vpack.c.b16 %v2866, %v2862
        %v5159 = vpack.c.b16 %v2867, %v2863
        %v5160 = vpack.c.b16 %v2868, %v2864
        %v5161 = vpack.c.b16 %v2873, %v2869
        %v5162 = vpack.c.b16 %v2874, %v2870
        %v5163 = vpack.c.b16 %v2875, %v2871
        %v5164 = vpack.c.b16 %v2876, %v2872
        %v5165 = vpack.c.b16 %v2881, %v2877
        %v5166 = vpack.c.b16 %v2882, %v2878
        %v5167 = vpack.c.b16 %v2883, %v2879
        %v5168 = vpack.c.b16 %v2884, %v2880
        %v5169 = vpack.c.b16 %v2889, %v2885
        %v5170 = vpack.c.b16 %v2890, %v2886
        %v5171 = vpack.c.b16 %v2891, %v2887
        %v5172 = vpack.c.b16 %v2892, %v2888
        %v5173 = vpack.c.b16 %v2897, %v2893
        %v5174 = vpack.c.b16 %v2898, %v2894
        %v5175 = vpack.c.b16 %v2899, %v2895
        %v5176 = vpack.c.b16 %v2900, %v2896
        %v5177 = vpack.c.b16 %v2905, %v2901
        %v5178 = vpack.c.b16 %v2906, %v2902
        %v5179 = vpack.c.b16 %v2907, %v2903
        %v5180 = vpack.c.b16 %v2908, %v2904
        %v5181 = vpack.c.b16 %v2913, %v2909
        %v5182 = vpack.c.b16 %v2914, %v2910
        %v5183 = vpack.c.b16 %v2915, %v2911
        %v5184 = vpack.c.b16 %v2916, %v2912
        %v5185 = vpack.c.b16 %v2921, %v2917
        %v5186 = vpack.c.b16 %v2922, %v2918
        %v5187 = vpack.c.b16 %v2923, %v2919
        %v5188 = vpack.c.b16 %v2924, %v2920
        %v5189 = vpack.c.b16 %v2929, %v2925
        %v5190 = vpack.c.b16 %v2930, %v2926
        %v5191 = vpack.c.b16 %v2931, %v2927
        %v5192 = vpack.c.b16 %v2932, %v2928
        %v5193 = vpack.c.b16 %v2937, %v2933
        %v5194 = vpack.c.b16 %v2938, %v2934
        %v5195 = vpack.c.b16 %v2939, %v2935
        %v5196 = vpack.c.b16 %v2940, %v2936
        %v5197 = vpack.c.b16 %v2945, %v2941
        %v5198 = vpack.c.b16 %v2946, %v2942
        %v5199 = vpack.c.b16 %v2947, %v2943
        %v5200 = vpack.c.b16 %v2948, %v2944
        %v5201 = vpack.c.b16 %v2953, %v2949
        %v5202 = vpack.c.b16 %v2954, %v2950
        %v5203 = vpack.c.b16 %v2955, %v2951
        %v5204 = vpack.c.b16 %v2956, %v2952
        %v5205 = vpack.c.b16 %v2961, %v2957
        %v5206 = vpack.c.b16 %v2962, %v2958
        %v5207 = vpack.c.b16 %v2963, %v2959
        %v5208 = vpack.c.b16 %v2964, %v2960
        %v5209 = vpack.c.b16 %v2969, %v2965
        %v5210 = vpack.c.b16 %v2970, %v2966
        %v5211 = vpack.c.b16 %v2971, %v2967
        %v5212 = vpack.c.b16 %v2972, %v2968
        %v5213 = vpack.c.b16 %v2977, %v2973
        %v5214 = vpack.c.b16 %v2978, %v2974
        %v5215 = vpack.c.b16 %v2979, %v2975
        %v5216 = vpack.c.b16 %v2980, %v2976
        %v5217 = vpack.c.b16 %v2985, %v2981
        %v5218 = vpack.c.b16 %v2986, %v2982
        %v5219 = vpack.c.b16 %v2987, %v2983
        %v5220 = vpack.c.b16 %v2988, %v2984
        %v5221 = vpack.c.b16 %v2993, %v2989
        %v5222 = vpack.c.b16 %v2994, %v2990
        %v5223 = vpack.c.b16 %v2995, %v2991
        %v5224 = vpack.c.b16 %v2996, %v2992
        %v5225 = vpack.c.b16 %v3001, %v2997
        %v5226 = vpack.c.b16 %v3002, %v2998
        %v5227 = vpack.c.b16 %v3003, %v2999
        %v5228 = vpack.c.b16 %v3004, %v3000
        %v5229 = vpack.c.b16 %v3009, %v3005
        %v5230 = vpack.c.b16 %v3010, %v3006
        %v5231 = vpack.c.b16 %v3011, %v3007
        %v5232 = vpack.c.b16 %v3012, %v3008
        %v5233 = vpack.c.b16 %v3017, %v3013
        %v5234 = vpack.c.b16 %v3018, %v3014
        %v5235 = vpack.c.b16 %v3019, %v3015
        %v5236 = vpack.c.b16 %v3020, %v3016
        %v5237 = vpack.c.b16 %v3025, %v3021
        %v5238 = vpack.c.b16 %v3026, %v3022
        %v5239 = vpack.c.b16 %v3027, %v3023
        %v5240 = vpack.c.b16 %v3028, %v3024
        %v5241 = vpack.c.b16 %v3033, %v3029
        %v5242 = vpack.c.b16 %v3034, %v3030
        %v5243 = vpack.c.b16 %v3035, %v3031
        %v5244 = vpack.c.b16 %v3036, %v3032
        %v5245 = vpack.c.b16 %v3041, %v3037
        %v5246 = vpack.c.b16 %v3042, %v3038
        %v5247 = vpack.c.b16 %v3043, %v3039
        %v5248 = vpack.c.b16 %v3044, %v3040
        %v5249 = vpack.c.b16 %v3049, %v3045
        %v5250 = vpack.c.b16 %v3050, %v3046
        %v5251 = vpack.c.b16 %v3051, %v3047
        %v5252 = vpack.c.b16 %v3052, %v3048
        %v5253 = vpack.c.b16 %v3057, %v3053
        %v5254 = vpack.c.b16 %v3058, %v3054
        %v5255 = vpack.c.b16 %v3059, %v3055
        %v5256 = vpack.c.b16 %v3060, %v3056
        %v5257 = vpack.c.b16 %v3065, %v3061
        %v5258 = vpack.c.b16 %v3066, %v3062
        %v5259 = vpack.c.b16 %v3067, %v3063
        %v5260 = vpack.c.b16 %v3068, %v3064
        %v5261 = vpack.c.b16 %v3073, %v3069
        %v5262 = vpack.c.b16 %v3074, %v3070
        %v5263 = vpack.c.b16 %v3075, %v3071
        %v5264 = vpack.c.b16 %v3076, %v3072
        %v5265 = vpack.c.b16 %v3081, %v3077
        %v5266 = vpack.c.b16 %v3082, %v3078
        %v5267 = vpack.c.b16 %v3083, %v3079
        %v5268 = vpack.c.b16 %v3084, %v3080
        %v5269 = vpack.c.b16 %v3089, %v3085
        %v5270 = vpack.c.b16 %v3090, %v3086
        %v5271 = vpack.c.b16 %v3091, %v3087
        %v5272 = vpack.c.b16 %v3092, %v3088
        %v5273 = vpack.c.b16 %v3097, %v3093
        %v5274 = vpack.c.b16 %v3098, %v3094
        %v5275 = vpack.c.b16 %v3099, %v3095
        %v5276 = vpack.c.b16 %v3100, %v3096
        %v5277 = vpack.c.b16 %v3105, %v3101
        %v5278 = vpack.c.b16 %v3106, %v3102
        %v5279 = vpack.c.b16 %v3107, %v3103
        %v5280 = vpack.c.b16 %v3108, %v3104
        %v5281 = vpack.c.b16 %v3113, %v3109
        %v5282 = vpack.c.b16 %v3114, %v3110
        %v5283 = vpack.c.b16 %v3115, %v3111
        %v5284 = vpack.c.b16 %v3116, %v3112
        %v5285 = vpack.c.b16 %v3121, %v3117
        %v5286 = vpack.c.b16 %v3122, %v3118
        %v5287 = vpack.c.b16 %v3123, %v3119
        %v5288 = vpack.c.b16 %v3124, %v3120
        %v5289 = vpack.c.b16 %v3129, %v3125
        %v5290 = vpack.c.b16 %v3130, %v3126
        %v5291 = vpack.c.b16 %v3131, %v3127
        %v5292 = vpack.c.b16 %v3132, %v3128
        %v5293 = vpack.c.b16 %v3137, %v3133
        %v5294 = vpack.c.b16 %v3138, %v3134
        %v5295 = vpack.c.b16 %v3139, %v3135
        %v5296 = vpack.c.b16 %v3140, %v3136
        %v5297 = vpack.c.b16 %v3145, %v3141
        %v5298 = vpack.c.b16 %v3146, %v3142
        %v5299 = vpack.c.b16 %v3147, %v3143
        %v5300 = vpack.c.b16 %v3148, %v3144
        %v5301 = vpack.c.b16 %v3153, %v3149
        %v5302 = vpack.c.b16 %v3154, %v3150
        %v5303 = vpack.c.b16 %v3155, %v3151
        %v5304 = vpack.c.b16 %v3156, %v3152
        %v5305 = vpack.c.b16 %v3161, %v3157
        %v5306 = vpack.c.b16 %v3162, %v3158
        %v5307 = vpack.c.b16 %v3163, %v3159
        %v5308 = vpack.c.b16 %v3164, %v3160
        %v5309 = vpack.c.b16 %v3169, %v3165
        %v5310 = vpack.c.b16 %v3170, %v3166
        %v5311 = vpack.c.b16 %v3171, %v3167
        %v5312 = vpack.c.b16 %v3172, %v3168
        %v5313 = vpack.c.b16 %v3177, %v3173
        %v5314 = vpack.c.b16 %v3178, %v3174
        %v5315 = vpack.c.b16 %v3179, %v3175
        %v5316 = vpack.c.b16 %v3180, %v3176
        %v5317 = vpack.c.b16 %v3185, %v3181
        %v5318 = vpack.c.b16 %v3186, %v3182
        %v5319 = vpack.c.b16 %v3187, %v3183
        %v5320 = vpack.c.b16 %v3188, %v3184
        %v5321 = vpack.c.b16 %v3193, %v3189
        %v5322 = vpack.c.b16 %v3194, %v3190
        %v5323 = vpack.c.b16 %v3195, %v3191
        %v5324 = vpack.c.b16 %v3196, %v3192
        %v5325 = vpack.c.b16 %v3201, %v3197
        %v5326 = vpack.c.b16 %v3202, %v3198
        %v5327 = vpack.c.b16 %v3203, %v3199
        %v5328 = vpack.c.b16 %v3204, %v3200
        %v5329 = vpack.c.b16 %v3209, %v3205
        %v5330 = vpack.c.b16 %v3210, %v3206
        %v5331 = vpack.c.b16 %v3211, %v3207
        %v5332 = vpack.c.b16 %v3212, %v3208
        %v5333 = vpack.c.b16 %v3217, %v3213
        %v5334 = vpack.c.b16 %v3218, %v3214
        %v5335 = vpack.c.b16 %v3219, %v3215
        %v5336 = vpack.c.b16 %v3220, %v3216
        %v5337 = vpack.c.b16 %v3225, %v3221
        %v5338 = vpack.c.b16 %v3226, %v3222
        %v5339 = vpack.c.b16 %v3227, %v3223
        %v5340 = vpack.c.b16 %v3228, %v3224
        %v5341 = vpack.c.b16 %v3233, %v3229
        %v5342 = vpack.c.b16 %v3234, %v3230
        %v5343 = vpack.c.b16 %v3235, %v3231
        %v5344 = vpack.c.b16 %v3236, %v3232
        %v5345 = vpack.c.b16 %v3241, %v3237
        %v5346 = vpack.c.b16 %v3242, %v3238
        %v5347 = vpack.c.b16 %v3243, %v3239
        %v5348 = vpack.c.b16 %v3244, %v3240
        %v5349 = vpack.c.b16 %v3249, %v3245
        %v5350 = vpack.c.b16 %v3250, %v3246
        %v5351 = vpack.c.b16 %v3251, %v3247
        %v5352 = vpack.c.b16 %v3252, %v3248
        %v5353 = vpack.c.b16 %v3257, %v3253
        %v5354 = vpack.c.b16 %v3258, %v3254
        %v5355 = vpack.c.b16 %v3259, %v3255
        %v5356 = vpack.c.b16 %v3260, %v3256
        %v5357 = vpack.c.b16 %v3265, %v3261
        %v5358 = vpack.c.b16 %v3266, %v3262
        %v5359 = vpack.c.b16 %v3267, %v3263
        %v5360 = vpack.c.b16 %v3268, %v3264
        %v5361 = vpack.c.b16 %v3273, %v3269
        %v5362 = vpack.c.b16 %v3274, %v3270
        %v5363 = vpack.c.b16 %v3275, %v3271
        %v5364 = vpack.c.b16 %v3276, %v3272
        %v5365 = vpack.c.b16 %v3281, %v3277
        %v5366 = vpack.c.b16 %v3282, %v3278
        %v5367 = vpack.c.b16 %v3283, %v3279
        %v5368 = vpack.c.b16 %v3284, %v3280
        %v5369 = vpack.c.b16 %v3289, %v3285
        %v5370 = vpack.c.b16 %v3290, %v3286
        %v5371 = vpack.c.b16 %v3291, %v3287
        %v5372 = vpack.c.b16 %v3292, %v3288
        %v5373 = vpack.c.b16 %v3297, %v3293
        %v5374 = vpack.c.b16 %v3298, %v3294
        %v5375 = vpack.c.b16 %v3299, %v3295
        %v5376 = vpack.c.b16 %v3300, %v3296
        %v5377 = vpack.c.b16 %v3305, %v3301
        %v5378 = vpack.c.b16 %v3306, %v3302
        %v5379 = vpack.c.b16 %v3307, %v3303
        %v5380 = vpack.c.b16 %v3308, %v3304
        %v5381 = vpack.c.b16 %v3313, %v3309
        %v5382 = vpack.c.b16 %v3314, %v3310
        %v5383 = vpack.c.b16 %v3315, %v3311
        %v5384 = vpack.c.b16 %v3316, %v3312
        %v5385 = vpack.c.b16 %v3321, %v3317
        %v5386 = vpack.c.b16 %v3322, %v3318
        %v5387 = vpack.c.b16 %v3323, %v3319
        %v5388 = vpack.c.b16 %v3324, %v3320
        %v5389 = vpack.c.b16 %v3329, %v3325
        %v5390 = vpack.c.b16 %v3330, %v3326
        %v5391 = vpack.c.b16 %v3331, %v3327
        %v5392 = vpack.c.b16 %v3332, %v3328
        %v5393 = vpack.c.b16 %v3337, %v3333
        %v5394 = vpack.c.b16 %v3338, %v3334
        %v5395 = vpack.c.b16 %v3339, %v3335
        %v5396 = vpack.c.b16 %v3340, %v3336
        %v5397 = vpack.c.b16 %v3345, %v3341
        %v5398 = vpack.c.b16 %v3346, %v3342
        %v5399 = vpack.c.b16 %v3347, %v3343
        %v5400 = vpack.c.b16 %v3348, %v3344
        %v5401 = vpack.c.b16 %v3353, %v3349
        %v5402 = vpack.c.b16 %v3354, %v3350
        %v5403 = vpack.c.b16 %v3355, %v3351
        %v5404 = vpack.c.b16 %v3356, %v3352
        %v5405 = vpack.c.b16 %v3361, %v3357
        %v5406 = vpack.c.b16 %v3362, %v3358
        %v5407 = vpack.c.b16 %v3363, %v3359
        %v5408 = vpack.c.b16 %v3364, %v3360
        %v5409 = vpack.c.b16 %v3369, %v3365
        %v5410 = vpack.c.b16 %v3370, %v3366
        %v5411 = vpack.c.b16 %v3371, %v3367
        %v5412 = vpack.c.b16 %v3372, %v3368
        %v5413 = vpack.c.b16 %v3377, %v3373
        %v5414 = vpack.c.b16 %v3378, %v3374
        %v5415 = vpack.c.b16 %v3379, %v3375
        %v5416 = vpack.c.b16 %v3380, %v3376
        %v5417 = vpack.c.b16 %v3385, %v3381
        %v5418 = vpack.c.b16 %v3386, %v3382
        %v5419 = vpack.c.b16 %v3387, %v3383
        %v5420 = vpack.c.b16 %v3388, %v3384
        %v5421 = vpack.c.b16 %v3393, %v3389
        %v5422 = vpack.c.b16 %v3394, %v3390
        %v5423 = vpack.c.b16 %v3395, %v3391
        %v5424 = vpack.c.b16 %v3396, %v3392
        %v5425 = vpack.c.b16 %v3401, %v3397
        %v5426 = vpack.c.b16 %v3402, %v3398
        %v5427 = vpack.c.b16 %v3403, %v3399
        %v5428 = vpack.c.b16 %v3404, %v3400
        %v5429 = vpack.c.b16 %v3409, %v3405
        %v5430 = vpack.c.b16 %v3410, %v3406
        %v5431 = vpack.c.b16 %v3411, %v3407
        %v5432 = vpack.c.b16 %v3412, %v3408
        %v5433 = vpack.c.b16 %v3417, %v3413
        %v5434 = vpack.c.b16 %v3418, %v3414
        %v5435 = vpack.c.b16 %v3419, %v3415
        %v5436 = vpack.c.b16 %v3420, %v3416
        %v5437 = vpack.c.b16 %v3425, %v3421
        %v5438 = vpack.c.b16 %v3426, %v3422
        %v5439 = vpack.c.b16 %v3427, %v3423
        %v5440 = vpack.c.b16 %v3428, %v3424
        %v5441 = vpack.c.b16 %v3433, %v3429
        %v5442 = vpack.c.b16 %v3434, %v3430
        %v5443 = vpack.c.b16 %v3435, %v3431
        %v5444 = vpack.c.b16 %v3436, %v3432
        %v5445 = vpack.c.b16 %v3441, %v3437
        %v5446 = vpack.c.b16 %v3442, %v3438
        %v5447 = vpack.c.b16 %v3443, %v3439
        %v5448 = vpack.c.b16 %v3444, %v3440
        %v5449 = vpack.c.b16 %v3449, %v3445
        %v5450 = vpack.c.b16 %v3450, %v3446
        %v5451 = vpack.c.b16 %v3451, %v3447
        %v5452 = vpack.c.b16 %v3452, %v3448
        %v5453 = vpack.c.b16 %v3457, %v3453
        %v5454 = vpack.c.b16 %v3458, %v3454
        %v5455 = vpack.c.b16 %v3459, %v3455
        %v5456 = vpack.c.b16 %v3460, %v3456
        %v5457 = vpack.c.b16 %v3465, %v3461
        %v5458 = vpack.c.b16 %v3466, %v3462
        %v5459 = vpack.c.b16 %v3467, %v3463
        %v5460 = vpack.c.b16 %v3468, %v3464
        %v5461 = vpack.c.b16 %v3473, %v3469
        %v5462 = vpack.c.b16 %v3474, %v3470
        %v5463 = vpack.c.b16 %v3475, %v3471
        %v5464 = vpack.c.b16 %v3476, %v3472
        %v5465 = vpack.c.b16 %v3481, %v3477
        %v5466 = vpack.c.b16 %v3482, %v3478
        %v5467 = vpack.c.b16 %v3483, %v3479
        %v5468 = vpack.c.b16 %v3484, %v3480
        %v5469 = vpack.c.b16 %v3489, %v3485
        %v5470 = vpack.c.b16 %v3490, %v3486
        %v5471 = vpack.c.b16 %v3491, %v3487
        %v5472 = vpack.c.b16 %v3492, %v3488
        %v5473 = vpack.c.b16 %v3497, %v3493
        %v5474 = vpack.c.b16 %v3498, %v3494
        %v5475 = vpack.c.b16 %v3499, %v3495
        %v5476 = vpack.c.b16 %v3500, %v3496
        %v5477 = vpack.c.b16 %v3505, %v3501
        %v5478 = vpack.c.b16 %v3506, %v3502
        %v5479 = vpack.c.b16 %v3507, %v3503
        %v5480 = vpack.c.b16 %v3508, %v3504
        %v5481 = vpack.c.b16 %v3513, %v3509
        %v5482 = vpack.c.b16 %v3514, %v3510
        %v5483 = vpack.c.b16 %v3515, %v3511
        %v5484 = vpack.c.b16 %v3516, %v3512
        %v5485 = vpack.c.b16 %v3521, %v3517
        %v5486 = vpack.c.b16 %v3522, %v3518
        %v5487 = vpack.c.b16 %v3523, %v3519
        %v5488 = vpack.c.b16 %v3524, %v3520
        %v5489 = vpack.c.b16 %v3529, %v3525
        %v5490 = vpack.c.b16 %v3530, %v3526
        %v5491 = vpack.c.b16 %v3531, %v3527
        %v5492 = vpack.c.b16 %v3532, %v3528
        %v5493 = vpack.c.b16 %v3537, %v3533
        %v5494 = vpack.c.b16 %v3538, %v3534
        %v5495 = vpack.c.b16 %v3539, %v3535
        %v5496 = vpack.c.b16 %v3540, %v3536
        %v5497 = vpack.c.b16 %v3545, %v3541
        %v5498 = vpack.c.b16 %v3546, %v3542
        %v5499 = vpack.c.b16 %v3547, %v3543
        %v5500 = vpack.c.b16 %v3548, %v3544
        %v5501 = vpack.c.b16 %v3553, %v3549
        %v5502 = vpack.c.b16 %v3554, %v3550
        %v5503 = vpack.c.b16 %v3555, %v3551
        %v5504 = vpack.c.b16 %v3556, %v3552
        %v5505 = vpack.c.b16 %v3561, %v3557
        %v5506 = vpack.c.b16 %v3562, %v3558
        %v5507 = vpack.c.b16 %v3563, %v3559
        %v5508 = vpack.c.b16 %v3564, %v3560
        %v5509 = vpack.c.b16 %v3569, %v3565
        %v5510 = vpack.c.b16 %v3570, %v3566
        %v5511 = vpack.c.b16 %v3571, %v3567
        %v5512 = vpack.c.b16 %v3572, %v3568
        %v5513 = vpack.c.b16 %v3577, %v3573
        %v5514 = vpack.c.b16 %v3578, %v3574
        %v5515 = vpack.c.b16 %v3579, %v3575
        %v5516 = vpack.c.b16 %v3580, %v3576
        %v5517 = vpack.c.b16 %v3585, %v3581
        %v5518 = vpack.c.b16 %v3586, %v3582
        %v5519 = vpack.c.b16 %v3587, %v3583
        %v5520 = vpack.c.b16 %v3588, %v3584
        %v5521 = vpack.c.b16 %v3593, %v3589
        %v5522 = vpack.c.b16 %v3594, %v3590
        %v5523 = vpack.c.b16 %v3595, %v3591
        %v5524 = vpack.c.b16 %v3596, %v3592
        %v5525 = vpack.c.b16 %v3601, %v3597
        %v5526 = vpack.c.b16 %v3602, %v3598
        %v5527 = vpack.c.b16 %v3603, %v3599
        %v5528 = vpack.c.b16 %v3604, %v3600
        %v5529 = vpack.c.b16 %v3609, %v3605
        %v5530 = vpack.c.b16 %v3610, %v3606
        %v5531 = vpack.c.b16 %v3611, %v3607
        %v5532 = vpack.c.b16 %v3612, %v3608
        %v5533 = vpack.c.b16 %v3617, %v3613
        %v5534 = vpack.c.b16 %v3618, %v3614
        %v5535 = vpack.c.b16 %v3619, %v3615
        %v5536 = vpack.c.b16 %v3620, %v3616
        %v5537 = vpack.c.b16 %v3625, %v3621
        %v5538 = vpack.c.b16 %v3626, %v3622
        %v5539 = vpack.c.b16 %v3627, %v3623
        %v5540 = vpack.c.b16 %v3628, %v3624
        %v5541 = vpack.c.b16 %v3633, %v3629
        %v5542 = vpack.c.b16 %v3634, %v3630
        %v5543 = vpack.c.b16 %v3635, %v3631
        %v5544 = vpack.c.b16 %v3636, %v3632
        %v5545 = vpack.c.b16 %v3641, %v3637
        %v5546 = vpack.c.b16 %v3642, %v3638
        %v5547 = vpack.c.b16 %v3643, %v3639
        %v5548 = vpack.c.b16 %v3644, %v3640
        %v5549 = vpack.c.b16 %v3649, %v3645
        %v5550 = vpack.c.b16 %v3650, %v3646
        %v5551 = vpack.c.b16 %v3651, %v3647
        %v5552 = vpack.c.b16 %v3652, %v3648
        %v5553 = vpack.c.b16 %v3657, %v3653
        %v5554 = vpack.c.b16 %v3658, %v3654
        %v5555 = vpack.c.b16 %v3659, %v3655
        %v5556 = vpack.c.b16 %v3660, %v3656
        %v5557 = vpack.c.b16 %v3665, %v3661
        %v5558 = vpack.c.b16 %v3666, %v3662
        %v5559 = vpack.c.b16 %v3667, %v3663
        %v5560 = vpack.c.b16 %v3668, %v3664
        %v5561 = vpack.c.b16 %v3673, %v3669
        %v5562 = vpack.c.b16 %v3674, %v3670
        %v5563 = vpack.c.b16 %v3675, %v3671
        %v5564 = vpack.c.b16 %v3676, %v3672
        %v5565 = vpack.c.b16 %v3681, %v3677
        %v5566 = vpack.c.b16 %v3682, %v3678
        %v5567 = vpack.c.b16 %v3683, %v3679
        %v5568 = vpack.c.b16 %v3684, %v3680
        %v5569 = vpack.c.b16 %v3689, %v3685
        %v5570 = vpack.c.b16 %v3690, %v3686
        %v5571 = vpack.c.b16 %v3691, %v3687
        %v5572 = vpack.c.b16 %v3692, %v3688
        %v5573 = vpack.c.b16 %v3697, %v3693
        %v5574 = vpack.c.b16 %v3698, %v3694
        %v5575 = vpack.c.b16 %v3699, %v3695
        %v5576 = vpack.c.b16 %v3700, %v3696
        %v5577 = vpack.c.b16 %v3705, %v3701
        %v5578 = vpack.c.b16 %v3706, %v3702
        %v5579 = vpack.c.b16 %v3707, %v3703
        %v5580 = vpack.c.b16 %v3708, %v3704
        %v5581 = vpack.c.b16 %v3713, %v3709
        %v5582 = vpack.c.b16 %v3714, %v3710
        %v5583 = vpack.c.b16 %v3715, %v3711
        %v5584 = vpack.c.b16 %v3716, %v3712
        %v5585 = vpack.c.b16 %v3721, %v3717
        %v5586 = vpack.c.b16 %v3722, %v3718
        %v5587 = vpack.c.b16 %v3723, %v3719
        %v5588 = vpack.c.b16 %v3724, %v3720
        %v5589 = vpack.c.b16 %v3729, %v3725
        %v5590 = vpack.c.b16 %v3730, %v3726
        %v5591 = vpack.c.b16 %v3731, %v3727
        %v5592 = vpack.c.b16 %v3732, %v3728
        %v5593 = vpack.c.b16 %v3737, %v3733
        %v5594 = vpack.c.b16 %v3738, %v3734
        %v5595 = vpack.c.b16 %v3739, %v3735
        %v5596 = vpack.c.b16 %v3740, %v3736
        %v5597 = vpack.c.b16 %v3745, %v3741
        %v5598 = vpack.c.b16 %v3746, %v3742
        %v5599 = vpack.c.b16 %v3747, %v3743
        %v5600 = vpack.c.b16 %v3748, %v3744
        %v5601 = vpack.c.b16 %v3753, %v3749
        %v5602 = vpack.c.b16 %v3754, %v3750
        %v5603 = vpack.c.b16 %v3755, %v3751
        %v5604 = vpack.c.b16 %v3756, %v3752
        %v5605 = vpack.c.b16 %v3761, %v3757
        %v5606 = vpack.c.b16 %v3762, %v3758
        %v5607 = vpack.c.b16 %v3763, %v3759
        %v5608 = vpack.c.b16 %v3764, %v3760
        %v5609 = vpack.c.b16 %v3769, %v3765
        %v5610 = vpack.c.b16 %v3770, %v3766
        %v5611 = vpack.c.b16 %v3771, %v3767
        %v5612 = vpack.c.b16 %v3772, %v3768
        %v5613 = vpack.c.b16 %v3777, %v3773
        %v5614 = vpack.c.b16 %v3778, %v3774
        %v5615 = vpack.c.b16 %v3779, %v3775
        %v5616 = vpack.c.b16 %v3780, %v3776
        %v5617 = vpack.c.b16 %v3785, %v3781
        %v5618 = vpack.c.b16 %v3786, %v3782
        %v5619 = vpack.c.b16 %v3787, %v3783
        %v5620 = vpack.c.b16 %v3788, %v3784
        %v5621 = vpack.c.b16 %v3793, %v3789
        %v5622 = vpack.c.b16 %v3794, %v3790
        %v5623 = vpack.c.b16 %v3795, %v3791
        %v5624 = vpack.c.b16 %v3796, %v3792
        %v5625 = vpack.c.b16 %v3801, %v3797
        %v5626 = vpack.c.b16 %v3802, %v3798
        %v5627 = vpack.c.b16 %v3803, %v3799
        %v5628 = vpack.c.b16 %v3804, %v3800
        %v5629 = vpack.c.b16 %v3809, %v3805
        %v5630 = vpack.c.b16 %v3810, %v3806
        %v5631 = vpack.c.b16 %v3811, %v3807
        %v5632 = vpack.c.b16 %v3812, %v3808
        %v5633 = vpack.c.b16 %v3817, %v3813
        %v5634 = vpack.c.b16 %v3818, %v3814
        %v5635 = vpack.c.b16 %v3819, %v3815
        %v5636 = vpack.c.b16 %v3820, %v3816
        %v5637 = vpack.c.b16 %v3825, %v3821
        %v5638 = vpack.c.b16 %v3826, %v3822
        %v5639 = vpack.c.b16 %v3827, %v3823
        %v5640 = vpack.c.b16 %v3828, %v3824
        %v5641 = vpack.c.b16 %v3833, %v3829
        %v5642 = vpack.c.b16 %v3834, %v3830
        %v5643 = vpack.c.b16 %v3835, %v3831
        %v5644 = vpack.c.b16 %v3836, %v3832
        %v5645 = vpack.c.b16 %v3841, %v3837
        %v5646 = vpack.c.b16 %v3842, %v3838
        %v5647 = vpack.c.b16 %v3843, %v3839
        %v5648 = vpack.c.b16 %v3844, %v3840
        %v5649 = vpack.c.b16 %v3849, %v3845
        %v5650 = vpack.c.b16 %v3850, %v3846
        %v5651 = vpack.c.b16 %v3851, %v3847
        %v5652 = vpack.c.b16 %v3852, %v3848
        %v5653 = vpack.c.b16 %v3857, %v3853
        %v5654 = vpack.c.b16 %v3858, %v3854
        %v5655 = vpack.c.b16 %v3859, %v3855
        %v5656 = vpack.c.b16 %v3860, %v3856
        %v5657 = vpack.c.b16 %v3865, %v3861
        %v5658 = vpack.c.b16 %v3866, %v3862
        %v5659 = vpack.c.b16 %v3867, %v3863
        %v5660 = vpack.c.b16 %v3868, %v3864
        %v5661 = vpack.c.b16 %v3873, %v3869
        %v5662 = vpack.c.b16 %v3874, %v3870
        %v5663 = vpack.c.b16 %v3875, %v3871
        %v5664 = vpack.c.b16 %v3876, %v3872
        %v5665 = vpack.c.b16 %v3881, %v3877
        %v5666 = vpack.c.b16 %v3882, %v3878
        %v5667 = vpack.c.b16 %v3883, %v3879
        %v5668 = vpack.c.b16 %v3884, %v3880
        %v5669 = vpack.c.b16 %v3889, %v3885
        %v5670 = vpack.c.b16 %v3890, %v3886
        %v5671 = vpack.c.b16 %v3891, %v3887
        %v5672 = vpack.c.b16 %v3892, %v3888
        %v5673 = vpack.c.b16 %v3897, %v3893
        %v5674 = vpack.c.b16 %v3898, %v3894
        %v5675 = vpack.c.b16 %v3899, %v3895
        %v5676 = vpack.c.b16 %v3900, %v3896
        %v5677 = vpack.c.b16 %v3905, %v3901
        %v5678 = vpack.c.b16 %v3906, %v3902
        %v5679 = vpack.c.b16 %v3907, %v3903
        %v5680 = vpack.c.b16 %v3908, %v3904
        %v5681 = vpack.c.b16 %v3913, %v3909
        %v5682 = vpack.c.b16 %v3914, %v3910
        %v5683 = vpack.c.b16 %v3915, %v3911
        %v5684 = vpack.c.b16 %v3916, %v3912
        %v5685 = vpack.c.b16 %v3921, %v3917
        %v5686 = vpack.c.b16 %v3922, %v3918
        %v5687 = vpack.c.b16 %v3923, %v3919
        %v5688 = vpack.c.b16 %v3924, %v3920
        %v5689 = vpack.c.b16 %v3929, %v3925
        %v5690 = vpack.c.b16 %v3930, %v3926
        %v5691 = vpack.c.b16 %v3931, %v3927
        %v5692 = vpack.c.b16 %v3932, %v3928
        %v5693 = vpack.c.b16 %v3937, %v3933
        %v5694 = vpack.c.b16 %v3938, %v3934
        %v5695 = vpack.c.b16 %v3939, %v3935
        %v5696 = vpack.c.b16 %v3940, %v3936
        %v5697 = vpack.c.b16 %v3945, %v3941
        %v5698 = vpack.c.b16 %v3946, %v3942
        %v5699 = vpack.c.b16 %v3947, %v3943
        %v5700 = vpack.c.b16 %v3948, %v3944
        %v5701 = vpack.c.b16 %v3953, %v3949
        %v5702 = vpack.c.b16 %v3954, %v3950
        %v5703 = vpack.c.b16 %v3955, %v3951
        %v5704 = vpack.c.b16 %v3956, %v3952
        %v5705 = vpack.c.b16 %v3961, %v3957
        %v5706 = vpack.c.b16 %v3962, %v3958
        %v5707 = vpack.c.b16 %v3963, %v3959
        %v5708 = vpack.c.b16 %v3964, %v3960
        %v5709 = vpack.c.b16 %v3969, %v3965
        %v5710 = vpack.c.b16 %v3970, %v3966
        %v5711 = vpack.c.b16 %v3971, %v3967
        %v5712 = vpack.c.b16 %v3972, %v3968
        %v5713 = vpack.c.b16 %v3977, %v3973
        %v5714 = vpack.c.b16 %v3978, %v3974
        %v5715 = vpack.c.b16 %v3979, %v3975
        %v5716 = vpack.c.b16 %v3980, %v3976
        %v5717 = vpack.c.b16 %v3985, %v3981
        %v5718 = vpack.c.b16 %v3986, %v3982
        %v5719 = vpack.c.b16 %v3987, %v3983
        %v5720 = vpack.c.b16 %v3988, %v3984
        %v5721 = vpack.c.b16 %v3993, %v3989
        %v5722 = vpack.c.b16 %v3994, %v3990
        %v5723 = vpack.c.b16 %v3995, %v3991
        %v5724 = vpack.c.b16 %v3996, %v3992
        %v5725 = vpack.c.b16 %v4001, %v3997
        %v5726 = vpack.c.b16 %v4002, %v3998
        %v5727 = vpack.c.b16 %v4003, %v3999
        %v5728 = vpack.c.b16 %v4004, %v4000
        %v5729 = vpack.c.b16 %v4009, %v4005
        %v5730 = vpack.c.b16 %v4010, %v4006
        %v5731 = vpack.c.b16 %v4011, %v4007
        %v5732 = vpack.c.b16 %v4012, %v4008
        %v5733 = vpack.c.b16 %v4017, %v4013
        %v5734 = vpack.c.b16 %v4018, %v4014
        %v5735 = vpack.c.b16 %v4019, %v4015
        %v5736 = vpack.c.b16 %v4020, %v4016
        %v5737 = vpack.c.b16 %v4025, %v4021
        %v5738 = vpack.c.b16 %v4026, %v4022
        %v5739 = vpack.c.b16 %v4027, %v4023
        %v5740 = vpack.c.b16 %v4028, %v4024
        %v5741 = vpack.c.b16 %v4033, %v4029
        %v5742 = vpack.c.b16 %v4034, %v4030
        %v5743 = vpack.c.b16 %v4035, %v4031
        %v5744 = vpack.c.b16 %v4036, %v4032
        %v5745 = vpack.c.b16 %v4041, %v4037
        %v5746 = vpack.c.b16 %v4042, %v4038
        %v5747 = vpack.c.b16 %v4043, %v4039
        %v5748 = vpack.c.b16 %v4044, %v4040
        %v5749 = vpack.c.b16 %v4049, %v4045
        %v5750 = vpack.c.b16 %v4050, %v4046
        %v5751 = vpack.c.b16 %v4051, %v4047
        %v5752 = vpack.c.b16 %v4052, %v4048
        %v5753 = vpack.c.b16 %v4057, %v4053
        %v5754 = vpack.c.b16 %v4058, %v4054
        %v5755 = vpack.c.b16 %v4059, %v4055
        %v5756 = vpack.c.b16 %v4060, %v4056
        %v5757 = vpack.c.b16 %v4065, %v4061
        %v5758 = vpack.c.b16 %v4066, %v4062
        %v5759 = vpack.c.b16 %v4067, %v4063
        %v5760 = vpack.c.b16 %v4068, %v4064
        %v5761 = vpack.c.b16 %v4073, %v4069
        %v5762 = vpack.c.b16 %v4074, %v4070
        %v5763 = vpack.c.b16 %v4075, %v4071
        %v5764 = vpack.c.b16 %v4076, %v4072
        %v5765 = vpack.c.b16 %v4081, %v4077
        %v5766 = vpack.c.b16 %v4082, %v4078
        %v5767 = vpack.c.b16 %v4083, %v4079
        %v5768 = vpack.c.b16 %v4084, %v4080
        %v5769 = vpack.c.b16 %v4089, %v4085
        %v5770 = vpack.c.b16 %v4090, %v4086
        %v5771 = vpack.c.b16 %v4091, %v4087
        %v5772 = vpack.c.b16 %v4092, %v4088
        %v5773 = vpack.c.b16 %v4097, %v4093
        %v5774 = vpack.c.b16 %v4098, %v4094
        %v5775 = vpack.c.b16 %v4099, %v4095
        %v5776 = vpack.c.b16 %v4100, %v4096
        %v5777 = vpack.c.b16 %v4105, %v4101
        %v5778 = vpack.c.b16 %v4106, %v4102
        %v5779 = vpack.c.b16 %v4107, %v4103
        %v5780 = vpack.c.b16 %v4108, %v4104
        %v5781 = vpack.c.b16 %v4113, %v4109
        %v5782 = vpack.c.b16 %v4114, %v4110
        %v5783 = vpack.c.b16 %v4115, %v4111
        %v5784 = vpack.c.b16 %v4116, %v4112
        %v5785 = vpack.c.b16 %v4121, %v4117
        %v5786 = vpack.c.b16 %v4122, %v4118
        %v5787 = vpack.c.b16 %v4123, %v4119
        %v5788 = vpack.c.b16 %v4124, %v4120
        %v5789 = vpack.c.b16 %v4129, %v4125
        %v5790 = vpack.c.b16 %v4130, %v4126
        %v5791 = vpack.c.b16 %v4131, %v4127
        %v5792 = vpack.c.b16 %v4132, %v4128
        %v5793 = vpack.c.b16 %v4137, %v4133
        %v5794 = vpack.c.b16 %v4138, %v4134
        %v5795 = vpack.c.b16 %v4139, %v4135
        %v5796 = vpack.c.b16 %v4140, %v4136
        %v5797 = vpack.c.b16 %v4145, %v4141
        %v5798 = vpack.c.b16 %v4146, %v4142
        %v5799 = vpack.c.b16 %v4147, %v4143
        %v5800 = vpack.c.b16 %v4148, %v4144
        %v5801 = vpack.c.b16 %v4153, %v4149
        %v5802 = vpack.c.b16 %v4154, %v4150
        %v5803 = vpack.c.b16 %v4155, %v4151
        %v5804 = vpack.c.b16 %v4156, %v4152
        %v5805 = vpack.c.b16 %v4161, %v4157
        %v5806 = vpack.c.b16 %v4162, %v4158
        %v5807 = vpack.c.b16 %v4163, %v4159
        %v5808 = vpack.c.b16 %v4164, %v4160
        %v5809 = vpack.c.b16 %v4169, %v4165
        %v5810 = vpack.c.b16 %v4170, %v4166
        %v5811 = vpack.c.b16 %v4171, %v4167
        %v5812 = vpack.c.b16 %v4172, %v4168
        %v5813 = vpack.c.b16 %v4177, %v4173
        %v5814 = vpack.c.b16 %v4178, %v4174
        %v5815 = vpack.c.b16 %v4179, %v4175
        %v5816 = vpack.c.b16 %v4180, %v4176
        %v5817 = vpack.c.b16 %v4185, %v4181
        %v5818 = vpack.c.b16 %v4186, %v4182
        %v5819 = vpack.c.b16 %v4187, %v4183
        %v5820 = vpack.c.b16 %v4188, %v4184
        %v5821 = vpack.c.b16 %v4193, %v4189
        %v5822 = vpack.c.b16 %v4194, %v4190
        %v5823 = vpack.c.b16 %v4195, %v4191
        %v5824 = vpack.c.b16 %v4196, %v4192
        %v5825 = vpack.c.b16 %v4201, %v4197
        %v5826 = vpack.c.b16 %v4202, %v4198
        %v5827 = vpack.c.b16 %v4203, %v4199
        %v5828 = vpack.c.b16 %v4204, %v4200
        %v5829 = vpack.c.b16 %v4209, %v4205
        %v5830 = vpack.c.b16 %v4210, %v4206
        %v5831 = vpack.c.b16 %v4211, %v4207
        %v5832 = vpack.c.b16 %v4212, %v4208
        %v5833 = vpack.c.b16 %v4217, %v4213
        %v5834 = vpack.c.b16 %v4218, %v4214
        %v5835 = vpack.c.b16 %v4219, %v4215
        %v5836 = vpack.c.b16 %v4220, %v4216
        %v5837 = vpack.c.b16 %v4225, %v4221
        %v5838 = vpack.c.b16 %v4226, %v4222
        %v5839 = vpack.c.b16 %v4227, %v4223
        %v5840 = vpack.c.b16 %v4228, %v4224
        %v5841 = vpack.c.b16 %v4233, %v4229
        %v5842 = vpack.c.b16 %v4234, %v4230
        %v5843 = vpack.c.b16 %v4235, %v4231
        %v5844 = vpack.c.b16 %v4236, %v4232
        %v5845 = vpack.c.b16 %v4241, %v4237
        %v5846 = vpack.c.b16 %v4242, %v4238
        %v5847 = vpack.c.b16 %v4243, %v4239
        %v5848 = vpack.c.b16 %v4244, %v4240
        %v5849 = vpack.c.b16 %v4249, %v4245
        %v5850 = vpack.c.b16 %v4250, %v4246
        %v5851 = vpack.c.b16 %v4251, %v4247
        %v5852 = vpack.c.b16 %v4252, %v4248
        %v5853 = vpack.c.b16 %v4257, %v4253
        %v5854 = vpack.c.b16 %v4258, %v4254
        %v5855 = vpack.c.b16 %v4259, %v4255
        %v5856 = vpack.c.b16 %v4260, %v4256
        %v5857 = vpack.c.b16 %v4265, %v4261
        %v5858 = vpack.c.b16 %v4266, %v4262
        %v5859 = vpack.c.b16 %v4267, %v4263
        %v5860 = vpack.c.b16 %v4268, %v4264
        %v5861 = vpack.c.b16 %v4273, %v4269
        %v5862 = vpack.c.b16 %v4274, %v4270
        %v5863 = vpack.c.b16 %v4275, %v4271
        %v5864 = vpack.c.b16 %v4276, %v4272
        %v5865 = vpack.c.b16 %v4281, %v4277
        %v5866 = vpack.c.b16 %v4282, %v4278
        %v5867 = vpack.c.b16 %v4283, %v4279
        %v5868 = vpack.c.b16 %v4284, %v4280
        %v5869 = vpack.c.b16 %v4289, %v4285
        %v5870 = vpack.c.b16 %v4290, %v4286
        %v5871 = vpack.c.b16 %v4291, %v4287
        %v5872 = vpack.c.b16 %v4292, %v4288
        %v5873 = vpack.c.b16 %v4297, %v4293
        %v5874 = vpack.c.b16 %v4298, %v4294
        %v5875 = vpack.c.b16 %v4299, %v4295
        %v5876 = vpack.c.b16 %v4300, %v4296
        %v5877 = vpack.c.b16 %v4305, %v4301
        %v5878 = vpack.c.b16 %v4306, %v4302
        %v5879 = vpack.c.b16 %v4307, %v4303
        %v5880 = vpack.c.b16 %v4308, %v4304
        %v5881 = vpack.c.b16 %v4313, %v4309
        %v5882 = vpack.c.b16 %v4314, %v4310
        %v5883 = vpack.c.b16 %v4315, %v4311
        %v5884 = vpack.c.b16 %v4316, %v4312
        %v5885 = vpack.c.b16 %v4321, %v4317
        %v5886 = vpack.c.b16 %v4322, %v4318
        %v5887 = vpack.c.b16 %v4323, %v4319
        %v5888 = vpack.c.b16 %v4324, %v4320
        %v5889 = vpack.c.b16 %v4329, %v4325
        %v5890 = vpack.c.b16 %v4330, %v4326
        %v5891 = vpack.c.b16 %v4331, %v4327
        %v5892 = vpack.c.b16 %v4332, %v4328
        %v5893 = vpack.c.b16 %v4337, %v4333
        %v5894 = vpack.c.b16 %v4338, %v4334
        %v5895 = vpack.c.b16 %v4339, %v4335
        %v5896 = vpack.c.b16 %v4340, %v4336
        %v5897 = vpack.c.b16 %v4345, %v4341
        %v5898 = vpack.c.b16 %v4346, %v4342
        %v5899 = vpack.c.b16 %v4347, %v4343
        %v5900 = vpack.c.b16 %v4348, %v4344
        %v5901 = vpack.c.b16 %v4353, %v4349
        %v5902 = vpack.c.b16 %v4354, %v4350
        %v5903 = vpack.c.b16 %v4355, %v4351
        %v5904 = vpack.c.b16 %v4356, %v4352
        %v5905 = vpack.c.b16 %v4361, %v4357
        %v5906 = vpack.c.b16 %v4362, %v4358
        %v5907 = vpack.c.b16 %v4363, %v4359
        %v5908 = vpack.c.b16 %v4364, %v4360
        %v5909 = vpack.c.b16 %v4369, %v4365
        %v5910 = vpack.c.b16 %v4370, %v4366
        %v5911 = vpack.c.b16 %v4371, %v4367
        %v5912 = vpack.c.b16 %v4372, %v4368
        %v5913 = vpack.c.b16 %v4377, %v4373
        %v5914 = vpack.c.b16 %v4378, %v4374
        %v5915 = vpack.c.b16 %v4379, %v4375
        %v5916 = vpack.c.b16 %v4380, %v4376
        %v5917 = vpack.c.b16 %v4385, %v4381
        %v5918 = vpack.c.b16 %v4386, %v4382
        %v5919 = vpack.c.b16 %v4387, %v4383
        %v5920 = vpack.c.b16 %v4388, %v4384
        %v5921 = vpack.c.b16 %v4393, %v4389
        %v5922 = vpack.c.b16 %v4394, %v4390
        %v5923 = vpack.c.b16 %v4395, %v4391
        %v5924 = vpack.c.b16 %v4396, %v4392
        %v5925 = vpack.c.b16 %v4401, %v4397
        %v5926 = vpack.c.b16 %v4402, %v4398
        %v5927 = vpack.c.b16 %v4403, %v4399
        %v5928 = vpack.c.b16 %v4404, %v4400
        %v5929 = vpack.c.b16 %v4409, %v4405
        %v5930 = vpack.c.b16 %v4410, %v4406
        %v5931 = vpack.c.b16 %v4411, %v4407
        %v5932 = vpack.c.b16 %v4412, %v4408
        %v5933 = vpack.c.b16 %v4417, %v4413
        %v5934 = vpack.c.b16 %v4418, %v4414
        %v5935 = vpack.c.b16 %v4419, %v4415
        %v5936 = vpack.c.b16 %v4420, %v4416
        %v5937 = vpack.c.b16 %v4425, %v4421
        %v5938 = vpack.c.b16 %v4426, %v4422
        %v5939 = vpack.c.b16 %v4427, %v4423
        %v5940 = vpack.c.b16 %v4428, %v4424
        %v5941 = vpack.c.b16 %v4433, %v4429
        %v5942 = vpack.c.b16 %v4434, %v4430
        %v5943 = vpack.c.b16 %v4435, %v4431
        %v5944 = vpack.c.b16 %v4436, %v4432
        %v5945 = vpack.c.b16 %v4441, %v4437
        %v5946 = vpack.c.b16 %v4442, %v4438
        %v5947 = vpack.c.b16 %v4443, %v4439
        %v5948 = vpack.c.b16 %v4444, %v4440
        %v5949 = vpack.c.b16 %v4449, %v4445
        %v5950 = vpack.c.b16 %v4450, %v4446
        %v5951 = vpack.c.b16 %v4451, %v4447
        %v5952 = vpack.c.b16 %v4452, %v4448
        %v5953 = vpack.c.b16 %v4457, %v4453
        %v5954 = vpack.c.b16 %v4458, %v4454
        %v5955 = vpack.c.b16 %v4459, %v4455
        %v5956 = vpack.c.b16 %v4460, %v4456
        %v5957 = vpack.c.b16 %v4465, %v4461
        %v5958 = vpack.c.b16 %v4466, %v4462
        %v5959 = vpack.c.b16 %v4467, %v4463
        %v5960 = vpack.c.b16 %v4468, %v4464
        %v5961 = vpack.c.b16 %v4473, %v4469
        %v5962 = vpack.c.b16 %v4474, %v4470
        %v5963 = vpack.c.b16 %v4475, %v4471
        %v5964 = vpack.c.b16 %v4476, %v4472
        %v5965 = vpack.c.b16 %v4481, %v4477
        %v5966 = vpack.c.b16 %v4482, %v4478
        %v5967 = vpack.c.b16 %v4483, %v4479
        %v5968 = vpack.c.b16 %v4484, %v4480
        %v5969 = vpack.c.b16 %v4489, %v4485
        %v5970 = vpack.c.b16 %v4490, %v4486
        %v5971 = vpack.c.b16 %v4491, %v4487
        %v5972 = vpack.c.b16 %v4492, %v4488
        %v5973 = vpack.c.b16 %v4497, %v4493
        %v5974 = vpack.c.b16 %v4498, %v4494
        %v5975 = vpack.c.b16 %v4499, %v4495
        %v5976 = vpack.c.b16 %v4500, %v4496
        %v5977 = vpack.c.b16 %v4505, %v4501
        %v5978 = vpack.c.b16 %v4506, %v4502
        %v5979 = vpack.c.b16 %v4507, %v4503
        %v5980 = vpack.c.b16 %v4508, %v4504
        %v5981 = vpack.c.b16 %v4513, %v4509
        %v5982 = vpack.c.b16 %v4514, %v4510
        %v5983 = vpack.c.b16 %v4515, %v4511
        %v5984 = vpack.c.b16 %v4516, %v4512
        %v5985 = vpack.c.b16 %v4521, %v4517
        %v5986 = vpack.c.b16 %v4522, %v4518
        %v5987 = vpack.c.b16 %v4523, %v4519
        %v5988 = vpack.c.b16 %v4524, %v4520
        %v5989 = vpack.c.b16 %v4529, %v4525
        %v5990 = vpack.c.b16 %v4530, %v4526
        %v5991 = vpack.c.b16 %v4531, %v4527
        %v5992 = vpack.c.b16 %v4532, %v4528
        %v5993 = vpack.c.b16 %v4537, %v4533
        %v5994 = vpack.c.b16 %v4538, %v4534
        %v5995 = vpack.c.b16 %v4539, %v4535
        %v5996 = vpack.c.b16 %v4540, %v4536
        %v5997 = vpack.c.b16 %v4545, %v4541
        %v5998 = vpack.c.b16 %v4546, %v4542
        %v5999 = vpack.c.b16 %v4547, %v4543
        %v6000 = vpack.c.b16 %v4548, %v4544
        %v6001 = vpack.c.b16 %v4553, %v4549
        %v6002 = vpack.c.b16 %v4554, %v4550
        %v6003 = vpack.c.b16 %v4555, %v4551
        %v6004 = vpack.c.b16 %v4556, %v4552
        %v6005 = vpack.c.b16 %v4561, %v4557
        %v6006 = vpack.c.b16 %v4562, %v4558
        %v6007 = vpack.c.b16 %v4563, %v4559
        %v6008 = vpack.c.b16 %v4564, %v4560
        %v6009 = vpack.c.b16 %v4569, %v4565
        %v6010 = vpack.c.b16 %v4570, %v4566
        %v6011 = vpack.c.b16 %v4571, %v4567
        %v6012 = vpack.c.b16 %v4572, %v4568
        %v6013 = vpack.c.b16 %v4577, %v4573
        %v6014 = vpack.c.b16 %v4578, %v4574
        %v6015 = vpack.c.b16 %v4579, %v4575
        %v6016 = vpack.c.b16 %v4580, %v4576
        %v6017 = vpack.c.b16 %v4585, %v4581
        %v6018 = vpack.c.b16 %v4586, %v4582
        %v6019 = vpack.c.b16 %v4587, %v4583
        %v6020 = vpack.c.b16 %v4588, %v4584
        %v6021 = vpack.c.b16 %v4593, %v4589
        %v6022 = vpack.c.b16 %v4594, %v4590
        %v6023 = vpack.c.b16 %v4595, %v4591
        %v6024 = vpack.c.b16 %v4596, %v4592
        %v6025 = vpack.c.b16 %v4601, %v4597
        %v6026 = vpack.c.b16 %v4602, %v4598
        %v6027 = vpack.c.b16 %v4603, %v4599
        %v6028 = vpack.c.b16 %v4604, %v4600
        %v6029 = vpack.c.b16 %v4609, %v4605
        %v6030 = vpack.c.b16 %v4610, %v4606
        %v6031 = vpack.c.b16 %v4611, %v4607
        %v6032 = vpack.c.b16 %v4612, %v4608
        %v6033 = vpack.c.b16 %v4617, %v4613
        %v6034 = vpack.c.b16 %v4618, %v4614
        %v6035 = vpack.c.b16 %v4619, %v4615
        %v6036 = vpack.c.b16 %v4620, %v4616
        %v6037 = vpack.c.b16 %v4625, %v4621
        %v6038 = vpack.c.b16 %v4626, %v4622
        %v6039 = vpack.c.b16 %v4627, %v4623
        %v6040 = vpack.c.b16 %v4628, %v4624
        %v6041 = vpack.c.b16 %v4633, %v4629
        %v6042 = vpack.c.b16 %v4634, %v4630
        %v6043 = vpack.c.b16 %v4635, %v4631
        %v6044 = vpack.c.b16 %v4636, %v4632
        %v6045 = vpack.c.b16 %v4641, %v4637
        %v6046 = vpack.c.b16 %v4642, %v4638
        %v6047 = vpack.c.b16 %v4643, %v4639
        %v6048 = vpack.c.b16 %v4644, %v4640
        %v6049 = vpack.c.b16 %v4649, %v4645
        %v6050 = vpack.c.b16 %v4650, %v4646
        %v6051 = vpack.c.b16 %v4651, %v4647
        %v6052 = vpack.c.b16 %v4652, %v4648
        %v6053 = vpack.c.b16 %v4657, %v4653
        %v6054 = vpack.c.b16 %v4658, %v4654
        %v6055 = vpack.c.b16 %v4659, %v4655
        %v6056 = vpack.c.b16 %v4660, %v4656
        %v6057 = vpack.c.b16 %v4665, %v4661
        %v6058 = vpack.c.b16 %v4666, %v4662
        %v6059 = vpack.c.b16 %v4667, %v4663
        %v6060 = vpack.c.b16 %v4668, %v4664
        %v6061 = vpack.c.b16 %v4673, %v4669
        %v6062 = vpack.c.b16 %v4674, %v4670
        %v6063 = vpack.c.b16 %v4675, %v4671
        %v6064 = vpack.c.b16 %v4676, %v4672
        %v6065 = vpack.c.b16 %v4681, %v4677
        %v6066 = vpack.c.b16 %v4682, %v4678
        %v6067 = vpack.c.b16 %v4683, %v4679
        %v6068 = vpack.c.b16 %v4684, %v4680
        %v6069 = vpack.c.b16 %v4689, %v4685
        %v6070 = vpack.c.b16 %v4690, %v4686
        %v6071 = vpack.c.b16 %v4691, %v4687
        %v6072 = vpack.c.b16 %v4692, %v4688
        %v6073 = vpack.c.b16 %v4697, %v4693
        %v6074 = vpack.c.b16 %v4698, %v4694
        %v6075 = vpack.c.b16 %v4699, %v4695
        %v6076 = vpack.c.b16 %v4700, %v4696
        %v6077 = vpack.c.b16 %v4705, %v4701
        %v6078 = vpack.c.b16 %v4706, %v4702
        %v6079 = vpack.c.b16 %v4707, %v4703
        %v6080 = vpack.c.b16 %v4708, %v4704
        %v6081 = vpack.c.b16 %v4713, %v4709
        %v6082 = vpack.c.b16 %v4714, %v4710
        %v6083 = vpack.c.b16 %v4715, %v4711
        %v6084 = vpack.c.b16 %v4716, %v4712
        %v6085 = vpack.c.b16 %v4721, %v4717
        %v6086 = vpack.c.b16 %v4722, %v4718
        %v6087 = vpack.c.b16 %v4723, %v4719
        %v6088 = vpack.c.b16 %v4724, %v4720
        %v6089 = vpack.c.b16 %v4729, %v4725
        %v6090 = vpack.c.b16 %v4730, %v4726
        %v6091 = vpack.c.b16 %v4731, %v4727
        %v6092 = vpack.c.b16 %v4732, %v4728
        %v6093 = vpack.c.b16 %v4737, %v4733
        %v6094 = vpack.c.b16 %v4738, %v4734
        %v6095 = vpack.c.b16 %v4739, %v4735
        %v6096 = vpack.c.b16 %v4740, %v4736
        %v6097 = vpack.c.b16 %v4745, %v4741
        %v6098 = vpack.c.b16 %v4746, %v4742
        %v6099 = vpack.c.b16 %v4747, %v4743
        %v6100 = vpack.c.b16 %v4748, %v4744
        %v6101 = vpack.c.b16 %v4753, %v4749
        %v6102 = vpack.c.b16 %v4754, %v4750
        %v6103 = vpack.c.b16 %v4755, %v4751
        %v6104 = vpack.c.b16 %v4756, %v4752
        %v6105 = vpack.c.b16 %v4761, %v4757
        %v6106 = vpack.c.b16 %v4762, %v4758
        %v6107 = vpack.c.b16 %v4763, %v4759
        %v6108 = vpack.c.b16 %v4764, %v4760
        %v6109 = vpack.c.b16 %v4769, %v4765
        %v6110 = vpack.c.b16 %v4770, %v4766
        %v6111 = vpack.c.b16 %v4771, %v4767
        %v6112 = vpack.c.b16 %v4772, %v4768
        %v6113 = vpack.c.b16 %v4777, %v4773
        %v6114 = vpack.c.b16 %v4778, %v4774
        %v6115 = vpack.c.b16 %v4779, %v4775
        %v6116 = vpack.c.b16 %v4780, %v4776
        %v6117 = vpack.c.b16 %v4785, %v4781
        %v6118 = vpack.c.b16 %v4786, %v4782
        %v6119 = vpack.c.b16 %v4787, %v4783
        %v6120 = vpack.c.b16 %v4788, %v4784
        %v6121 = vpack.c.b16 %v4793, %v4789
        %v6122 = vpack.c.b16 %v4794, %v4790
        %v6123 = vpack.c.b16 %v4795, %v4791
        %v6124 = vpack.c.b16 %v4796, %v4792
        %v6125 = vpack.c.b16 %v4801, %v4797
        %v6126 = vpack.c.b16 %v4802, %v4798
        %v6127 = vpack.c.b16 %v4803, %v4799
        %v6128 = vpack.c.b16 %v4804, %v4800
        %v6129 = vpack.c.b16 %v4809, %v4805
        %v6130 = vpack.c.b16 %v4810, %v4806
        %v6131 = vpack.c.b16 %v4811, %v4807
        %v6132 = vpack.c.b16 %v4812, %v4808
        %v6133 = vpack.c.b16 %v4817, %v4813
        %v6134 = vpack.c.b16 %v4818, %v4814
        %v6135 = vpack.c.b16 %v4819, %v4815
        %v6136 = vpack.c.b16 %v4820, %v4816
        %v6137 = vpack.c.b16 %v4825, %v4821
        %v6138 = vpack.c.b16 %v4826, %v4822
        %v6139 = vpack.c.b16 %v4827, %v4823
        %v6140 = vpack.c.b16 %v4828, %v4824
        %v6141 = vpack.c.b16 %v4833, %v4829
        %v6142 = vpack.c.b16 %v4834, %v4830
        %v6143 = vpack.c.b16 %v4835, %v4831
        %v6144 = vpack.c.b16 %v4836, %v4832
        %v6145 = vpack.c.b16 %v4841, %v4837
        %v6146 = vpack.c.b16 %v4842, %v4838
        %v6147 = vpack.c.b16 %v4843, %v4839
        %v6148 = vpack.c.b16 %v4844, %v4840
        %v6149 = vpack.c.b16 %v4849, %v4845
        %v6150 = vpack.c.b16 %v4850, %v4846
        %v6151 = vpack.c.b16 %v4851, %v4847
        %v6152 = vpack.c.b16 %v4852, %v4848
        %v6153 = vpack.c.b16 %v4857, %v4853
        %v6154 = vpack.c.b16 %v4858, %v4854
        %v6155 = vpack.c.b16 %v4859, %v4855
        %v6156 = vpack.c.b16 %v4860, %v4856
        %v6157 = vpack.c.b16 %v4865, %v4861
        %v6158 = vpack.c.b16 %v4866, %v4862
        %v6159 = vpack.c.b16 %v4867, %v4863
        %v6160 = vpack.c.b16 %v4868, %v4864
        %v6161 = vpack.c.b16 %v4873, %v4869
        %v6162 = vpack.c.b16 %v4874, %v4870
        %v6163 = vpack.c.b16 %v4875, %v4871
        %v6164 = vpack.c.b16 %v4876, %v4872
        %v6165 = vpack.c.b16 %v4881, %v4877
        %v6166 = vpack.c.b16 %v4882, %v4878
        %v6167 = vpack.c.b16 %v4883, %v4879
        %v6168 = vpack.c.b16 %v4884, %v4880
        %v6169 = vpack.c.b16 %v4889, %v4885
        %v6170 = vpack.c.b16 %v4890, %v4886
        %v6171 = vpack.c.b16 %v4891, %v4887
        %v6172 = vpack.c.b16 %v4892, %v4888
        %v6173 = vpack.c.b16 %v4897, %v4893
        %v6174 = vpack.c.b16 %v4898, %v4894
        %v6175 = vpack.c.b16 %v4899, %v4895
        %v6176 = vpack.c.b16 %v4900, %v4896
        %v6177 = vpack.c.b16 %v4905, %v4901
        %v6178 = vpack.c.b16 %v4906, %v4902
        %v6179 = vpack.c.b16 %v4907, %v4903
        %v6180 = vpack.c.b16 %v4908, %v4904
        %v6181 = vpack.c.b16 %v4913, %v4909
        %v6182 = vpack.c.b16 %v4914, %v4910
        %v6183 = vpack.c.b16 %v4915, %v4911
        %v6184 = vpack.c.b16 %v4916, %v4912
        %v6185 = vpack.c.b16 %v4921, %v4917
        %v6186 = vpack.c.b16 %v4922, %v4918
        %v6187 = vpack.c.b16 %v4923, %v4919
        %v6188 = vpack.c.b16 %v4924, %v4920
        %v6189 = vpack.c.b16 %v4929, %v4925
        %v6190 = vpack.c.b16 %v4930, %v4926
        %v6191 = vpack.c.b16 %v4931, %v4927
        %v6192 = vpack.c.b16 %v4932, %v4928
        %v6193 = vpack.c.b16 %v4937, %v4933
        %v6194 = vpack.c.b16 %v4938, %v4934
        %v6195 = vpack.c.b16 %v4939, %v4935
        %v6196 = vpack.c.b16 %v4940, %v4936
        %v6197 = vpack.c.b16 %v4945, %v4941
        %v6198 = vpack.c.b16 %v4946, %v4942
        %v6199 = vpack.c.b16 %v4947, %v4943
        %v6200 = vpack.c.b16 %v4948, %v4944
        %v6201 = vpack.c.b16 %v4953, %v4949
        %v6202 = vpack.c.b16 %v4954, %v4950
        %v6203 = vpack.c.b16 %v4955, %v4951
        %v6204 = vpack.c.b16 %v4956, %v4952
        %v6205 = vpack.c.b16 %v4961, %v4957
        %v6206 = vpack.c.b16 %v4962, %v4958
        %v6207 = vpack.c.b16 %v4963, %v4959
        %v6208 = vpack.c.b16 %v4964, %v4960
        %v6209 = vpack.c.b16 %v4969, %v4965
        %v6210 = vpack.c.b16 %v4970, %v4966
        %v6211 = vpack.c.b16 %v4971, %v4967
        %v6212 = vpack.c.b16 %v4972, %v4968
        %v6213 = vpack.c.b16 %v4977, %v4973
        %v6214 = vpack.c.b16 %v4978, %v4974
        %v6215 = vpack.c.b16 %v4979, %v4975
        %v6216 = vpack.c.b16 %v4980, %v4976
        %v6217 = vpack.c.b16 %v4985, %v4981
        %v6218 = vpack.c.b16 %v4986, %v4982
        %v6219 = vpack.c.b16 %v4987, %v4983
        %v6220 = vpack.c.b16 %v4988, %v4984
        %v6221 = vpack.c.b16 %v4993, %v4989
        %v6222 = vpack.c.b16 %v4994, %v4990
        %v6223 = vpack.c.b16 %v4995, %v4991
        %v6224 = vpack.c.b16 %v4996, %v4992
        %v6225 = vpack.c.b16 %v5001, %v4997
        %v6226 = vpack.c.b16 %v5002, %v4998
        %v6227 = vpack.c.b16 %v5003, %v4999
        %v6228 = vpack.c.b16 %v5004, %v5000
        %v6229 = vpack.c.b16 %v5009, %v5005
        %v6230 = vpack.c.b16 %v5010, %v5006
        %v6231 = vpack.c.b16 %v5011, %v5007
        %v6232 = vpack.c.b16 %v5012, %v5008
        %v6233 = vpack.c.b16 %v5017, %v5013
        %v6234 = vpack.c.b16 %v5018, %v5014
        %v6235 = vpack.c.b16 %v5019, %v5015
        %v6236 = vpack.c.b16 %v5020, %v5016
        %v6237 = vpack.c.b16 %v5025, %v5021
        %v6238 = vpack.c.b16 %v5026, %v5022
        %v6239 = vpack.c.b16 %v5027, %v5023
        %v6240 = vpack.c.b16 %v5028, %v5024
        %v6241 = vpack.c.b16 %v5033, %v5029
        %v6242 = vpack.c.b16 %v5034, %v5030
        %v6243 = vpack.c.b16 %v5035, %v5031
        %v6244 = vpack.c.b16 %v5036, %v5032
        %v6245 = vpack.c.b16 %v5041, %v5037
        %v6246 = vpack.c.b16 %v5042, %v5038
        %v6247 = vpack.c.b16 %v5043, %v5039
        %v6248 = vpack.c.b16 %v5044, %v5040
        %v6249 = vpack.c.b16 %v5049, %v5045
        %v6250 = vpack.c.b16 %v5050, %v5046
        %v6251 = vpack.c.b16 %v5051, %v5047
        %v6252 = vpack.c.b16 %v5052, %v5048
        %v6253 = vpack.c.b16 %v5057, %v5053
        %v6254 = vpack.c.b16 %v5058, %v5054
        %v6255 = vpack.c.b16 %v5059, %v5055
        %v6256 = vpack.c.b16 %v5060, %v5056
        %v6257 = vpack.c.b16 %v5065, %v5061
        %v6258 = vpack.c.b16 %v5066, %v5062
        %v6259 = vpack.c.b16 %v5067, %v5063
        %v6260 = vpack.c.b16 %v5068, %v5064
        %v6261 = vpack.c.b16 %v5073, %v5069
        %v6262 = vpack.c.b16 %v5074, %v5070
        %v6263 = vpack.c.b16 %v5075, %v5071
        %v6264 = vpack.c.b16 %v5076, %v5072
        %v6265 = vpack.c.b16 %v5081, %v5077
        %v6266 = vpack.c.b16 %v5082, %v5078
        %v6267 = vpack.c.b16 %v5083, %v5079
        %v6268 = vpack.c.b16 %v5084, %v5080
        %v6269 = vpack.c.b16 %v5089, %v5085
        %v6270 = vpack.c.b16 %v5090, %v5086
        %v6271 = vpack.c.b16 %v5091, %v5087
        %v6272 = vpack.c.b16 %v5092, %v5088
        %v6273 = vpack.c.b16 %v5097, %v5093
        %v6274 = vpack.c.b16 %v5098, %v5094
        %v6275 = vpack.c.b16 %v5099, %v5095
        %v6276 = vpack.c.b16 %v5100, %v5096
        %v6277 = vpack.c.b16 %v5105, %v5101
        %v6278 = vpack.c.b16 %v5106, %v5102
        %v6279 = vpack.c.b16 %v5107, %v5103
        %v6280 = vpack.c.b16 %v5108, %v5104
        %v6281 = vpack.c.b16 %v5113, %v5109
        %v6282 = vpack.c.b16 %v5114, %v5110
        %v6283 = vpack.c.b16 %v5115, %v5111
        %v6284 = vpack.c.b16 %v5116, %v5112
        %v6285 = vpack.c.b16 %v5121, %v5117
        %v6286 = vpack.c.b16 %v5122, %v5118
        %v6287 = vpack.c.b16 %v5123, %v5119
        %v6288 = vpack.c.b16 %v5124, %v5120
        %v6289 = vpack.c.b16 %v5129, %v5125
        %v6290 = vpack.c.b16 %v5130, %v5126
        %v6291 = vpack.c.b16 %v5131, %v5127
        %v6292 = vpack.c.b16 %v5132, %v5128
        %v6293 = vpack.c.b16 %v5137, %v5133
        %v6294 = vpack.c.b16 %v5138, %v5134
        %v6295 = vpack.c.b16 %v5139, %v5135
        %v6296 = vpack.c.b16 %v5140, %v5136
        %v6297 = vpack.c.b16 %v5145, %v5141
        %v6298 = vpack.c.b16 %v5146, %v5142
        %v6299 = vpack.c.b16 %v5147, %v5143
        %v6300 = vpack.c.b16 %v5148, %v5144
        %7453 = vmatprep.subr.bf16.mxu0 %v5150
        %7454 = vmatpush1.bf16.msra.mxu0 %v5149
        %7455 = vmatprep.subr.bf16.mxu0 %v5154
        %7456 = vmatpush1.bf16.msra.mxu0 %v5153
        %7457 = vmatprep.subr.bf16.mxu0 %v5158
        %7458 = vmatpush1.bf16.msra.mxu0 %v5157
        %7459 = vmatprep.subr.bf16.mxu0 %v5162
        %7460 = vmatpush1.bf16.msra.mxu0 %v5161
        %7461 = vmatprep.subr.bf16.mxu0 %v5166
        %7462 = vmatpush1.bf16.msra.mxu0 %v5165
        %7463 = vmatprep.subr.bf16.mxu0 %v5170
        %7464 = vmatpush1.bf16.msra.mxu0 %v5169
        %7465 = vmatprep.subr.bf16.mxu0 %v5174
        %7466 = vmatpush1.bf16.msra.mxu0 %v5173
        %7467 = vmatprep.subr.bf16.mxu0 %v5178
        %7468 = vmatpush1.bf16.msra.mxu0 %v5177
        %7469 = vmatprep.subr.bf16.mxu0 %v5182
        %7470 = vmatpush1.bf16.msra.mxu0 %v5181
        %7471 = vmatprep.subr.bf16.mxu0 %v5186
        %7472 = vmatpush1.bf16.msra.mxu0 %v5185
        %7473 = vmatprep.subr.bf16.mxu0 %v5190
        %7474 = vmatpush1.bf16.msra.mxu0 %v5189
        %7475 = vmatprep.subr.bf16.mxu0 %v5194
        %7476 = vmatpush1.bf16.msra.mxu0 %v5193
        %7477 = vmatprep.subr.bf16.mxu0 %v5198
        %7478 = vmatpush1.bf16.msra.mxu0 %v5197
        %7479 = vmatprep.subr.bf16.mxu0 %v5202
        %7480 = vmatpush1.bf16.msra.mxu0 %v5201
        %7481 = vmatprep.subr.bf16.mxu0 %v5206
        %7482 = vmatpush1.bf16.msra.mxu0 %v5205
        %7483 = vmatprep.subr.bf16.mxu0 %v5210
        %7484 = vmatpush1.bf16.msra.mxu0 %v5209
        %7485 = vmatprep.mubr.bf16.mxu0 %v1474
        %7486 = vmatmul.mubr.bf16.gmra.mrb[0].mxu0 %v1460
        %v7487 = vpop.f32.mrb[0].mxu0
        %v7488 = vadd.f32 0.0, %v7487
        %v7489 = vpop.f32.mrb[0].mxu0
        %v7490 = vadd.f32 0.0, %v7489
        %v7491 = vpop.f32.mrb[0].mxu0
        %v7492 = vpop.f32.mrb[0].mxu0
        %7493 = vdwg.mxu0
        %7494 = vmatprep.subr.bf16.mxu0 %v5214
        %7495 = vmatpush1.bf16.msra.mxu0 %v5213
        %7496 = vmatprep.subr.bf16.mxu0 %v5218
        %7497 = vmatpush1.bf16.msra.mxu0 %v5217
        %7498 = vmatprep.subr.bf16.mxu0 %v5222
        %7499 = vmatpush1.bf16.msra.mxu0 %v5221
        %7500 = vmatprep.subr.bf16.mxu0 %v5226
        %7501 = vmatpush1.bf16.msra.mxu0 %v5225
        %7502 = vmatprep.subr.bf16.mxu0 %v5230
        %7503 = vmatpush1.bf16.msra.mxu0 %v5229
        %7504 = vmatprep.subr.bf16.mxu0 %v5234
        %7505 = vmatpush1.bf16.msra.mxu0 %v5233
        %7506 = vmatprep.subr.bf16.mxu0 %v5238
        %7507 = vmatpush1.bf16.msra.mxu0 %v5237
        %7508 = vmatprep.subr.bf16.mxu0 %v5242
        %7509 = vmatpush1.bf16.msra.mxu0 %v5241
        %7510 = vmatprep.subr.bf16.mxu0 %v5246
        %7511 = vmatpush1.bf16.msra.mxu0 %v5245
        %7512 = vmatprep.subr.bf16.mxu0 %v5250
        %7513 = vmatpush1.bf16.msra.mxu0 %v5249
        %7514 = vmatprep.subr.bf16.mxu0 %v5254
        %7515 = vmatpush1.bf16.msra.mxu0 %v5253
        %7516 = vmatprep.subr.bf16.mxu0 %v5258
        %7517 = vmatpush1.bf16.msra.mxu0 %v5257
        %7518 = vmatprep.subr.bf16.mxu0 %v5262
        %7519 = vmatpush1.bf16.msra.mxu0 %v5261
        %7520 = vmatprep.subr.bf16.mxu0 %v5266
        %7521 = vmatpush1.bf16.msra.mxu0 %v5265
        %7522 = vmatprep.subr.bf16.mxu0 %v5270
        %7523 = vmatpush1.bf16.msra.mxu0 %v5269
        %7524 = vmatprep.subr.bf16.mxu0 %v5274
        %7525 = vmatpush1.bf16.msra.mxu0 %v5273
        %7526 = vmatprep.mubr.bf16.mxu0 %v1484
        %7527 = vmatmul.mubr.bf16.gmra.mrb[0].mxu0 %v1482
        %v7528 = vpop.f32.mrb[0].mxu0
        %v7529 = vadd.f32 %v7488, %v7528
        %v7530 = vpop.f32.mrb[0].mxu0
        %v7531 = vadd.f32 %v7490, %v7530
        %v7532 = vpop.f32.mrb[0].mxu0
        %v7533 = vpop.f32.mrb[0].mxu0
        %7534 = vdwg.mxu0
        %7535 = vmatprep.subr.bf16.mxu0 %v5278
        %7536 = vmatpush1.bf16.msra.mxu0 %v5277
        %7537 = vmatprep.subr.bf16.mxu0 %v5282
        %7538 = vmatpush1.bf16.msra.mxu0 %v5281
        %7539 = vmatprep.subr.bf16.mxu0 %v5286
        %7540 = vmatpush1.bf16.msra.mxu0 %v5285
        %7541 = vmatprep.subr.bf16.mxu0 %v5290
        %7542 = vmatpush1.bf16.msra.mxu0 %v5289
        %7543 = vmatprep.subr.bf16.mxu0 %v5294
        %7544 = vmatpush1.bf16.msra.mxu0 %v5293
        %7545 = vmatprep.subr.bf16.mxu0 %v5298
        %7546 = vmatpush1.bf16.msra.mxu0 %v5297
        %7547 = vmatprep.subr.bf16.mxu0 %v5302
        %7548 = vmatpush1.bf16.msra.mxu0 %v5301
        %7549 = vmatprep.subr.bf16.mxu0 %v5306
        %7550 = vmatpush1.bf16.msra.mxu0 %v5305
        %7551 = vmatprep.subr.bf16.mxu0 %v5310
        %7552 = vmatpush1.bf16.msra.mxu0 %v5309
        %7553 = vmatprep.subr.bf16.mxu0 %v5314
        %7554 = vmatpush1.bf16.msra.mxu0 %v5313
        %7555 = vmatprep.subr.bf16.mxu0 %v5318
        %7556 = vmatpush1.bf16.msra.mxu0 %v5317
        %7557 = vmatprep.subr.bf16.mxu0 %v5322
        %7558 = vmatpush1.bf16.msra.mxu0 %v5321
        %7559 = vmatprep.subr.bf16.mxu0 %v5326
        %7560 = vmatpush1.bf16.msra.mxu0 %v5325
        %7561 = vmatprep.subr.bf16.mxu0 %v5330
        %7562 = vmatpush1.bf16.msra.mxu0 %v5329
        %7563 = vmatprep.subr.bf16.mxu0 %v5334
        %7564 = vmatpush1.bf16.msra.mxu0 %v5333
        %7565 = vmatprep.subr.bf16.mxu0 %v5338
        %7566 = vmatpush1.bf16.msra.mxu0 %v5337
        %7567 = vmatprep.mubr.bf16.mxu0 %v1481
        %7568 = vmatmul.mubr.bf16.gmra.mrb[0].mxu0 %v1467
        %v7569 = vpop.f32.mrb[0].mxu0
        %v7570 = vadd.f32 %v7529, %v7569
        %v7571 = vpop.f32.mrb[0].mxu0
        %v7572 = vadd.f32 %v7531, %v7571
        %v7573 = vpop.f32.mrb[0].mxu0
        %v7574 = vpop.f32.mrb[0].mxu0
        %7575 = vdwg.mxu0
        %7576 = vmatprep.subr.bf16.mxu0 %v5342
        %7577 = vmatpush1.bf16.msra.mxu0 %v5341
        %7578 = vmatprep.subr.bf16.mxu0 %v5346
        %7579 = vmatpush1.bf16.msra.mxu0 %v5345
        %7580 = vmatprep.subr.bf16.mxu0 %v5350
        %7581 = vmatpush1.bf16.msra.mxu0 %v5349
        %7582 = vmatprep.subr.bf16.mxu0 %v5354
        %7583 = vmatpush1.bf16.msra.mxu0 %v5353
        %7584 = vmatprep.subr.bf16.mxu0 %v5358
        %7585 = vmatpush1.bf16.msra.mxu0 %v5357
        %7586 = vmatprep.subr.bf16.mxu0 %v5362
        %7587 = vmatpush1.bf16.msra.mxu0 %v5361
        %7588 = vmatprep.subr.bf16.mxu0 %v5366
        %7589 = vmatpush1.bf16.msra.mxu0 %v5365
        %7590 = vmatprep.subr.bf16.mxu0 %v5370
        %7591 = vmatpush1.bf16.msra.mxu0 %v5369
        %7592 = vmatprep.subr.bf16.mxu0 %v5374
        %7593 = vmatpush1.bf16.msra.mxu0 %v5373
        %7594 = vmatprep.subr.bf16.mxu0 %v5378
        %7595 = vmatpush1.bf16.msra.mxu0 %v5377
        %7596 = vmatprep.subr.bf16.mxu0 %v5382
        %7597 = vmatpush1.bf16.msra.mxu0 %v5381
        %7598 = vmatprep.subr.bf16.mxu0 %v5386
        %7599 = vmatpush1.bf16.msra.mxu0 %v5385
        %7600 = vmatprep.subr.bf16.mxu0 %v5390
        %7601 = vmatpush1.bf16.msra.mxu0 %v5389
        %7602 = vmatprep.subr.bf16.mxu0 %v5394
        %7603 = vmatpush1.bf16.msra.mxu0 %v5393
        %7604 = vmatprep.subr.bf16.mxu0 %v5398
        %7605 = vmatpush1.bf16.msra.mxu0 %v5397
        %7606 = vmatprep.subr.bf16.mxu0 %v5402
        %7607 = vmatpush1.bf16.msra.mxu0 %v5401
        %7608 = vmatprep.mubr.bf16.mxu0 %v1485
        %7609 = vmatmul.mubr.bf16.gmra.mrb[0].mxu0 %v1483
        %v7610 = vpop.f32.mrb[0].mxu0
        %v7611 = vadd.f32 %v7570, %v7610
        %v7612 = vpop.f32.mrb[0].mxu0
        %v7613 = vadd.f32 %v7572, %v7612
        %v7614 = vpop.f32.mrb[0].mxu0
        %v7615 = vpop.f32.mrb[0].mxu0
        %7616 = vdwg.mxu0
        %7617 = vmatprep.subr.bf16.mxu0 %v5406
        %7618 = vmatpush1.bf16.msra.mxu0 %v5405
        %7619 = vmatprep.subr.bf16.mxu0 %v5410
        %7620 = vmatpush1.bf16.msra.mxu0 %v5409
        %7621 = vmatprep.subr.bf16.mxu0 %v5414
        %7622 = vmatpush1.bf16.msra.mxu0 %v5413
        %7623 = vmatprep.subr.bf16.mxu0 %v5418
        %7624 = vmatpush1.bf16.msra.mxu0 %v5417
        %7625 = vmatprep.subr.bf16.mxu0 %v5422
        %7626 = vmatpush1.bf16.msra.mxu0 %v5421
        %7627 = vmatprep.subr.bf16.mxu0 %v5426
        %7628 = vmatpush1.bf16.msra.mxu0 %v5425
        %7629 = vmatprep.subr.bf16.mxu0 %v5430
        %7630 = vmatpush1.bf16.msra.mxu0 %v5429
        %7631 = vmatprep.subr.bf16.mxu0 %v5434
        %7632 = vmatpush1.bf16.msra.mxu0 %v5433
        %7633 = vmatprep.subr.bf16.mxu0 %v5438
        %7634 = vmatpush1.bf16.msra.mxu0 %v5437
        %7635 = vmatprep.subr.bf16.mxu0 %v5442
        %7636 = vmatpush1.bf16.msra.mxu0 %v5441
        %7637 = vmatprep.subr.bf16.mxu0 %v5446
        %7638 = vmatpush1.bf16.msra.mxu0 %v5445
        %7639 = vmatprep.subr.bf16.mxu0 %v5450
        %7640 = vmatpush1.bf16.msra.mxu0 %v5449
        %7641 = vmatprep.subr.bf16.mxu0 %v5454
        %7642 = vmatpush1.bf16.msra.mxu0 %v5453
        %7643 = vmatprep.subr.bf16.mxu0 %v5458
        %7644 = vmatpush1.bf16.msra.mxu0 %v5457
        %7645 = vmatprep.subr.bf16.mxu0 %v5462
        %7646 = vmatpush1.bf16.msra.mxu0 %v5461
        %7647 = vmatprep.subr.bf16.mxu0 %v5466
        %7648 = vmatpush1.bf16.msra.mxu0 %v5465
        %7649 = vmatprep.mubr.bf16.mxu0 %v1523
        %7650 = vmatmul.mubr.bf16.gmra.mrb[0].mxu0 %v1509
        %v7651 = vpop.f32.mrb[0].mxu0
        %v7652 = vadd.f32 %v7611, %v7651
        %v7653 = vpop.f32.mrb[0].mxu0
        %v7654 = vadd.f32 %v7613, %v7653
        %v7655 = vpop.f32.mrb[0].mxu0
        %v7656 = vpop.f32.mrb[0].mxu0
        %7657 = vdwg.mxu0
        %7658 = vmatprep.subr.bf16.mxu0 %v5470
        %7659 = vmatpush1.bf16.msra.mxu0 %v5469
        %7660 = vmatprep.subr.bf16.mxu0 %v5474
        %7661 = vmatpush1.bf16.msra.mxu0 %v5473
        %7662 = vmatprep.subr.bf16.mxu0 %v5478
        %7663 = vmatpush1.bf16.msra.mxu0 %v5477
        %7664 = vmatprep.subr.bf16.mxu0 %v5482
        %7665 = vmatpush1.bf16.msra.mxu0 %v5481
        %7666 = vmatprep.subr.bf16.mxu0 %v5486
        %7667 = vmatpush1.bf16.msra.mxu0 %v5485
        %7668 = vmatprep.subr.bf16.mxu0 %v5490
        %7669 = vmatpush1.bf16.msra.mxu0 %v5489
        %7670 = vmatprep.subr.bf16.mxu0 %v5494
        %7671 = vmatpush1.bf16.msra.mxu0 %v5493
        %7672 = vmatprep.subr.bf16.mxu0 %v5498
        %7673 = vmatpush1.bf16.msra.mxu0 %v5497
        %7674 = vmatprep.subr.bf16.mxu0 %v5502
        %7675 = vmatpush1.bf16.msra.mxu0 %v5501
        %7676 = vmatprep.subr.bf16.mxu0 %v5506
        %7677 = vmatpush1.bf16.msra.mxu0 %v5505
        %7678 = vmatprep.subr.bf16.mxu0 %v5510
        %7679 = vmatpush1.bf16.msra.mxu0 %v5509
        %7680 = vmatprep.subr.bf16.mxu0 %v5514
        %7681 = vmatpush1.bf16.msra.mxu0 %v5513
        %7682 = vmatprep.subr.bf16.mxu0 %v5518
        %7683 = vmatpush1.bf16.msra.mxu0 %v5517
        %7684 = vmatprep.subr.bf16.mxu0 %v5522
        %7685 = vmatpush1.bf16.msra.mxu0 %v5521
        %7686 = vmatprep.subr.bf16.mxu0 %v5526
        %7687 = vmatpush1.bf16.msra.mxu0 %v5525
        %7688 = vmatprep.subr.bf16.mxu0 %v5530
        %7689 = vmatpush1.bf16.msra.mxu0 %v5529
        %7690 = vmatprep.mubr.bf16.mxu0 %v1533
        %7691 = vmatmul.mubr.bf16.gmra.mrb[0].mxu0 %v1531
        %v7692 = vpop.f32.mrb[0].mxu0
        %v7693 = vadd.f32 %v7652, %v7692
        %v7694 = vpop.f32.mrb[0].mxu0
        %v7695 = vadd.f32 %v7654, %v7694
        %v7696 = vpop.f32.mrb[0].mxu0
        %v7697 = vpop.f32.mrb[0].mxu0
        %7698 = vdwg.mxu0
        %7699 = vmatprep.subr.bf16.mxu0 %v5534
        %7700 = vmatpush1.bf16.msra.mxu0 %v5533
        %7701 = vmatprep.subr.bf16.mxu0 %v5538
        %7702 = vmatpush1.bf16.msra.mxu0 %v5537
        %7703 = vmatprep.subr.bf16.mxu0 %v5542
        %7704 = vmatpush1.bf16.msra.mxu0 %v5541
        %7705 = vmatprep.subr.bf16.mxu0 %v5546
        %7706 = vmatpush1.bf16.msra.mxu0 %v5545
        %7707 = vmatprep.subr.bf16.mxu0 %v5550
        %7708 = vmatpush1.bf16.msra.mxu0 %v5549
        %7709 = vmatprep.subr.bf16.mxu0 %v5554
        %7710 = vmatpush1.bf16.msra.mxu0 %v5553
        %7711 = vmatprep.subr.bf16.mxu0 %v5558
        %7712 = vmatpush1.bf16.msra.mxu0 %v5557
        %7713 = vmatprep.subr.bf16.mxu0 %v5562
        %7714 = vmatpush1.bf16.msra.mxu0 %v5561
        %7715 = vmatprep.subr.bf16.mxu0 %v5566
        %7716 = vmatpush1.bf16.msra.mxu0 %v5565
        %7717 = vmatprep.subr.bf16.mxu0 %v5570
        %7718 = vmatpush1.bf16.msra.mxu0 %v5569
        %7719 = vmatprep.subr.bf16.mxu0 %v5574
        %7720 = vmatpush1.bf16.msra.mxu0 %v5573
        %7721 = vmatprep.subr.bf16.mxu0 %v5578
        %7722 = vmatpush1.bf16.msra.mxu0 %v5577
        %7723 = vmatprep.subr.bf16.mxu0 %v5582
        %7724 = vmatpush1.bf16.msra.mxu0 %v5581
        %7725 = vmatprep.subr.bf16.mxu0 %v5586
        %7726 = vmatpush1.bf16.msra.mxu0 %v5585
        %7727 = vmatprep.subr.bf16.mxu0 %v5590
        %7728 = vmatpush1.bf16.msra.mxu0 %v5589
        %7729 = vmatprep.subr.bf16.mxu0 %v5594
        %7730 = vmatpush1.bf16.msra.mxu0 %v5593
        %7731 = vmatprep.mubr.bf16.mxu0 %v1530
        %7732 = vmatmul.mubr.bf16.gmra.mrb[0].mxu0 %v1516
        %v7733 = vpop.f32.mrb[0].mxu0
        %v7734 = vadd.f32 %v7693, %v7733
        %v7735 = vpop.f32.mrb[0].mxu0
        %v7736 = vadd.f32 %v7695, %v7735
        %v7737 = vpop.f32.mrb[0].mxu0
        %v7738 = vpop.f32.mrb[0].mxu0
        %7739 = vdwg.mxu0
        %7740 = vmatprep.subr.bf16.mxu0 %v5598
        %7741 = vmatpush1.bf16.msra.mxu0 %v5597
        %7742 = vmatprep.subr.bf16.mxu0 %v5602
        %7743 = vmatpush1.bf16.msra.mxu0 %v5601
        %7744 = vmatprep.subr.bf16.mxu0 %v5606
        %7745 = vmatpush1.bf16.msra.mxu0 %v5605
        %7746 = vmatprep.subr.bf16.mxu0 %v5610
        %7747 = vmatpush1.bf16.msra.mxu0 %v5609
        %7748 = vmatprep.subr.bf16.mxu0 %v5614
        %7749 = vmatpush1.bf16.msra.mxu0 %v5613
        %7750 = vmatprep.subr.bf16.mxu0 %v5618
        %7751 = vmatpush1.bf16.msra.mxu0 %v5617
        %7752 = vmatprep.subr.bf16.mxu0 %v5622
        %7753 = vmatpush1.bf16.msra.mxu0 %v5621
        %7754 = vmatprep.subr.bf16.mxu0 %v5626
        %7755 = vmatpush1.bf16.msra.mxu0 %v5625
        %7756 = vmatprep.subr.bf16.mxu0 %v5630
        %7757 = vmatpush1.bf16.msra.mxu0 %v5629
        %7758 = vmatprep.subr.bf16.mxu0 %v5634
        %7759 = vmatpush1.bf16.msra.mxu0 %v5633
        %7760 = vmatprep.subr.bf16.mxu0 %v5638
        %7761 = vmatpush1.bf16.msra.mxu0 %v5637
        %7762 = vmatprep.subr.bf16.mxu0 %v5642
        %7763 = vmatpush1.bf16.msra.mxu0 %v5641
        %7764 = vmatprep.subr.bf16.mxu0 %v5646
        %7765 = vmatpush1.bf16.msra.mxu0 %v5645
        %7766 = vmatprep.subr.bf16.mxu0 %v5650
        %7767 = vmatpush1.bf16.msra.mxu0 %v5649
        %7768 = vmatprep.subr.bf16.mxu0 %v5654
        %7769 = vmatpush1.bf16.msra.mxu0 %v5653
        %7770 = vmatprep.subr.bf16.mxu0 %v5658
        %7771 = vmatpush1.bf16.msra.mxu0 %v5657
        %7772 = vmatprep.mubr.bf16.mxu0 %v1534
        %7773 = vmatmul.mubr.bf16.gmra.mrb[0].mxu0 %v1532
        %v7774 = vpop.f32.mrb[0].mxu0
        %v7775 = vadd.f32 %v7734, %v7774
        %v7776 = vpop.f32.mrb[0].mxu0
        %v7777 = vadd.f32 %v7736, %v7776
        %v7778 = vpop.f32.mrb[0].mxu0
        %v7779 = vpop.f32.mrb[0].mxu0
        %7780 = vdwg.mxu0
        %7781 = vmatprep.subr.bf16.mxu0 %v5662
        %7782 = vmatpush1.bf16.msra.mxu0 %v5661
        %7783 = vmatprep.subr.bf16.mxu0 %v5666
        %7784 = vmatpush1.bf16.msra.mxu0 %v5665
        %7785 = vmatprep.subr.bf16.mxu0 %v5670
        %7786 = vmatpush1.bf16.msra.mxu0 %v5669
        %7787 = vmatprep.subr.bf16.mxu0 %v5674
        %7788 = vmatpush1.bf16.msra.mxu0 %v5673
        %7789 = vmatprep.subr.bf16.mxu0 %v5678
        %7790 = vmatpush1.bf16.msra.mxu0 %v5677
        %7791 = vmatprep.subr.bf16.mxu0 %v5682
        %7792 = vmatpush1.bf16.msra.mxu0 %v5681
        %7793 = vmatprep.subr.bf16.mxu0 %v5686
        %7794 = vmatpush1.bf16.msra.mxu0 %v5685
        %7795 = vmatprep.subr.bf16.mxu0 %v5690
        %7796 = vmatpush1.bf16.msra.mxu0 %v5689
        %7797 = vmatprep.subr.bf16.mxu0 %v5694
        %7798 = vmatpush1.bf16.msra.mxu0 %v5693
        %7799 = vmatprep.subr.bf16.mxu0 %v5698
        %7800 = vmatpush1.bf16.msra.mxu0 %v5697
        %7801 = vmatprep.subr.bf16.mxu0 %v5702
        %7802 = vmatpush1.bf16.msra.mxu0 %v5701
        %7803 = vmatprep.subr.bf16.mxu0 %v5706
        %7804 = vmatpush1.bf16.msra.mxu0 %v5705
        %7805 = vmatprep.subr.bf16.mxu0 %v5710
        %7806 = vmatpush1.bf16.msra.mxu0 %v5709
        %7807 = vmatprep.subr.bf16.mxu0 %v5714
        %7808 = vmatpush1.bf16.msra.mxu0 %v5713
        %7809 = vmatprep.subr.bf16.mxu0 %v5718
        %7810 = vmatpush1.bf16.msra.mxu0 %v5717
        %7811 = vmatprep.subr.bf16.mxu0 %v5722
        %7812 = vmatpush1.bf16.msra.mxu0 %v5721
        %7813 = vmatprep.mubr.bf16.mxu0 %v1572
        %7814 = vmatmul.mubr.bf16.gmra.mrb[0].mxu0 %v1558
        %v7815 = vpop.f32.mrb[0].mxu0
        %v7816 = vadd.f32 %v7775, %v7815
        %v7817 = vpop.f32.mrb[0].mxu0
        %v7818 = vadd.f32 %v7777, %v7817
        %v7819 = vpop.f32.mrb[0].mxu0
        %v7820 = vpop.f32.mrb[0].mxu0
        %7821 = vdwg.mxu0
        %7822 = vmatprep.subr.bf16.mxu0 %v5726
        %7823 = vmatpush1.bf16.msra.mxu0 %v5725
        %7824 = vmatprep.subr.bf16.mxu0 %v5730
        %7825 = vmatpush1.bf16.msra.mxu0 %v5729
        %7826 = vmatprep.subr.bf16.mxu0 %v5734
        %7827 = vmatpush1.bf16.msra.mxu0 %v5733
        %7828 = vmatprep.subr.bf16.mxu0 %v5738
        %7829 = vmatpush1.bf16.msra.mxu0 %v5737
        %7830 = vmatprep.subr.bf16.mxu0 %v5742
        %7831 = vmatpush1.bf16.msra.mxu0 %v5741
        %7832 = vmatprep.subr.bf16.mxu0 %v5746
        %7833 = vmatpush1.bf16.msra.mxu0 %v5745
        %7834 = vmatprep.subr.bf16.mxu0 %v5750
        %7835 = vmatpush1.bf16.msra.mxu0 %v5749
        %7836 = vmatprep.subr.bf16.mxu0 %v5754
        %7837 = vmatpush1.bf16.msra.mxu0 %v5753
        %7838 = vmatprep.subr.bf16.mxu0 %v5758
        %7839 = vmatpush1.bf16.msra.mxu0 %v5757
        %7840 = vmatprep.subr.bf16.mxu0 %v5762
        %7841 = vmatpush1.bf16.msra.mxu0 %v5761
        %7842 = vmatprep.subr.bf16.mxu0 %v5766
        %7843 = vmatpush1.bf16.msra.mxu0 %v5765
        %7844 = vmatprep.subr.bf16.mxu0 %v5770
        %7845 = vmatpush1.bf16.msra.mxu0 %v5769
        %7846 = vmatprep.subr.bf16.mxu0 %v5774
        %7847 = vmatpush1.bf16.msra.mxu0 %v5773
        %7848 = vmatprep.subr.bf16.mxu0 %v5778
        %7849 = vmatpush1.bf16.msra.mxu0 %v5777
        %7850 = vmatprep.subr.bf16.mxu0 %v5782
        %7851 = vmatpush1.bf16.msra.mxu0 %v5781
        %7852 = vmatprep.subr.bf16.mxu0 %v5786
        %7853 = vmatpush1.bf16.msra.mxu0 %v5785
        %7854 = vmatprep.mubr.bf16.mxu0 %v1582
        %7855 = vmatmul.mubr.bf16.gmra.mrb[0].mxu0 %v1580
        %v7856 = vpop.f32.mrb[0].mxu0
        %v7857 = vadd.f32 %v7816, %v7856
        %v7858 = vpop.f32.mrb[0].mxu0
        %v7859 = vadd.f32 %v7818, %v7858
        %v7860 = vpop.f32.mrb[0].mxu0
        %v7861 = vpop.f32.mrb[0].mxu0
        %7862 = vdwg.mxu0
        %7863 = vmatprep.subr.bf16.mxu0 %v5790
        %7864 = vmatpush1.bf16.msra.mxu0 %v5789
        %7865 = vmatprep.subr.bf16.mxu0 %v5794
        %7866 = vmatpush1.bf16.msra.mxu0 %v5793
        %7867 = vmatprep.subr.bf16.mxu0 %v5798
        %7868 = vmatpush1.bf16.msra.mxu0 %v5797
        %7869 = vmatprep.subr.bf16.mxu0 %v5802
        %7870 = vmatpush1.bf16.msra.mxu0 %v5801
        %7871 = vmatprep.subr.bf16.mxu0 %v5806
        %7872 = vmatpush1.bf16.msra.mxu0 %v5805
        %7873 = vmatprep.subr.bf16.mxu0 %v5810
        %7874 = vmatpush1.bf16.msra.mxu0 %v5809
        %7875 = vmatprep.subr.bf16.mxu0 %v5814
        %7876 = vmatpush1.bf16.msra.mxu0 %v5813
        %7877 = vmatprep.subr.bf16.mxu0 %v5818
        %7878 = vmatpush1.bf16.msra.mxu0 %v5817
        %7879 = vmatprep.subr.bf16.mxu0 %v5822
        %7880 = vmatpush1.bf16.msra.mxu0 %v5821
        %7881 = vmatprep.subr.bf16.mxu0 %v5826
        %7882 = vmatpush1.bf16.msra.mxu0 %v5825
        %7883 = vmatprep.subr.bf16.mxu0 %v5830
        %7884 = vmatpush1.bf16.msra.mxu0 %v5829
        %7885 = vmatprep.subr.bf16.mxu0 %v5834
        %7886 = vmatpush1.bf16.msra.mxu0 %v5833
        %7887 = vmatprep.subr.bf16.mxu0 %v5838
        %7888 = vmatpush1.bf16.msra.mxu0 %v5837
        %7889 = vmatprep.subr.bf16.mxu0 %v5842
        %7890 = vmatpush1.bf16.msra.mxu0 %v5841
        %7891 = vmatprep.subr.bf16.mxu0 %v5846
        %7892 = vmatpush1.bf16.msra.mxu0 %v5845
        %7893 = vmatprep.subr.bf16.mxu0 %v5850
        %7894 = vmatpush1.bf16.msra.mxu0 %v5849
        %7895 = vmatprep.mubr.bf16.mxu0 %v1579
        %7896 = vmatmul.mubr.bf16.gmra.mrb[0].mxu0 %v1565
        %v7897 = vpop.f32.mrb[0].mxu0
        %v7898 = vadd.f32 %v7857, %v7897
        %v7899 = vpop.f32.mrb[0].mxu0
        %v7900 = vadd.f32 %v7859, %v7899
        %v7901 = vpop.f32.mrb[0].mxu0
        %v7902 = vpop.f32.mrb[0].mxu0
        %7903 = vdwg.mxu0
        %7904 = vmatprep.subr.bf16.mxu0 %v5854
        %7905 = vmatpush1.bf16.msra.mxu0 %v5853
        %7906 = vmatprep.subr.bf16.mxu0 %v5858
        %7907 = vmatpush1.bf16.msra.mxu0 %v5857
        %7908 = vmatprep.subr.bf16.mxu0 %v5862
        %7909 = vmatpush1.bf16.msra.mxu0 %v5861
        %7910 = vmatprep.subr.bf16.mxu0 %v5866
        %7911 = vmatpush1.bf16.msra.mxu0 %v5865
        %7912 = vmatprep.subr.bf16.mxu0 %v5870
        %7913 = vmatpush1.bf16.msra.mxu0 %v5869
        %7914 = vmatprep.subr.bf16.mxu0 %v5874
        %7915 = vmatpush1.bf16.msra.mxu0 %v5873
        %7916 = vmatprep.subr.bf16.mxu0 %v5878
        %7917 = vmatpush1.bf16.msra.mxu0 %v5877
        %7918 = vmatprep.subr.bf16.mxu0 %v5882
        %7919 = vmatpush1.bf16.msra.mxu0 %v5881
        %7920 = vmatprep.subr.bf16.mxu0 %v5886
        %7921 = vmatpush1.bf16.msra.mxu0 %v5885
        %7922 = vmatprep.subr.bf16.mxu0 %v5890
        %7923 = vmatpush1.bf16.msra.mxu0 %v5889
        %7924 = vmatprep.subr.bf16.mxu0 %v5894
        %7925 = vmatpush1.bf16.msra.mxu0 %v5893
        %7926 = vmatprep.subr.bf16.mxu0 %v5898
        %7927 = vmatpush1.bf16.msra.mxu0 %v5897
        %7928 = vmatprep.subr.bf16.mxu0 %v5902
        %7929 = vmatpush1.bf16.msra.mxu0 %v5901
        %7930 = vmatprep.subr.bf16.mxu0 %v5906
        %7931 = vmatpush1.bf16.msra.mxu0 %v5905
        %7932 = vmatprep.subr.bf16.mxu0 %v5910
        %7933 = vmatpush1.bf16.msra.mxu0 %v5909
        %7934 = vmatprep.subr.bf16.mxu0 %v5914
        %7935 = vmatpush1.bf16.msra.mxu0 %v5913
        %7936 = vmatprep.mubr.bf16.mxu0 %v1583
        %7937 = vmatmul.mubr.bf16.gmra.mrb[0].mxu0 %v1581
        %v7938 = vpop.f32.mrb[0].mxu0
        %v7939 = vadd.f32 %v7898, %v7938
        %v7940 = vpop.f32.mrb[0].mxu0
        %v7941 = vadd.f32 %v7900, %v7940
        %v7942 = vpop.f32.mrb[0].mxu0
        %v7943 = vpop.f32.mrb[0].mxu0
        %7944 = vdwg.mxu0
        %7945 = vmatprep.subr.bf16.mxu0 %v5918
        %7946 = vmatpush1.bf16.msra.mxu0 %v5917
        %7947 = vmatprep.subr.bf16.mxu0 %v5922
        %7948 = vmatpush1.bf16.msra.mxu0 %v5921
        %7949 = vmatprep.subr.bf16.mxu0 %v5926
        %7950 = vmatpush1.bf16.msra.mxu0 %v5925
        %7951 = vmatprep.subr.bf16.mxu0 %v5930
        %7952 = vmatpush1.bf16.msra.mxu0 %v5929
        %7953 = vmatprep.subr.bf16.mxu0 %v5934
        %7954 = vmatpush1.bf16.msra.mxu0 %v5933
        %7955 = vmatprep.subr.bf16.mxu0 %v5938
        %7956 = vmatpush1.bf16.msra.mxu0 %v5937
        %7957 = vmatprep.subr.bf16.mxu0 %v5942
        %7958 = vmatpush1.bf16.msra.mxu0 %v5941
        %7959 = vmatprep.subr.bf16.mxu0 %v5946
        %7960 = vmatpush1.bf16.msra.mxu0 %v5945
        %7961 = vmatprep.subr.bf16.mxu0 %v5950
        %7962 = vmatpush1.bf16.msra.mxu0 %v5949
        %7963 = vmatprep.subr.bf16.mxu0 %v5954
        %7964 = vmatpush1.bf16.msra.mxu0 %v5953
        %7965 = vmatprep.subr.bf16.mxu0 %v5958
        %7966 = vmatpush1.bf16.msra.mxu0 %v5957
        %7967 = vmatprep.subr.bf16.mxu0 %v5962
        %7968 = vmatpush1.bf16.msra.mxu0 %v5961
        %7969 = vmatprep.subr.bf16.mxu0 %v5966
        %7970 = vmatpush1.bf16.msra.mxu0 %v5965
        %7971 = vmatprep.subr.bf16.mxu0 %v5970
        %7972 = vmatpush1.bf16.msra.mxu0 %v5969
        %7973 = vmatprep.subr.bf16.mxu0 %v5974
        %7974 = vmatpush1.bf16.msra.mxu0 %v5973
        %7975 = vmatprep.subr.bf16.mxu0 %v5978
        %7976 = vmatpush1.bf16.msra.mxu0 %v5977
        %7977 = vmatprep.mubr.bf16.mxu0 %v1621
        %7978 = vmatmul.mubr.bf16.gmra.mrb[0].mxu0 %v1607
        %v7979 = vpop.f32.mrb[0].mxu0
        %v7980 = vadd.f32 %v7939, %v7979
        %v7981 = vpop.f32.mrb[0].mxu0
        %v7982 = vadd.f32 %v7941, %v7981
        %v7983 = vpop.f32.mrb[0].mxu0
        %v7984 = vpop.f32.mrb[0].mxu0
        %7985 = vdwg.mxu0
        %7986 = vmatprep.subr.bf16.mxu0 %v5982
        %7987 = vmatpush1.bf16.msra.mxu0 %v5981
        %7988 = vmatprep.subr.bf16.mxu0 %v5986
        %7989 = vmatpush1.bf16.msra.mxu0 %v5985
        %7990 = vmatprep.subr.bf16.mxu0 %v5990
        %7991 = vmatpush1.bf16.msra.mxu0 %v5989
        %7992 = vmatprep.subr.bf16.mxu0 %v5994
        %7993 = vmatpush1.bf16.msra.mxu0 %v5993
        %7994 = vmatprep.subr.bf16.mxu0 %v5998
        %7995 = vmatpush1.bf16.msra.mxu0 %v5997
        %7996 = vmatprep.subr.bf16.mxu0 %v6002
        %7997 = vmatpush1.bf16.msra.mxu0 %v6001
        %7998 = vmatprep.subr.bf16.mxu0 %v6006
        %7999 = vmatpush1.bf16.msra.mxu0 %v6005
        %8000 = vmatprep.subr.bf16.mxu0 %v6010
        %8001 = vmatpush1.bf16.msra.mxu0 %v6009
        %8002 = vmatprep.subr.bf16.mxu0 %v6014
        %8003 = vmatpush1.bf16.msra.mxu0 %v6013
        %8004 = vmatprep.subr.bf16.mxu0 %v6018
        %8005 = vmatpush1.bf16.msra.mxu0 %v6017
        %8006 = vmatprep.subr.bf16.mxu0 %v6022
        %8007 = vmatpush1.bf16.msra.mxu0 %v6021
        %8008 = vmatprep.subr.bf16.mxu0 %v6026
        %8009 = vmatpush1.bf16.msra.mxu0 %v6025
        %8010 = vmatprep.subr.bf16.mxu0 %v6030
        %8011 = vmatpush1.bf16.msra.mxu0 %v6029
        %8012 = vmatprep.subr.bf16.mxu0 %v6034
        %8013 = vmatpush1.bf16.msra.mxu0 %v6033
        %8014 = vmatprep.subr.bf16.mxu0 %v6038
        %8015 = vmatpush1.bf16.msra.mxu0 %v6037
        %8016 = vmatprep.subr.bf16.mxu0 %v6042
        %8017 = vmatpush1.bf16.msra.mxu0 %v6041
        %8018 = vmatprep.mubr.bf16.mxu0 %v1631
        %8019 = vmatmul.mubr.bf16.gmra.mrb[0].mxu0 %v1629
        %v8020 = vpop.f32.mrb[0].mxu0
        %v8021 = vadd.f32 %v7980, %v8020
        %v8022 = vpop.f32.mrb[0].mxu0
        %v8023 = vadd.f32 %v7982, %v8022
        %v8024 = vpop.f32.mrb[0].mxu0
        %v8025 = vpop.f32.mrb[0].mxu0
        %8026 = vdwg.mxu0
        %8027 = vmatprep.subr.bf16.mxu0 %v6046
        %8028 = vmatpush1.bf16.msra.mxu0 %v6045
        %8029 = vmatprep.subr.bf16.mxu0 %v6050
        %8030 = vmatpush1.bf16.msra.mxu0 %v6049
        %8031 = vmatprep.subr.bf16.mxu0 %v6054
        %8032 = vmatpush1.bf16.msra.mxu0 %v6053
        %8033 = vmatprep.subr.bf16.mxu0 %v6058
        %8034 = vmatpush1.bf16.msra.mxu0 %v6057
        %8035 = vmatprep.subr.bf16.mxu0 %v6062
        %8036 = vmatpush1.bf16.msra.mxu0 %v6061
        %8037 = vmatprep.subr.bf16.mxu0 %v6066
        %8038 = vmatpush1.bf16.msra.mxu0 %v6065
        %8039 = vmatprep.subr.bf16.mxu0 %v6070
        %8040 = vmatpush1.bf16.msra.mxu0 %v6069
        %8041 = vmatprep.subr.bf16.mxu0 %v6074
        %8042 = vmatpush1.bf16.msra.mxu0 %v6073
        %8043 = vmatprep.subr.bf16.mxu0 %v6078
        %8044 = vmatpush1.bf16.msra.mxu0 %v6077
        %8045 = vmatprep.subr.bf16.mxu0 %v6082
        %8046 = vmatpush1.bf16.msra.mxu0 %v6081
        %8047 = vmatprep.subr.bf16.mxu0 %v6086
        %8048 = vmatpush1.bf16.msra.mxu0 %v6085
        %8049 = vmatprep.subr.bf16.mxu0 %v6090
        %8050 = vmatpush1.bf16.msra.mxu0 %v6089
        %8051 = vmatprep.subr.bf16.mxu0 %v6094
        %8052 = vmatpush1.bf16.msra.mxu0 %v6093
        %8053 = vmatprep.subr.bf16.mxu0 %v6098
        %8054 = vmatpush1.bf16.msra.mxu0 %v6097
        %8055 = vmatprep.subr.bf16.mxu0 %v6102
        %8056 = vmatpush1.bf16.msra.mxu0 %v6101
        %8057 = vmatprep.subr.bf16.mxu0 %v6106
        %8058 = vmatpush1.bf16.msra.mxu0 %v6105
        %8059 = vmatprep.mubr.bf16.mxu0 %v1628
        %8060 = vmatmul.mubr.bf16.gmra.mrb[0].mxu0 %v1614
        %v8061 = vpop.f32.mrb[0].mxu0
        %v8062 = vadd.f32 %v8021, %v8061
        %v8063 = vpop.f32.mrb[0].mxu0
        %v8064 = vadd.f32 %v8023, %v8063
        %v8065 = vpop.f32.mrb[0].mxu0
        %v8066 = vpop.f32.mrb[0].mxu0
        %8067 = vdwg.mxu0
        %8068 = vmatprep.subr.bf16.mxu0 %v6110
        %8069 = vmatpush1.bf16.msra.mxu0 %v6109
        %8070 = vmatprep.subr.bf16.mxu0 %v6114
        %8071 = vmatpush1.bf16.msra.mxu0 %v6113
        %8072 = vmatprep.subr.bf16.mxu0 %v6118
        %8073 = vmatpush1.bf16.msra.mxu0 %v6117
        %8074 = vmatprep.subr.bf16.mxu0 %v6122
        %8075 = vmatpush1.bf16.msra.mxu0 %v6121
        %8076 = vmatprep.subr.bf16.mxu0 %v6126
        %8077 = vmatpush1.bf16.msra.mxu0 %v6125
        %8078 = vmatprep.subr.bf16.mxu0 %v6130
        %8079 = vmatpush1.bf16.msra.mxu0 %v6129
        %8080 = vmatprep.subr.bf16.mxu0 %v6134
        %8081 = vmatpush1.bf16.msra.mxu0 %v6133
        %8082 = vmatprep.subr.bf16.mxu0 %v6138
        %8083 = vmatpush1.bf16.msra.mxu0 %v6137
        %8084 = vmatprep.subr.bf16.mxu0 %v6142
        %8085 = vmatpush1.bf16.msra.mxu0 %v6141
        %8086 = vmatprep.subr.bf16.mxu0 %v6146
        %8087 = vmatpush1.bf16.msra.mxu0 %v6145
        %8088 = vmatprep.subr.bf16.mxu0 %v6150
        %8089 = vmatpush1.bf16.msra.mxu0 %v6149
        %8090 = vmatprep.subr.bf16.mxu0 %v6154
        %8091 = vmatpush1.bf16.msra.mxu0 %v6153
        %8092 = vmatprep.subr.bf16.mxu0 %v6158
        %8093 = vmatpush1.bf16.msra.mxu0 %v6157
        %8094 = vmatprep.subr.bf16.mxu0 %v6162
        %8095 = vmatpush1.bf16.msra.mxu0 %v6161
        %8096 = vmatprep.subr.bf16.mxu0 %v6166
        %8097 = vmatpush1.bf16.msra.mxu0 %v6165
        %8098 = vmatprep.subr.bf16.mxu0 %v6170
        %8099 = vmatpush1.bf16.msra.mxu0 %v6169
        %8100 = vmatprep.mubr.bf16.mxu0 %v1632
        %8101 = vmatmul.mubr.bf16.gmra.mrb[0].mxu0 %v1630
        %v8102 = vpop.f32.mrb[0].mxu0
        %v8103 = vadd.f32 %v8062, %v8102
        %v8104 = vpop.f32.mrb[0].mxu0
        %v8105 = vadd.f32 %v8064, %v8104
        %v8106 = vpop.f32.mrb[0].mxu0
        %v8107 = vpop.f32.mrb[0].mxu0
        %8108 = vdwg.mxu0
        %8109 = vmatprep.subr.bf16.mxu0 %v6174
        %8110 = vmatpush1.bf16.msra.mxu0 %v6173
        %8111 = vmatprep.subr.bf16.mxu0 %v6178
        %8112 = vmatpush1.bf16.msra.mxu0 %v6177
        %8113 = vmatprep.subr.bf16.mxu0 %v6182
        %8114 = vmatpush1.bf16.msra.mxu0 %v6181
        %8115 = vmatprep.subr.bf16.mxu0 %v6186
        %8116 = vmatpush1.bf16.msra.mxu0 %v6185
        %8117 = vmatprep.subr.bf16.mxu0 %v6190
        %8118 = vmatpush1.bf16.msra.mxu0 %v6189
        %8119 = vmatprep.subr.bf16.mxu0 %v6194
        %8120 = vmatpush1.bf16.msra.mxu0 %v6193
        %8121 = vmatprep.subr.bf16.mxu0 %v6198
        %8122 = vmatpush1.bf16.msra.mxu0 %v6197
        %8123 = vmatprep.subr.bf16.mxu0 %v6202
        %8124 = vmatpush1.bf16.msra.mxu0 %v6201
        %8125 = vmatprep.subr.bf16.mxu0 %v6206
        %8126 = vmatpush1.bf16.msra.mxu0 %v6205
        %8127 = vmatprep.subr.bf16.mxu0 %v6210
        %8128 = vmatpush1.bf16.msra.mxu0 %v6209
        %8129 = vmatprep.subr.bf16.mxu0 %v6214
        %8130 = vmatpush1.bf16.msra.mxu0 %v6213
        %8131 = vmatprep.subr.bf16.mxu0 %v6218
        %8132 = vmatpush1.bf16.msra.mxu0 %v6217
        %8133 = vmatprep.subr.bf16.mxu0 %v6222
        %8134 = vmatpush1.bf16.msra.mxu0 %v6221
        %8135 = vmatprep.subr.bf16.mxu0 %v6226
        %8136 = vmatpush1.bf16.msra.mxu0 %v6225
        %8137 = vmatprep.subr.bf16.mxu0 %v6230
        %8138 = vmatpush1.bf16.msra.mxu0 %v6229
        %8139 = vmatprep.subr.bf16.mxu0 %v6234
        %8140 = vmatpush1.bf16.msra.mxu0 %v6233
        %8141 = vmatprep.mubr.bf16.mxu0 %v1654
        %8142 = vmatmul.mubr.bf16.gmra.mrb[0].mxu0 %v1647
        %v8143 = vpop.f32.mrb[0].mxu0
        %v8144 = vadd.f32 %v8103, %v8143
        %v8145 = vpop.f32.mrb[0].mxu0
        %v8146 = vadd.f32 %v8105, %v8145
        %v8147 = vpop.f32.mrb[0].mxu0
        %v8148 = vpop.f32.mrb[0].mxu0
        %8149 = vdwg.mxu0
        %8150 = vmatprep.subr.bf16.mxu0 %v6238
        %8151 = vmatpush1.bf16.msra.mxu0 %v6237
        %8152 = vmatprep.subr.bf16.mxu0 %v6242
        %8153 = vmatpush1.bf16.msra.mxu0 %v6241
        %8154 = vmatprep.subr.bf16.mxu0 %v6246
        %8155 = vmatpush1.bf16.msra.mxu0 %v6245
        %8156 = vmatprep.subr.bf16.mxu0 %v6250
        %8157 = vmatpush1.bf16.msra.mxu0 %v6249
        %8158 = vmatprep.subr.bf16.mxu0 %v6254
        %8159 = vmatpush1.bf16.msra.mxu0 %v6253
        %8160 = vmatprep.subr.bf16.mxu0 %v6258
        %8161 = vmatpush1.bf16.msra.mxu0 %v6257
        %8162 = vmatprep.subr.bf16.mxu0 %v6262
        %8163 = vmatpush1.bf16.msra.mxu0 %v6261
        %8164 = vmatprep.subr.bf16.mxu0 %v6266
        %8165 = vmatpush1.bf16.msra.mxu0 %v6265
        %8166 = vmatprep.subr.bf16.mxu0 %v6270
        %8167 = vmatpush1.bf16.msra.mxu0 %v6269
        %8168 = vmatprep.subr.bf16.mxu0 %v6274
        %8169 = vmatpush1.bf16.msra.mxu0 %v6273
        %8170 = vmatprep.subr.bf16.mxu0 %v6278
        %8171 = vmatpush1.bf16.msra.mxu0 %v6277
        %8172 = vmatprep.subr.bf16.mxu0 %v6282
        %8173 = vmatpush1.bf16.msra.mxu0 %v6281
        %8174 = vmatprep.subr.bf16.mxu0 %v6286
        %8175 = vmatpush1.bf16.msra.mxu0 %v6285
        %8176 = vmatprep.subr.bf16.mxu0 %v6290
        %8177 = vmatpush1.bf16.msra.mxu0 %v6289
        %8178 = vmatprep.subr.bf16.mxu0 %v6294
        %8179 = vmatpush1.bf16.msra.mxu0 %v6293
        %8180 = vmatprep.subr.bf16.mxu0 %v6298
        %8181 = vmatpush1.bf16.msra.mxu0 %v6297
        %8182 = vmatprep.mubr.bf16.mxu0 %v1656
        %8183 = vmatmul.mubr.bf16.gmra.mrb[0].mxu0 %v1655
        %v8184 = vpop.f32.mrb[0].mxu0
        %v8185 = vadd.f32 %v8144, %v8184
        %v8186 = vpop.f32.mrb[0].mxu0
        %v8187 = vadd.f32 %v8146, %v8186
        %v8188 = vpop.f32.mrb[0].mxu0
        %v8189 = vpop.f32.mrb[0].mxu0
        %8190 = vdwg.mxu0
        %8191 = vmatprep.subr.bf16.mxu0 %v5152
        %8192 = vmatpush1.bf16.msra.mxu0 %v5151
        %8193 = vmatprep.subr.bf16.mxu0 %v5156
        %8194 = vmatpush1.bf16.msra.mxu0 %v5155
        %8195 = vmatprep.subr.bf16.mxu0 %v5160
        %8196 = vmatpush1.bf16.msra.mxu0 %v5159
        %8197 = vmatprep.subr.bf16.mxu0 %v5164
        %8198 = vmatpush1.bf16.msra.mxu0 %v5163
        %8199 = vmatprep.subr.bf16.mxu0 %v5168
        %8200 = vmatpush1.bf16.msra.mxu0 %v5167
        %8201 = vmatprep.subr.bf16.mxu0 %v5172
        %8202 = vmatpush1.bf16.msra.mxu0 %v5171
        %8203 = vmatprep.subr.bf16.mxu0 %v5176
        %8204 = vmatpush1.bf16.msra.mxu0 %v5175
        %8205 = vmatprep.subr.bf16.mxu0 %v5180
        %8206 = vmatpush1.bf16.msra.mxu0 %v5179
        %8207 = vmatprep.subr.bf16.mxu0 %v5184
        %8208 = vmatpush1.bf16.msra.mxu0 %v5183
        %8209 = vmatprep.subr.bf16.mxu0 %v5188
        %8210 = vmatpush1.bf16.msra.mxu0 %v5187
        %8211 = vmatprep.subr.bf16.mxu0 %v5192
        %8212 = vmatpush1.bf16.msra.mxu0 %v5191
        %8213 = vmatprep.subr.bf16.mxu0 %v5196
        %8214 = vmatpush1.bf16.msra.mxu0 %v5195
        %8215 = vmatprep.subr.bf16.mxu0 %v5200
        %8216 = vmatpush1.bf16.msra.mxu0 %v5199
        %8217 = vmatprep.subr.bf16.mxu0 %v5204
        %8218 = vmatpush1.bf16.msra.mxu0 %v5203
        %8219 = vmatprep.subr.bf16.mxu0 %v5208
        %8220 = vmatpush1.bf16.msra.mxu0 %v5207
        %8221 = vmatprep.subr.bf16.mxu0 %v5212
        %8222 = vmatpush1.bf16.msra.mxu0 %v5211
        %8223 = vmatprep.mubr.bf16.mxu0 %v1474
        %8224 = vmatmul.mubr.bf16.gmra.mrb[0].mxu0 %v1460
        %v8225 = vpop.f32.mrb[0].mxu0
        %v8226 = vadd.f32 0.0, %v8225
        %v8227 = vpop.f32.mrb[0].mxu0
        %v8228 = vadd.f32 0.0, %v8227
        %v8229 = vpop.f32.mrb[0].mxu0
        %v8230 = vpop.f32.mrb[0].mxu0
        %8231 = vdwg.mxu0
        %8232 = vmatprep.subr.bf16.mxu0 %v5216
        %8233 = vmatpush1.bf16.msra.mxu0 %v5215
        %8234 = vmatprep.subr.bf16.mxu0 %v5220
        %8235 = vmatpush1.bf16.msra.mxu0 %v5219
        %8236 = vmatprep.subr.bf16.mxu0 %v5224
        %8237 = vmatpush1.bf16.msra.mxu0 %v5223
        %8238 = vmatprep.subr.bf16.mxu0 %v5228
        %8239 = vmatpush1.bf16.msra.mxu0 %v5227
        %8240 = vmatprep.subr.bf16.mxu0 %v5232
        %8241 = vmatpush1.bf16.msra.mxu0 %v5231
        %8242 = vmatprep.subr.bf16.mxu0 %v5236
        %8243 = vmatpush1.bf16.msra.mxu0 %v5235
        %8244 = vmatprep.subr.bf16.mxu0 %v5240
        %8245 = vmatpush1.bf16.msra.mxu0 %v5239
        %8246 = vmatprep.subr.bf16.mxu0 %v5244
        %8247 = vmatpush1.bf16.msra.mxu0 %v5243
        %8248 = vmatprep.subr.bf16.mxu0 %v5248
        %8249 = vmatpush1.bf16.msra.mxu0 %v5247
        %8250 = vmatprep.subr.bf16.mxu0 %v5252
        %8251 = vmatpush1.bf16.msra.mxu0 %v5251
        %8252 = vmatprep.subr.bf16.mxu0 %v5256
        %8253 = vmatpush1.bf16.msra.mxu0 %v5255
        %8254 = vmatprep.subr.bf16.mxu0 %v5260
        %8255 = vmatpush1.bf16.msra.mxu0 %v5259
        %8256 = vmatprep.subr.bf16.mxu0 %v5264
        %8257 = vmatpush1.bf16.msra.mxu0 %v5263
        %8258 = vmatprep.subr.bf16.mxu0 %v5268
        %8259 = vmatpush1.bf16.msra.mxu0 %v5267
        %8260 = vmatprep.subr.bf16.mxu0 %v5272
        %8261 = vmatpush1.bf16.msra.mxu0 %v5271
        %8262 = vmatprep.subr.bf16.mxu0 %v5276
        %8263 = vmatpush1.bf16.msra.mxu0 %v5275
        %8264 = vmatprep.mubr.bf16.mxu0 %v1484
        %8265 = vmatmul.mubr.bf16.gmra.mrb[0].mxu0 %v1482
        %v8266 = vpop.f32.mrb[0].mxu0
        %v8267 = vadd.f32 %v8226, %v8266
        %v8268 = vpop.f32.mrb[0].mxu0
        %v8269 = vadd.f32 %v8228, %v8268
        %v8270 = vpop.f32.mrb[0].mxu0
        %v8271 = vpop.f32.mrb[0].mxu0
        %8272 = vdwg.mxu0
        %8273 = vmatprep.subr.bf16.mxu0 %v5280
        %8274 = vmatpush1.bf16.msra.mxu0 %v5279
        %8275 = vmatprep.subr.bf16.mxu0 %v5284
        %8276 = vmatpush1.bf16.msra.mxu0 %v5283
        %8277 = vmatprep.subr.bf16.mxu0 %v5288
        %8278 = vmatpush1.bf16.msra.mxu0 %v5287
        %8279 = vmatprep.subr.bf16.mxu0 %v5292
        %8280 = vmatpush1.bf16.msra.mxu0 %v5291
        %8281 = vmatprep.subr.bf16.mxu0 %v5296
        %8282 = vmatpush1.bf16.msra.mxu0 %v5295
        %8283 = vmatprep.subr.bf16.mxu0 %v5300
        %8284 = vmatpush1.bf16.msra.mxu0 %v5299
        %8285 = vmatprep.subr.bf16.mxu0 %v5304
        %8286 = vmatpush1.bf16.msra.mxu0 %v5303
        %8287 = vmatprep.subr.bf16.mxu0 %v5308
        %8288 = vmatpush1.bf16.msra.mxu0 %v5307
        %8289 = vmatprep.subr.bf16.mxu0 %v5312
        %8290 = vmatpush1.bf16.msra.mxu0 %v5311
        %8291 = vmatprep.subr.bf16.mxu0 %v5316
        %8292 = vmatpush1.bf16.msra.mxu0 %v5315
        %8293 = vmatprep.subr.bf16.mxu0 %v5320
        %8294 = vmatpush1.bf16.msra.mxu0 %v5319
        %8295 = vmatprep.subr.bf16.mxu0 %v5324
        %8296 = vmatpush1.bf16.msra.mxu0 %v5323
        %8297 = vmatprep.subr.bf16.mxu0 %v5328
        %8298 = vmatpush1.bf16.msra.mxu0 %v5327
        %8299 = vmatprep.subr.bf16.mxu0 %v5332
        %8300 = vmatpush1.bf16.msra.mxu0 %v5331
        %8301 = vmatprep.subr.bf16.mxu0 %v5336
        %8302 = vmatpush1.bf16.msra.mxu0 %v5335
        %8303 = vmatprep.subr.bf16.mxu0 %v5340
        %8304 = vmatpush1.bf16.msra.mxu0 %v5339
        %8305 = vmatprep.mubr.bf16.mxu0 %v1481
        %8306 = vmatmul.mubr.bf16.gmra.mrb[0].mxu0 %v1467
        %v8307 = vpop.f32.mrb[0].mxu0
        %v8308 = vadd.f32 %v8267, %v8307
        %v8309 = vpop.f32.mrb[0].mxu0
        %v8310 = vadd.f32 %v8269, %v8309
        %v8311 = vpop.f32.mrb[0].mxu0
        %v8312 = vpop.f32.mrb[0].mxu0
        %8313 = vdwg.mxu0
        %8314 = vmatprep.subr.bf16.mxu0 %v5344
        %8315 = vmatpush1.bf16.msra.mxu0 %v5343
        %8316 = vmatprep.subr.bf16.mxu0 %v5348
        %8317 = vmatpush1.bf16.msra.mxu0 %v5347
        %8318 = vmatprep.subr.bf16.mxu0 %v5352
        %8319 = vmatpush1.bf16.msra.mxu0 %v5351
        %8320 = vmatprep.subr.bf16.mxu0 %v5356
        %8321 = vmatpush1.bf16.msra.mxu0 %v5355
        %8322 = vmatprep.subr.bf16.mxu0 %v5360
        %8323 = vmatpush1.bf16.msra.mxu0 %v5359
        %8324 = vmatprep.subr.bf16.mxu0 %v5364
        %8325 = vmatpush1.bf16.msra.mxu0 %v5363
        %8326 = vmatprep.subr.bf16.mxu0 %v5368
        %8327 = vmatpush1.bf16.msra.mxu0 %v5367
        %8328 = vmatprep.subr.bf16.mxu0 %v5372
        %8329 = vmatpush1.bf16.msra.mxu0 %v5371
        %8330 = vmatprep.subr.bf16.mxu0 %v5376
        %8331 = vmatpush1.bf16.msra.mxu0 %v5375
        %8332 = vmatprep.subr.bf16.mxu0 %v5380
        %8333 = vmatpush1.bf16.msra.mxu0 %v5379
        %8334 = vmatprep.subr.bf16.mxu0 %v5384
        %8335 = vmatpush1.bf16.msra.mxu0 %v5383
        %8336 = vmatprep.subr.bf16.mxu0 %v5388
        %8337 = vmatpush1.bf16.msra.mxu0 %v5387
        %8338 = vmatprep.subr.bf16.mxu0 %v5392
        %8339 = vmatpush1.bf16.msra.mxu0 %v5391
        %8340 = vmatprep.subr.bf16.mxu0 %v5396
        %8341 = vmatpush1.bf16.msra.mxu0 %v5395
        %8342 = vmatprep.subr.bf16.mxu0 %v5400
        %8343 = vmatpush1.bf16.msra.mxu0 %v5399
        %8344 = vmatprep.subr.bf16.mxu0 %v5404
        %8345 = vmatpush1.bf16.msra.mxu0 %v5403
        %8346 = vmatprep.mubr.bf16.mxu0 %v1485
        %8347 = vmatmul.mubr.bf16.gmra.mrb[0].mxu0 %v1483
        %v8348 = vpop.f32.mrb[0].mxu0
        %v8349 = vadd.f32 %v8308, %v8348
        %v8350 = vpop.f32.mrb[0].mxu0
        %v8351 = vadd.f32 %v8310, %v8350
        %v8352 = vpop.f32.mrb[0].mxu0
        %v8353 = vpop.f32.mrb[0].mxu0
        %8354 = vdwg.mxu0
        %8355 = vmatprep.subr.bf16.mxu0 %v5408
        %8356 = vmatpush1.bf16.msra.mxu0 %v5407
        %8357 = vmatprep.subr.bf16.mxu0 %v5412
        %8358 = vmatpush1.bf16.msra.mxu0 %v5411
        %8359 = vmatprep.subr.bf16.mxu0 %v5416
        %8360 = vmatpush1.bf16.msra.mxu0 %v5415
        %8361 = vmatprep.subr.bf16.mxu0 %v5420
        %8362 = vmatpush1.bf16.msra.mxu0 %v5419
        %8363 = vmatprep.subr.bf16.mxu0 %v5424
        %8364 = vmatpush1.bf16.msra.mxu0 %v5423
        %8365 = vmatprep.subr.bf16.mxu0 %v5428
        %8366 = vmatpush1.bf16.msra.mxu0 %v5427
        %8367 = vmatprep.subr.bf16.mxu0 %v5432
        %8368 = vmatpush1.bf16.msra.mxu0 %v5431
        %8369 = vmatprep.subr.bf16.mxu0 %v5436
        %8370 = vmatpush1.bf16.msra.mxu0 %v5435
        %8371 = vmatprep.subr.bf16.mxu0 %v5440
        %8372 = vmatpush1.bf16.msra.mxu0 %v5439
        %8373 = vmatprep.subr.bf16.mxu0 %v5444
        %8374 = vmatpush1.bf16.msra.mxu0 %v5443
        %8375 = vmatprep.subr.bf16.mxu0 %v5448
        %8376 = vmatpush1.bf16.msra.mxu0 %v5447
        %8377 = vmatprep.subr.bf16.mxu0 %v5452
        %8378 = vmatpush1.bf16.msra.mxu0 %v5451
        %8379 = vmatprep.subr.bf16.mxu0 %v5456
        %8380 = vmatpush1.bf16.msra.mxu0 %v5455
        %8381 = vmatprep.subr.bf16.mxu0 %v5460
        %8382 = vmatpush1.bf16.msra.mxu0 %v5459
        %8383 = vmatprep.subr.bf16.mxu0 %v5464
        %8384 = vmatpush1.bf16.msra.mxu0 %v5463
        %8385 = vmatprep.subr.bf16.mxu0 %v5468
        %8386 = vmatpush1.bf16.msra.mxu0 %v5467
        %8387 = vmatprep.mubr.bf16.mxu0 %v1523
        %8388 = vmatmul.mubr.bf16.gmra.mrb[0].mxu0 %v1509
        %v8389 = vpop.f32.mrb[0].mxu0
        %v8390 = vadd.f32 %v8349, %v8389
        %v8391 = vpop.f32.mrb[0].mxu0
        %v8392 = vadd.f32 %v8351, %v8391
        %v8393 = vpop.f32.mrb[0].mxu0
        %v8394 = vpop.f32.mrb[0].mxu0
        %8395 = vdwg.mxu0
        %8396 = vmatprep.subr.bf16.mxu0 %v5472
        %8397 = vmatpush1.bf16.msra.mxu0 %v5471
        %8398 = vmatprep.subr.bf16.mxu0 %v5476
        %8399 = vmatpush1.bf16.msra.mxu0 %v5475
        %8400 = vmatprep.subr.bf16.mxu0 %v5480
        %8401 = vmatpush1.bf16.msra.mxu0 %v5479
        %8402 = vmatprep.subr.bf16.mxu0 %v5484
        %8403 = vmatpush1.bf16.msra.mxu0 %v5483
        %8404 = vmatprep.subr.bf16.mxu0 %v5488
        %8405 = vmatpush1.bf16.msra.mxu0 %v5487
        %8406 = vmatprep.subr.bf16.mxu0 %v5492
        %8407 = vmatpush1.bf16.msra.mxu0 %v5491
        %8408 = vmatprep.subr.bf16.mxu0 %v5496
        %8409 = vmatpush1.bf16.msra.mxu0 %v5495
        %8410 = vmatprep.subr.bf16.mxu0 %v5500
        %8411 = vmatpush1.bf16.msra.mxu0 %v5499
        %8412 = vmatprep.subr.bf16.mxu0 %v5504
        %8413 = vmatpush1.bf16.msra.mxu0 %v5503
        %8414 = vmatprep.subr.bf16.mxu0 %v5508
        %8415 = vmatpush1.bf16.msra.mxu0 %v5507
        %8416 = vmatprep.subr.bf16.mxu0 %v5512
        %8417 = vmatpush1.bf16.msra.mxu0 %v5511
        %8418 = vmatprep.subr.bf16.mxu0 %v5516
        %8419 = vmatpush1.bf16.msra.mxu0 %v5515
        %8420 = vmatprep.subr.bf16.mxu0 %v5520
        %8421 = vmatpush1.bf16.msra.mxu0 %v5519
        %8422 = vmatprep.subr.bf16.mxu0 %v5524
        %8423 = vmatpush1.bf16.msra.mxu0 %v5523
        %8424 = vmatprep.subr.bf16.mxu0 %v5528
        %8425 = vmatpush1.bf16.msra.mxu0 %v5527
        %8426 = vmatprep.subr.bf16.mxu0 %v5532
        %8427 = vmatpush1.bf16.msra.mxu0 %v5531
        %8428 = vmatprep.mubr.bf16.mxu0 %v1533
        %8429 = vmatmul.mubr.bf16.gmra.mrb[0].mxu0 %v1531
        %v8430 = vpop.f32.mrb[0].mxu0
        %v8431 = vadd.f32 %v8390, %v8430
        %v8432 = vpop.f32.mrb[0].mxu0
        %v8433 = vadd.f32 %v8392, %v8432
        %v8434 = vpop.f32.mrb[0].mxu0
        %v8435 = vpop.f32.mrb[0].mxu0
        %8436 = vdwg.mxu0
        %8437 = vmatprep.subr.bf16.mxu0 %v5536
        %8438 = vmatpush1.bf16.msra.mxu0 %v5535
        %8439 = vmatprep.subr.bf16.mxu0 %v5540
        %8440 = vmatpush1.bf16.msra.mxu0 %v5539
        %8441 = vmatprep.subr.bf16.mxu0 %v5544
        %8442 = vmatpush1.bf16.msra.mxu0 %v5543
        %8443 = vmatprep.subr.bf16.mxu0 %v5548
        %8444 = vmatpush1.bf16.msra.mxu0 %v5547
        %8445 = vmatprep.subr.bf16.mxu0 %v5552
        %8446 = vmatpush1.bf16.msra.mxu0 %v5551
        %8447 = vmatprep.subr.bf16.mxu0 %v5556
        %8448 = vmatpush1.bf16.msra.mxu0 %v5555
        %8449 = vmatprep.subr.bf16.mxu0 %v5560
        %8450 = vmatpush1.bf16.msra.mxu0 %v5559
        %8451 = vmatprep.subr.bf16.mxu0 %v5564
        %8452 = vmatpush1.bf16.msra.mxu0 %v5563
        %8453 = vmatprep.subr.bf16.mxu0 %v5568
        %8454 = vmatpush1.bf16.msra.mxu0 %v5567
        %8455 = vmatprep.subr.bf16.mxu0 %v5572
        %8456 = vmatpush1.bf16.msra.mxu0 %v5571
        %8457 = vmatprep.subr.bf16.mxu0 %v5576
        %8458 = vmatpush1.bf16.msra.mxu0 %v5575
        %8459 = vmatprep.subr.bf16.mxu0 %v5580
        %8460 = vmatpush1.bf16.msra.mxu0 %v5579
        %8461 = vmatprep.subr.bf16.mxu0 %v5584
        %8462 = vmatpush1.bf16.msra.mxu0 %v5583
        %8463 = vmatprep.subr.bf16.mxu0 %v5588
        %8464 = vmatpush1.bf16.msra.mxu0 %v5587
        %8465 = vmatprep.subr.bf16.mxu0 %v5592
        %8466 = vmatpush1.bf16.msra.mxu0 %v5591
        %8467 = vmatprep.subr.bf16.mxu0 %v5596
        %8468 = vmatpush1.bf16.msra.mxu0 %v5595
        %8469 = vmatprep.mubr.bf16.mxu0 %v1530
        %8470 = vmatmul.mubr.bf16.gmra.mrb[0].mxu0 %v1516
        %v8471 = vpop.f32.mrb[0].mxu0
        %v8472 = vadd.f32 %v8431, %v8471
        %v8473 = vpop.f32.mrb[0].mxu0
        %v8474 = vadd.f32 %v8433, %v8473
        %v8475 = vpop.f32.mrb[0].mxu0
        %v8476 = vpop.f32.mrb[0].mxu0
        %8477 = vdwg.mxu0
        %8478 = vmatprep.subr.bf16.mxu0 %v5600
        %8479 = vmatpush1.bf16.msra.mxu0 %v5599
        %8480 = vmatprep.subr.bf16.mxu0 %v5604
        %8481 = vmatpush1.bf16.msra.mxu0 %v5603
        %8482 = vmatprep.subr.bf16.mxu0 %v5608
        %8483 = vmatpush1.bf16.msra.mxu0 %v5607
        %8484 = vmatprep.subr.bf16.mxu0 %v5612
        %8485 = vmatpush1.bf16.msra.mxu0 %v5611
        %8486 = vmatprep.subr.bf16.mxu0 %v5616
        %8487 = vmatpush1.bf16.msra.mxu0 %v5615
        %8488 = vmatprep.subr.bf16.mxu0 %v5620
        %8489 = vmatpush1.bf16.msra.mxu0 %v5619
        %8490 = vmatprep.subr.bf16.mxu0 %v5624
        %8491 = vmatpush1.bf16.msra.mxu0 %v5623
        %8492 = vmatprep.subr.bf16.mxu0 %v5628
        %8493 = vmatpush1.bf16.msra.mxu0 %v5627
        %8494 = vmatprep.subr.bf16.mxu0 %v5632
        %8495 = vmatpush1.bf16.msra.mxu0 %v5631
        %8496 = vmatprep.subr.bf16.mxu0 %v5636
        %8497 = vmatpush1.bf16.msra.mxu0 %v5635
        %8498 = vmatprep.subr.bf16.mxu0 %v5640
        %8499 = vmatpush1.bf16.msra.mxu0 %v5639
        %8500 = vmatprep.subr.bf16.mxu0 %v5644
        %8501 = vmatpush1.bf16.msra.mxu0 %v5643
        %8502 = vmatprep.subr.bf16.mxu0 %v5648
        %8503 = vmatpush1.bf16.msra.mxu0 %v5647
        %8504 = vmatprep.subr.bf16.mxu0 %v5652
        %8505 = vmatpush1.bf16.msra.mxu0 %v5651
        %8506 = vmatprep.subr.bf16.mxu0 %v5656
        %8507 = vmatpush1.bf16.msra.mxu0 %v5655
        %8508 = vmatprep.subr.bf16.mxu0 %v5660
        %8509 = vmatpush1.bf16.msra.mxu0 %v5659
        %8510 = vmatprep.mubr.bf16.mxu0 %v1534
        %8511 = vmatmul.mubr.bf16.gmra.mrb[0].mxu0 %v1532
        %v8512 = vpop.f32.mrb[0].mxu0
        %v8513 = vadd.f32 %v8472, %v8512
        %v8514 = vpop.f32.mrb[0].mxu0
        %v8515 = vadd.f32 %v8474, %v8514
        %v8516 = vpop.f32.mrb[0].mxu0
        %v8517 = vpop.f32.mrb[0].mxu0
        %8518 = vdwg.mxu0
        %8519 = vmatprep.subr.bf16.mxu0 %v5664
        %8520 = vmatpush1.bf16.msra.mxu0 %v5663
        %8521 = vmatprep.subr.bf16.mxu0 %v5668
        %8522 = vmatpush1.bf16.msra.mxu0 %v5667
        %8523 = vmatprep.subr.bf16.mxu0 %v5672
        %8524 = vmatpush1.bf16.msra.mxu0 %v5671
        %8525 = vmatprep.subr.bf16.mxu0 %v5676
        %8526 = vmatpush1.bf16.msra.mxu0 %v5675
        %8527 = vmatprep.subr.bf16.mxu0 %v5680
        %8528 = vmatpush1.bf16.msra.mxu0 %v5679
        %8529 = vmatprep.subr.bf16.mxu0 %v5684
        %8530 = vmatpush1.bf16.msra.mxu0 %v5683
        %8531 = vmatprep.subr.bf16.mxu0 %v5688
        %8532 = vmatpush1.bf16.msra.mxu0 %v5687
        %8533 = vmatprep.subr.bf16.mxu0 %v5692
        %8534 = vmatpush1.bf16.msra.mxu0 %v5691
        %8535 = vmatprep.subr.bf16.mxu0 %v5696
        %8536 = vmatpush1.bf16.msra.mxu0 %v5695
        %8537 = vmatprep.subr.bf16.mxu0 %v5700
        %8538 = vmatpush1.bf16.msra.mxu0 %v5699
        %8539 = vmatprep.subr.bf16.mxu0 %v5704
        %8540 = vmatpush1.bf16.msra.mxu0 %v5703
        %8541 = vmatprep.subr.bf16.mxu0 %v5708
        %8542 = vmatpush1.bf16.msra.mxu0 %v5707
        %8543 = vmatprep.subr.bf16.mxu0 %v5712
        %8544 = vmatpush1.bf16.msra.mxu0 %v5711
        %8545 = vmatprep.subr.bf16.mxu0 %v5716
        %8546 = vmatpush1.bf16.msra.mxu0 %v5715
        %8547 = vmatprep.subr.bf16.mxu0 %v5720
        %8548 = vmatpush1.bf16.msra.mxu0 %v5719
        %8549 = vmatprep.subr.bf16.mxu0 %v5724
        %8550 = vmatpush1.bf16.msra.mxu0 %v5723
        %8551 = vmatprep.mubr.bf16.mxu0 %v1572
        %8552 = vmatmul.mubr.bf16.gmra.mrb[0].mxu0 %v1558
        %v8553 = vpop.f32.mrb[0].mxu0
        %v8554 = vadd.f32 %v8513, %v8553
        %v8555 = vpop.f32.mrb[0].mxu0
        %v8556 = vadd.f32 %v8515, %v8555
        %v8557 = vpop.f32.mrb[0].mxu0
        %v8558 = vpop.f32.mrb[0].mxu0
        %8559 = vdwg.mxu0
        %8560 = vmatprep.subr.bf16.mxu0 %v5728
        %8561 = vmatpush1.bf16.msra.mxu0 %v5727
        %8562 = vmatprep.subr.bf16.mxu0 %v5732
        %8563 = vmatpush1.bf16.msra.mxu0 %v5731
        %8564 = vmatprep.subr.bf16.mxu0 %v5736
        %8565 = vmatpush1.bf16.msra.mxu0 %v5735
        %8566 = vmatprep.subr.bf16.mxu0 %v5740
        %8567 = vmatpush1.bf16.msra.mxu0 %v5739
        %8568 = vmatprep.subr.bf16.mxu0 %v5744
        %8569 = vmatpush1.bf16.msra.mxu0 %v5743
        %8570 = vmatprep.subr.bf16.mxu0 %v5748
        %8571 = vmatpush1.bf16.msra.mxu0 %v5747
        %8572 = vmatprep.subr.bf16.mxu0 %v5752
        %8573 = vmatpush1.bf16.msra.mxu0 %v5751
        %8574 = vmatprep.subr.bf16.mxu0 %v5756
        %8575 = vmatpush1.bf16.msra.mxu0 %v5755
        %8576 = vmatprep.subr.bf16.mxu0 %v5760
        %8577 = vmatpush1.bf16.msra.mxu0 %v5759
        %8578 = vmatprep.subr.bf16.mxu0 %v5764
        %8579 = vmatpush1.bf16.msra.mxu0 %v5763
        %8580 = vmatprep.subr.bf16.mxu0 %v5768
        %8581 = vmatpush1.bf16.msra.mxu0 %v5767
        %8582 = vmatprep.subr.bf16.mxu0 %v5772
        %8583 = vmatpush1.bf16.msra.mxu0 %v5771
        %8584 = vmatprep.subr.bf16.mxu0 %v5776
        %8585 = vmatpush1.bf16.msra.mxu0 %v5775
        %8586 = vmatprep.subr.bf16.mxu0 %v5780
        %8587 = vmatpush1.bf16.msra.mxu0 %v5779
        %8588 = vmatprep.subr.bf16.mxu0 %v5784
        %8589 = vmatpush1.bf16.msra.mxu0 %v5783
        %8590 = vmatprep.subr.bf16.mxu0 %v5788
        %8591 = vmatpush1.bf16.msra.mxu0 %v5787
        %8592 = vmatprep.mubr.bf16.mxu0 %v1582
        %8593 = vmatmul.mubr.bf16.gmra.mrb[0].mxu0 %v1580
        %v8594 = vpop.f32.mrb[0].mxu0
        %v8595 = vadd.f32 %v8554, %v8594
        %v8596 = vpop.f32.mrb[0].mxu0
        %v8597 = vadd.f32 %v8556, %v8596
        %v8598 = vpop.f32.mrb[0].mxu0
        %v8599 = vpop.f32.mrb[0].mxu0
        %8600 = vdwg.mxu0
        %8601 = vmatprep.subr.bf16.mxu0 %v5792
        %8602 = vmatpush1.bf16.msra.mxu0 %v5791
        %8603 = vmatprep.subr.bf16.mxu0 %v5796
        %8604 = vmatpush1.bf16.msra.mxu0 %v5795
        %8605 = vmatprep.subr.bf16.mxu0 %v5800
        %8606 = vmatpush1.bf16.msra.mxu0 %v5799
        %8607 = vmatprep.subr.bf16.mxu0 %v5804
        %8608 = vmatpush1.bf16.msra.mxu0 %v5803
        %8609 = vmatprep.subr.bf16.mxu0 %v5808
        %8610 = vmatpush1.bf16.msra.mxu0 %v5807
        %8611 = vmatprep.subr.bf16.mxu0 %v5812
        %8612 = vmatpush1.bf16.msra.mxu0 %v5811
        %8613 = vmatprep.subr.bf16.mxu0 %v5816
        %8614 = vmatpush1.bf16.msra.mxu0 %v5815
        %8615 = vmatprep.subr.bf16.mxu0 %v5820
        %8616 = vmatpush1.bf16.msra.mxu0 %v5819
        %8617 = vmatprep.subr.bf16.mxu0 %v5824
        %8618 = vmatpush1.bf16.msra.mxu0 %v5823
        %8619 = vmatprep.subr.bf16.mxu0 %v5828
        %8620 = vmatpush1.bf16.msra.mxu0 %v5827
        %8621 = vmatprep.subr.bf16.mxu0 %v5832
        %8622 = vmatpush1.bf16.msra.mxu0 %v5831
        %8623 = vmatprep.subr.bf16.mxu0 %v5836
        %8624 = vmatpush1.bf16.msra.mxu0 %v5835
        %8625 = vmatprep.subr.bf16.mxu0 %v5840
        %8626 = vmatpush1.bf16.msra.mxu0 %v5839
        %8627 = vmatprep.subr.bf16.mxu0 %v5844
        %8628 = vmatpush1.bf16.msra.mxu0 %v5843
        %8629 = vmatprep.subr.bf16.mxu0 %v5848
        %8630 = vmatpush1.bf16.msra.mxu0 %v5847
        %8631 = vmatprep.subr.bf16.mxu0 %v5852
        %8632 = vmatpush1.bf16.msra.mxu0 %v5851
        %8633 = vmatprep.mubr.bf16.mxu0 %v1579
        %8634 = vmatmul.mubr.bf16.gmra.mrb[0].mxu0 %v1565
        %v8635 = vpop.f32.mrb[0].mxu0
        %v8636 = vadd.f32 %v8595, %v8635
        %v8637 = vpop.f32.mrb[0].mxu0
        %v8638 = vadd.f32 %v8597, %v8637
        %v8639 = vpop.f32.mrb[0].mxu0
        %v8640 = vpop.f32.mrb[0].mxu0
        %8641 = vdwg.mxu0
        %8642 = vmatprep.subr.bf16.mxu0 %v5856
        %8643 = vmatpush1.bf16.msra.mxu0 %v5855
        %8644 = vmatprep.subr.bf16.mxu0 %v5860
        %8645 = vmatpush1.bf16.msra.mxu0 %v5859
        %8646 = vmatprep.subr.bf16.mxu0 %v5864
        %8647 = vmatpush1.bf16.msra.mxu0 %v5863
        %8648 = vmatprep.subr.bf16.mxu0 %v5868
        %8649 = vmatpush1.bf16.msra.mxu0 %v5867
        %8650 = vmatprep.subr.bf16.mxu0 %v5872
        %8651 = vmatpush1.bf16.msra.mxu0 %v5871
        %8652 = vmatprep.subr.bf16.mxu0 %v5876
        %8653 = vmatpush1.bf16.msra.mxu0 %v5875
        %8654 = vmatprep.subr.bf16.mxu0 %v5880
        %8655 = vmatpush1.bf16.msra.mxu0 %v5879
        %8656 = vmatprep.subr.bf16.mxu0 %v5884
        %8657 = vmatpush1.bf16.msra.mxu0 %v5883
        %8658 = vmatprep.subr.bf16.mxu0 %v5888
        %8659 = vmatpush1.bf16.msra.mxu0 %v5887
        %8660 = vmatprep.subr.bf16.mxu0 %v5892
        %8661 = vmatpush1.bf16.msra.mxu0 %v5891
        %8662 = vmatprep.subr.bf16.mxu0 %v5896
        %8663 = vmatpush1.bf16.msra.mxu0 %v5895
        %8664 = vmatprep.subr.bf16.mxu0 %v5900
        %8665 = vmatpush1.bf16.msra.mxu0 %v5899
        %8666 = vmatprep.subr.bf16.mxu0 %v5904
        %8667 = vmatpush1.bf16.msra.mxu0 %v5903
        %8668 = vmatprep.subr.bf16.mxu0 %v5908
        %8669 = vmatpush1.bf16.msra.mxu0 %v5907
        %8670 = vmatprep.subr.bf16.mxu0 %v5912
        %8671 = vmatpush1.bf16.msra.mxu0 %v5911
        %8672 = vmatprep.subr.bf16.mxu0 %v5916
        %8673 = vmatpush1.bf16.msra.mxu0 %v5915
        %8674 = vmatprep.mubr.bf16.mxu0 %v1583
        %8675 = vmatmul.mubr.bf16.gmra.mrb[0].mxu0 %v1581
        %v8676 = vpop.f32.mrb[0].mxu0
        %v8677 = vadd.f32 %v8636, %v8676
        %v8678 = vpop.f32.mrb[0].mxu0
        %v8679 = vadd.f32 %v8638, %v8678
        %v8680 = vpop.f32.mrb[0].mxu0
        %v8681 = vpop.f32.mrb[0].mxu0
        %8682 = vdwg.mxu0
        %8683 = vmatprep.subr.bf16.mxu0 %v5920
        %8684 = vmatpush1.bf16.msra.mxu0 %v5919
        %8685 = vmatprep.subr.bf16.mxu0 %v5924
        %8686 = vmatpush1.bf16.msra.mxu0 %v5923
        %8687 = vmatprep.subr.bf16.mxu0 %v5928
        %8688 = vmatpush1.bf16.msra.mxu0 %v5927
        %8689 = vmatprep.subr.bf16.mxu0 %v5932
        %8690 = vmatpush1.bf16.msra.mxu0 %v5931
        %8691 = vmatprep.subr.bf16.mxu0 %v5936
        %8692 = vmatpush1.bf16.msra.mxu0 %v5935
        %8693 = vmatprep.subr.bf16.mxu0 %v5940
        %8694 = vmatpush1.bf16.msra.mxu0 %v5939
        %8695 = vmatprep.subr.bf16.mxu0 %v5944
        %8696 = vmatpush1.bf16.msra.mxu0 %v5943
        %8697 = vmatprep.subr.bf16.mxu0 %v5948
        %8698 = vmatpush1.bf16.msra.mxu0 %v5947
        %8699 = vmatprep.subr.bf16.mxu0 %v5952
        %8700 = vmatpush1.bf16.msra.mxu0 %v5951
        %8701 = vmatprep.subr.bf16.mxu0 %v5956
        %8702 = vmatpush1.bf16.msra.mxu0 %v5955
        %8703 = vmatprep.subr.bf16.mxu0 %v5960
        %8704 = vmatpush1.bf16.msra.mxu0 %v5959
        %8705 = vmatprep.subr.bf16.mxu0 %v5964
        %8706 = vmatpush1.bf16.msra.mxu0 %v5963
        %8707 = vmatprep.subr.bf16.mxu0 %v5968
        %8708 = vmatpush1.bf16.msra.mxu0 %v5967
        %8709 = vmatprep.subr.bf16.mxu0 %v5972
        %8710 = vmatpush1.bf16.msra.mxu0 %v5971
        %8711 = vmatprep.subr.bf16.mxu0 %v5976
        %8712 = vmatpush1.bf16.msra.mxu0 %v5975
        %8713 = vmatprep.subr.bf16.mxu0 %v5980
        %8714 = vmatpush1.bf16.msra.mxu0 %v5979
        %8715 = vmatprep.mubr.bf16.mxu0 %v1621
        %8716 = vmatmul.mubr.bf16.gmra.mrb[0].mxu0 %v1607
        %v8717 = vpop.f32.mrb[0].mxu0
        %v8718 = vadd.f32 %v8677, %v8717
        %v8719 = vpop.f32.mrb[0].mxu0
        %v8720 = vadd.f32 %v8679, %v8719
        %v8721 = vpop.f32.mrb[0].mxu0
        %v8722 = vpop.f32.mrb[0].mxu0
        %8723 = vdwg.mxu0
        %8724 = vmatprep.subr.bf16.mxu0 %v5984
        %8725 = vmatpush1.bf16.msra.mxu0 %v5983
        %8726 = vmatprep.subr.bf16.mxu0 %v5988
        %8727 = vmatpush1.bf16.msra.mxu0 %v5987
        %8728 = vmatprep.subr.bf16.mxu0 %v5992
        %8729 = vmatpush1.bf16.msra.mxu0 %v5991
        %8730 = vmatprep.subr.bf16.mxu0 %v5996
        %8731 = vmatpush1.bf16.msra.mxu0 %v5995
        %8732 = vmatprep.subr.bf16.mxu0 %v6000
        %8733 = vmatpush1.bf16.msra.mxu0 %v5999
        %8734 = vmatprep.subr.bf16.mxu0 %v6004
        %8735 = vmatpush1.bf16.msra.mxu0 %v6003
        %8736 = vmatprep.subr.bf16.mxu0 %v6008
        %8737 = vmatpush1.bf16.msra.mxu0 %v6007
        %8738 = vmatprep.subr.bf16.mxu0 %v6012
        %8739 = vmatpush1.bf16.msra.mxu0 %v6011
        %8740 = vmatprep.subr.bf16.mxu0 %v6016
        %8741 = vmatpush1.bf16.msra.mxu0 %v6015
        %8742 = vmatprep.subr.bf16.mxu0 %v6020
        %8743 = vmatpush1.bf16.msra.mxu0 %v6019
        %8744 = vmatprep.subr.bf16.mxu0 %v6024
        %8745 = vmatpush1.bf16.msra.mxu0 %v6023
        %8746 = vmatprep.subr.bf16.mxu0 %v6028
        %8747 = vmatpush1.bf16.msra.mxu0 %v6027
        %8748 = vmatprep.subr.bf16.mxu0 %v6032
        %8749 = vmatpush1.bf16.msra.mxu0 %v6031
        %8750 = vmatprep.subr.bf16.mxu0 %v6036
        %8751 = vmatpush1.bf16.msra.mxu0 %v6035
        %8752 = vmatprep.subr.bf16.mxu0 %v6040
        %8753 = vmatpush1.bf16.msra.mxu0 %v6039
        %8754 = vmatprep.subr.bf16.mxu0 %v6044
        %8755 = vmatpush1.bf16.msra.mxu0 %v6043
        %8756 = vmatprep.mubr.bf16.mxu0 %v1631
        %8757 = vmatmul.mubr.bf16.gmra.mrb[0].mxu0 %v1629
        %v8758 = vpop.f32.mrb[0].mxu0
        %v8759 = vadd.f32 %v8718, %v8758
        %v8760 = vpop.f32.mrb[0].mxu0
        %v8761 = vadd.f32 %v8720, %v8760
        %v8762 = vpop.f32.mrb[0].mxu0
        %v8763 = vpop.f32.mrb[0].mxu0
        %8764 = vdwg.mxu0
        %8765 = vmatprep.subr.bf16.mxu0 %v6048
        %8766 = vmatpush1.bf16.msra.mxu0 %v6047
        %8767 = vmatprep.subr.bf16.mxu0 %v6052
        %8768 = vmatpush1.bf16.msra.mxu0 %v6051
        %8769 = vmatprep.subr.bf16.mxu0 %v6056
        %8770 = vmatpush1.bf16.msra.mxu0 %v6055
        %8771 = vmatprep.subr.bf16.mxu0 %v6060
        %8772 = vmatpush1.bf16.msra.mxu0 %v6059
        %8773 = vmatprep.subr.bf16.mxu0 %v6064
        %8774 = vmatpush1.bf16.msra.mxu0 %v6063
        %8775 = vmatprep.subr.bf16.mxu0 %v6068
        %8776 = vmatpush1.bf16.msra.mxu0 %v6067
        %8777 = vmatprep.subr.bf16.mxu0 %v6072
        %8778 = vmatpush1.bf16.msra.mxu0 %v6071
        %8779 = vmatprep.subr.bf16.mxu0 %v6076
        %8780 = vmatpush1.bf16.msra.mxu0 %v6075
        %8781 = vmatprep.subr.bf16.mxu0 %v6080
        %8782 = vmatpush1.bf16.msra.mxu0 %v6079
        %8783 = vmatprep.subr.bf16.mxu0 %v6084
        %8784 = vmatpush1.bf16.msra.mxu0 %v6083
        %8785 = vmatprep.subr.bf16.mxu0 %v6088
        %8786 = vmatpush1.bf16.msra.mxu0 %v6087
        %8787 = vmatprep.subr.bf16.mxu0 %v6092
        %8788 = vmatpush1.bf16.msra.mxu0 %v6091
        %8789 = vmatprep.subr.bf16.mxu0 %v6096
        %8790 = vmatpush1.bf16.msra.mxu0 %v6095
        %8791 = vmatprep.subr.bf16.mxu0 %v6100
        %8792 = vmatpush1.bf16.msra.mxu0 %v6099
        %8793 = vmatprep.subr.bf16.mxu0 %v6104
        %8794 = vmatpush1.bf16.msra.mxu0 %v6103
        %8795 = vmatprep.subr.bf16.mxu0 %v6108
        %8796 = vmatpush1.bf16.msra.mxu0 %v6107
        %8797 = vmatprep.mubr.bf16.mxu0 %v1628
        %8798 = vmatmul.mubr.bf16.gmra.mrb[0].mxu0 %v1614
        %v8799 = vpop.f32.mrb[0].mxu0
        %v8800 = vadd.f32 %v8759, %v8799
        %v8801 = vpop.f32.mrb[0].mxu0
        %v8802 = vadd.f32 %v8761, %v8801
        %v8803 = vpop.f32.mrb[0].mxu0
        %v8804 = vpop.f32.mrb[0].mxu0
        %8805 = vdwg.mxu0
        %8806 = vmatprep.subr.bf16.mxu0 %v6112
        %8807 = vmatpush1.bf16.msra.mxu0 %v6111
        %8808 = vmatprep.subr.bf16.mxu0 %v6116
        %8809 = vmatpush1.bf16.msra.mxu0 %v6115
        %8810 = vmatprep.subr.bf16.mxu0 %v6120
        %8811 = vmatpush1.bf16.msra.mxu0 %v6119
        %8812 = vmatprep.subr.bf16.mxu0 %v6124
        %8813 = vmatpush1.bf16.msra.mxu0 %v6123
        %8814 = vmatprep.subr.bf16.mxu0 %v6128
        %8815 = vmatpush1.bf16.msra.mxu0 %v6127
        %8816 = vmatprep.subr.bf16.mxu0 %v6132
        %8817 = vmatpush1.bf16.msra.mxu0 %v6131
        %8818 = vmatprep.subr.bf16.mxu0 %v6136
        %8819 = vmatpush1.bf16.msra.mxu0 %v6135
        %8820 = vmatprep.subr.bf16.mxu0 %v6140
        %8821 = vmatpush1.bf16.msra.mxu0 %v6139
        %8822 = vmatprep.subr.bf16.mxu0 %v6144
        %8823 = vmatpush1.bf16.msra.mxu0 %v6143
        %8824 = vmatprep.subr.bf16.mxu0 %v6148
        %8825 = vmatpush1.bf16.msra.mxu0 %v6147
        %8826 = vmatprep.subr.bf16.mxu0 %v6152
        %8827 = vmatpush1.bf16.msra.mxu0 %v6151
        %8828 = vmatprep.subr.bf16.mxu0 %v6156
        %8829 = vmatpush1.bf16.msra.mxu0 %v6155
        %8830 = vmatprep.subr.bf16.mxu0 %v6160
        %8831 = vmatpush1.bf16.msra.mxu0 %v6159
        %8832 = vmatprep.subr.bf16.mxu0 %v6164
        %8833 = vmatpush1.bf16.msra.mxu0 %v6163
        %8834 = vmatprep.subr.bf16.mxu0 %v6168
        %8835 = vmatpush1.bf16.msra.mxu0 %v6167
        %8836 = vmatprep.subr.bf16.mxu0 %v6172
        %8837 = vmatpush1.bf16.msra.mxu0 %v6171
        %8838 = vmatprep.mubr.bf16.mxu0 %v1632
        %8839 = vmatmul.mubr.bf16.gmra.mrb[0].mxu0 %v1630
        %v8840 = vpop.f32.mrb[0].mxu0
        %v8841 = vadd.f32 %v8800, %v8840
        %v8842 = vpop.f32.mrb[0].mxu0
        %v8843 = vadd.f32 %v8802, %v8842
        %v8844 = vpop.f32.mrb[0].mxu0
        %v8845 = vpop.f32.mrb[0].mxu0
        %8846 = vdwg.mxu0
        %8847 = vmatprep.subr.bf16.mxu0 %v6176
        %8848 = vmatpush1.bf16.msra.mxu0 %v6175
        %8849 = vmatprep.subr.bf16.mxu0 %v6180
        %8850 = vmatpush1.bf16.msra.mxu0 %v6179
        %8851 = vmatprep.subr.bf16.mxu0 %v6184
        %8852 = vmatpush1.bf16.msra.mxu0 %v6183
        %8853 = vmatprep.subr.bf16.mxu0 %v6188
        %8854 = vmatpush1.bf16.msra.mxu0 %v6187
        %8855 = vmatprep.subr.bf16.mxu0 %v6192
        %8856 = vmatpush1.bf16.msra.mxu0 %v6191
        %8857 = vmatprep.subr.bf16.mxu0 %v6196
        %8858 = vmatpush1.bf16.msra.mxu0 %v6195
        %8859 = vmatprep.subr.bf16.mxu0 %v6200
        %8860 = vmatpush1.bf16.msra.mxu0 %v6199
        %8861 = vmatprep.subr.bf16.mxu0 %v6204
        %8862 = vmatpush1.bf16.msra.mxu0 %v6203
        %8863 = vmatprep.subr.bf16.mxu0 %v6208
        %8864 = vmatpush1.bf16.msra.mxu0 %v6207
        %8865 = vmatprep.subr.bf16.mxu0 %v6212
        %8866 = vmatpush1.bf16.msra.mxu0 %v6211
        %8867 = vmatprep.subr.bf16.mxu0 %v6216
        %8868 = vmatpush1.bf16.msra.mxu0 %v6215
        %8869 = vmatprep.subr.bf16.mxu0 %v6220
        %8870 = vmatpush1.bf16.msra.mxu0 %v6219
        %8871 = vmatprep.subr.bf16.mxu0 %v6224
        %8872 = vmatpush1.bf16.msra.mxu0 %v6223
        %8873 = vmatprep.subr.bf16.mxu0 %v6228
        %8874 = vmatpush1.bf16.msra.mxu0 %v6227
        %8875 = vmatprep.subr.bf16.mxu0 %v6232
        %8876 = vmatpush1.bf16.msra.mxu0 %v6231
        %8877 = vmatprep.subr.bf16.mxu0 %v6236
        %8878 = vmatpush1.bf16.msra.mxu0 %v6235
        %8879 = vmatprep.mubr.bf16.mxu0 %v1654
        %8880 = vmatmul.mubr.bf16.gmra.mrb[0].mxu0 %v1647
        %v8881 = vpop.f32.mrb[0].mxu0
        %v8882 = vadd.f32 %v8841, %v8881
        %v8883 = vpop.f32.mrb[0].mxu0
        %v8884 = vadd.f32 %v8843, %v8883
        %v8885 = vpop.f32.mrb[0].mxu0
        %v8886 = vpop.f32.mrb[0].mxu0
        %8887 = vdwg.mxu0
        %8888 = vmatprep.subr.bf16.mxu0 %v6240
        %8889 = vmatpush1.bf16.msra.mxu0 %v6239
        %8890 = vmatprep.subr.bf16.mxu0 %v6244
        %8891 = vmatpush1.bf16.msra.mxu0 %v6243
        %8892 = vmatprep.subr.bf16.mxu0 %v6248
        %8893 = vmatpush1.bf16.msra.mxu0 %v6247
        %8894 = vmatprep.subr.bf16.mxu0 %v6252
        %8895 = vmatpush1.bf16.msra.mxu0 %v6251
        %8896 = vmatprep.subr.bf16.mxu0 %v6256
        %8897 = vmatpush1.bf16.msra.mxu0 %v6255
        %8898 = vmatprep.subr.bf16.mxu0 %v6260
        %8899 = vmatpush1.bf16.msra.mxu0 %v6259
        %8900 = vmatprep.subr.bf16.mxu0 %v6264
        %8901 = vmatpush1.bf16.msra.mxu0 %v6263
        %8902 = vmatprep.subr.bf16.mxu0 %v6268
        %8903 = vmatpush1.bf16.msra.mxu0 %v6267
        %8904 = vmatprep.subr.bf16.mxu0 %v6272
        %8905 = vmatpush1.bf16.msra.mxu0 %v6271
        %8906 = vmatprep.subr.bf16.mxu0 %v6276
        %8907 = vmatpush1.bf16.msra.mxu0 %v6275
        %8908 = vmatprep.subr.bf16.mxu0 %v6280
        %8909 = vmatpush1.bf16.msra.mxu0 %v6279
        %8910 = vmatprep.subr.bf16.mxu0 %v6284
        %8911 = vmatpush1.bf16.msra.mxu0 %v6283
        %8912 = vmatprep.subr.bf16.mxu0 %v6288
        %8913 = vmatpush1.bf16.msra.mxu0 %v6287
        %8914 = vmatprep.subr.bf16.mxu0 %v6292
        %8915 = vmatpush1.bf16.msra.mxu0 %v6291
        %8916 = vmatprep.subr.bf16.mxu0 %v6296
        %8917 = vmatpush1.bf16.msra.mxu0 %v6295
        %8918 = vmatprep.subr.bf16.mxu0 %v6300
        %8919 = vmatpush1.bf16.msra.mxu0 %v6299
        %8920 = vmatprep.mubr.bf16.mxu0 %v1656
        %8921 = vmatmul.mubr.bf16.gmra.mrb[0].mxu0 %v1655
        %v8922 = vpop.f32.mrb[0].mxu0
        %v8923 = vadd.f32 %v8882, %v8922
        %v8924 = vpop.f32.mrb[0].mxu0
        %v8925 = vadd.f32 %v8884, %v8924
        %v8926 = vpop.f32.mrb[0].mxu0
        %v8927 = vpop.f32.mrb[0].mxu0
        %8928 = vdwg.mxu0
        %v8933 = vcombine.low %v8185, %v8187
        %v8934 = vcombine.low %v8923, %v8925
        %v8936 = vunpack.c.l.s4 1983009808
        %v8937 = vunpack.c.0.s8 %v8936
        %v8938 = vlaneseq
        %v8939 = vshrl.u32 %v8938, 7
        %v8940 = vsub.s32 %v8937, %v8939
        %v8941 = vrot.slane %v8933, %v8940
        %v8943 = vunpack.c.l.s4 1983009808
        %v8944 = vunpack.c.0.s8 %v8943
        %v8945 = vlaneseq
        %v8946 = vshrl.u32 %v8945, 7
        %v8947 = vsub.s32 %v8944, %v8946
        %v8948 = vrot.slane %v8934, %v8947
        %v8949 = vcombine.low %v8941, %v8948
        %v8951 = vadd.f32 %v274, %v8949
        %8952 = vst [vmem:[#allocation2] sm:$0xff] %v8951
        %p8953 = scmp.eq.s32.totalorder %s25, 7
        // Predicated region
        $region45: #{encoder_share_forward.2} parent=31 // pred_check
          %p8954 = pneg %p8953
        $region46: #{encoder_share_forward.2} parent=31 // pred_check_branch
          %8956 = sbr.rel (%p8954) target = $region48
        $region47: #{encoder_share_forward.2} parent=31 // pred_region
          %v8957 = vld [vmem:[#allocation2] sm:$0xff]
          %v8958 = vld [vmem:[%s223] sm:$0xf]
          %v8960 = vlaneseq
          %v8961 = vshrl.u32 %v8960, 7
          %v8962 = vsub.s32 0, %v8961
          %v8963 = vrot.slane %v8958, %v8962
          %v8964 = vlaneseq
          %v8965 = vshrl.u32 %v8964, 7
          %v8966 = vsub.s32 1, %v8965
          %v8967 = vrot.slane %v8958, %v8966
          %v8968 = vlaneseq
          %v8969 = vshrl.u32 %v8968, 7
          %v8970 = vsub.s32 2, %v8969
          %v8971 = vrot.slane %v8958, %v8970
          %v8972 = vlaneseq
          %v8973 = vshrl.u32 %v8972, 7
          %v8974 = vsub.s32 3, %v8973
          %v8975 = vrot.slane %v8958, %v8974
          %v8976 = vcombine.low %v8963, %v8967
          %v8977 = vcombine.low %v8971, %v8975
          %v8979 = vunpack.c.l.s4 1983009808
          %v8980 = vunpack.c.0.s8 %v8979
          %v8981 = vlaneseq
          %v8982 = vshrl.u32 %v8981, 7
          %v8983 = vsub.s32 %v8980, %v8982
          %v8984 = vrot.slane %v8976, %v8983
          %v8986 = vunpack.c.l.s4 1983009808
          %v8987 = vunpack.c.0.s8 %v8986
          %v8988 = vlaneseq
          %v8989 = vshrl.u32 %v8988, 7
          %v8990 = vsub.s32 %v8987, %v8989
          %v8991 = vrot.slane %v8977, %v8990
          %v8992 = vcombine.low %v8984, %v8991
          %v8994 = vadd.f32 %v8957, %v8992
          %vm8995 = vcmp.gt.f32.partialorder %v8994, 0.0
          %v8996 = vmin.f32 %v8994, 0.0
          %v8997 = vmul.f32 %v8996, 1.442695
          %v8998 = vpow.pop %v8997
          %v8999 = vsub.f32 %v8998, 1.0
          %v9000 = vsel %vm8995, %v8994, %v8999
          %9001 = vst [vmem:[%s267] sm:$0xff] %v9000
        $region48: #{encoder_share_forward.2} parent=31 // pred_fallthru
          _
        %s9002 = smul.u32 4, %s24
        %p9003 = scmp.lt.s32.totalorder %s9002, 7
        %s9004 = scalar_select %p9003, %s9002, 7
        %s9005 = smul.addr %s9004, 2
        %s9006 = scalar_lea.vmem %s3, %s9005
        // Predicated region
        $region49: #{encoder_share_forward.2} parent=31 // pred_check
          %p9007 = pneg %p130
        $region50: #{encoder_share_forward.2} parent=31 // pred_check_branch
          %9009 = sbr.rel (%p9007) target = $region52
        $region51: #{encoder_share_forward.2} parent=31 // pred_region
          %s9010 = smul.u32 4, %s24
        $region52: #{encoder_share_forward.2} parent=31 // pred_fallthru
          _
      $region32: #{encoder_share_forward.2} parent=5 // pred_fallthru
        _
      %p9011 = scmp.le.s32.totalorder 2, %s15
      // Predicated region
      $region53: #{encoder_share_forward.2} parent=5 // pred_check
        %p9012 = pneg %p9011
      $region54: #{encoder_share_forward.2} parent=5 // pred_check_branch
        %9014 = sbr.rel (%p9012) target = $region56
      $region55: #{encoder_share_forward.2} parent=5 // pred_region
        %s9015 = ssub.s32 %s15, 2
        // Predicated region
        $region57: #{encoder_share_forward.2} parent=55 // pred_check
          %p9016 = pneg %p136
        $region58: #{encoder_share_forward.2} parent=55 // pred_check_branch
          %9018 = sbr.rel (%p9016) target = $region60
        $region59: #{encoder_share_forward.2} parent=55 // pred_region
          %s9019 = smul.u32 4, %s26
          %p9020 = scmp.lt.s32.totalorder %s9019, 7
          %s9021 = scalar_select %p9020, %s9019, 7
          %s9022 = smul.addr %s9021, 2
          %s9023 = scalar_lea.vmem %s3, %s9022
        $region60: #{encoder_share_forward.2} parent=55 // pred_fallthru
          _
      $region56: #{encoder_share_forward.2} parent=5 // pred_fallthru
        _
    $region6: #{encoder_share_forward.2} parent=1 // loop_footer
      %s19 = sadd.s32 1, %s15
    $region7: #{encoder_share_forward.2} parent=1 // loop_footer_branch
      %14 = sbr.rel target = $region3
    $region8: #{encoder_share_forward.2} parent=1 // loop_exit
      _
    %9024 = vsyncpa [#allocation4], 1
    %s9025 = scalar_lea.sflag [#allocation4], 1
    %9026 = vsyncpa %s9025, 1
    %9027 = vsyncpa [#allocation6], 1
    %s9028 = scalar_lea.sflag [#allocation6], 1
    %9029 = vsyncpa %s9028, 1

</llo_original>
